<compile_context>
chip_gen: v6e
topology: v6e:2x2x1
jax: 0.10.0
libtpu: 0.0.40
codegen_flags: <defaults>
</compile_context>

<pallas_src>
import math
import jax
import jax.numpy as jnp
from jax.experimental import pallas as pl
from jax.experimental.pallas import tpu as pltpu

# ---- hyperparameters (small, consistent with the SchNet constructor in the loader) ----
F = 32            # num_filters == hidden channels per model
G = 16            # num_gaussians
T = 2             # num_interactions
H = F // 2        # output-head hidden per model
CUTOFF = 6.0

NA = 8                         # atoms per molecule
NUM_MOL = 32                   # molecules per kernel invocation
MOLS_PER_BLOCK = 16            # -> 128-atom tiles (use 32 for 256-row tiles on v6e/v7x)
NUM_BLOCKS = NUM_MOL // MOLS_PER_BLOCK
NB = MOLS_PER_BLOCK * NA       # atoms per grid block            = 128
EPM = NA * (NA - 1)            # edges per molecule (full graph) = 56
EB = MOLS_PER_BLOCK * EPM      # edges per grid block            = 896 (multiple of 128)
N_TOTAL = NUM_MOL * NA
E_TOTAL = NUM_MOL * EPM

F2 = 2 * F        # fused channel width (two models side by side)        = 64
TW = 2 * T * F    # fused edge-filter width over all (model, t) pairs    = 128
H2 = 2 * H        # fused output-head hidden width                       = 32
OUT_W = 128       # lane-dense per-atom output width (column 0 is the real value)

LOG2 = math.log(2.0)
GAUSS_COEFF = -0.5 / (CUTOFF / (G - 1)) ** 2   # offsets = linspace(0, cutoff, G)


def _ssp(x):
    # shifted softplus: softplus(x) - log(2), numerically stable, kept in f32 (VPU/EUP)
    return jnp.maximum(x, 0.0) + jnp.log1p(jnp.exp(-jnp.abs(x))) - LOG2


# --------------------------------------------------------------------------------------
# Fused per-block forward math. Shared verbatim between the Pallas kernel body and the
# pure-JAX references so the numerical checks are apples-to-apples.
#
#   hf0   [NB, F2]       f32   fused initial embeddings  [h_low | h_dif]
#   egat  [EB, NB+G]     bf16  gather one-hot (cols :NB) ++ edge_attr (cols NB:)
#   sca_c [NB, EB]       bf16  scatter-sum one-hot with (cosine cutoff * radius-valid) folded in
#   wflt  [G+TW, TW]     bf16  filter MLP: rows :G = layer0 [G,TW]; rows G: = block-diag layer1
#   wint  [3T, F2, F2]   bf16  block-diag weights per t: (cfconv.lin1, cfconv.lin2, interaction.lin)
#   wout  [F2+H2, 128]   bf16  rows :F2 cols :H2 = head lin1; rows F2: col 0 = blockdiag(lin2) @
#                              sum_layer.weight^T (zero-padded to 128 lanes -> dense stores)
#   bias  [8, TW]        f32   row0/1 filter biases; rows 2+t / 4+t (:F2) cfconv.lin2 / inter.lin
#                              biases; row6 (:H2) head lin1 bias; row7 unused
#
# returns per-atom [NB, 128] f32; column 0 = combined per-atom energy contribution (o2 bias and
# the per-molecule readout sum are finished in the wrapper).
# --------------------------------------------------------------------------------------
def _fused_block_forward(hf0, egat, sca_c, wflt, wint, wout, bias,
                         mxu_dtype=jnp.bfloat16):
    cast = lambda a: a.astype(mxu_dtype)

    gat = egat[:, :NB]                      # [EB, NB]  lane-aligned at 0
    edge_attr = egat[:, NB:]                # [EB, G]   lane-aligned at 128
    w0 = wflt[:G]                           # [G, TW]
    w1 = wflt[G:]                           # [TW, TW]
    o1w = wout[:F2, :H2]                    # [F2, H2]
    ocomb = wout[F2:, :]                    # [H2, 128] (col 0 = o2w_bd @ sum_layer^T)
    b0 = bias[0:1, :]
    b1 = bias[1:2, :]
    o1b = bias[6:7, :H2]

    # hoisted edge-filter MLP for all (model, interaction) pairs -> [EB, 2*T*F] (128-lane dense)
    wp = jnp.dot(cast(edge_attr), cast(w0), preferred_element_type=jnp.float32) + b0
    W_all = jnp.dot(cast(_ssp(wp)), cast(w1), preferred_element_type=jnp.float32) + b1

    h = hf0                                 # [NB, F2] f32, both models side by side
    for t in range(T):
        w_t = W_all[:, t * F2:(t + 1) * F2]                                     # [EB, F2]
        c1w, c2w, ilw = wint[3 * t], wint[3 * t + 1], wint[3 * t + 2]
        c2b = bias[2 + t:3 + t, :F2]
        ilb = bias[4 + t:5 + t, :F2]
        # CFConv: lin1 -> gather x[src] -> * filter -> scatter-sum at dst (cutoff folded into
        # sca_c) -> lin2
        x = jnp.dot(cast(h), cast(c1w), preferred_element_type=jnp.float32)     # [NB, F2]
        xj = jnp.dot(cast(gat), cast(x), preferred_element_type=jnp.float32)    # [EB, F2]
        agg = jnp.dot(cast(sca_c), cast(xj * w_t),
                      preferred_element_type=jnp.float32)                       # [NB, F2]
        x = jnp.dot(cast(agg), cast(c2w), preferred_element_type=jnp.float32) + c2b
        # interaction tail: ssp -> lin, residual add (f32)
        x = jnp.dot(cast(_ssp(x)), cast(ilw), preferred_element_type=jnp.float32) + ilb
        h = h + x

    # output head: lin1 -> ssp -> (lin2 @ sum_layer^T), zero-padded to 128 lanes
    hh = jnp.dot(cast(h), cast(o1w), preferred_element_type=jnp.float32) + o1b  # [NB, H2]
    return jnp.dot(cast(_ssp(hh)), cast(ocomb), preferred_element_type=jnp.float32)  # [NB, 128]


def multifi_schnet_kernel(hf0_ref, egat_ref, scac_ref, wflt_ref, wint_ref,
                          wout_ref, bias_ref, out_ref):
    out_ref[...] = _fused_block_forward(
        hf0_ref[...], egat_ref[...], scac_ref[...],
        wflt_ref[...], wint_ref[...], wout_ref[...], bias_ref[...])


def multifi_schnet(hf0, egat, sca_c, wflt, wint, wout, bias):
    nbytes = lambda a: a.size * a.dtype.itemsize
    flops_per_block = 2 * (
        EB * (G * TW + TW * TW)                               # filter MLP
        + T * (3 * NB * F2 * F2 + 2 * EB * NB * F2)           # lin1/lin2/inter + gather/scatter
        + NB * F2 * H2 + NB * H2 * OUT_W)                     # output head
    transc_per_block = 2 * (EB * TW + T * NB * F2 + NB * H2)  # exp + log1p per ssp element
    cost = pl.CostEstimate(
        flops=NUM_BLOCKS * flops_per_block,
        transcendentals=NUM_BLOCKS * transc_per_block,
        bytes_accessed=(nbytes(hf0) + nbytes(egat) + nbytes(sca_c)
                        + NUM_BLOCKS * (nbytes(wflt) + nbytes(wint) + nbytes(wout) + nbytes(bias))
                        + NUM_BLOCKS * NB * OUT_W * 4))

    grid_spec = pltpu.PrefetchScalarGridSpec(
        num_scalar_prefetch=0,
        grid=(NUM_BLOCKS,),
        in_specs=[
            pl.BlockSpec((NB, F2), lambda k: (k, 0)),            # hf0   (per-block atoms)
            pl.BlockSpec((EB, NB + G), lambda k: (k, 0)),        # egat  (per-block edges)
            pl.BlockSpec((NB, EB), lambda k: (k, 0)),            # sca_c (per-block scatter)
            pl.BlockSpec((G + TW, TW), lambda k: (0, 0)),        # wflt  (broadcast)
            pl.BlockSpec((3 * T, F2, F2), lambda k: (0, 0, 0)),  # wint  (broadcast)
            pl.BlockSpec((F2 + H2, OUT_W), lambda k: (0, 0)),    # wout  (broadcast)
            pl.BlockSpec((8, TW), lambda k: (0, 0)),             # bias  (broadcast)
        ],
        out_specs=pl.BlockSpec((NB, OUT_W), lambda k: (k, 0)),   # lane-dense per-atom output
    )
    return pl.pallas_call(
        multifi_schnet_kernel,
        out_shape=jax.ShapeDtypeStruct((NUM_BLOCKS * NB, OUT_W), jnp.float32),
        grid_spec=grid_spec,
        compiler_params=pltpu.CompilerParams(dimension_semantics=("parallel",)),
        cost_estimate=cost,
    )(hf0, egat, sca_c, wflt, wint, wout, bias)


# --------------------------------------------------------------------------------------
# Wrapper-side fusion / packing (pure data rearrangement of the per-model parameters).
# --------------------------------------------------------------------------------------
def _pack_inputs(h0, edge_attr, gat_local, sca_c,
                 m0w, m0b, m1w, m1b, c1w, c2w, c2b, ilw, ilb,
                 o1w, o1b, o2w, o2b, sw):
    bd = jax.scipy.linalg.block_diag
    hf0 = jnp.concatenate([h0[0], h0[1]], axis=1)                       # [N_TOTAL, F2]
    egat = jnp.concatenate([gat_local, edge_attr], axis=1)              # [E_TOTAL, NB+G]

    # edge-filter MLP fused over (t, m): column-block order t0m0 | t0m1 | t1m0 | t1m1
    w0 = jnp.concatenate([m0w[m, t] for t in range(T) for m in range(2)], axis=1)   # [G, TW]
    b0 = jnp.concatenate([m0b[m, t] for t in range(T) for m in range(2)], axis=1)   # [1, TW]
    w1 = bd(*[m1w[m, t] for t in range(T) for m in range(2)])                       # [TW, TW]
    b1 = jnp.concatenate([m1b[m, t] for t in range(T) for m in range(2)], axis=1)   # [1, TW]
    wflt = jnp.concatenate([w0, w1], axis=0)                                        # [G+TW, TW]

    # per-interaction block-diagonal weights, order per t: (cfconv.lin1, cfconv.lin2, inter.lin)
    wint = jnp.stack([bd(w[0, t], w[1, t]) for t in range(T) for w in (c1w, c2w, ilw)])

    # output head with sum_layer folded in; zero-padded to 128 lanes for dense output stores
    wout = jnp.zeros((F2 + H2, OUT_W), jnp.float32)
    wout = wout.at[:F2, :H2].set(bd(o1w[0], o1w[1]))                    # head lin1  [F2, H2]
    wout = wout.at[F2:, 0:1].set(bd(o2w[0], o2w[1]) @ sw.T)             # lin2 @ sum_layer^T

    # one f32 bias slab (single (8,128) tile); o2 bias handled scalar-side in the wrapper
    bias = jnp.zeros((8, TW), jnp.float32)
    bias = bias.at[0, :].set(b0[0])
    bias = bias.at[1, :].set(b1[0])
    for t in range(T):
        bias = bias.at[2 + t, :F2].set(jnp.concatenate([c2b[0, t], c2b[1, t]], axis=1)[0])
        bias = bias.at[4 + t, :F2].set(jnp.concatenate([ilb[0, t], ilb[1, t]], axis=1)[0])
    bias = bias.at[6, :H2].set(jnp.concatenate([o1b[0], o1b[1]], axis=1)[0])
    return hf0, egat, sca_c, wflt, wint, wout, bias


# --------------------------------------------------------------------------------------
# Unfused per-model reference (gold, f32) — original SchNet math, for a structural check.
# --------------------------------------------------------------------------------------
def _reference_forward(h0, dist, valid, offs, gat, sca, rdt,
                       m0w, m0b, m1w, m1b, c1w, c2w, c2b, ilw, ilb,
                       o1w, o1b, o2w, o2b, sw):
    diff = dist - offs
    edge_attr = jnp.exp(GAUSS_COEFF * diff * diff)
    C = 0.5 * (jnp.cos(dist * (math.pi / CUTOFF)) + 1.0) * valid
    ys = []
    for m in range(2):
        h = h0[m]
        for t in range(T):
            w = _ssp(jnp.dot(edge_attr, m0w[m, t], preferred_element_type=jnp.float32) + m0b[m, t])
            w = jnp.dot(w, m1w[m, t], preferred_element_type=jnp.float32) + m1b[m, t]
            w = w * C
            x = jnp.dot(h, c1w[m, t], preferred_element_type=jnp.float32)
            xj = jnp.dot(gat, x, preferred_element_type=jnp.float32)
            msg = xj * w
            agg = jnp.dot(sca, msg, preferred_element_type=jnp.float32)
            x = jnp.dot(agg, c2w[m, t], preferred_element_type=jnp.float32) + c2b[m, t]
            x = _ssp(x)
            x = jnp.dot(x, ilw[m, t], preferred_element_type=jnp.float32) + ilb[m, t]
            h = h + x
        hh = jnp.dot(h, o1w[m], preferred_element_type=jnp.float32) + o1b[m]
        hh = _ssp(hh)
        hh = jnp.dot(hh, o2w[m], preferred_element_type=jnp.float32) + o2b[m]
        ys.append(jnp.dot(rdt, hh, preferred_element_type=jnp.float32))
    return ys[0] * sw[0, 0] + ys[1] * sw[0, 1]


def _lin_w(key, fin, fout, lead=()):
    bound = 1.0 / math.sqrt(fin)
    return jax.random.uniform(key, lead + (fin, fout), jnp.float32, -bound, bound)


def _lin_b(key, fin, fout, lead=()):
    bound = 1.0 / math.sqrt(fin)
    return jax.random.uniform(key, lead + (1, fout), jnp.float32, -bound, bound)


if __name__ == "__main__":
    key = jax.random.PRNGKey(0)
    keys = jax.random.split(key, 20)

    # -------- synthetic molecular batch (glue) --------
    z = jax.random.randint(keys[0], (N_TOTAL,), 1, 10)                      # atomic numbers
    pos = jax.random.uniform(keys[1], (N_TOTAL, 3), jnp.float32, 0.0, 2.0)  # all pairs < cutoff
    batch = jnp.repeat(jnp.arange(NUM_MOL), NA)

    # fully connected edges within each molecule (i != j); message from src -> aggregated at dst
    src_np, dst_np = [], []
    for m in range(NUM_MOL):
        base = m * NA
        for i in range(NA):
            for j in range(NA):
                if i != j:
                    src_np.append(base + j)
                    dst_np.append(base + i)
    assert len(src_np) == E_TOTAL
    src = jnp.array(src_np, dtype=jnp.int32)
    dst = jnp.array(dst_np, dtype=jnp.int32)

    dist = jnp.linalg.norm(pos[dst] - pos[src], axis=-1)
    valid = (dist < CUTOFF).astype(jnp.float32)                   # radius_graph cutoff mask
    offs = jnp.linspace(0.0, CUTOFF, G, dtype=jnp.float32).reshape(1, G)

    # loop-invariant edge preprocessing (GaussianSmearing + cosine cutoff), lane-dense, in wrapper
    edge_attr = jnp.exp(GAUSS_COEFF * (dist[:, None] - offs) ** 2)          # [E_TOTAL, G]
    C = 0.5 * (jnp.cos(dist * (math.pi / CUTOFF)) + 1.0) * valid            # [E_TOTAL]

    # block-local gather/scatter one-hots (atoms & edges are laid out block-major, so the global
    # row index IS the block-major row index; columns are block-local)
    eidx = jnp.arange(E_TOTAL)
    gat_local = jnp.zeros((E_TOTAL, NB), jnp.float32).at[eidx, src % NB].set(1.0)
    sca_c = jnp.zeros((N_TOTAL, EB), jnp.float32).at[dst, eidx % EB].set(C)

    # global matrices for the gold (unfused) reference only
    gat_g = jnp.zeros((E_TOTAL, N_TOTAL), jnp.float32).at[eidx, src].set(1.0)
    sca_g = jnp.zeros((N_TOTAL, E_TOTAL), jnp.float32).at[dst, eidx].set(1.0)
    rdt_g = (batch[None, :] == jnp.arange(NUM_MOL)[:, None]).astype(jnp.float32)

    # -------- deterministic parameters for the two SchNet models (leading axis of 2) --------
    emb = 0.1 * jax.random.normal(keys[2], (2, 100, F), jnp.float32)  # Embedding(100, F) / model
    h0 = emb[:, z, :]                                                 # [2, N_TOTAL, F]

    m0w = _lin_w(keys[3], G, F, (2, T)); m0b = _lin_b(keys[4], G, F, (2, T))
    m1w = _lin_w(keys[5], F, F, (2, T)); m1b = _lin_b(keys[6], F, F, (2, T))
    c1w = _lin_w(keys[7], F, F, (2, T))                               # CFConv.lin1 (no bias)
    c2w = _lin_w(keys[8], F, F, (2, T)); c2b = _lin_b(keys[9], F, F, (2, T))
    ilw = _lin_w(keys[10], F, F, (2, T)); ilb = _lin_b(keys[11], F, F, (2, T))
    o1w = _lin_w(keys[12], F, H, (2,)); o1b = _lin_b(keys[13], F, H, (2,))
    o2w = _lin_w(keys[14], H, 1, (2,)); o2b = _lin_b(keys[15], H, 1, (2,))
    sw = jax.random.uniform(keys[16], (1, 2), jnp.float32,
                            -1.0 / math.sqrt(2.0), 1.0 / math.sqrt(2.0))  # Linear(2,1,bias=False)

    params = (m0w, m0b, m1w, m1b, c1w, c2w, c2b, ilw, ilb, o1w, o1b, o2w, o2b, sw)

    # fuse the two models + pack into 7 slabs (f32), then cast MXU-operand slabs to bf16
    hf0, egat, sca_c_p, wflt, wint, wout, bias = _pack_inputs(
        h0, edge_attr, gat_local, sca_c, *params)
    bf16 = jnp.bfloat16
    kernel_inputs = (hf0, egat.astype(bf16), sca_c_p.astype(bf16),
                     wflt.astype(bf16), wint.astype(bf16), wout.astype(bf16), bias)

    out = multifi_schnet(*kernel_inputs)
    out = jax.block_until_ready(out)

    # finish the (trivial) readout + folded o2/sum_layer bias in XLA
    atom_bias = o2b[0, 0, 0] * sw[0, 0] + o2b[1, 0, 0] * sw[0, 1]

    def finish(per_atom):
        return per_atom[:, 0].reshape(NUM_MOL, NA).sum(axis=1, keepdims=True) + NA * atom_bias

    y = finish(out)

    # reference 1: identical fused bf16 math in pure JAX (same ops as the kernel, per block)
    def fused_ref(inputs, mxu_dtype):
        hf0_, egat_, scac_, wflt_, wint_, wout_, bias_ = inputs
        blocks = []
        for k in range(NUM_BLOCKS):
            blocks.append(_fused_block_forward(
                hf0_[k * NB:(k + 1) * NB], egat_[k * EB:(k + 1) * EB],
                scac_[k * NB:(k + 1) * NB], wflt_, wint_, wout_, bias_, mxu_dtype))
        return jnp.concatenate(blocks, axis=0)

    y_ref = finish(fused_ref(kernel_inputs, bf16))

    # reference 2 (structural check): fused f32 math must match the original unfused math
    with jax.default_matmul_precision("highest"):
        f32_inputs = (hf0, egat, sca_c_p, wflt, wint, wout, bias)
        y_fused_f32 = finish(fused_ref(f32_inputs, jnp.float32))
        y_gold = _reference_forward(h0, dist.reshape(E_TOTAL, 1), valid.reshape(E_TOTAL, 1),
                                    offs, gat_g, sca_g, rdt_g, *params)

    assert out.shape == (N_TOTAL, OUT_W)
    assert y.shape == (NUM_MOL, 1)
    assert bool(jnp.all(jnp.isfinite(out)))
    assert bool(jnp.allclose(y_fused_f32, y_gold, rtol=1e-4, atol=1e-4)), (y_fused_f32, y_gold)
    assert bool(jnp.allclose(y, y_ref, rtol=1e-3, atol=1e-3)), (y, y_ref)

    print("KERNEL_OK")
</pallas_src>

<mosaic_0001>
module attributes {stable_mosaic.version = 11 : i64} {
  func.func @multifi_schnet_kernel(%arg0: i32, %arg1: memref<128x64xf32, #tpu.memory_space<vmem>>, %arg2: memref<896x144xbf16, #tpu.memory_space<vmem>>, %arg3: memref<128x896xbf16, #tpu.memory_space<vmem>>, %arg4: memref<144x128xbf16, #tpu.memory_space<vmem>>, %arg5: memref<6x64x64xbf16, #tpu.memory_space<vmem>>, %arg6: memref<96x128xbf16, #tpu.memory_space<vmem>>, %arg7: memref<8x128xf32, #tpu.memory_space<vmem>>, %arg8: memref<128x128xf32, #tpu.memory_space<vmem>>) attributes {dimension_semantics = [#tpu.dimension_semantics<parallel>], iteration_bounds = array<i64: 2>, scalar_prefetch = 0 : i64, scratch_operands = 0 : i64, tpu.core_type = #tpu.core_type<tc>, window_params = [{transform_indices = @transform_0, window_bounds = array<i64: 128, 64>}, {transform_indices = @transform_1, window_bounds = array<i64: 896, 144>}, {transform_indices = @transform_2, window_bounds = array<i64: 128, 896>}, {pipeline_mode = #tpu.pipeline_mode<synchronous>, transform_indices = @transform_3, window_bounds = array<i64: 144, 128>}, {pipeline_mode = #tpu.pipeline_mode<synchronous>, transform_indices = @transform_4, window_bounds = array<i64: 6, 64, 64>}, {pipeline_mode = #tpu.pipeline_mode<synchronous>, transform_indices = @transform_5, window_bounds = array<i64: 96, 128>}, {pipeline_mode = #tpu.pipeline_mode<synchronous>, transform_indices = @transform_6, window_bounds = array<i64: 8, 128>}, {transform_indices = @transform_7, window_bounds = array<i64: 128, 128>}]} {
    %c0 = arith.constant 0 : index
    %c0_0 = arith.constant 0 : index
    %0 = vector.load %arg1[%c0, %c0_0] : memref<128x64xf32, #tpu.memory_space<vmem>>, vector<128x64xf32>
    %c0_1 = arith.constant 0 : index
    %c0_2 = arith.constant 0 : index
    %1 = vector.load %arg2[%c0_1, %c0_2] : memref<896x144xbf16, #tpu.memory_space<vmem>>, vector<896x144xbf16>
    %c0_3 = arith.constant 0 : index
    %c0_4 = arith.constant 0 : index
    %2 = vector.load %arg3[%c0_3, %c0_4] : memref<128x896xbf16, #tpu.memory_space<vmem>>, vector<128x896xbf16>
    %c0_5 = arith.constant 0 : index
    %c0_6 = arith.constant 0 : index
    %3 = vector.load %arg4[%c0_5, %c0_6] : memref<144x128xbf16, #tpu.memory_space<vmem>>, vector<144x128xbf16>
    %c0_7 = arith.constant 0 : index
    %c0_8 = arith.constant 0 : index
    %c0_9 = arith.constant 0 : index
    %4 = vector.load %arg5[%c0_7, %c0_8, %c0_9] : memref<6x64x64xbf16, #tpu.memory_space<vmem>>, vector<6x64x64xbf16>
    %c0_10 = arith.constant 0 : index
    %c0_11 = arith.constant 0 : index
    %5 = vector.load %arg6[%c0_10, %c0_11] : memref<96x128xbf16, #tpu.memory_space<vmem>>, vector<96x128xbf16>
    %c0_12 = arith.constant 0 : index
    %c0_13 = arith.constant 0 : index
    %6 = vector.load %arg7[%c0_12, %c0_13] : memref<8x128xf32, #tpu.memory_space<vmem>>, vector<8x128xf32>
    %7 = vector.extract_strided_slice %1 {offsets = [0, 0], sizes = [896, 128], strides = [1, 1]} : vector<896x144xbf16> to vector<896x128xbf16>
    %8 = vector.extract_strided_slice %1 {offsets = [0, 128], sizes = [896, 16], strides = [1, 1]} : vector<896x144xbf16> to vector<896x16xbf16>
    %9 = vector.extract_strided_slice %3 {offsets = [0, 0], sizes = [16, 128], strides = [1, 1]} : vector<144x128xbf16> to vector<16x128xbf16>
    %10 = vector.extract_strided_slice %3 {offsets = [16, 0], sizes = [128, 128], strides = [1, 1]} : vector<144x128xbf16> to vector<128x128xbf16>
    %11 = vector.extract_strided_slice %5 {offsets = [0, 0], sizes = [64, 32], strides = [1, 1]} : vector<96x128xbf16> to vector<64x32xbf16>
    %12 = vector.extract_strided_slice %5 {offsets = [64, 0], sizes = [32, 128], strides = [1, 1]} : vector<96x128xbf16> to vector<32x128xbf16>
    %13 = vector.extract_strided_slice %6 {offsets = [0, 0], sizes = [1, 128], strides = [1, 1]} : vector<8x128xf32> to vector<1x128xf32>
    %14 = vector.extract_strided_slice %6 {offsets = [1, 0], sizes = [1, 128], strides = [1, 1]} : vector<8x128xf32> to vector<1x128xf32>
    %15 = vector.extract_strided_slice %6 {offsets = [6, 0], sizes = [1, 32], strides = [1, 1]} : vector<8x128xf32> to vector<1x32xf32>
    %cst = arith.constant dense<0.000000e+00> : vector<896x128xf32>
    %16 = tpu.matmul %8, %9, %cst {dimension_numbers = #tpu.dot_dimension_numbers<[1], [0], [0], [1], [0, 0, 1, 1], [], []>} : vector<896x16xbf16>, vector<16x128xbf16>, vector<896x128xf32> -> vector<896x128xf32>
    %17 = vector.broadcast %13 : vector<1x128xf32> to vector<896x128xf32>
    %18 = arith.addf %16, %17 : vector<896x128xf32>
    %cst_14 = arith.constant 0.000000e+00 : f32
    %19 = vector.broadcast %cst_14 : f32 to vector<896x128xf32>
    %20 = arith.maximumf %18, %19 : vector<896x128xf32>
    %21 = math.absf %18 : vector<896x128xf32>
    %cst_15 = arith.constant 0.000000e+00 : f32
    %22 = vector.broadcast %cst_15 : f32 to vector<896x128xf32>
    %23 = arith.subf %22, %21 : vector<896x128xf32>
    %24 = math.exp %23 : vector<896x128xf32>
    %25 = math.log1p %24 : vector<896x128xf32>
    %26 = arith.addf %20, %25 : vector<896x128xf32>
    %cst_16 = arith.constant 0.693147182 : f32
    %27 = vector.broadcast %cst_16 : f32 to vector<896x128xf32>
    %28 = arith.subf %26, %27 : vector<896x128xf32>
    %29 = arith.truncf %28 : vector<896x128xf32> to vector<896x128xbf16>
    %cst_17 = arith.constant dense<0.000000e+00> : vector<896x128xf32>
    %30 = tpu.matmul %29, %10, %cst_17 {dimension_numbers = #tpu.dot_dimension_numbers<[1], [0], [0], [1], [0, 0, 1, 1], [], []>} : vector<896x128xbf16>, vector<128x128xbf16>, vector<896x128xf32> -> vector<896x128xf32>
    %31 = vector.broadcast %14 : vector<1x128xf32> to vector<896x128xf32>
    %32 = arith.addf %30, %31 : vector<896x128xf32>
    %33 = vector.extract_strided_slice %32 {offsets = [0, 0], sizes = [896, 64], strides = [1, 1]} : vector<896x128xf32> to vector<896x64xf32>
    %34 = vector.extract_strided_slice %4 {offsets = [0, 0, 0], sizes = [1, 64, 64], strides = [1, 1, 1]} : vector<6x64x64xbf16> to vector<1x64x64xbf16>
    %35 = vector.shape_cast %34 : vector<1x64x64xbf16> to vector<64x64xbf16>
    %36 = vector.extract_strided_slice %4 {offsets = [1, 0, 0], sizes = [1, 64, 64], strides = [1, 1, 1]} : vector<6x64x64xbf16> to vector<1x64x64xbf16>
    %37 = vector.shape_cast %36 : vector<1x64x64xbf16> to vector<64x64xbf16>
    %38 = vector.extract_strided_slice %4 {offsets = [2, 0, 0], sizes = [1, 64, 64], strides = [1, 1, 1]} : vector<6x64x64xbf16> to vector<1x64x64xbf16>
    %39 = vector.shape_cast %38 : vector<1x64x64xbf16> to vector<64x64xbf16>
    %40 = vector.extract_strided_slice %6 {offsets = [2, 0], sizes = [1, 64], strides = [1, 1]} : vector<8x128xf32> to vector<1x64xf32>
    %41 = vector.extract_strided_slice %6 {offsets = [4, 0], sizes = [1, 64], strides = [1, 1]} : vector<8x128xf32> to vector<1x64xf32>
    %42 = arith.truncf %0 : vector<128x64xf32> to vector<128x64xbf16>
    %cst_18 = arith.constant dense<0.000000e+00> : vector<128x64xf32>
    %43 = tpu.matmul %42, %35, %cst_18 {dimension_numbers = #tpu.dot_dimension_numbers<[1], [0], [0], [1], [0, 0, 1, 1], [], []>} : vector<128x64xbf16>, vector<64x64xbf16>, vector<128x64xf32> -> vector<128x64xf32>
    %44 = arith.truncf %43 : vector<128x64xf32> to vector<128x64xbf16>
    %cst_19 = arith.constant dense<0.000000e+00> : vector<896x64xf32>
    %45 = tpu.matmul %7, %44, %cst_19 {dimension_numbers = #tpu.dot_dimension_numbers<[1], [0], [0], [1], [0, 0, 1, 1], [], []>} : vector<896x128xbf16>, vector<128x64xbf16>, vector<896x64xf32> -> vector<896x64xf32>
    %46 = arith.mulf %45, %33 : vector<896x64xf32>
    %47 = arith.truncf %46 : vector<896x64xf32> to vector<896x64xbf16>
    %cst_20 = arith.constant dense<0.000000e+00> : vector<128x64xf32>
    %48 = tpu.matmul %2, %47, %cst_20 {dimension_numbers = #tpu.dot_dimension_numbers<[1], [0], [0], [1], [0, 0, 1, 1], [], []>} : vector<128x896xbf16>, vector<896x64xbf16>, vector<128x64xf32> -> vector<128x64xf32>
    %49 = arith.truncf %48 : vector<128x64xf32> to vector<128x64xbf16>
    %cst_21 = arith.constant dense<0.000000e+00> : vector<128x64xf32>
    %50 = tpu.matmul %49, %37, %cst_21 {dimension_numbers = #tpu.dot_dimension_numbers<[1], [0], [0], [1], [0, 0, 1, 1], [], []>} : vector<128x64xbf16>, vector<64x64xbf16>, vector<128x64xf32> -> vector<128x64xf32>
    %51 = vector.broadcast %40 : vector<1x64xf32> to vector<128x64xf32>
    %52 = arith.addf %50, %51 : vector<128x64xf32>
    %cst_22 = arith.constant 0.000000e+00 : f32
    %53 = vector.broadcast %cst_22 : f32 to vector<128x64xf32>
    %54 = arith.maximumf %52, %53 : vector<128x64xf32>
    %55 = math.absf %52 : vector<128x64xf32>
    %cst_23 = arith.constant 0.000000e+00 : f32
    %56 = vector.broadcast %cst_23 : f32 to vector<128x64xf32>
    %57 = arith.subf %56, %55 : vector<128x64xf32>
    %58 = math.exp %57 : vector<128x64xf32>
    %59 = math.log1p %58 : vector<128x64xf32>
    %60 = arith.addf %54, %59 : vector<128x64xf32>
    %cst_24 = arith.constant 0.693147182 : f32
    %61 = vector.broadcast %cst_24 : f32 to vector<128x64xf32>
    %62 = arith.subf %60, %61 : vector<128x64xf32>
    %63 = arith.truncf %62 : vector<128x64xf32> to vector<128x64xbf16>
    %cst_25 = arith.constant dense<0.000000e+00> : vector<128x64xf32>
    %64 = tpu.matmul %63, %39, %cst_25 {dimension_numbers = #tpu.dot_dimension_numbers<[1], [0], [0], [1], [0, 0, 1, 1], [], []>} : vector<128x64xbf16>, vector<64x64xbf16>, vector<128x64xf32> -> vector<128x64xf32>
    %65 = vector.broadcast %41 : vector<1x64xf32> to vector<128x64xf32>
    %66 = arith.addf %64, %65 : vector<128x64xf32>
    %67 = arith.addf %0, %66 : vector<128x64xf32>
    %68 = vector.extract_strided_slice %32 {offsets = [0, 64], sizes = [896, 64], strides = [1, 1]} : vector<896x128xf32> to vector<896x64xf32>
    %69 = vector.extract_strided_slice %4 {offsets = [3, 0, 0], sizes = [1, 64, 64], strides = [1, 1, 1]} : vector<6x64x64xbf16> to vector<1x64x64xbf16>
    %70 = vector.shape_cast %69 : vector<1x64x64xbf16> to vector<64x64xbf16>
    %71 = vector.extract_strided_slice %4 {offsets = [4, 0, 0], sizes = [1, 64, 64], strides = [1, 1, 1]} : vector<6x64x64xbf16> to vector<1x64x64xbf16>
    %72 = vector.shape_cast %71 : vector<1x64x64xbf16> to vector<64x64xbf16>
    %73 = vector.extract_strided_slice %4 {offsets = [5, 0, 0], sizes = [1, 64, 64], strides = [1, 1, 1]} : vector<6x64x64xbf16> to vector<1x64x64xbf16>
    %74 = vector.shape_cast %73 : vector<1x64x64xbf16> to vector<64x64xbf16>
    %75 = vector.extract_strided_slice %6 {offsets = [3, 0], sizes = [1, 64], strides = [1, 1]} : vector<8x128xf32> to vector<1x64xf32>
    %76 = vector.extract_strided_slice %6 {offsets = [5, 0], sizes = [1, 64], strides = [1, 1]} : vector<8x128xf32> to vector<1x64xf32>
    %77 = arith.truncf %67 : vector<128x64xf32> to vector<128x64xbf16>
    %cst_26 = arith.constant dense<0.000000e+00> : vector<128x64xf32>
    %78 = tpu.matmul %77, %70, %cst_26 {dimension_numbers = #tpu.dot_dimension_numbers<[1], [0], [0], [1], [0, 0, 1, 1], [], []>} : vector<128x64xbf16>, vector<64x64xbf16>, vector<128x64xf32> -> vector<128x64xf32>
    %79 = arith.truncf %78 : vector<128x64xf32> to vector<128x64xbf16>
    %cst_27 = arith.constant dense<0.000000e+00> : vector<896x64xf32>
    %80 = tpu.matmul %7, %79, %cst_27 {dimension_numbers = #tpu.dot_dimension_numbers<[1], [0], [0], [1], [0, 0, 1, 1], [], []>} : vector<896x128xbf16>, vector<128x64xbf16>, vector<896x64xf32> -> vector<896x64xf32>
    %81 = arith.mulf %80, %68 : vector<896x64xf32>
    %82 = arith.truncf %81 : vector<896x64xf32> to vector<896x64xbf16>
    %cst_28 = arith.constant dense<0.000000e+00> : vector<128x64xf32>
    %83 = tpu.matmul %2, %82, %cst_28 {dimension_numbers = #tpu.dot_dimension_numbers<[1], [0], [0], [1], [0, 0, 1, 1], [], []>} : vector<128x896xbf16>, vector<896x64xbf16>, vector<128x64xf32> -> vector<128x64xf32>
    %84 = arith.truncf %83 : vector<128x64xf32> to vector<128x64xbf16>
    %cst_29 = arith.constant dense<0.000000e+00> : vector<128x64xf32>
    %85 = tpu.matmul %84, %72, %cst_29 {dimension_numbers = #tpu.dot_dimension_numbers<[1], [0], [0], [1], [0, 0, 1, 1], [], []>} : vector<128x64xbf16>, vector<64x64xbf16>, vector<128x64xf32> -> vector<128x64xf32>
    %86 = vector.broadcast %75 : vector<1x64xf32> to vector<128x64xf32>
    %87 = arith.addf %85, %86 : vector<128x64xf32>
    %cst_30 = arith.constant 0.000000e+00 : f32
    %88 = vector.broadcast %cst_30 : f32 to vector<128x64xf32>
    %89 = arith.maximumf %87, %88 : vector<128x64xf32>
    %90 = math.absf %87 : vector<128x64xf32>
    %cst_31 = arith.constant 0.000000e+00 : f32
    %91 = vector.broadcast %cst_31 : f32 to vector<128x64xf32>
    %92 = arith.subf %91, %90 : vector<128x64xf32>
    %93 = math.exp %92 : vector<128x64xf32>
    %94 = math.log1p %93 : vector<128x64xf32>
    %95 = arith.addf %89, %94 : vector<128x64xf32>
    %cst_32 = arith.constant 0.693147182 : f32
    %96 = vector.broadcast %cst_32 : f32 to vector<128x64xf32>
    %97 = arith.subf %95, %96 : vector<128x64xf32>
    %98 = arith.truncf %97 : vector<128x64xf32> to vector<128x64xbf16>
    %cst_33 = arith.constant dense<0.000000e+00> : vector<128x64xf32>
    %99 = tpu.matmul %98, %74, %cst_33 {dimension_numbers = #tpu.dot_dimension_numbers<[1], [0], [0], [1], [0, 0, 1, 1], [], []>} : vector<128x64xbf16>, vector<64x64xbf16>, vector<128x64xf32> -> vector<128x64xf32>
    %100 = vector.broadcast %76 : vector<1x64xf32> to vector<128x64xf32>
    %101 = arith.addf %99, %100 : vector<128x64xf32>
    %102 = arith.addf %67, %101 : vector<128x64xf32>
    %103 = arith.truncf %102 : vector<128x64xf32> to vector<128x64xbf16>
    %cst_34 = arith.constant dense<0.000000e+00> : vector<128x32xf32>
    %104 = tpu.matmul %103, %11, %cst_34 {dimension_numbers = #tpu.dot_dimension_numbers<[1], [0], [0], [1], [0, 0, 1, 1], [], []>} : vector<128x64xbf16>, vector<64x32xbf16>, vector<128x32xf32> -> vector<128x32xf32>
    %105 = vector.broadcast %15 : vector<1x32xf32> to vector<128x32xf32>
    %106 = arith.addf %104, %105 : vector<128x32xf32>
    %cst_35 = arith.constant 0.000000e+00 : f32
    %107 = vector.broadcast %cst_35 : f32 to vector<128x32xf32>
    %108 = arith.maximumf %106, %107 : vector<128x32xf32>
    %109 = math.absf %106 : vector<128x32xf32>
    %cst_36 = arith.constant 0.000000e+00 : f32
    %110 = vector.broadcast %cst_36 : f32 to vector<128x32xf32>
    %111 = arith.subf %110, %109 : vector<128x32xf32>
    %112 = math.exp %111 : vector<128x32xf32>
    %113 = math.log1p %112 : vector<128x32xf32>
    %114 = arith.addf %108, %113 : vector<128x32xf32>
    %cst_37 = arith.constant 0.693147182 : f32
    %115 = vector.broadcast %cst_37 : f32 to vector<128x32xf32>
    %116 = arith.subf %114, %115 : vector<128x32xf32>
    %117 = arith.truncf %116 : vector<128x32xf32> to vector<128x32xbf16>
    %cst_38 = arith.constant dense<0.000000e+00> : vector<128x128xf32>
    %118 = tpu.matmul %117, %12, %cst_38 {dimension_numbers = #tpu.dot_dimension_numbers<[1], [0], [0], [1], [0, 0, 1, 1], [], []>} : vector<128x32xbf16>, vector<32x128xbf16>, vector<128x128xf32> -> vector<128x128xf32>
    %c0_39 = arith.constant 0 : index
    %c0_40 = arith.constant 0 : index
    %119 = vector.load %arg8[%c0_39, %c0_40] : memref<128x128xf32, #tpu.memory_space<vmem>>, vector<128x128xf32>
    tpu.vector_store %arg8[%c0_39, %c0_40], %118 {strides = array<i32>} : memref<128x128xf32, #tpu.memory_space<vmem>>, vector<128x128xf32>,
    return
  }
  func.func @transform_0(%arg0: i32) -> (i32, i32) {
    %c0_i32 = arith.constant 0 : i32
    %c0_i32_0 = arith.constant 0 : i32
    return %arg0, %c0_i32 : i32, i32
  }
  func.func @transform_1(%arg0: i32) -> (i32, i32) {
    %c0_i32 = arith.constant 0 : i32
    %c0_i32_0 = arith.constant 0 : i32
    return %arg0, %c0_i32 : i32, i32
  }
  func.func @transform_2(%arg0: i32) -> (i32, i32) {
    %c0_i32 = arith.constant 0 : i32
    %c0_i32_0 = arith.constant 0 : i32
    return %arg0, %c0_i32 : i32, i32
  }
  func.func @transform_3(%arg0: i32) -> (i32, i32) {
    %c0_i32 = arith.constant 0 : i32
    %c0_i32_0 = arith.constant 0 : i32
    %c0_i32_1 = arith.constant 0 : i32
    return %c0_i32, %c0_i32_0 : i32, i32
  }
  func.func @transform_4(%arg0: i32) -> (i32, i32, i32) {
    %c0_i32 = arith.constant 0 : i32
    %c0_i32_0 = arith.constant 0 : i32
    %c0_i32_1 = arith.constant 0 : i32
    %c0_i32_2 = arith.constant 0 : i32
    return %c0_i32, %c0_i32_0, %c0_i32_1 : i32, i32, i32
  }
  func.func @transform_5(%arg0: i32) -> (i32, i32) {
    %c0_i32 = arith.constant 0 : i32
    %c0_i32_0 = arith.constant 0 : i32
    %c0_i32_1 = arith.constant 0 : i32
    return %c0_i32, %c0_i32_0 : i32, i32
  }
  func.func @transform_6(%arg0: i32) -> (i32, i32) {
    %c0_i32 = arith.constant 0 : i32
    %c0_i32_0 = arith.constant 0 : i32
    %c0_i32_1 = arith.constant 0 : i32
    return %c0_i32, %c0_i32_0 : i32, i32
  }
  func.func @transform_7(%arg0: i32) -> (i32, i32) {
    %c0_i32 = arith.constant 0 : i32
    %c0_i32_0 = arith.constant 0 : i32
    return %arg0, %c0_i32 : i32, i32
  }
}

</mosaic_0001>

<llo_original>
// kernel: tpu_custom_call.1
$region0: #{tpu_custom_call.1}
  #allocation0 [shape = 'u32[]', space=smem, size = 0x4, offset = 0x4, fixed_abs, tag = 'smem constant byte address 0x4 - core index']
  #allocation1 [shape = 'u32[144,128]{1,0:T(1,128)}', space=vmem, size = 0x12000, scoped, tag = 'internal scratch']
  %s0 = inlined_call_operand.vmem [shape: f32[256,64], index: 0, kind: input, shape index: {}]
  %s1 = inlined_call_operand.vmem [shape: bf16[1792,144], index: 1, kind: input, shape index: {}]
  %s2 = inlined_call_operand.vmem [shape: bf16[256,896], index: 2, kind: input, shape index: {}]
  %s3 = inlined_call_operand.vmem [shape: bf16[144,128], index: 3, kind: input, shape index: {}]
  %s4 = inlined_call_operand.vmem [shape: bf16[6,64,64], index: 4, kind: input, shape index: {}]
  %s5 = inlined_call_operand.vmem [shape: bf16[96,128], index: 5, kind: input, shape index: {}]
  %s6 = inlined_call_operand.vmem [shape: f32[8,128], index: 6, kind: input, shape index: {}]
  %s7 = inlined_call_operand.hbm [shape: f32[256,128], index: 7, kind: output, shape index: {}]
  %s8 = sld [smem:[#allocation0]]
  $region61: #{tpu_custom_call.1} parent=0
    _
  %s10 = ssub.s32 1, %s8
  %s11 = scalar_select 0, %s10, %s8
  $region1: #{tpu_custom_call.1} parent=0
    #allocation2 [shape = 'u8[131072]{0}', space=vmem, size = 0x20000, scoped, tag = 'output window, operand 0']
    #allocation3 [shape = 's32[2]{0}', space=sflag, size = 0x8, scoped, tag = 'scoped memory for tpu_custom_call.1']
    %12 = vsyncpa [#allocation3], 0
    %s13 = scalar_lea.sflag [#allocation3], 1
    %14 = vsyncpa %s13, 0
    loop: start=0, step=1, limit=4
    $region2: #{tpu_custom_call.1} parent=1 // loop_pre_header
      _
    $region3: #{tpu_custom_call.1} parent=1 // loop_header
      %s16 = sphi 0, %s20
      %p17 = scmp.ge.s32.totalorder %s16, 4
      %s26 = sphi 0, %s28
      %s29 = sphi 0, %s26
      %s30 = sphi 0, %s29
      %s46 = sphi 0, %s30
      %s52 = sphi 0, %s54
      %s55 = sphi 0, %s52
      %s56 = sphi 0, %s55
      %s72 = sphi 0, %s56
      %s78 = sphi 0, %s80
      %s81 = sphi 0, %s78
      %s82 = sphi 0, %s81
      %s98 = sphi 0, %s82
      %s102 = sphi 0, %s102
      %s104 = sphi 0, %s102
      %s105 = sphi 0, %s104
      %s119 = sphi 0, %s105
      %s123 = sphi 0, %s123
      %s125 = sphi 0, %s123
      %s126 = sphi 0, %s125
      %s140 = sphi 0, %s126
      %s144 = sphi 0, %s144
      %s146 = sphi 0, %s144
      %s147 = sphi 0, %s146
      %s161 = sphi 0, %s147
      %s165 = sphi 0, %s165
      %s167 = sphi 0, %s165
      %s168 = sphi 0, %s167
      %s182 = sphi 0, %s168
      %s188 = sphi 0, %s190
      %s191 = sphi 0, %s188
      %s192 = sphi 0, %s191
      %s208 = sphi 0, %s192
    $region4: #{tpu_custom_call.1} parent=1 // loop_header_branch
      %19 = sbr.rel (%p17) target = $region8
    $region5: #{tpu_custom_call.1} parent=1 // loop_body
      %s21 = ssub.s32 %s16, 1
      %s22 = ssub.s32 %s16, 2
      %s23 = sadd.s32 %s16, 1
      %s24 = ssub.s32 %s16, %s23
      %p25 = scmp.eq.s32.totalorder %s24, 0
      %s27 = sadd.s32 %s26, 1
      %s28 = scalar_select %p25, %s26, %s27
      %p31 = pneg %p25
      %p32 = scmp.eq.s32.totalorder %s16, 1
      %p33 = por %p31, %p32
      %p34 = scmp.ne.s32.totalorder %s26, %s29
      %p35 = scmp.eq.s32.totalorder %s16, 0
      %p36 = por %p34, %p35
      %p37 = scmp.ne.s32.totalorder %s26, %s29
      %p38 = scmp.eq.s32.totalorder %s21, 1
      %p39 = por %p37, %p38
      %p40 = scmp.ne.s32.totalorder %s29, %s30
      %p41 = scmp.eq.s32.totalorder %s21, 0
      %p42 = por %p40, %p41
      %p43 = scmp.ne.s32.totalorder %s29, %s30
      %p44 = scmp.eq.s32.totalorder %s22, 1
      %p45 = por %p43, %p44
      %p47 = scmp.ne.s32.totalorder %s30, %s46
      %p48 = scmp.eq.s32.totalorder %s22, 0
      %p49 = por %p47, %p48
      %s50 = ssub.s32 %s16, %s23
      %p51 = scmp.eq.s32.totalorder %s50, 0
      %s53 = sadd.s32 %s52, 1
      %s54 = scalar_select %p51, %s52, %s53
      %p57 = pneg %p51
      %p58 = scmp.eq.s32.totalorder %s16, 1
      %p59 = por %p57, %p58
      %p60 = scmp.ne.s32.totalorder %s52, %s55
      %p61 = scmp.eq.s32.totalorder %s16, 0
      %p62 = por %p60, %p61
      %p63 = scmp.ne.s32.totalorder %s52, %s55
      %p64 = scmp.eq.s32.totalorder %s21, 1
      %p65 = por %p63, %p64
      %p66 = scmp.ne.s32.totalorder %s55, %s56
      %p67 = scmp.eq.s32.totalorder %s21, 0
      %p68 = por %p66, %p67
      %p69 = scmp.ne.s32.totalorder %s55, %s56
      %p70 = scmp.eq.s32.totalorder %s22, 1
      %p71 = por %p69, %p70
      %p73 = scmp.ne.s32.totalorder %s56, %s72
      %p74 = scmp.eq.s32.totalorder %s22, 0
      %p75 = por %p73, %p74
      %s76 = ssub.s32 %s16, %s23
      %p77 = scmp.eq.s32.totalorder %s76, 0
      %s79 = sadd.s32 %s78, 1
      %s80 = scalar_select %p77, %s78, %s79
      %p83 = pneg %p77
      %p84 = scmp.eq.s32.totalorder %s16, 1
      %p85 = por %p83, %p84
      %p86 = scmp.ne.s32.totalorder %s78, %s81
      %p87 = scmp.eq.s32.totalorder %s16, 0
      %p88 = por %p86, %p87
      %p89 = scmp.ne.s32.totalorder %s78, %s81
      %p90 = scmp.eq.s32.totalorder %s21, 1
      %p91 = por %p89, %p90
      %p92 = scmp.ne.s32.totalorder %s81, %s82
      %p93 = scmp.eq.s32.totalorder %s21, 0
      %p94 = por %p92, %p93
      %p95 = scmp.ne.s32.totalorder %s81, %s82
      %p96 = scmp.eq.s32.totalorder %s22, 1
      %p97 = por %p95, %p96
      %p99 = scmp.ne.s32.totalorder %s82, %s98
      %p100 = scmp.eq.s32.totalorder %s22, 0
      %p101 = por %p99, %p100
      %s103 = sadd.s32 %s102, 1
      %p106 = scmp.eq.s32.totalorder %s16, 1
      %p107 = scmp.ne.s32.totalorder %s102, %s104
      %p108 = scmp.eq.s32.totalorder %s16, 0
      %p109 = por %p107, %p108
      %p110 = scmp.ne.s32.totalorder %s102, %s104
      %p111 = scmp.eq.s32.totalorder %s21, 1
      %p112 = por %p110, %p111
      %p113 = scmp.ne.s32.totalorder %s104, %s105
      %p114 = scmp.eq.s32.totalorder %s21, 0
      %p115 = por %p113, %p114
      %p116 = scmp.ne.s32.totalorder %s104, %s105
      %p117 = scmp.eq.s32.totalorder %s22, 1
      %p118 = por %p116, %p117
      %p120 = scmp.ne.s32.totalorder %s105, %s119
      %p121 = scmp.eq.s32.totalorder %s22, 0
      %p122 = por %p120, %p121
      %s124 = sadd.s32 %s123, 1
      %p127 = scmp.eq.s32.totalorder %s16, 1
      %p128 = scmp.ne.s32.totalorder %s123, %s125
      %p129 = scmp.eq.s32.totalorder %s16, 0
      %p130 = por %p128, %p129
      %p131 = scmp.ne.s32.totalorder %s123, %s125
      %p132 = scmp.eq.s32.totalorder %s21, 1
      %p133 = por %p131, %p132
      %p134 = scmp.ne.s32.totalorder %s125, %s126
      %p135 = scmp.eq.s32.totalorder %s21, 0
      %p136 = por %p134, %p135
      %p137 = scmp.ne.s32.totalorder %s125, %s126
      %p138 = scmp.eq.s32.totalorder %s22, 1
      %p139 = por %p137, %p138
      %p141 = scmp.ne.s32.totalorder %s126, %s140
      %p142 = scmp.eq.s32.totalorder %s22, 0
      %p143 = por %p141, %p142
      %s145 = sadd.s32 %s144, 1
      %p148 = scmp.eq.s32.totalorder %s16, 1
      %p149 = scmp.ne.s32.totalorder %s144, %s146
      %p150 = scmp.eq.s32.totalorder %s16, 0
      %p151 = por %p149, %p150
      %p152 = scmp.ne.s32.totalorder %s144, %s146
      %p153 = scmp.eq.s32.totalorder %s21, 1
      %p154 = por %p152, %p153
      %p155 = scmp.ne.s32.totalorder %s146, %s147
      %p156 = scmp.eq.s32.totalorder %s21, 0
      %p157 = por %p155, %p156
      %p158 = scmp.ne.s32.totalorder %s146, %s147
      %p159 = scmp.eq.s32.totalorder %s22, 1
      %p160 = por %p158, %p159
      %p162 = scmp.ne.s32.totalorder %s147, %s161
      %p163 = scmp.eq.s32.totalorder %s22, 0
      %p164 = por %p162, %p163
      %s166 = sadd.s32 %s165, 1
      %p169 = scmp.eq.s32.totalorder %s16, 1
      %p170 = scmp.ne.s32.totalorder %s165, %s167
      %p171 = scmp.eq.s32.totalorder %s16, 0
      %p172 = por %p170, %p171
      %p173 = scmp.ne.s32.totalorder %s165, %s167
      %p174 = scmp.eq.s32.totalorder %s21, 1
      %p175 = por %p173, %p174
      %p176 = scmp.ne.s32.totalorder %s167, %s168
      %p177 = scmp.eq.s32.totalorder %s21, 0
      %p178 = por %p176, %p177
      %p179 = scmp.ne.s32.totalorder %s167, %s168
      %p180 = scmp.eq.s32.totalorder %s22, 1
      %p181 = por %p179, %p180
      %p183 = scmp.ne.s32.totalorder %s168, %s182
      %p184 = scmp.eq.s32.totalorder %s22, 0
      %p185 = por %p183, %p184
      %s186 = ssub.s32 %s16, %s23
      %p187 = scmp.eq.s32.totalorder %s186, 0
      %s189 = sadd.s32 %s188, 1
      %s190 = scalar_select %p187, %s188, %s189
      %p193 = pneg %p187
      %p194 = scmp.eq.s32.totalorder %s16, 1
      %p195 = por %p193, %p194
      %p196 = scmp.ne.s32.totalorder %s188, %s191
      %p197 = scmp.eq.s32.totalorder %s16, 0
      %p198 = por %p196, %p197
      %p199 = scmp.ne.s32.totalorder %s188, %s191
      %p200 = scmp.eq.s32.totalorder %s21, 1
      %p201 = por %p199, %p200
      %p202 = scmp.ne.s32.totalorder %s191, %s192
      %p203 = scmp.eq.s32.totalorder %s21, 0
      %p204 = por %p202, %p203
      %p205 = scmp.ne.s32.totalorder %s191, %s192
      %p206 = scmp.eq.s32.totalorder %s22, 1
      %p207 = por %p205, %p206
      %p209 = scmp.ne.s32.totalorder %s192, %s208
      %p210 = scmp.eq.s32.totalorder %s22, 0
      %p211 = por %p209, %p210
      %p212 = scmp.le.s32.totalorder 1, %s16
      %p213 = scmp.lt.s32.totalorder %s16, 3
      %p214 = pnand %p212, %p213
      %p215 = pneg %p214
      // Predicated region
      $region9: #{tpu_custom_call.1} parent=5 // pred_check
        _
      $region10: #{tpu_custom_call.1} parent=5 // pred_check_branch
        %217 = sbr.rel (%p214) target = $region12
      $region11: #{tpu_custom_call.1} parent=5 // pred_region
        %s218 = ssub.s32 %s16, 1
        // Predicated region
        $region13: #{tpu_custom_call.1} parent=11 // pred_check
          %p219 = pneg %p115
        $region14: #{tpu_custom_call.1} parent=11 // pred_check_branch
          %221 = sbr.rel (%p219) target = $region16
        $region15: #{tpu_custom_call.1} parent=11 // pred_region
          _
        $region16: #{tpu_custom_call.1} parent=11 // pred_fallthru
          _
        // Predicated region
        $region17: #{tpu_custom_call.1} parent=11 // pred_check
          %p222 = pneg %p136
        $region18: #{tpu_custom_call.1} parent=11 // pred_check_branch
          %224 = sbr.rel (%p222) target = $region20
        $region19: #{tpu_custom_call.1} parent=11 // pred_region
          _
        $region20: #{tpu_custom_call.1} parent=11 // pred_fallthru
          _
        // Predicated region
        $region21: #{tpu_custom_call.1} parent=11 // pred_check
          %p225 = pneg %p157
        $region22: #{tpu_custom_call.1} parent=11 // pred_check_branch
          %227 = sbr.rel (%p225) target = $region24
        $region23: #{tpu_custom_call.1} parent=11 // pred_region
          _
        $region24: #{tpu_custom_call.1} parent=11 // pred_fallthru
          _
        // Predicated region
        $region25: #{tpu_custom_call.1} parent=11 // pred_check
          %p228 = pneg %p178
        $region26: #{tpu_custom_call.1} parent=11 // pred_check_branch
          %230 = sbr.rel (%p228) target = $region28
        $region27: #{tpu_custom_call.1} parent=11 // pred_region
          _
        $region28: #{tpu_custom_call.1} parent=11 // pred_fallthru
          _
      $region12: #{tpu_custom_call.1} parent=5 // pred_fallthru
        _
      %p231 = scmp.lt.s32.totalorder %s16, 2
      // Predicated region
      $region29: #{tpu_custom_call.1} parent=5 // pred_check
        %p232 = pneg %p231
      $region30: #{tpu_custom_call.1} parent=5 // pred_check_branch
        %234 = sbr.rel (%p232) target = $region32
      $region31: #{tpu_custom_call.1} parent=5 // pred_region
        // Predicated region
        $region33: #{tpu_custom_call.1} parent=31 // pred_check
          %p235 = pneg %p36
        $region34: #{tpu_custom_call.1} parent=31 // pred_check_branch
          %237 = sbr.rel (%p235) target = $region36
        $region35: #{tpu_custom_call.1} parent=31 // pred_region
          %s238 = smul.u32 16, %s16
          %p239 = scmp.lt.s32.totalorder %s238, 31
          %s240 = scalar_select %p239, %s238, 31
          %s241 = smul.addr %s240, 8
          %s242 = scalar_lea.vmem %s0, %s241
          %s243 = smul.u32 16, %s16
        $region36: #{tpu_custom_call.1} parent=31 // pred_fallthru
          _
        // Predicated region
        $region37: #{tpu_custom_call.1} parent=31 // pred_check
          %p244 = pneg %p62
        $region38: #{tpu_custom_call.1} parent=31 // pred_check_branch
          %246 = sbr.rel (%p244) target = $region40
        $region39: #{tpu_custom_call.1} parent=31 // pred_region
          %s247 = smul.u32 112, %s16
          %p248 = scmp.lt.s32.totalorder %s247, 223
          %s249 = scalar_select %p248, %s247, 223
          %s250 = smul.addr %s249, 2
          %s251 = smul.addr %s250, 4
          %s252 = scalar_lea.vmem %s1, %s251
          %s253 = smul.u32 112, %s16
        $region40: #{tpu_custom_call.1} parent=31 // pred_fallthru
          _
        // Predicated region
        $region41: #{tpu_custom_call.1} parent=31 // pred_check
          %p254 = pneg %p88
        $region42: #{tpu_custom_call.1} parent=31 // pred_check_branch
          %256 = sbr.rel (%p254) target = $region44
        $region43: #{tpu_custom_call.1} parent=31 // pred_region
          %s257 = smul.u32 16, %s16
          %p258 = scmp.lt.s32.totalorder %s257, 31
          %s259 = scalar_select %p258, %s257, 31
          %s260 = smul.addr %s259, 7
          %s261 = smul.addr %s260, 4
          %s262 = scalar_lea.vmem %s2, %s261
          %s263 = smul.u32 16, %s16
        $region44: #{tpu_custom_call.1} parent=31 // pred_fallthru
          _
      $region32: #{tpu_custom_call.1} parent=5 // pred_fallthru
        _
      %p264 = scmp.le.s32.totalorder 1, %s16
      %p265 = scmp.lt.s32.totalorder %s16, 3
      %p266 = pnand %p264, %p265
      %p267 = pneg %p266
      // Predicated region
      $region45: #{tpu_custom_call.1} parent=5 // pred_check
        _
      $region46: #{tpu_custom_call.1} parent=5 // pred_check_branch
        %269 = sbr.rel (%p266) target = $region48
      $region47: #{tpu_custom_call.1} parent=5 // pred_region
        %s270 = ssub.s32 %s16, 1
        %s271 = smul.u32 16, %s21
        %p272 = scmp.lt.s32.totalorder %s271, 31
        %s273 = scalar_select %p272, %s271, 31
        %s274 = smul.addr %s273, 8
        %s275 = scalar_lea.vmem %s0, %s274
        %p276 = pneg %p42
        %p277 = pneg %p39
        %s278 = smul.u32 112, %s21
        %p279 = scmp.lt.s32.totalorder %s278, 223
        %s280 = scalar_select %p279, %s278, 223
        %s281 = smul.addr %s280, 2
        %s282 = smul.addr %s281, 4
        %s283 = scalar_lea.vmem %s1, %s282
        %p284 = pneg %p68
        %p285 = pneg %p65
        %s286 = smul.u32 16, %s21
        %p287 = scmp.lt.s32.totalorder %s286, 31
        %s288 = scalar_select %p287, %s286, 31
        %s289 = smul.addr %s288, 7
        %s290 = smul.addr %s289, 4
        %s291 = scalar_lea.vmem %s2, %s290
        %p292 = pneg %p94
        %p293 = pneg %p91
        %p294 = pneg %p115
        %p295 = pneg %p112
        %p296 = pneg %p136
        %p297 = pneg %p133
        %p298 = pneg %p157
        %p299 = pneg %p154
        %p300 = pneg %p178
        %p301 = pneg %p175
        %p302 = pneg %p204
        %p303 = pneg %p201
        %s304 = sand.u32 %s191, 1
        %s305 = scalar_lea.sflag [#allocation3], %s304
        %s306 = sand.u32 %s191, 1
        %s307 = smul.addr %s306, 128
        %s308 = scalar_lea.vmem [#allocation2], %s307
        %s309 = smul.u32 16, %s21
        %p310 = scmp.lt.s32.totalorder %s309, 31
        %s311 = scalar_select %p310, %s309, 31
        %s312 = smul.addr %s311, 8
        %s313 = scalar_lea.vmem %s0, %s312
        %s314 = smul.u32 16, %s21
        %s315 = smul.u32 112, %s21
        %p316 = scmp.lt.s32.totalorder %s315, 223
        %s317 = scalar_select %p316, %s315, 223
        %s318 = smul.addr %s317, 2
        %s319 = smul.addr %s318, 4
        %s320 = scalar_lea.vmem %s1, %s319
        %s321 = smul.u32 112, %s21
        %s322 = smul.u32 16, %s21
        %p323 = scmp.lt.s32.totalorder %s322, 31
        %s324 = scalar_select %p323, %s322, 31
        %s325 = smul.addr %s324, 7
        %s326 = smul.addr %s325, 4
        %s327 = scalar_lea.vmem %s2, %s326
        %s328 = smul.u32 16, %s21
        %s329 = smul.u32 16, %s21
        %v331 = vld [vmem:[%s313] sm:$0xff]
        %v332 = vld [vmem:[%s313 + $0x8] sm:$0xff]
        %v333 = vld [vmem:[%s313 + $0x10] sm:$0xff]
        %v334 = vld [vmem:[%s313 + $0x18] sm:$0xff]
        %v335 = vld [vmem:[%s313 + $0x20] sm:$0xff]
        %v336 = vld [vmem:[%s313 + $0x28] sm:$0xff]
        %v337 = vld [vmem:[%s313 + $0x30] sm:$0xff]
        %v338 = vld [vmem:[%s313 + $0x38] sm:$0xff]
        %v339 = vld [vmem:[%s313 + $0x40] sm:$0xff]
        %v340 = vld [vmem:[%s313 + $0x48] sm:$0xff]
        %v341 = vld [vmem:[%s313 + $0x50] sm:$0xff]
        %v342 = vld [vmem:[%s313 + $0x58] sm:$0xff]
        %v343 = vld [vmem:[%s313 + $0x60] sm:$0xff]
        %v344 = vld [vmem:[%s313 + $0x68] sm:$0xff]
        %v345 = vld [vmem:[%s313 + $0x70] sm:$0xff]
        %v346 = vld [vmem:[%s313 + $0x78] sm:$0xff]
        %v347 = vld [vmem:[%s320] sm:$0xff]
        %v348 = vld [vmem:[%s320 + $0x8] sm:$0xff]
        %v349 = vld [vmem:[%s320 + $0x10] sm:$0xff]
        %v350 = vld [vmem:[%s320 + $0x18] sm:$0xff]
        %v351 = vld [vmem:[%s320 + $0x20] sm:$0xff]
        %v352 = vld [vmem:[%s320 + $0x28] sm:$0xff]
        %v353 = vld [vmem:[%s320 + $0x30] sm:$0xff]
        %v354 = vld [vmem:[%s320 + $0x38] sm:$0xff]
        %v355 = vld [vmem:[%s320 + $0x40] sm:$0xff]
        %v356 = vld [vmem:[%s320 + $0x48] sm:$0xff]
        %v357 = vld [vmem:[%s320 + $0x50] sm:$0xff]
        %v358 = vld [vmem:[%s320 + $0x58] sm:$0xff]
        %v359 = vld [vmem:[%s320 + $0x60] sm:$0xff]
        %v360 = vld [vmem:[%s320 + $0x68] sm:$0xff]
        %v361 = vld [vmem:[%s320 + $0x70] sm:$0xff]
        %v362 = vld [vmem:[%s320 + $0x78] sm:$0xff]
        %v363 = vld [vmem:[%s320 + $0x80] sm:$0xff]
        %v364 = vld [vmem:[%s320 + $0x88] sm:$0xff]
        %v365 = vld [vmem:[%s320 + $0x90] sm:$0xff]
        %v366 = vld [vmem:[%s320 + $0x98] sm:$0xff]
        %v367 = vld [vmem:[%s320 + $0xa0] sm:$0xff]
        %v368 = vld [vmem:[%s320 + $0xa8] sm:$0xff]
        %v369 = vld [vmem:[%s320 + $0xb0] sm:$0xff]
        %v370 = vld [vmem:[%s320 + $0xb8] sm:$0xff]
        %v371 = vld [vmem:[%s320 + $0xc0] sm:$0xff]
        %v372 = vld [vmem:[%s320 + $0xc8] sm:$0xff]
        %v373 = vld [vmem:[%s320 + $0xd0] sm:$0xff]
        %v374 = vld [vmem:[%s320 + $0xd8] sm:$0xff]
        %v375 = vld [vmem:[%s320 + $0xe0] sm:$0xff]
        %v376 = vld [vmem:[%s320 + $0xe8] sm:$0xff]
        %v377 = vld [vmem:[%s320 + $0xf0] sm:$0xff]
        %v378 = vld [vmem:[%s320 + $0xf8] sm:$0xff]
        %v379 = vld [vmem:[%s320 + $0x100] sm:$0xff]
        %v380 = vld [vmem:[%s320 + $0x108] sm:$0xff]
        %v381 = vld [vmem:[%s320 + $0x110] sm:$0xff]
        %v382 = vld [vmem:[%s320 + $0x118] sm:$0xff]
        %v383 = vld [vmem:[%s320 + $0x120] sm:$0xff]
        %v384 = vld [vmem:[%s320 + $0x128] sm:$0xff]
        %v385 = vld [vmem:[%s320 + $0x130] sm:$0xff]
        %v386 = vld [vmem:[%s320 + $0x138] sm:$0xff]
        %v387 = vld [vmem:[%s320 + $0x140] sm:$0xff]
        %v388 = vld [vmem:[%s320 + $0x148] sm:$0xff]
        %v389 = vld [vmem:[%s320 + $0x150] sm:$0xff]
        %v390 = vld [vmem:[%s320 + $0x158] sm:$0xff]
        %v391 = vld [vmem:[%s320 + $0x160] sm:$0xff]
        %v392 = vld [vmem:[%s320 + $0x168] sm:$0xff]
        %v393 = vld [vmem:[%s320 + $0x170] sm:$0xff]
        %v394 = vld [vmem:[%s320 + $0x178] sm:$0xff]
        %v395 = vld [vmem:[%s320 + $0x180] sm:$0xff]
        %v396 = vld [vmem:[%s320 + $0x188] sm:$0xff]
        %v397 = vld [vmem:[%s320 + $0x190] sm:$0xff]
        %v398 = vld [vmem:[%s320 + $0x198] sm:$0xff]
        %v399 = vld [vmem:[%s320 + $0x1a0] sm:$0xff]
        %v400 = vld [vmem:[%s320 + $0x1a8] sm:$0xff]
        %v401 = vld [vmem:[%s320 + $0x1b0] sm:$0xff]
        %v402 = vld [vmem:[%s320 + $0x1b8] sm:$0xff]
        %v403 = vld [vmem:[%s320 + $0x1c0] sm:$0xff]
        %v404 = vld [vmem:[%s320 + $0x1c8] sm:$0xff]
        %v405 = vld [vmem:[%s320 + $0x1d0] sm:$0xff]
        %v406 = vld [vmem:[%s320 + $0x1d8] sm:$0xff]
        %v407 = vld [vmem:[%s320 + $0x1e0] sm:$0xff]
        %v408 = vld [vmem:[%s320 + $0x1e8] sm:$0xff]
        %v409 = vld [vmem:[%s320 + $0x1f0] sm:$0xff]
        %v410 = vld [vmem:[%s320 + $0x1f8] sm:$0xff]
        %v411 = vld [vmem:[%s320 + $0x200] sm:$0xff]
        %v412 = vld [vmem:[%s320 + $0x208] sm:$0xff]
        %v413 = vld [vmem:[%s320 + $0x210] sm:$0xff]
        %v414 = vld [vmem:[%s320 + $0x218] sm:$0xff]
        %v415 = vld [vmem:[%s320 + $0x220] sm:$0xff]
        %v416 = vld [vmem:[%s320 + $0x228] sm:$0xff]
        %v417 = vld [vmem:[%s320 + $0x230] sm:$0xff]
        %v418 = vld [vmem:[%s320 + $0x238] sm:$0xff]
        %v419 = vld [vmem:[%s320 + $0x240] sm:$0xff]
        %v420 = vld [vmem:[%s320 + $0x248] sm:$0xff]
        %v421 = vld [vmem:[%s320 + $0x250] sm:$0xff]
        %v422 = vld [vmem:[%s320 + $0x258] sm:$0xff]
        %v423 = vld [vmem:[%s320 + $0x260] sm:$0xff]
        %v424 = vld [vmem:[%s320 + $0x268] sm:$0xff]
        %v425 = vld [vmem:[%s320 + $0x270] sm:$0xff]
        %v426 = vld [vmem:[%s320 + $0x278] sm:$0xff]
        %v427 = vld [vmem:[%s320 + $0x280] sm:$0xff]
        %v428 = vld [vmem:[%s320 + $0x288] sm:$0xff]
        %v429 = vld [vmem:[%s320 + $0x290] sm:$0xff]
        %v430 = vld [vmem:[%s320 + $0x298] sm:$0xff]
        %v431 = vld [vmem:[%s320 + $0x2a0] sm:$0xff]
        %v432 = vld [vmem:[%s320 + $0x2a8] sm:$0xff]
        %v433 = vld [vmem:[%s320 + $0x2b0] sm:$0xff]
        %v434 = vld [vmem:[%s320 + $0x2b8] sm:$0xff]
        %v435 = vld [vmem:[%s320 + $0x2c0] sm:$0xff]
        %v436 = vld [vmem:[%s320 + $0x2c8] sm:$0xff]
        %v437 = vld [vmem:[%s320 + $0x2d0] sm:$0xff]
        %v438 = vld [vmem:[%s320 + $0x2d8] sm:$0xff]
        %v439 = vld [vmem:[%s320 + $0x2e0] sm:$0xff]
        %v440 = vld [vmem:[%s320 + $0x2e8] sm:$0xff]
        %v441 = vld [vmem:[%s320 + $0x2f0] sm:$0xff]
        %v442 = vld [vmem:[%s320 + $0x2f8] sm:$0xff]
        %v443 = vld [vmem:[%s320 + $0x300] sm:$0xff]
        %v444 = vld [vmem:[%s320 + $0x308] sm:$0xff]
        %v445 = vld [vmem:[%s320 + $0x310] sm:$0xff]
        %v446 = vld [vmem:[%s320 + $0x318] sm:$0xff]
        %v447 = vld [vmem:[%s320 + $0x320] sm:$0xff]
        %v448 = vld [vmem:[%s320 + $0x328] sm:$0xff]
        %v449 = vld [vmem:[%s320 + $0x330] sm:$0xff]
        %v450 = vld [vmem:[%s320 + $0x338] sm:$0xff]
        %v451 = vld [vmem:[%s320 + $0x340] sm:$0xff]
        %v452 = vld [vmem:[%s320 + $0x348] sm:$0xff]
        %v453 = vld [vmem:[%s320 + $0x350] sm:$0xff]
        %v454 = vld [vmem:[%s320 + $0x358] sm:$0xff]
        %v455 = vld [vmem:[%s320 + $0x360] sm:$0xff]
        %v456 = vld [vmem:[%s320 + $0x368] sm:$0xff]
        %v457 = vld [vmem:[%s320 + $0x370] sm:$0xff]
        %v458 = vld [vmem:[%s320 + $0x378] sm:$0xff]
        %v459 = vld [vmem:[%s327] sm:$0xff]
        %v460 = vld [vmem:[%s327 + $0x8] sm:$0xff]
        %v461 = vld [vmem:[%s327 + $0x10] sm:$0xff]
        %v462 = vld [vmem:[%s327 + $0x18] sm:$0xf]
        %v463 = vld [vmem:[%s327 + $0x1c] sm:$0xff]
        %v464 = vld [vmem:[%s327 + $0x24] sm:$0xff]
        %v465 = vld [vmem:[%s327 + $0x2c] sm:$0xff]
        %v466 = vld [vmem:[%s327 + $0x34] sm:$0xf]
        %v467 = vld [vmem:[%s327 + $0x38] sm:$0xff]
        %v468 = vld [vmem:[%s327 + $0x40] sm:$0xff]
        %v469 = vld [vmem:[%s327 + $0x48] sm:$0xff]
        %v470 = vld [vmem:[%s327 + $0x50] sm:$0xf]
        %v471 = vld [vmem:[%s327 + $0x54] sm:$0xff]
        %v472 = vld [vmem:[%s327 + $0x5c] sm:$0xff]
        %v473 = vld [vmem:[%s327 + $0x64] sm:$0xff]
        %v474 = vld [vmem:[%s327 + $0x6c] sm:$0xf]
        %v475 = vld [vmem:[%s327 + $0x70] sm:$0xff]
        %v476 = vld [vmem:[%s327 + $0x78] sm:$0xff]
        %v477 = vld [vmem:[%s327 + $0x80] sm:$0xff]
        %v478 = vld [vmem:[%s327 + $0x88] sm:$0xf]
        %v479 = vld [vmem:[%s327 + $0x8c] sm:$0xff]
        %v480 = vld [vmem:[%s327 + $0x94] sm:$0xff]
        %v481 = vld [vmem:[%s327 + $0x9c] sm:$0xff]
        %v482 = vld [vmem:[%s327 + $0xa4] sm:$0xf]
        %v483 = vld [vmem:[%s327 + $0xa8] sm:$0xff]
        %v484 = vld [vmem:[%s327 + $0xb0] sm:$0xff]
        %v485 = vld [vmem:[%s327 + $0xb8] sm:$0xff]
        %v486 = vld [vmem:[%s327 + $0xc0] sm:$0xf]
        %v487 = vld [vmem:[%s327 + $0xc4] sm:$0xff]
        %v488 = vld [vmem:[%s327 + $0xcc] sm:$0xff]
        %v489 = vld [vmem:[%s327 + $0xd4] sm:$0xff]
        %v490 = vld [vmem:[%s327 + $0xdc] sm:$0xf]
        %v491 = vld [vmem:[%s327 + $0xe0] sm:$0xff]
        %v492 = vld [vmem:[%s327 + $0xe8] sm:$0xff]
        %v493 = vld [vmem:[%s327 + $0xf0] sm:$0xff]
        %v494 = vld [vmem:[%s327 + $0xf8] sm:$0xf]
        %v495 = vld [vmem:[%s327 + $0xfc] sm:$0xff]
        %v496 = vld [vmem:[%s327 + $0x104] sm:$0xff]
        %v497 = vld [vmem:[%s327 + $0x10c] sm:$0xff]
        %v498 = vld [vmem:[%s327 + $0x114] sm:$0xf]
        %v499 = vld [vmem:[%s327 + $0x118] sm:$0xff]
        %v500 = vld [vmem:[%s327 + $0x120] sm:$0xff]
        %v501 = vld [vmem:[%s327 + $0x128] sm:$0xff]
        %v502 = vld [vmem:[%s327 + $0x130] sm:$0xf]
        %v503 = vld [vmem:[%s327 + $0x134] sm:$0xff]
        %v504 = vld [vmem:[%s327 + $0x13c] sm:$0xff]
        %v505 = vld [vmem:[%s327 + $0x144] sm:$0xff]
        %v506 = vld [vmem:[%s327 + $0x14c] sm:$0xf]
        %v507 = vld [vmem:[%s327 + $0x150] sm:$0xff]
        %v508 = vld [vmem:[%s327 + $0x158] sm:$0xff]
        %v509 = vld [vmem:[%s327 + $0x160] sm:$0xff]
        %v510 = vld [vmem:[%s327 + $0x168] sm:$0xf]
        %v511 = vld [vmem:[%s327 + $0x16c] sm:$0xff]
        %v512 = vld [vmem:[%s327 + $0x174] sm:$0xff]
        %v513 = vld [vmem:[%s327 + $0x17c] sm:$0xff]
        %v514 = vld [vmem:[%s327 + $0x184] sm:$0xf]
        %v515 = vld [vmem:[%s327 + $0x188] sm:$0xff]
        %v516 = vld [vmem:[%s327 + $0x190] sm:$0xff]
        %v517 = vld [vmem:[%s327 + $0x198] sm:$0xff]
        %v518 = vld [vmem:[%s327 + $0x1a0] sm:$0xf]
        %v519 = vld [vmem:[%s327 + $0x1a4] sm:$0xff]
        %v520 = vld [vmem:[%s327 + $0x1ac] sm:$0xff]
        %v521 = vld [vmem:[%s327 + $0x1b4] sm:$0xff]
        %v522 = vld [vmem:[%s327 + $0x1bc] sm:$0xf]
        %v523 = vld [vmem:[%s3] sm:$0xf]
        %v524 = vld [vmem:[%s3 + $0x4] sm:$0xf]
        %v525 = vld [vmem:[%s3 + $0x8] sm:$0xf]
        %v526 = vld [vmem:[%s3 + $0xc] sm:$0xf]
        %v527 = vld [vmem:[%s3 + $0x10] sm:$0xf]
        %v528 = vld [vmem:[%s3 + $0x14] sm:$0xf]
        %v529 = vld [vmem:[%s3 + $0x18] sm:$0xf]
        %v530 = vld [vmem:[%s3 + $0x1c] sm:$0xf]
        %v531 = vld [vmem:[%s3 + $0x20] sm:$0xf]
        %v532 = vld [vmem:[%s3 + $0x24] sm:$0xf]
        %v533 = vld [vmem:[%s3 + $0x28] sm:$0xf]
        %v534 = vld [vmem:[%s3 + $0x2c] sm:$0xf]
        %v535 = vld [vmem:[%s3 + $0x30] sm:$0xf]
        %v536 = vld [vmem:[%s3 + $0x34] sm:$0xf]
        %v537 = vld [vmem:[%s3 + $0x38] sm:$0xf]
        %v538 = vld [vmem:[%s3 + $0x3c] sm:$0xf]
        %v539 = vld [vmem:[%s3 + $0x40] sm:$0xf]
        %v540 = vld [vmem:[%s3 + $0x44] sm:$0xf]
        %v541 = vld [vmem:[%s4] sm:$0xf]
        %v542 = vld [vmem:[%s4 + $0x4] sm:$0xf]
        %v543 = vld [vmem:[%s4 + $0x8] sm:$0xf]
        %v544 = vld [vmem:[%s4 + $0xc] sm:$0xf]
        %v545 = vld [vmem:[%s4 + $0x10] sm:$0xf]
        %v546 = vld [vmem:[%s4 + $0x14] sm:$0xf]
        %v547 = vld [vmem:[%s4 + $0x18] sm:$0xf]
        %v548 = vld [vmem:[%s4 + $0x1c] sm:$0xf]
        %v549 = vld [vmem:[%s4 + $0x20] sm:$0xf]
        %v550 = vld [vmem:[%s4 + $0x24] sm:$0xf]
        %v551 = vld [vmem:[%s4 + $0x28] sm:$0xf]
        %v552 = vld [vmem:[%s4 + $0x2c] sm:$0xf]
        %v553 = vld [vmem:[%s4 + $0x30] sm:$0xf]
        %v554 = vld [vmem:[%s4 + $0x34] sm:$0xf]
        %v555 = vld [vmem:[%s4 + $0x38] sm:$0xf]
        %v556 = vld [vmem:[%s4 + $0x3c] sm:$0xf]
        %v557 = vld [vmem:[%s4 + $0x40] sm:$0xf]
        %v558 = vld [vmem:[%s4 + $0x44] sm:$0xf]
        %v559 = vld [vmem:[%s4 + $0x48] sm:$0xf]
        %v560 = vld [vmem:[%s4 + $0x4c] sm:$0xf]
        %v561 = vld [vmem:[%s4 + $0x50] sm:$0xf]
        %v562 = vld [vmem:[%s4 + $0x54] sm:$0xf]
        %v563 = vld [vmem:[%s4 + $0x58] sm:$0xf]
        %v564 = vld [vmem:[%s4 + $0x5c] sm:$0xf]
        %v565 = vld [vmem:[%s4 + $0x60] sm:$0xf]
        %v566 = vld [vmem:[%s4 + $0x64] sm:$0xf]
        %v567 = vld [vmem:[%s4 + $0x68] sm:$0xf]
        %v568 = vld [vmem:[%s4 + $0x6c] sm:$0xf]
        %v569 = vld [vmem:[%s4 + $0x70] sm:$0xf]
        %v570 = vld [vmem:[%s4 + $0x74] sm:$0xf]
        %v571 = vld [vmem:[%s4 + $0x78] sm:$0xf]
        %v572 = vld [vmem:[%s4 + $0x7c] sm:$0xf]
        %v573 = vld [vmem:[%s4 + $0x80] sm:$0xf]
        %v574 = vld [vmem:[%s4 + $0x84] sm:$0xf]
        %v575 = vld [vmem:[%s4 + $0x88] sm:$0xf]
        %v576 = vld [vmem:[%s4 + $0x8c] sm:$0xf]
        %v577 = vld [vmem:[%s4 + $0x90] sm:$0xf]
        %v578 = vld [vmem:[%s4 + $0x94] sm:$0xf]
        %v579 = vld [vmem:[%s4 + $0x98] sm:$0xf]
        %v580 = vld [vmem:[%s4 + $0x9c] sm:$0xf]
        %v581 = vld [vmem:[%s4 + $0xa0] sm:$0xf]
        %v582 = vld [vmem:[%s4 + $0xa4] sm:$0xf]
        %v583 = vld [vmem:[%s4 + $0xa8] sm:$0xf]
        %v584 = vld [vmem:[%s4 + $0xac] sm:$0xf]
        %v585 = vld [vmem:[%s4 + $0xb0] sm:$0xf]
        %v586 = vld [vmem:[%s4 + $0xb4] sm:$0xf]
        %v587 = vld [vmem:[%s4 + $0xb8] sm:$0xf]
        %v588 = vld [vmem:[%s4 + $0xbc] sm:$0xf]
        %v589 = vld [vmem:[%s5] sm:$0xf]
        %v590 = vld [vmem:[%s5 + $0x4] sm:$0xf]
        %v591 = vld [vmem:[%s5 + $0x8] sm:$0xf]
        %v592 = vld [vmem:[%s5 + $0xc] sm:$0xf]
        %v593 = vld [vmem:[%s5 + $0x10] sm:$0xf]
        %v594 = vld [vmem:[%s5 + $0x14] sm:$0xf]
        %v595 = vld [vmem:[%s5 + $0x18] sm:$0xf]
        %v596 = vld [vmem:[%s5 + $0x1c] sm:$0xf]
        %v597 = vld [vmem:[%s5 + $0x20] sm:$0xf]
        %v598 = vld [vmem:[%s5 + $0x24] sm:$0xf]
        %v599 = vld [vmem:[%s5 + $0x28] sm:$0xf]
        %v600 = vld [vmem:[%s5 + $0x2c] sm:$0xf]
        %v601 = vld [vmem:[%s6] sm:$0xff]
        %v602 = vlaneseq
        %v603 = vshrl.u32 %v602, 7
        %v604 = vsub.s32 0, %v603
        %v605 = vrot.slane %v601, %v604
        %v718 = vunpack.c.h.b16 %v347
        %v719 = vunpack.c.h.b16 %v348
        %v720 = vunpack.c.h.b16 %v349
        %v721 = vunpack.c.h.b16 %v350
        %v722 = vunpack.c.h.b16 %v351
        %v723 = vunpack.c.h.b16 %v352
        %v724 = vunpack.c.h.b16 %v353
        %v725 = vunpack.c.h.b16 %v354
        %v726 = vunpack.c.h.b16 %v355
        %v727 = vunpack.c.h.b16 %v356
        %v728 = vunpack.c.h.b16 %v357
        %v729 = vunpack.c.h.b16 %v358
        %v730 = vunpack.c.h.b16 %v359
        %v731 = vunpack.c.h.b16 %v360
        %v732 = vunpack.c.h.b16 %v361
        %v733 = vunpack.c.h.b16 %v362
        %v734 = vunpack.c.h.b16 %v363
        %v735 = vunpack.c.h.b16 %v364
        %v736 = vunpack.c.h.b16 %v365
        %v737 = vunpack.c.h.b16 %v366
        %v738 = vunpack.c.h.b16 %v367
        %v739 = vunpack.c.h.b16 %v368
        %v740 = vunpack.c.h.b16 %v369
        %v741 = vunpack.c.h.b16 %v370
        %v742 = vunpack.c.h.b16 %v371
        %v743 = vunpack.c.h.b16 %v372
        %v744 = vunpack.c.h.b16 %v373
        %v745 = vunpack.c.h.b16 %v374
        %v746 = vunpack.c.h.b16 %v375
        %v747 = vunpack.c.h.b16 %v376
        %v748 = vunpack.c.h.b16 %v377
        %v749 = vunpack.c.h.b16 %v378
        %v750 = vunpack.c.h.b16 %v379
        %v751 = vunpack.c.h.b16 %v380
        %v752 = vunpack.c.h.b16 %v381
        %v753 = vunpack.c.h.b16 %v382
        %v754 = vunpack.c.h.b16 %v383
        %v755 = vunpack.c.h.b16 %v384
        %v756 = vunpack.c.h.b16 %v385
        %v757 = vunpack.c.h.b16 %v386
        %v758 = vunpack.c.h.b16 %v387
        %v759 = vunpack.c.h.b16 %v388
        %v760 = vunpack.c.h.b16 %v389
        %v761 = vunpack.c.h.b16 %v390
        %v762 = vunpack.c.h.b16 %v391
        %v763 = vunpack.c.h.b16 %v392
        %v764 = vunpack.c.h.b16 %v393
        %v765 = vunpack.c.h.b16 %v394
        %v766 = vunpack.c.h.b16 %v395
        %v767 = vunpack.c.h.b16 %v396
        %v768 = vunpack.c.h.b16 %v397
        %v769 = vunpack.c.h.b16 %v398
        %v770 = vunpack.c.h.b16 %v399
        %v771 = vunpack.c.h.b16 %v400
        %v772 = vunpack.c.h.b16 %v401
        %v773 = vunpack.c.h.b16 %v402
        %v774 = vunpack.c.h.b16 %v403
        %v775 = vunpack.c.h.b16 %v404
        %v776 = vunpack.c.h.b16 %v405
        %v777 = vunpack.c.h.b16 %v406
        %v778 = vunpack.c.h.b16 %v407
        %v779 = vunpack.c.h.b16 %v408
        %v780 = vunpack.c.h.b16 %v409
        %v781 = vunpack.c.h.b16 %v410
        %v782 = vunpack.c.h.b16 %v411
        %v783 = vunpack.c.h.b16 %v412
        %v784 = vunpack.c.h.b16 %v413
        %v785 = vunpack.c.h.b16 %v414
        %v786 = vunpack.c.h.b16 %v415
        %v787 = vunpack.c.h.b16 %v416
        %v788 = vunpack.c.h.b16 %v417
        %v789 = vunpack.c.h.b16 %v418
        %v790 = vunpack.c.h.b16 %v419
        %v791 = vunpack.c.h.b16 %v420
        %v792 = vunpack.c.h.b16 %v421
        %v793 = vunpack.c.h.b16 %v422
        %v794 = vunpack.c.h.b16 %v423
        %v795 = vunpack.c.h.b16 %v424
        %v796 = vunpack.c.h.b16 %v425
        %v797 = vunpack.c.h.b16 %v426
        %v798 = vunpack.c.h.b16 %v427
        %v799 = vunpack.c.h.b16 %v428
        %v800 = vunpack.c.h.b16 %v429
        %v801 = vunpack.c.h.b16 %v430
        %v802 = vunpack.c.h.b16 %v431
        %v803 = vunpack.c.h.b16 %v432
        %v804 = vunpack.c.h.b16 %v433
        %v805 = vunpack.c.h.b16 %v434
        %v806 = vunpack.c.h.b16 %v435
        %v807 = vunpack.c.h.b16 %v436
        %v808 = vunpack.c.h.b16 %v437
        %v809 = vunpack.c.h.b16 %v438
        %v810 = vunpack.c.h.b16 %v439
        %v811 = vunpack.c.h.b16 %v440
        %v812 = vunpack.c.h.b16 %v441
        %v813 = vunpack.c.h.b16 %v442
        %v814 = vunpack.c.h.b16 %v443
        %v815 = vunpack.c.h.b16 %v444
        %v816 = vunpack.c.h.b16 %v445
        %v817 = vunpack.c.h.b16 %v446
        %v818 = vunpack.c.h.b16 %v447
        %v819 = vunpack.c.h.b16 %v448
        %v820 = vunpack.c.h.b16 %v449
        %v821 = vunpack.c.h.b16 %v450
        %v822 = vunpack.c.h.b16 %v451
        %v823 = vunpack.c.h.b16 %v452
        %v824 = vunpack.c.h.b16 %v453
        %v825 = vunpack.c.h.b16 %v454
        %v826 = vunpack.c.h.b16 %v455
        %v827 = vunpack.c.h.b16 %v456
        %v828 = vunpack.c.h.b16 %v457
        %v829 = vunpack.c.h.b16 %v458
        %v830 = vpack.c.b16 %v719, %v718
        %v831 = vpack.c.b16 %v721, %v720
        %v832 = vpack.c.b16 %v723, %v722
        %v833 = vpack.c.b16 %v725, %v724
        %v834 = vpack.c.b16 %v727, %v726
        %v835 = vpack.c.b16 %v729, %v728
        %v836 = vpack.c.b16 %v731, %v730
        %v837 = vpack.c.b16 %v733, %v732
        %v838 = vpack.c.b16 %v735, %v734
        %v839 = vpack.c.b16 %v737, %v736
        %v840 = vpack.c.b16 %v739, %v738
        %v841 = vpack.c.b16 %v741, %v740
        %v842 = vpack.c.b16 %v743, %v742
        %v843 = vpack.c.b16 %v745, %v744
        %v844 = vpack.c.b16 %v747, %v746
        %v845 = vpack.c.b16 %v749, %v748
        %v846 = vpack.c.b16 %v751, %v750
        %v847 = vpack.c.b16 %v753, %v752
        %v848 = vpack.c.b16 %v755, %v754
        %v849 = vpack.c.b16 %v757, %v756
        %v850 = vpack.c.b16 %v759, %v758
        %v851 = vpack.c.b16 %v761, %v760
        %v852 = vpack.c.b16 %v763, %v762
        %v853 = vpack.c.b16 %v765, %v764
        %v854 = vpack.c.b16 %v767, %v766
        %v855 = vpack.c.b16 %v769, %v768
        %v856 = vpack.c.b16 %v771, %v770
        %v857 = vpack.c.b16 %v773, %v772
        %v858 = vpack.c.b16 %v775, %v774
        %v859 = vpack.c.b16 %v777, %v776
        %v860 = vpack.c.b16 %v779, %v778
        %v861 = vpack.c.b16 %v781, %v780
        %v862 = vpack.c.b16 %v783, %v782
        %v863 = vpack.c.b16 %v785, %v784
        %v864 = vpack.c.b16 %v787, %v786
        %v865 = vpack.c.b16 %v789, %v788
        %v866 = vpack.c.b16 %v791, %v790
        %v867 = vpack.c.b16 %v793, %v792
        %v868 = vpack.c.b16 %v795, %v794
        %v869 = vpack.c.b16 %v797, %v796
        %v870 = vpack.c.b16 %v799, %v798
        %v871 = vpack.c.b16 %v801, %v800
        %v872 = vpack.c.b16 %v803, %v802
        %v873 = vpack.c.b16 %v805, %v804
        %v874 = vpack.c.b16 %v807, %v806
        %v875 = vpack.c.b16 %v809, %v808
        %v876 = vpack.c.b16 %v811, %v810
        %v877 = vpack.c.b16 %v813, %v812
        %v878 = vpack.c.b16 %v815, %v814
        %v879 = vpack.c.b16 %v817, %v816
        %v880 = vpack.c.b16 %v819, %v818
        %v881 = vpack.c.b16 %v821, %v820
        %v882 = vpack.c.b16 %v823, %v822
        %v883 = vpack.c.b16 %v825, %v824
        %v884 = vpack.c.b16 %v827, %v826
        %v885 = vpack.c.b16 %v829, %v828
        %v888 = vunpack.c.l.b16 %v523
        %v889 = vunpack.c.l.b16 %v524
        %v890 = vpack.c.b16 %v889, %v888
        %vm892 = vcmask 130048
        %v894 = vsel %vm892, %v830, 0
        %v897 = vsel %vm892, %v831, 0
        %v900 = vsel %vm892, %v832, 0
        %v903 = vsel %vm892, %v833, 0
        %v906 = vsel %vm892, %v834, 0
        %v909 = vsel %vm892, %v835, 0
        %v912 = vsel %vm892, %v836, 0
        %v915 = vsel %vm892, %v837, 0
        %v918 = vsel %vm892, %v838, 0
        %v921 = vsel %vm892, %v839, 0
        %v924 = vsel %vm892, %v840, 0
        %v927 = vsel %vm892, %v841, 0
        %v930 = vsel %vm892, %v842, 0
        %v933 = vsel %vm892, %v843, 0
        %v936 = vsel %vm892, %v844, 0
        %v939 = vsel %vm892, %v845, 0
        %v942 = vsel %vm892, %v846, 0
        %v945 = vsel %vm892, %v847, 0
        %v948 = vsel %vm892, %v848, 0
        %v951 = vsel %vm892, %v849, 0
        %v954 = vsel %vm892, %v850, 0
        %v957 = vsel %vm892, %v851, 0
        %v960 = vsel %vm892, %v852, 0
        %v963 = vsel %vm892, %v853, 0
        %v966 = vsel %vm892, %v854, 0
        %v969 = vsel %vm892, %v855, 0
        %v972 = vsel %vm892, %v856, 0
        %v975 = vsel %vm892, %v857, 0
        %v978 = vsel %vm892, %v858, 0
        %v981 = vsel %vm892, %v859, 0
        %v984 = vsel %vm892, %v860, 0
        %v987 = vsel %vm892, %v861, 0
        %v990 = vsel %vm892, %v862, 0
        %v993 = vsel %vm892, %v863, 0
        %v996 = vsel %vm892, %v864, 0
        %v999 = vsel %vm892, %v865, 0
        %v1002 = vsel %vm892, %v866, 0
        %v1005 = vsel %vm892, %v867, 0
        %v1008 = vsel %vm892, %v868, 0
        %v1011 = vsel %vm892, %v869, 0
        %v1014 = vsel %vm892, %v870, 0
        %v1017 = vsel %vm892, %v871, 0
        %v1020 = vsel %vm892, %v872, 0
        %v1023 = vsel %vm892, %v873, 0
        %v1026 = vsel %vm892, %v874, 0
        %v1029 = vsel %vm892, %v875, 0
        %v1032 = vsel %vm892, %v876, 0
        %v1035 = vsel %vm892, %v877, 0
        %v1038 = vsel %vm892, %v878, 0
        %v1041 = vsel %vm892, %v879, 0
        %v1044 = vsel %vm892, %v880, 0
        %v1047 = vsel %vm892, %v881, 0
        %v1050 = vsel %vm892, %v882, 0
        %v1053 = vsel %vm892, %v883, 0
        %v1056 = vsel %vm892, %v884, 0
        %v1059 = vsel %vm892, %v885, 0
        %1061 = vmatprep.subr.bf16.mxu0 0
        %1062 = vmatpush1.bf16.msra.mxu0 0
        %1063 = vmatprep.subr.bf16.mxu0 0
        %1064 = vmatpush1.bf16.msra.mxu0 0
        %1065 = vmatprep.subr.bf16.mxu0 0
        %1066 = vmatpush1.bf16.msra.mxu0 0
        %1067 = vmatprep.subr.bf16.mxu0 0
        %1068 = vmatpush1.bf16.msra.mxu0 0
        %1069 = vmatprep.subr.bf16.mxu0 0
        %1070 = vmatpush1.bf16.msra.mxu0 0
        %1071 = vmatprep.subr.bf16.mxu0 0
        %1072 = vmatpush1.bf16.msra.mxu0 0
        %1073 = vmatprep.subr.bf16.mxu0 0
        %1074 = vmatpush1.bf16.msra.mxu0 0
        %1075 = vmatprep.subr.bf16.mxu0 0
        %1076 = vmatpush1.bf16.msra.mxu0 %v890
        %1077 = vmatprep.subr.bf16.mxu0 0
        %1078 = vmatpush2.bf16.msra.mxu0 0
        %1079 = vmatprep.subr.bf16.mxu0 0
        %1080 = vmatpush2.bf16.msra.mxu0 0
        %1081 = vmatprep.subr.bf16.mxu0 0
        %1082 = vmatpush2.bf16.msra.mxu0 0
        %1083 = vmatprep.subr.bf16.mxu0 0
        %1084 = vmatpush2.bf16.msra.mxu0 0
        %1085 = vmatprep.subr.bf16.mxu0 0
        %1086 = vmatpush2.bf16.msra.mxu0 0
        %1087 = vmatprep.subr.bf16.mxu0 0
        %1088 = vmatpush2.bf16.msra.mxu0 0
        %1089 = vmatprep.subr.bf16.mxu0 0
        %1090 = vmatpush2.bf16.msra.mxu0 0
        %1091 = vmatprep.subr.bf16.mxu0 0
        %1092 = vmatpush2.bf16.msra.mxu0 0
        %1093 = vmatprep.mubr.bf16.mxu0 0
        %1094 = vmatmul.mubr.bf16.gmra.mxu0 %v894
        %v1095 = vpop.f32.mrf.mxu0
        %v1096 = vadd.f32 %v605, %v1095
        %v1097 = vpop.f32.mrf.mxu0
        %v1098 = vpop.f32.mrf.mxu0
        %v1099 = vadd.f32 %v605, %v1098
        %v1100 = vpop.f32.mrf.mxu0
        %1101 = vmatprep.mubr.bf16.mxu0 0
        %1102 = vmatmul.mubr.bf16.gmra.mxu0 %v897
        %v1103 = vpop.f32.mrf.mxu0
        %v1104 = vadd.f32 %v605, %v1103
        %v1105 = vpop.f32.mrf.mxu0
        %v1106 = vpop.f32.mrf.mxu0
        %v1107 = vadd.f32 %v605, %v1106
        %v1108 = vpop.f32.mrf.mxu0
        %1109 = vmatprep.mubr.bf16.mxu0 0
        %1110 = vmatmul.mubr.bf16.gmra.mxu0 %v900
        %v1111 = vpop.f32.mrf.mxu0
        %v1112 = vadd.f32 %v605, %v1111
        %v1113 = vpop.f32.mrf.mxu0
        %v1114 = vpop.f32.mrf.mxu0
        %v1115 = vadd.f32 %v605, %v1114
        %v1116 = vpop.f32.mrf.mxu0
        %1117 = vmatprep.mubr.bf16.mxu0 0
        %1118 = vmatmul.mubr.bf16.gmra.mxu0 %v903
        %v1119 = vpop.f32.mrf.mxu0
        %v1120 = vadd.f32 %v605, %v1119
        %v1121 = vpop.f32.mrf.mxu0
        %v1122 = vpop.f32.mrf.mxu0
        %v1123 = vadd.f32 %v605, %v1122
        %v1124 = vpop.f32.mrf.mxu0
        %1125 = vmatprep.mubr.bf16.mxu0 0
        %1126 = vmatmul.mubr.bf16.gmra.mxu0 %v906
        %v1127 = vpop.f32.mrf.mxu0
        %v1128 = vadd.f32 %v605, %v1127
        %v1129 = vpop.f32.mrf.mxu0
        %v1130 = vpop.f32.mrf.mxu0
        %v1131 = vadd.f32 %v605, %v1130
        %v1132 = vpop.f32.mrf.mxu0
        %1133 = vmatprep.mubr.bf16.mxu0 0
        %1134 = vmatmul.mubr.bf16.gmra.mxu0 %v909
        %v1135 = vpop.f32.mrf.mxu0
        %v1136 = vadd.f32 %v605, %v1135
        %v1137 = vpop.f32.mrf.mxu0
        %v1138 = vpop.f32.mrf.mxu0
        %v1139 = vadd.f32 %v605, %v1138
        %v1140 = vpop.f32.mrf.mxu0
        %1141 = vmatprep.mubr.bf16.mxu0 0
        %1142 = vmatmul.mubr.bf16.gmra.mxu0 %v912
        %v1143 = vpop.f32.mrf.mxu0
        %v1144 = vadd.f32 %v605, %v1143
        %v1145 = vpop.f32.mrf.mxu0
        %v1146 = vpop.f32.mrf.mxu0
        %v1147 = vadd.f32 %v605, %v1146
        %v1148 = vpop.f32.mrf.mxu0
        %1149 = vmatprep.mubr.bf16.mxu0 0
        %1150 = vmatmul.mubr.bf16.gmra.mxu0 %v915
        %v1151 = vpop.f32.mrf.mxu0
        %v1152 = vadd.f32 %v605, %v1151
        %v1153 = vpop.f32.mrf.mxu0
        %v1154 = vpop.f32.mrf.mxu0
        %v1155 = vadd.f32 %v605, %v1154
        %v1156 = vpop.f32.mrf.mxu0
        %1157 = vmatprep.mubr.bf16.mxu0 0
        %1158 = vmatmul.mubr.bf16.gmra.mxu0 %v918
        %v1159 = vpop.f32.mrf.mxu0
        %v1160 = vadd.f32 %v605, %v1159
        %v1161 = vpop.f32.mrf.mxu0
        %v1162 = vpop.f32.mrf.mxu0
        %v1163 = vadd.f32 %v605, %v1162
        %v1164 = vpop.f32.mrf.mxu0
        %1165 = vmatprep.mubr.bf16.mxu0 0
        %1166 = vmatmul.mubr.bf16.gmra.mxu0 %v921
        %v1167 = vpop.f32.mrf.mxu0
        %v1168 = vadd.f32 %v605, %v1167
        %v1169 = vpop.f32.mrf.mxu0
        %v1170 = vpop.f32.mrf.mxu0
        %v1171 = vadd.f32 %v605, %v1170
        %v1172 = vpop.f32.mrf.mxu0
        %1173 = vmatprep.mubr.bf16.mxu0 0
        %1174 = vmatmul.mubr.bf16.gmra.mxu0 %v924
        %v1175 = vpop.f32.mrf.mxu0
        %v1176 = vadd.f32 %v605, %v1175
        %v1177 = vpop.f32.mrf.mxu0
        %v1178 = vpop.f32.mrf.mxu0
        %v1179 = vadd.f32 %v605, %v1178
        %v1180 = vpop.f32.mrf.mxu0
        %1181 = vmatprep.mubr.bf16.mxu0 0
        %1182 = vmatmul.mubr.bf16.gmra.mxu0 %v927
        %v1183 = vpop.f32.mrf.mxu0
        %v1184 = vadd.f32 %v605, %v1183
        %v1185 = vpop.f32.mrf.mxu0
        %v1186 = vpop.f32.mrf.mxu0
        %v1187 = vadd.f32 %v605, %v1186
        %v1188 = vpop.f32.mrf.mxu0
        %1189 = vmatprep.mubr.bf16.mxu0 0
        %1190 = vmatmul.mubr.bf16.gmra.mxu0 %v930
        %v1191 = vpop.f32.mrf.mxu0
        %v1192 = vadd.f32 %v605, %v1191
        %v1193 = vpop.f32.mrf.mxu0
        %v1194 = vpop.f32.mrf.mxu0
        %v1195 = vadd.f32 %v605, %v1194
        %v1196 = vpop.f32.mrf.mxu0
        %1197 = vmatprep.mubr.bf16.mxu0 0
        %1198 = vmatmul.mubr.bf16.gmra.mxu0 %v933
        %v1199 = vpop.f32.mrf.mxu0
        %v1200 = vadd.f32 %v605, %v1199
        %v1201 = vpop.f32.mrf.mxu0
        %v1202 = vpop.f32.mrf.mxu0
        %v1203 = vadd.f32 %v605, %v1202
        %v1204 = vpop.f32.mrf.mxu0
        %1205 = vmatprep.mubr.bf16.mxu0 0
        %1206 = vmatmul.mubr.bf16.gmra.mxu0 %v936
        %v1207 = vpop.f32.mrf.mxu0
        %v1208 = vadd.f32 %v605, %v1207
        %v1209 = vpop.f32.mrf.mxu0
        %v1210 = vpop.f32.mrf.mxu0
        %v1211 = vadd.f32 %v605, %v1210
        %v1212 = vpop.f32.mrf.mxu0
        %1213 = vmatprep.mubr.bf16.mxu0 0
        %1214 = vmatmul.mubr.bf16.gmra.mxu0 %v939
        %v1215 = vpop.f32.mrf.mxu0
        %v1216 = vadd.f32 %v605, %v1215
        %v1217 = vpop.f32.mrf.mxu0
        %v1218 = vpop.f32.mrf.mxu0
        %v1219 = vadd.f32 %v605, %v1218
        %v1220 = vpop.f32.mrf.mxu0
        %1221 = vmatprep.mubr.bf16.mxu0 0
        %1222 = vmatmul.mubr.bf16.gmra.mxu0 %v942
        %v1223 = vpop.f32.mrf.mxu0
        %v1224 = vadd.f32 %v605, %v1223
        %v1225 = vpop.f32.mrf.mxu0
        %v1226 = vpop.f32.mrf.mxu0
        %v1227 = vadd.f32 %v605, %v1226
        %v1228 = vpop.f32.mrf.mxu0
        %1229 = vmatprep.mubr.bf16.mxu0 0
        %1230 = vmatmul.mubr.bf16.gmra.mxu0 %v945
        %v1231 = vpop.f32.mrf.mxu0
        %v1232 = vadd.f32 %v605, %v1231
        %v1233 = vpop.f32.mrf.mxu0
        %v1234 = vpop.f32.mrf.mxu0
        %v1235 = vadd.f32 %v605, %v1234
        %v1236 = vpop.f32.mrf.mxu0
        %1237 = vmatprep.mubr.bf16.mxu0 0
        %1238 = vmatmul.mubr.bf16.gmra.mxu0 %v948
        %v1239 = vpop.f32.mrf.mxu0
        %v1240 = vadd.f32 %v605, %v1239
        %v1241 = vpop.f32.mrf.mxu0
        %v1242 = vpop.f32.mrf.mxu0
        %v1243 = vadd.f32 %v605, %v1242
        %v1244 = vpop.f32.mrf.mxu0
        %1245 = vmatprep.mubr.bf16.mxu0 0
        %1246 = vmatmul.mubr.bf16.gmra.mxu0 %v951
        %v1247 = vpop.f32.mrf.mxu0
        %v1248 = vadd.f32 %v605, %v1247
        %v1249 = vpop.f32.mrf.mxu0
        %v1250 = vpop.f32.mrf.mxu0
        %v1251 = vadd.f32 %v605, %v1250
        %v1252 = vpop.f32.mrf.mxu0
        %1253 = vmatprep.mubr.bf16.mxu0 0
        %1254 = vmatmul.mubr.bf16.gmra.mxu0 %v954
        %v1255 = vpop.f32.mrf.mxu0
        %v1256 = vadd.f32 %v605, %v1255
        %v1257 = vpop.f32.mrf.mxu0
        %v1258 = vpop.f32.mrf.mxu0
        %v1259 = vadd.f32 %v605, %v1258
        %v1260 = vpop.f32.mrf.mxu0
        %1261 = vmatprep.mubr.bf16.mxu0 0
        %1262 = vmatmul.mubr.bf16.gmra.mxu0 %v957
        %v1263 = vpop.f32.mrf.mxu0
        %v1264 = vadd.f32 %v605, %v1263
        %v1265 = vpop.f32.mrf.mxu0
        %v1266 = vpop.f32.mrf.mxu0
        %v1267 = vadd.f32 %v605, %v1266
        %v1268 = vpop.f32.mrf.mxu0
        %1269 = vmatprep.mubr.bf16.mxu0 0
        %1270 = vmatmul.mubr.bf16.gmra.mxu0 %v960
        %v1271 = vpop.f32.mrf.mxu0
        %v1272 = vadd.f32 %v605, %v1271
        %v1273 = vpop.f32.mrf.mxu0
        %v1274 = vpop.f32.mrf.mxu0
        %v1275 = vadd.f32 %v605, %v1274
        %v1276 = vpop.f32.mrf.mxu0
        %1277 = vmatprep.mubr.bf16.mxu0 0
        %1278 = vmatmul.mubr.bf16.gmra.mxu0 %v963
        %v1279 = vpop.f32.mrf.mxu0
        %v1280 = vadd.f32 %v605, %v1279
        %v1281 = vpop.f32.mrf.mxu0
        %v1282 = vpop.f32.mrf.mxu0
        %v1283 = vadd.f32 %v605, %v1282
        %v1284 = vpop.f32.mrf.mxu0
        %1285 = vmatprep.mubr.bf16.mxu0 0
        %1286 = vmatmul.mubr.bf16.gmra.mxu0 %v966
        %v1287 = vpop.f32.mrf.mxu0
        %v1288 = vadd.f32 %v605, %v1287
        %v1289 = vpop.f32.mrf.mxu0
        %v1290 = vpop.f32.mrf.mxu0
        %v1291 = vadd.f32 %v605, %v1290
        %v1292 = vpop.f32.mrf.mxu0
        %1293 = vmatprep.mubr.bf16.mxu0 0
        %1294 = vmatmul.mubr.bf16.gmra.mxu0 %v969
        %v1295 = vpop.f32.mrf.mxu0
        %v1296 = vadd.f32 %v605, %v1295
        %v1297 = vpop.f32.mrf.mxu0
        %v1298 = vpop.f32.mrf.mxu0
        %v1299 = vadd.f32 %v605, %v1298
        %v1300 = vpop.f32.mrf.mxu0
        %1301 = vmatprep.mubr.bf16.mxu0 0
        %1302 = vmatmul.mubr.bf16.gmra.mxu0 %v972
        %v1303 = vpop.f32.mrf.mxu0
        %v1304 = vadd.f32 %v605, %v1303
        %v1305 = vpop.f32.mrf.mxu0
        %v1306 = vpop.f32.mrf.mxu0
        %v1307 = vadd.f32 %v605, %v1306
        %v1308 = vpop.f32.mrf.mxu0
        %1309 = vmatprep.mubr.bf16.mxu0 0
        %1310 = vmatmul.mubr.bf16.gmra.mxu0 %v975
        %v1311 = vpop.f32.mrf.mxu0
        %v1312 = vadd.f32 %v605, %v1311
        %v1313 = vpop.f32.mrf.mxu0
        %v1314 = vpop.f32.mrf.mxu0
        %v1315 = vadd.f32 %v605, %v1314
        %v1316 = vpop.f32.mrf.mxu0
        %1317 = vmatprep.mubr.bf16.mxu0 0
        %1318 = vmatmul.mubr.bf16.gmra.mxu0 %v978
        %v1319 = vpop.f32.mrf.mxu0
        %v1320 = vadd.f32 %v605, %v1319
        %v1321 = vpop.f32.mrf.mxu0
        %v1322 = vpop.f32.mrf.mxu0
        %v1323 = vadd.f32 %v605, %v1322
        %v1324 = vpop.f32.mrf.mxu0
        %1325 = vmatprep.mubr.bf16.mxu0 0
        %1326 = vmatmul.mubr.bf16.gmra.mxu0 %v981
        %v1327 = vpop.f32.mrf.mxu0
        %v1328 = vadd.f32 %v605, %v1327
        %v1329 = vpop.f32.mrf.mxu0
        %v1330 = vpop.f32.mrf.mxu0
        %v1331 = vadd.f32 %v605, %v1330
        %v1332 = vpop.f32.mrf.mxu0
        %1333 = vmatprep.mubr.bf16.mxu0 0
        %1334 = vmatmul.mubr.bf16.gmra.mxu0 %v984
        %v1335 = vpop.f32.mrf.mxu0
        %v1336 = vadd.f32 %v605, %v1335
        %v1337 = vpop.f32.mrf.mxu0
        %v1338 = vpop.f32.mrf.mxu0
        %v1339 = vadd.f32 %v605, %v1338
        %v1340 = vpop.f32.mrf.mxu0
        %1341 = vmatprep.mubr.bf16.mxu0 0
        %1342 = vmatmul.mubr.bf16.gmra.mxu0 %v987
        %v1343 = vpop.f32.mrf.mxu0
        %v1344 = vadd.f32 %v605, %v1343
        %v1345 = vpop.f32.mrf.mxu0
        %v1346 = vpop.f32.mrf.mxu0
        %v1347 = vadd.f32 %v605, %v1346
        %v1348 = vpop.f32.mrf.mxu0
        %1349 = vmatprep.mubr.bf16.mxu0 0
        %1350 = vmatmul.mubr.bf16.gmra.mxu0 %v990
        %v1351 = vpop.f32.mrf.mxu0
        %v1352 = vadd.f32 %v605, %v1351
        %v1353 = vpop.f32.mrf.mxu0
        %v1354 = vpop.f32.mrf.mxu0
        %v1355 = vadd.f32 %v605, %v1354
        %v1356 = vpop.f32.mrf.mxu0
        %1357 = vmatprep.mubr.bf16.mxu0 0
        %1358 = vmatmul.mubr.bf16.gmra.mxu0 %v993
        %v1359 = vpop.f32.mrf.mxu0
        %v1360 = vadd.f32 %v605, %v1359
        %v1361 = vpop.f32.mrf.mxu0
        %v1362 = vpop.f32.mrf.mxu0
        %v1363 = vadd.f32 %v605, %v1362
        %v1364 = vpop.f32.mrf.mxu0
        %1365 = vmatprep.mubr.bf16.mxu0 0
        %1366 = vmatmul.mubr.bf16.gmra.mxu0 %v996
        %v1367 = vpop.f32.mrf.mxu0
        %v1368 = vadd.f32 %v605, %v1367
        %v1369 = vpop.f32.mrf.mxu0
        %v1370 = vpop.f32.mrf.mxu0
        %v1371 = vadd.f32 %v605, %v1370
        %v1372 = vpop.f32.mrf.mxu0
        %1373 = vmatprep.mubr.bf16.mxu0 0
        %1374 = vmatmul.mubr.bf16.gmra.mxu0 %v999
        %v1375 = vpop.f32.mrf.mxu0
        %v1376 = vadd.f32 %v605, %v1375
        %v1377 = vpop.f32.mrf.mxu0
        %v1378 = vpop.f32.mrf.mxu0
        %v1379 = vadd.f32 %v605, %v1378
        %v1380 = vpop.f32.mrf.mxu0
        %1381 = vmatprep.mubr.bf16.mxu0 0
        %1382 = vmatmul.mubr.bf16.gmra.mxu0 %v1002
        %v1383 = vpop.f32.mrf.mxu0
        %v1384 = vadd.f32 %v605, %v1383
        %v1385 = vpop.f32.mrf.mxu0
        %v1386 = vpop.f32.mrf.mxu0
        %v1387 = vadd.f32 %v605, %v1386
        %v1388 = vpop.f32.mrf.mxu0
        %1389 = vmatprep.mubr.bf16.mxu0 0
        %1390 = vmatmul.mubr.bf16.gmra.mxu0 %v1005
        %v1391 = vpop.f32.mrf.mxu0
        %v1392 = vadd.f32 %v605, %v1391
        %v1393 = vpop.f32.mrf.mxu0
        %v1394 = vpop.f32.mrf.mxu0
        %v1395 = vadd.f32 %v605, %v1394
        %v1396 = vpop.f32.mrf.mxu0
        %1397 = vmatprep.mubr.bf16.mxu0 0
        %1398 = vmatmul.mubr.bf16.gmra.mxu0 %v1008
        %v1399 = vpop.f32.mrf.mxu0
        %v1400 = vadd.f32 %v605, %v1399
        %v1401 = vpop.f32.mrf.mxu0
        %v1402 = vpop.f32.mrf.mxu0
        %v1403 = vadd.f32 %v605, %v1402
        %v1404 = vpop.f32.mrf.mxu0
        %1405 = vmatprep.mubr.bf16.mxu0 0
        %1406 = vmatmul.mubr.bf16.gmra.mxu0 %v1011
        %v1407 = vpop.f32.mrf.mxu0
        %v1408 = vadd.f32 %v605, %v1407
        %v1409 = vpop.f32.mrf.mxu0
        %v1410 = vpop.f32.mrf.mxu0
        %v1411 = vadd.f32 %v605, %v1410
        %v1412 = vpop.f32.mrf.mxu0
        %1413 = vmatprep.mubr.bf16.mxu0 0
        %1414 = vmatmul.mubr.bf16.gmra.mxu0 %v1014
        %v1415 = vpop.f32.mrf.mxu0
        %v1416 = vadd.f32 %v605, %v1415
        %v1417 = vpop.f32.mrf.mxu0
        %v1418 = vpop.f32.mrf.mxu0
        %v1419 = vadd.f32 %v605, %v1418
        %v1420 = vpop.f32.mrf.mxu0
        %1421 = vmatprep.mubr.bf16.mxu0 0
        %1422 = vmatmul.mubr.bf16.gmra.mxu0 %v1017
        %v1423 = vpop.f32.mrf.mxu0
        %v1424 = vadd.f32 %v605, %v1423
        %v1425 = vpop.f32.mrf.mxu0
        %v1426 = vpop.f32.mrf.mxu0
        %v1427 = vadd.f32 %v605, %v1426
        %v1428 = vpop.f32.mrf.mxu0
        %1429 = vmatprep.mubr.bf16.mxu0 0
        %1430 = vmatmul.mubr.bf16.gmra.mxu0 %v1020
        %v1431 = vpop.f32.mrf.mxu0
        %v1432 = vadd.f32 %v605, %v1431
        %v1433 = vpop.f32.mrf.mxu0
        %v1434 = vpop.f32.mrf.mxu0
        %v1435 = vadd.f32 %v605, %v1434
        %v1436 = vpop.f32.mrf.mxu0
        %1437 = vmatprep.mubr.bf16.mxu0 0
        %1438 = vmatmul.mubr.bf16.gmra.mxu0 %v1023
        %v1439 = vpop.f32.mrf.mxu0
        %v1440 = vadd.f32 %v605, %v1439
        %v1441 = vpop.f32.mrf.mxu0
        %v1442 = vpop.f32.mrf.mxu0
        %v1443 = vadd.f32 %v605, %v1442
        %v1444 = vpop.f32.mrf.mxu0
        %1445 = vmatprep.mubr.bf16.mxu0 0
        %1446 = vmatmul.mubr.bf16.gmra.mxu0 %v1026
        %v1447 = vpop.f32.mrf.mxu0
        %v1448 = vadd.f32 %v605, %v1447
        %v1449 = vpop.f32.mrf.mxu0
        %v1450 = vpop.f32.mrf.mxu0
        %v1451 = vadd.f32 %v605, %v1450
        %v1452 = vpop.f32.mrf.mxu0
        %1453 = vmatprep.mubr.bf16.mxu0 0
        %1454 = vmatmul.mubr.bf16.gmra.mxu0 %v1029
        %v1455 = vpop.f32.mrf.mxu0
        %v1456 = vadd.f32 %v605, %v1455
        %v1457 = vpop.f32.mrf.mxu0
        %v1458 = vpop.f32.mrf.mxu0
        %v1459 = vadd.f32 %v605, %v1458
        %v1460 = vpop.f32.mrf.mxu0
        %1461 = vmatprep.mubr.bf16.mxu0 0
        %1462 = vmatmul.mubr.bf16.gmra.mxu0 %v1032
        %v1463 = vpop.f32.mrf.mxu0
        %v1464 = vadd.f32 %v605, %v1463
        %v1465 = vpop.f32.mrf.mxu0
        %v1466 = vpop.f32.mrf.mxu0
        %v1467 = vadd.f32 %v605, %v1466
        %v1468 = vpop.f32.mrf.mxu0
        %1469 = vmatprep.mubr.bf16.mxu0 0
        %1470 = vmatmul.mubr.bf16.gmra.mxu0 %v1035
        %v1471 = vpop.f32.mrf.mxu0
        %v1472 = vadd.f32 %v605, %v1471
        %v1473 = vpop.f32.mrf.mxu0
        %v1474 = vpop.f32.mrf.mxu0
        %v1475 = vadd.f32 %v605, %v1474
        %v1476 = vpop.f32.mrf.mxu0
        %1477 = vmatprep.mubr.bf16.mxu0 0
        %1478 = vmatmul.mubr.bf16.gmra.mxu0 %v1038
        %v1479 = vpop.f32.mrf.mxu0
        %v1480 = vadd.f32 %v605, %v1479
        %v1481 = vpop.f32.mrf.mxu0
        %v1482 = vpop.f32.mrf.mxu0
        %v1483 = vadd.f32 %v605, %v1482
        %v1484 = vpop.f32.mrf.mxu0
        %1485 = vmatprep.mubr.bf16.mxu0 0
        %1486 = vmatmul.mubr.bf16.gmra.mxu0 %v1041
        %v1487 = vpop.f32.mrf.mxu0
        %v1488 = vadd.f32 %v605, %v1487
        %v1489 = vpop.f32.mrf.mxu0
        %v1490 = vpop.f32.mrf.mxu0
        %v1491 = vadd.f32 %v605, %v1490
        %v1492 = vpop.f32.mrf.mxu0
        %1493 = vmatprep.mubr.bf16.mxu0 0
        %1494 = vmatmul.mubr.bf16.gmra.mxu0 %v1044
        %v1495 = vpop.f32.mrf.mxu0
        %v1496 = vadd.f32 %v605, %v1495
        %v1497 = vpop.f32.mrf.mxu0
        %v1498 = vpop.f32.mrf.mxu0
        %v1499 = vadd.f32 %v605, %v1498
        %v1500 = vpop.f32.mrf.mxu0
        %1501 = vmatprep.mubr.bf16.mxu0 0
        %1502 = vmatmul.mubr.bf16.gmra.mxu0 %v1047
        %v1503 = vpop.f32.mrf.mxu0
        %v1504 = vadd.f32 %v605, %v1503
        %v1505 = vpop.f32.mrf.mxu0
        %v1506 = vpop.f32.mrf.mxu0
        %v1507 = vadd.f32 %v605, %v1506
        %v1508 = vpop.f32.mrf.mxu0
        %1509 = vmatprep.mubr.bf16.mxu0 0
        %1510 = vmatmul.mubr.bf16.gmra.mxu0 %v1050
        %v1511 = vpop.f32.mrf.mxu0
        %v1512 = vadd.f32 %v605, %v1511
        %v1513 = vpop.f32.mrf.mxu0
        %v1514 = vpop.f32.mrf.mxu0
        %v1515 = vadd.f32 %v605, %v1514
        %v1516 = vpop.f32.mrf.mxu0
        %1517 = vmatprep.mubr.bf16.mxu0 0
        %1518 = vmatmul.mubr.bf16.gmra.mxu0 %v1053
        %v1519 = vpop.f32.mrf.mxu0
        %v1520 = vadd.f32 %v605, %v1519
        %v1521 = vpop.f32.mrf.mxu0
        %v1522 = vpop.f32.mrf.mxu0
        %v1523 = vadd.f32 %v605, %v1522
        %v1524 = vpop.f32.mrf.mxu0
        %1525 = vmatprep.mubr.bf16.mxu0 0
        %1526 = vmatmul.mubr.bf16.gmra.mxu0 %v1056
        %v1527 = vpop.f32.mrf.mxu0
        %v1528 = vadd.f32 %v605, %v1527
        %v1529 = vpop.f32.mrf.mxu0
        %v1530 = vpop.f32.mrf.mxu0
        %v1531 = vadd.f32 %v605, %v1530
        %v1532 = vpop.f32.mrf.mxu0
        %1533 = vmatprep.mubr.bf16.mxu0 0
        %1534 = vmatmul.mubr.bf16.gmra.mxu0 %v1059
        %v1535 = vpop.f32.mrf.mxu0
        %v1536 = vadd.f32 %v605, %v1535
        %v1537 = vpop.f32.mrf.mxu0
        %v1538 = vpop.f32.mrf.mxu0
        %v1539 = vadd.f32 %v605, %v1538
        %v1540 = vpop.f32.mrf.mxu0
        %1541 = vdwg.mxu0
        %v1542 = vmax.f32 %v1096, 0.0
        %v1543 = vmax.f32 %v1099, 0.0
        %v1544 = vmax.f32 %v1104, 0.0
        %v1545 = vmax.f32 %v1107, 0.0
        %v1546 = vmax.f32 %v1112, 0.0
        %v1547 = vmax.f32 %v1115, 0.0
        %v1548 = vmax.f32 %v1120, 0.0
        %v1549 = vmax.f32 %v1123, 0.0
        %v1550 = vmax.f32 %v1128, 0.0
        %v1551 = vmax.f32 %v1131, 0.0
        %v1552 = vmax.f32 %v1136, 0.0
        %v1553 = vmax.f32 %v1139, 0.0
        %v1554 = vmax.f32 %v1144, 0.0
        %v1555 = vmax.f32 %v1147, 0.0
        %v1556 = vmax.f32 %v1152, 0.0
        %v1557 = vmax.f32 %v1155, 0.0
        %v1558 = vmax.f32 %v1160, 0.0
        %v1559 = vmax.f32 %v1163, 0.0
        %v1560 = vmax.f32 %v1168, 0.0
        %v1561 = vmax.f32 %v1171, 0.0
        %v1562 = vmax.f32 %v1176, 0.0
        %v1563 = vmax.f32 %v1179, 0.0
        %v1564 = vmax.f32 %v1184, 0.0
        %v1565 = vmax.f32 %v1187, 0.0
        %v1566 = vmax.f32 %v1192, 0.0
        %v1567 = vmax.f32 %v1195, 0.0
        %v1568 = vmax.f32 %v1200, 0.0
        %v1569 = vmax.f32 %v1203, 0.0
        %v1570 = vmax.f32 %v1208, 0.0
        %v1571 = vmax.f32 %v1211, 0.0
        %v1572 = vmax.f32 %v1216, 0.0
        %v1573 = vmax.f32 %v1219, 0.0
        %v1574 = vmax.f32 %v1224, 0.0
        %v1575 = vmax.f32 %v1227, 0.0
        %v1576 = vmax.f32 %v1232, 0.0
        %v1577 = vmax.f32 %v1235, 0.0
        %v1578 = vmax.f32 %v1240, 0.0
        %v1579 = vmax.f32 %v1243, 0.0
        %v1580 = vmax.f32 %v1248, 0.0
        %v1581 = vmax.f32 %v1251, 0.0
        %v1582 = vmax.f32 %v1256, 0.0
        %v1583 = vmax.f32 %v1259, 0.0
        %v1584 = vmax.f32 %v1264, 0.0
        %v1585 = vmax.f32 %v1267, 0.0
        %v1586 = vmax.f32 %v1272, 0.0
        %v1587 = vmax.f32 %v1275, 0.0
        %v1588 = vmax.f32 %v1280, 0.0
        %v1589 = vmax.f32 %v1283, 0.0
        %v1590 = vmax.f32 %v1288, 0.0
        %v1591 = vmax.f32 %v1291, 0.0
        %v1592 = vmax.f32 %v1296, 0.0
        %v1593 = vmax.f32 %v1299, 0.0
        %v1594 = vmax.f32 %v1304, 0.0
        %v1595 = vmax.f32 %v1307, 0.0
        %v1596 = vmax.f32 %v1312, 0.0
        %v1597 = vmax.f32 %v1315, 0.0
        %v1598 = vmax.f32 %v1320, 0.0
        %v1599 = vmax.f32 %v1323, 0.0
        %v1600 = vmax.f32 %v1328, 0.0
        %v1601 = vmax.f32 %v1331, 0.0
        %v1602 = vmax.f32 %v1336, 0.0
        %v1603 = vmax.f32 %v1339, 0.0
        %v1604 = vmax.f32 %v1344, 0.0
        %v1605 = vmax.f32 %v1347, 0.0
        %v1606 = vmax.f32 %v1352, 0.0
        %v1607 = vmax.f32 %v1355, 0.0
        %v1608 = vmax.f32 %v1360, 0.0
        %v1609 = vmax.f32 %v1363, 0.0
        %v1610 = vmax.f32 %v1368, 0.0
        %v1611 = vmax.f32 %v1371, 0.0
        %v1612 = vmax.f32 %v1376, 0.0
        %v1613 = vmax.f32 %v1379, 0.0
        %v1614 = vmax.f32 %v1384, 0.0
        %v1615 = vmax.f32 %v1387, 0.0
        %v1616 = vmax.f32 %v1392, 0.0
        %v1617 = vmax.f32 %v1395, 0.0
        %v1618 = vmax.f32 %v1400, 0.0
        %v1619 = vmax.f32 %v1403, 0.0
        %v1620 = vmax.f32 %v1408, 0.0
        %v1621 = vmax.f32 %v1411, 0.0
        %v1622 = vmax.f32 %v1416, 0.0
        %v1623 = vmax.f32 %v1419, 0.0
        %v1624 = vmax.f32 %v1424, 0.0
        %v1625 = vmax.f32 %v1427, 0.0
        %v1626 = vmax.f32 %v1432, 0.0
        %v1627 = vmax.f32 %v1435, 0.0
        %v1628 = vmax.f32 %v1440, 0.0
        %v1629 = vmax.f32 %v1443, 0.0
        %v1630 = vmax.f32 %v1448, 0.0
        %v1631 = vmax.f32 %v1451, 0.0
        %v1632 = vmax.f32 %v1456, 0.0
        %v1633 = vmax.f32 %v1459, 0.0
        %v1634 = vmax.f32 %v1464, 0.0
        %v1635 = vmax.f32 %v1467, 0.0
        %v1636 = vmax.f32 %v1472, 0.0
        %v1637 = vmax.f32 %v1475, 0.0
        %v1638 = vmax.f32 %v1480, 0.0
        %v1639 = vmax.f32 %v1483, 0.0
        %v1640 = vmax.f32 %v1488, 0.0
        %v1641 = vmax.f32 %v1491, 0.0
        %v1642 = vmax.f32 %v1496, 0.0
        %v1643 = vmax.f32 %v1499, 0.0
        %v1644 = vmax.f32 %v1504, 0.0
        %v1645 = vmax.f32 %v1507, 0.0
        %v1646 = vmax.f32 %v1512, 0.0
        %v1647 = vmax.f32 %v1515, 0.0
        %v1648 = vmax.f32 %v1520, 0.0
        %v1649 = vmax.f32 %v1523, 0.0
        %v1650 = vmax.f32 %v1528, 0.0
        %v1651 = vmax.f32 %v1531, 0.0
        %v1652 = vmax.f32 %v1536, 0.0
        %v1653 = vmax.f32 %v1539, 0.0
        %v1654 = vand.u32 2147483647, %v1096
        %v1655 = vand.u32 2147483647, %v1099
        %v1656 = vand.u32 2147483647, %v1104
        %v1657 = vand.u32 2147483647, %v1107
        %v1658 = vand.u32 2147483647, %v1112
        %v1659 = vand.u32 2147483647, %v1115
        %v1660 = vand.u32 2147483647, %v1120
        %v1661 = vand.u32 2147483647, %v1123
        %v1662 = vand.u32 2147483647, %v1128
        %v1663 = vand.u32 2147483647, %v1131
        %v1664 = vand.u32 2147483647, %v1136
        %v1665 = vand.u32 2147483647, %v1139
        %v1666 = vand.u32 2147483647, %v1144
        %v1667 = vand.u32 2147483647, %v1147
        %v1668 = vand.u32 2147483647, %v1152
        %v1669 = vand.u32 2147483647, %v1155
        %v1670 = vand.u32 2147483647, %v1160
        %v1671 = vand.u32 2147483647, %v1163
        %v1672 = vand.u32 2147483647, %v1168
        %v1673 = vand.u32 2147483647, %v1171
        %v1674 = vand.u32 2147483647, %v1176
        %v1675 = vand.u32 2147483647, %v1179
        %v1676 = vand.u32 2147483647, %v1184
        %v1677 = vand.u32 2147483647, %v1187
        %v1678 = vand.u32 2147483647, %v1192
        %v1679 = vand.u32 2147483647, %v1195
        %v1680 = vand.u32 2147483647, %v1200
        %v1681 = vand.u32 2147483647, %v1203
        %v1682 = vand.u32 2147483647, %v1208
        %v1683 = vand.u32 2147483647, %v1211
        %v1684 = vand.u32 2147483647, %v1216
        %v1685 = vand.u32 2147483647, %v1219
        %v1686 = vand.u32 2147483647, %v1224
        %v1687 = vand.u32 2147483647, %v1227
        %v1688 = vand.u32 2147483647, %v1232
        %v1689 = vand.u32 2147483647, %v1235
        %v1690 = vand.u32 2147483647, %v1240
        %v1691 = vand.u32 2147483647, %v1243
        %v1692 = vand.u32 2147483647, %v1248
        %v1693 = vand.u32 2147483647, %v1251
        %v1694 = vand.u32 2147483647, %v1256
        %v1695 = vand.u32 2147483647, %v1259
        %v1696 = vand.u32 2147483647, %v1264
        %v1697 = vand.u32 2147483647, %v1267
        %v1698 = vand.u32 2147483647, %v1272
        %v1699 = vand.u32 2147483647, %v1275
        %v1700 = vand.u32 2147483647, %v1280
        %v1701 = vand.u32 2147483647, %v1283
        %v1702 = vand.u32 2147483647, %v1288
        %v1703 = vand.u32 2147483647, %v1291
        %v1704 = vand.u32 2147483647, %v1296
        %v1705 = vand.u32 2147483647, %v1299
        %v1706 = vand.u32 2147483647, %v1304
        %v1707 = vand.u32 2147483647, %v1307
        %v1708 = vand.u32 2147483647, %v1312
        %v1709 = vand.u32 2147483647, %v1315
        %v1710 = vand.u32 2147483647, %v1320
        %v1711 = vand.u32 2147483647, %v1323
        %v1712 = vand.u32 2147483647, %v1328
        %v1713 = vand.u32 2147483647, %v1331
        %v1714 = vand.u32 2147483647, %v1336
        %v1715 = vand.u32 2147483647, %v1339
        %v1716 = vand.u32 2147483647, %v1344
        %v1717 = vand.u32 2147483647, %v1347
        %v1718 = vand.u32 2147483647, %v1352
        %v1719 = vand.u32 2147483647, %v1355
        %v1720 = vand.u32 2147483647, %v1360
        %v1721 = vand.u32 2147483647, %v1363
        %v1722 = vand.u32 2147483647, %v1368
        %v1723 = vand.u32 2147483647, %v1371
        %v1724 = vand.u32 2147483647, %v1376
        %v1725 = vand.u32 2147483647, %v1379
        %v1726 = vand.u32 2147483647, %v1384
        %v1727 = vand.u32 2147483647, %v1387
        %v1728 = vand.u32 2147483647, %v1392
        %v1729 = vand.u32 2147483647, %v1395
        %v1730 = vand.u32 2147483647, %v1400
        %v1731 = vand.u32 2147483647, %v1403
        %v1732 = vand.u32 2147483647, %v1408
        %v1733 = vand.u32 2147483647, %v1411
        %v1734 = vand.u32 2147483647, %v1416
        %v1735 = vand.u32 2147483647, %v1419
        %v1736 = vand.u32 2147483647, %v1424
        %v1737 = vand.u32 2147483647, %v1427
        %v1738 = vand.u32 2147483647, %v1432
        %v1739 = vand.u32 2147483647, %v1435
        %v1740 = vand.u32 2147483647, %v1440
        %v1741 = vand.u32 2147483647, %v1443
        %v1742 = vand.u32 2147483647, %v1448
        %v1743 = vand.u32 2147483647, %v1451
        %v1744 = vand.u32 2147483647, %v1456
        %v1745 = vand.u32 2147483647, %v1459
        %v1746 = vand.u32 2147483647, %v1464
        %v1747 = vand.u32 2147483647, %v1467
        %v1748 = vand.u32 2147483647, %v1472
        %v1749 = vand.u32 2147483647, %v1475
        %v1750 = vand.u32 2147483647, %v1480
        %v1751 = vand.u32 2147483647, %v1483
        %v1752 = vand.u32 2147483647, %v1488
        %v1753 = vand.u32 2147483647, %v1491
        %v1754 = vand.u32 2147483647, %v1496
        %v1755 = vand.u32 2147483647, %v1499
        %v1756 = vand.u32 2147483647, %v1504
        %v1757 = vand.u32 2147483647, %v1507
        %v1758 = vand.u32 2147483647, %v1512
        %v1759 = vand.u32 2147483647, %v1515
        %v1760 = vand.u32 2147483647, %v1520
        %v1761 = vand.u32 2147483647, %v1523
        %v1762 = vand.u32 2147483647, %v1528
        %v1763 = vand.u32 2147483647, %v1531
        %v1764 = vand.u32 2147483647, %v1536
        %v1765 = vand.u32 2147483647, %v1539
        %v1766 = vsub.f32 0.0, %v1654
        %v1767 = vsub.f32 0.0, %v1655
        %v1768 = vsub.f32 0.0, %v1656
        %v1769 = vsub.f32 0.0, %v1657
        %v1770 = vsub.f32 0.0, %v1658
        %v1771 = vsub.f32 0.0, %v1659
        %v1772 = vsub.f32 0.0, %v1660
        %v1773 = vsub.f32 0.0, %v1661
        %v1774 = vsub.f32 0.0, %v1662
        %v1775 = vsub.f32 0.0, %v1663
        %v1776 = vsub.f32 0.0, %v1664
        %v1777 = vsub.f32 0.0, %v1665
        %v1778 = vsub.f32 0.0, %v1666
        %v1779 = vsub.f32 0.0, %v1667
        %v1780 = vsub.f32 0.0, %v1668
        %v1781 = vsub.f32 0.0, %v1669
        %v1782 = vsub.f32 0.0, %v1670
        %v1783 = vsub.f32 0.0, %v1671
        %v1784 = vsub.f32 0.0, %v1672
        %v1785 = vsub.f32 0.0, %v1673
        %v1786 = vsub.f32 0.0, %v1674
        %v1787 = vsub.f32 0.0, %v1675
        %v1788 = vsub.f32 0.0, %v1676
        %v1789 = vsub.f32 0.0, %v1677
        %v1790 = vsub.f32 0.0, %v1678
        %v1791 = vsub.f32 0.0, %v1679
        %v1792 = vsub.f32 0.0, %v1680
        %v1793 = vsub.f32 0.0, %v1681
        %v1794 = vsub.f32 0.0, %v1682
        %v1795 = vsub.f32 0.0, %v1683
        %v1796 = vsub.f32 0.0, %v1684
        %v1797 = vsub.f32 0.0, %v1685
        %v1798 = vsub.f32 0.0, %v1686
        %v1799 = vsub.f32 0.0, %v1687
        %v1800 = vsub.f32 0.0, %v1688
        %v1801 = vsub.f32 0.0, %v1689
        %v1802 = vsub.f32 0.0, %v1690
        %v1803 = vsub.f32 0.0, %v1691
        %v1804 = vsub.f32 0.0, %v1692
        %v1805 = vsub.f32 0.0, %v1693
        %v1806 = vsub.f32 0.0, %v1694
        %v1807 = vsub.f32 0.0, %v1695
        %v1808 = vsub.f32 0.0, %v1696
        %v1809 = vsub.f32 0.0, %v1697
        %v1810 = vsub.f32 0.0, %v1698
        %v1811 = vsub.f32 0.0, %v1699
        %v1812 = vsub.f32 0.0, %v1700
        %v1813 = vsub.f32 0.0, %v1701
        %v1814 = vsub.f32 0.0, %v1702
        %v1815 = vsub.f32 0.0, %v1703
        %v1816 = vsub.f32 0.0, %v1704
        %v1817 = vsub.f32 0.0, %v1705
        %v1818 = vsub.f32 0.0, %v1706
        %v1819 = vsub.f32 0.0, %v1707
        %v1820 = vsub.f32 0.0, %v1708
        %v1821 = vsub.f32 0.0, %v1709
        %v1822 = vsub.f32 0.0, %v1710
        %v1823 = vsub.f32 0.0, %v1711
        %v1824 = vsub.f32 0.0, %v1712
        %v1825 = vsub.f32 0.0, %v1713
        %v1826 = vsub.f32 0.0, %v1714
        %v1827 = vsub.f32 0.0, %v1715
        %v1828 = vsub.f32 0.0, %v1716
        %v1829 = vsub.f32 0.0, %v1717
        %v1830 = vsub.f32 0.0, %v1718
        %v1831 = vsub.f32 0.0, %v1719
        %v1832 = vsub.f32 0.0, %v1720
        %v1833 = vsub.f32 0.0, %v1721
        %v1834 = vsub.f32 0.0, %v1722
        %v1835 = vsub.f32 0.0, %v1723
        %v1836 = vsub.f32 0.0, %v1724
        %v1837 = vsub.f32 0.0, %v1725
        %v1838 = vsub.f32 0.0, %v1726
        %v1839 = vsub.f32 0.0, %v1727
        %v1840 = vsub.f32 0.0, %v1728
        %v1841 = vsub.f32 0.0, %v1729
        %v1842 = vsub.f32 0.0, %v1730
        %v1843 = vsub.f32 0.0, %v1731
        %v1844 = vsub.f32 0.0, %v1732
        %v1845 = vsub.f32 0.0, %v1733
        %v1846 = vsub.f32 0.0, %v1734
        %v1847 = vsub.f32 0.0, %v1735
        %v1848 = vsub.f32 0.0, %v1736
        %v1849 = vsub.f32 0.0, %v1737
        %v1850 = vsub.f32 0.0, %v1738
        %v1851 = vsub.f32 0.0, %v1739
        %v1852 = vsub.f32 0.0, %v1740
        %v1853 = vsub.f32 0.0, %v1741
        %v1854 = vsub.f32 0.0, %v1742
        %v1855 = vsub.f32 0.0, %v1743
        %v1856 = vsub.f32 0.0, %v1744
        %v1857 = vsub.f32 0.0, %v1745
        %v1858 = vsub.f32 0.0, %v1746
        %v1859 = vsub.f32 0.0, %v1747
        %v1860 = vsub.f32 0.0, %v1748
        %v1861 = vsub.f32 0.0, %v1749
        %v1862 = vsub.f32 0.0, %v1750
        %v1863 = vsub.f32 0.0, %v1751
        %v1864 = vsub.f32 0.0, %v1752
        %v1865 = vsub.f32 0.0, %v1753
        %v1866 = vsub.f32 0.0, %v1754
        %v1867 = vsub.f32 0.0, %v1755
        %v1868 = vsub.f32 0.0, %v1756
        %v1869 = vsub.f32 0.0, %v1757
        %v1870 = vsub.f32 0.0, %v1758
        %v1871 = vsub.f32 0.0, %v1759
        %v1872 = vsub.f32 0.0, %v1760
        %v1873 = vsub.f32 0.0, %v1761
        %v1874 = vsub.f32 0.0, %v1762
        %v1875 = vsub.f32 0.0, %v1763
        %v1876 = vsub.f32 0.0, %v1764
        %v1877 = vsub.f32 0.0, %v1765
        %v1878 = vmul.f32 %v1766, 1.442695
        %v1879 = vpow.pop %v1878
        %v1880 = vmul.f32 %v1767, 1.442695
        %v1881 = vpow.pop %v1880
        %v1882 = vmul.f32 %v1768, 1.442695
        %v1883 = vpow.pop %v1882
        %v1884 = vmul.f32 %v1769, 1.442695
        %v1885 = vpow.pop %v1884
        %v1886 = vmul.f32 %v1770, 1.442695
        %v1887 = vpow.pop %v1886
        %v1888 = vmul.f32 %v1771, 1.442695
        %v1889 = vpow.pop %v1888
        %v1890 = vmul.f32 %v1772, 1.442695
        %v1891 = vpow.pop %v1890
        %v1892 = vmul.f32 %v1773, 1.442695
        %v1893 = vpow.pop %v1892
        %v1894 = vmul.f32 %v1774, 1.442695
        %v1895 = vpow.pop %v1894
        %v1896 = vmul.f32 %v1775, 1.442695
        %v1897 = vpow.pop %v1896
        %v1898 = vmul.f32 %v1776, 1.442695
        %v1899 = vpow.pop %v1898
        %v1900 = vmul.f32 %v1777, 1.442695
        %v1901 = vpow.pop %v1900
        %v1902 = vmul.f32 %v1778, 1.442695
        %v1903 = vpow.pop %v1902
        %v1904 = vmul.f32 %v1779, 1.442695
        %v1905 = vpow.pop %v1904
        %v1906 = vmul.f32 %v1780, 1.442695
        %v1907 = vpow.pop %v1906
        %v1908 = vmul.f32 %v1781, 1.442695
        %v1909 = vpow.pop %v1908
        %v1910 = vmul.f32 %v1782, 1.442695
        %v1911 = vpow.pop %v1910
        %v1912 = vmul.f32 %v1783, 1.442695
        %v1913 = vpow.pop %v1912
        %v1914 = vmul.f32 %v1784, 1.442695
        %v1915 = vpow.pop %v1914
        %v1916 = vmul.f32 %v1785, 1.442695
        %v1917 = vpow.pop %v1916
        %v1918 = vmul.f32 %v1786, 1.442695
        %v1919 = vpow.pop %v1918
        %v1920 = vmul.f32 %v1787, 1.442695
        %v1921 = vpow.pop %v1920
        %v1922 = vmul.f32 %v1788, 1.442695
        %v1923 = vpow.pop %v1922
        %v1924 = vmul.f32 %v1789, 1.442695
        %v1925 = vpow.pop %v1924
        %v1926 = vmul.f32 %v1790, 1.442695
        %v1927 = vpow.pop %v1926
        %v1928 = vmul.f32 %v1791, 1.442695
        %v1929 = vpow.pop %v1928
        %v1930 = vmul.f32 %v1792, 1.442695
        %v1931 = vpow.pop %v1930
        %v1932 = vmul.f32 %v1793, 1.442695
        %v1933 = vpow.pop %v1932
        %v1934 = vmul.f32 %v1794, 1.442695
        %v1935 = vpow.pop %v1934
        %v1936 = vmul.f32 %v1795, 1.442695
        %v1937 = vpow.pop %v1936
        %v1938 = vmul.f32 %v1796, 1.442695
        %v1939 = vpow.pop %v1938
        %v1940 = vmul.f32 %v1797, 1.442695
        %v1941 = vpow.pop %v1940
        %v1942 = vmul.f32 %v1798, 1.442695
        %v1943 = vpow.pop %v1942
        %v1944 = vmul.f32 %v1799, 1.442695
        %v1945 = vpow.pop %v1944
        %v1946 = vmul.f32 %v1800, 1.442695
        %v1947 = vpow.pop %v1946
        %v1948 = vmul.f32 %v1801, 1.442695
        %v1949 = vpow.pop %v1948
        %v1950 = vmul.f32 %v1802, 1.442695
        %v1951 = vpow.pop %v1950
        %v1952 = vmul.f32 %v1803, 1.442695
        %v1953 = vpow.pop %v1952
        %v1954 = vmul.f32 %v1804, 1.442695
        %v1955 = vpow.pop %v1954
        %v1956 = vmul.f32 %v1805, 1.442695
        %v1957 = vpow.pop %v1956
        %v1958 = vmul.f32 %v1806, 1.442695
        %v1959 = vpow.pop %v1958
        %v1960 = vmul.f32 %v1807, 1.442695
        %v1961 = vpow.pop %v1960
        %v1962 = vmul.f32 %v1808, 1.442695
        %v1963 = vpow.pop %v1962
        %v1964 = vmul.f32 %v1809, 1.442695
        %v1965 = vpow.pop %v1964
        %v1966 = vmul.f32 %v1810, 1.442695
        %v1967 = vpow.pop %v1966
        %v1968 = vmul.f32 %v1811, 1.442695
        %v1969 = vpow.pop %v1968
        %v1970 = vmul.f32 %v1812, 1.442695
        %v1971 = vpow.pop %v1970
        %v1972 = vmul.f32 %v1813, 1.442695
        %v1973 = vpow.pop %v1972
        %v1974 = vmul.f32 %v1814, 1.442695
        %v1975 = vpow.pop %v1974
        %v1976 = vmul.f32 %v1815, 1.442695
        %v1977 = vpow.pop %v1976
        %v1978 = vmul.f32 %v1816, 1.442695
        %v1979 = vpow.pop %v1978
        %v1980 = vmul.f32 %v1817, 1.442695
        %v1981 = vpow.pop %v1980
        %v1982 = vmul.f32 %v1818, 1.442695
        %v1983 = vpow.pop %v1982
        %v1984 = vmul.f32 %v1819, 1.442695
        %v1985 = vpow.pop %v1984
        %v1986 = vmul.f32 %v1820, 1.442695
        %v1987 = vpow.pop %v1986
        %v1988 = vmul.f32 %v1821, 1.442695
        %v1989 = vpow.pop %v1988
        %v1990 = vmul.f32 %v1822, 1.442695
        %v1991 = vpow.pop %v1990
        %v1992 = vmul.f32 %v1823, 1.442695
        %v1993 = vpow.pop %v1992
        %v1994 = vmul.f32 %v1824, 1.442695
        %v1995 = vpow.pop %v1994
        %v1996 = vmul.f32 %v1825, 1.442695
        %v1997 = vpow.pop %v1996
        %v1998 = vmul.f32 %v1826, 1.442695
        %v1999 = vpow.pop %v1998
        %v2000 = vmul.f32 %v1827, 1.442695
        %v2001 = vpow.pop %v2000
        %v2002 = vmul.f32 %v1828, 1.442695
        %v2003 = vpow.pop %v2002
        %v2004 = vmul.f32 %v1829, 1.442695
        %v2005 = vpow.pop %v2004
        %v2006 = vmul.f32 %v1830, 1.442695
        %v2007 = vpow.pop %v2006
        %v2008 = vmul.f32 %v1831, 1.442695
        %v2009 = vpow.pop %v2008
        %v2010 = vmul.f32 %v1832, 1.442695
        %v2011 = vpow.pop %v2010
        %v2012 = vmul.f32 %v1833, 1.442695
        %v2013 = vpow.pop %v2012
        %v2014 = vmul.f32 %v1834, 1.442695
        %v2015 = vpow.pop %v2014
        %v2016 = vmul.f32 %v1835, 1.442695
        %v2017 = vpow.pop %v2016
        %v2018 = vmul.f32 %v1836, 1.442695
        %v2019 = vpow.pop %v2018
        %v2020 = vmul.f32 %v1837, 1.442695
        %v2021 = vpow.pop %v2020
        %v2022 = vmul.f32 %v1838, 1.442695
        %v2023 = vpow.pop %v2022
        %v2024 = vmul.f32 %v1839, 1.442695
        %v2025 = vpow.pop %v2024
        %v2026 = vmul.f32 %v1840, 1.442695
        %v2027 = vpow.pop %v2026
        %v2028 = vmul.f32 %v1841, 1.442695
        %v2029 = vpow.pop %v2028
        %v2030 = vmul.f32 %v1842, 1.442695
        %v2031 = vpow.pop %v2030
        %v2032 = vmul.f32 %v1843, 1.442695
        %v2033 = vpow.pop %v2032
        %v2034 = vmul.f32 %v1844, 1.442695
        %v2035 = vpow.pop %v2034
        %v2036 = vmul.f32 %v1845, 1.442695
        %v2037 = vpow.pop %v2036
        %v2038 = vmul.f32 %v1846, 1.442695
        %v2039 = vpow.pop %v2038
        %v2040 = vmul.f32 %v1847, 1.442695
        %v2041 = vpow.pop %v2040
        %v2042 = vmul.f32 %v1848, 1.442695
        %v2043 = vpow.pop %v2042
        %v2044 = vmul.f32 %v1849, 1.442695
        %v2045 = vpow.pop %v2044
        %v2046 = vmul.f32 %v1850, 1.442695
        %v2047 = vpow.pop %v2046
        %v2048 = vmul.f32 %v1851, 1.442695
        %v2049 = vpow.pop %v2048
        %v2050 = vmul.f32 %v1852, 1.442695
        %v2051 = vpow.pop %v2050
        %v2052 = vmul.f32 %v1853, 1.442695
        %v2053 = vpow.pop %v2052
        %v2054 = vmul.f32 %v1854, 1.442695
        %v2055 = vpow.pop %v2054
        %v2056 = vmul.f32 %v1855, 1.442695
        %v2057 = vpow.pop %v2056
        %v2058 = vmul.f32 %v1856, 1.442695
        %v2059 = vpow.pop %v2058
        %v2060 = vmul.f32 %v1857, 1.442695
        %v2061 = vpow.pop %v2060
        %v2062 = vmul.f32 %v1858, 1.442695
        %v2063 = vpow.pop %v2062
        %v2064 = vmul.f32 %v1859, 1.442695
        %v2065 = vpow.pop %v2064
        %v2066 = vmul.f32 %v1860, 1.442695
        %v2067 = vpow.pop %v2066
        %v2068 = vmul.f32 %v1861, 1.442695
        %v2069 = vpow.pop %v2068
        %v2070 = vmul.f32 %v1862, 1.442695
        %v2071 = vpow.pop %v2070
        %v2072 = vmul.f32 %v1863, 1.442695
        %v2073 = vpow.pop %v2072
        %v2074 = vmul.f32 %v1864, 1.442695
        %v2075 = vpow.pop %v2074
        %v2076 = vmul.f32 %v1865, 1.442695
        %v2077 = vpow.pop %v2076
        %v2078 = vmul.f32 %v1866, 1.442695
        %v2079 = vpow.pop %v2078
        %v2080 = vmul.f32 %v1867, 1.442695
        %v2081 = vpow.pop %v2080
        %v2082 = vmul.f32 %v1868, 1.442695
        %v2083 = vpow.pop %v2082
        %v2084 = vmul.f32 %v1869, 1.442695
        %v2085 = vpow.pop %v2084
        %v2086 = vmul.f32 %v1870, 1.442695
        %v2087 = vpow.pop %v2086
        %v2088 = vmul.f32 %v1871, 1.442695
        %v2089 = vpow.pop %v2088
        %v2090 = vmul.f32 %v1872, 1.442695
        %v2091 = vpow.pop %v2090
        %v2092 = vmul.f32 %v1873, 1.442695
        %v2093 = vpow.pop %v2092
        %v2094 = vmul.f32 %v1874, 1.442695
        %v2095 = vpow.pop %v2094
        %v2096 = vmul.f32 %v1875, 1.442695
        %v2097 = vpow.pop %v2096
        %v2098 = vmul.f32 %v1876, 1.442695
        %v2099 = vpow.pop %v2098
        %v2100 = vmul.f32 %v1877, 1.442695
        %v2101 = vpow.pop %v2100
        %v2102 = vadd.f32 %v1879, 1.0
        %v2103 = vlog2.pop %v2102
        %v2104 = vmul.f32 %v2103, 0.6931472
        %v2105 = vmul.f32 -0.5, %v1879
        %v2106 = vadd.f32 %v2105, 1.0
        %v2107 = vmul.f32 %v2106, %v1879
        %v2108 = vand.u32 2147483647, %v1879
        %vm2109 = vcmp.lt.f32.partialorder %v2108, 0.0004427343
        %v2110 = vsel %vm2109, %v2107, %v2104
        %v2111 = vadd.f32 %v1881, 1.0
        %v2112 = vlog2.pop %v2111
        %v2113 = vmul.f32 %v2112, 0.6931472
        %v2114 = vmul.f32 -0.5, %v1881
        %v2115 = vadd.f32 %v2114, 1.0
        %v2116 = vmul.f32 %v2115, %v1881
        %v2117 = vand.u32 2147483647, %v1881
        %vm2118 = vcmp.lt.f32.partialorder %v2117, 0.0004427343
        %v2119 = vsel %vm2118, %v2116, %v2113
        %v2120 = vadd.f32 %v1883, 1.0
        %v2121 = vlog2.pop %v2120
        %v2122 = vmul.f32 %v2121, 0.6931472
        %v2123 = vmul.f32 -0.5, %v1883
        %v2124 = vadd.f32 %v2123, 1.0
        %v2125 = vmul.f32 %v2124, %v1883
        %v2126 = vand.u32 2147483647, %v1883
        %vm2127 = vcmp.lt.f32.partialorder %v2126, 0.0004427343
        %v2128 = vsel %vm2127, %v2125, %v2122
        %v2129 = vadd.f32 %v1885, 1.0
        %v2130 = vlog2.pop %v2129
        %v2131 = vmul.f32 %v2130, 0.6931472
        %v2132 = vmul.f32 -0.5, %v1885
        %v2133 = vadd.f32 %v2132, 1.0
        %v2134 = vmul.f32 %v2133, %v1885
        %v2135 = vand.u32 2147483647, %v1885
        %vm2136 = vcmp.lt.f32.partialorder %v2135, 0.0004427343
        %v2137 = vsel %vm2136, %v2134, %v2131
        %v2138 = vadd.f32 %v1887, 1.0
        %v2139 = vlog2.pop %v2138
        %v2140 = vmul.f32 %v2139, 0.6931472
        %v2141 = vmul.f32 -0.5, %v1887
        %v2142 = vadd.f32 %v2141, 1.0
        %v2143 = vmul.f32 %v2142, %v1887
        %v2144 = vand.u32 2147483647, %v1887
        %vm2145 = vcmp.lt.f32.partialorder %v2144, 0.0004427343
        %v2146 = vsel %vm2145, %v2143, %v2140
        %v2147 = vadd.f32 %v1889, 1.0
        %v2148 = vlog2.pop %v2147
        %v2149 = vmul.f32 %v2148, 0.6931472
        %v2150 = vmul.f32 -0.5, %v1889
        %v2151 = vadd.f32 %v2150, 1.0
        %v2152 = vmul.f32 %v2151, %v1889
        %v2153 = vand.u32 2147483647, %v1889
        %vm2154 = vcmp.lt.f32.partialorder %v2153, 0.0004427343
        %v2155 = vsel %vm2154, %v2152, %v2149
        %v2156 = vadd.f32 %v1891, 1.0
        %v2157 = vlog2.pop %v2156
        %v2158 = vmul.f32 %v2157, 0.6931472
        %v2159 = vmul.f32 -0.5, %v1891
        %v2160 = vadd.f32 %v2159, 1.0
        %v2161 = vmul.f32 %v2160, %v1891
        %v2162 = vand.u32 2147483647, %v1891
        %vm2163 = vcmp.lt.f32.partialorder %v2162, 0.0004427343
        %v2164 = vsel %vm2163, %v2161, %v2158
        %v2165 = vadd.f32 %v1893, 1.0
        %v2166 = vlog2.pop %v2165
        %v2167 = vmul.f32 %v2166, 0.6931472
        %v2168 = vmul.f32 -0.5, %v1893
        %v2169 = vadd.f32 %v2168, 1.0
        %v2170 = vmul.f32 %v2169, %v1893
        %v2171 = vand.u32 2147483647, %v1893
        %vm2172 = vcmp.lt.f32.partialorder %v2171, 0.0004427343
        %v2173 = vsel %vm2172, %v2170, %v2167
        %v2174 = vadd.f32 %v1895, 1.0
        %v2175 = vlog2.pop %v2174
        %v2176 = vmul.f32 %v2175, 0.6931472
        %v2177 = vmul.f32 -0.5, %v1895
        %v2178 = vadd.f32 %v2177, 1.0
        %v2179 = vmul.f32 %v2178, %v1895
        %v2180 = vand.u32 2147483647, %v1895
        %vm2181 = vcmp.lt.f32.partialorder %v2180, 0.0004427343
        %v2182 = vsel %vm2181, %v2179, %v2176
        %v2183 = vadd.f32 %v1897, 1.0
        %v2184 = vlog2.pop %v2183
        %v2185 = vmul.f32 %v2184, 0.6931472
        %v2186 = vmul.f32 -0.5, %v1897
        %v2187 = vadd.f32 %v2186, 1.0
        %v2188 = vmul.f32 %v2187, %v1897
        %v2189 = vand.u32 2147483647, %v1897
        %vm2190 = vcmp.lt.f32.partialorder %v2189, 0.0004427343
        %v2191 = vsel %vm2190, %v2188, %v2185
        %v2192 = vadd.f32 %v1899, 1.0
        %v2193 = vlog2.pop %v2192
        %v2194 = vmul.f32 %v2193, 0.6931472
        %v2195 = vmul.f32 -0.5, %v1899
        %v2196 = vadd.f32 %v2195, 1.0
        %v2197 = vmul.f32 %v2196, %v1899
        %v2198 = vand.u32 2147483647, %v1899
        %vm2199 = vcmp.lt.f32.partialorder %v2198, 0.0004427343
        %v2200 = vsel %vm2199, %v2197, %v2194
        %v2201 = vadd.f32 %v1901, 1.0
        %v2202 = vlog2.pop %v2201
        %v2203 = vmul.f32 %v2202, 0.6931472
        %v2204 = vmul.f32 -0.5, %v1901
        %v2205 = vadd.f32 %v2204, 1.0
        %v2206 = vmul.f32 %v2205, %v1901
        %v2207 = vand.u32 2147483647, %v1901
        %vm2208 = vcmp.lt.f32.partialorder %v2207, 0.0004427343
        %v2209 = vsel %vm2208, %v2206, %v2203
        %v2210 = vadd.f32 %v1903, 1.0
        %v2211 = vlog2.pop %v2210
        %v2212 = vmul.f32 %v2211, 0.6931472
        %v2213 = vmul.f32 -0.5, %v1903
        %v2214 = vadd.f32 %v2213, 1.0
        %v2215 = vmul.f32 %v2214, %v1903
        %v2216 = vand.u32 2147483647, %v1903
        %vm2217 = vcmp.lt.f32.partialorder %v2216, 0.0004427343
        %v2218 = vsel %vm2217, %v2215, %v2212
        %v2219 = vadd.f32 %v1905, 1.0
        %v2220 = vlog2.pop %v2219
        %v2221 = vmul.f32 %v2220, 0.6931472
        %v2222 = vmul.f32 -0.5, %v1905
        %v2223 = vadd.f32 %v2222, 1.0
        %v2224 = vmul.f32 %v2223, %v1905
        %v2225 = vand.u32 2147483647, %v1905
        %vm2226 = vcmp.lt.f32.partialorder %v2225, 0.0004427343
        %v2227 = vsel %vm2226, %v2224, %v2221
        %v2228 = vadd.f32 %v1907, 1.0
        %v2229 = vlog2.pop %v2228
        %v2230 = vmul.f32 %v2229, 0.6931472
        %v2231 = vmul.f32 -0.5, %v1907
        %v2232 = vadd.f32 %v2231, 1.0
        %v2233 = vmul.f32 %v2232, %v1907
        %v2234 = vand.u32 2147483647, %v1907
        %vm2235 = vcmp.lt.f32.partialorder %v2234, 0.0004427343
        %v2236 = vsel %vm2235, %v2233, %v2230
        %v2237 = vadd.f32 %v1909, 1.0
        %v2238 = vlog2.pop %v2237
        %v2239 = vmul.f32 %v2238, 0.6931472
        %v2240 = vmul.f32 -0.5, %v1909
        %v2241 = vadd.f32 %v2240, 1.0
        %v2242 = vmul.f32 %v2241, %v1909
        %v2243 = vand.u32 2147483647, %v1909
        %vm2244 = vcmp.lt.f32.partialorder %v2243, 0.0004427343
        %v2245 = vsel %vm2244, %v2242, %v2239
        %v2246 = vadd.f32 %v1911, 1.0
        %v2247 = vlog2.pop %v2246
        %v2248 = vmul.f32 %v2247, 0.6931472
        %v2249 = vmul.f32 -0.5, %v1911
        %v2250 = vadd.f32 %v2249, 1.0
        %v2251 = vmul.f32 %v2250, %v1911
        %v2252 = vand.u32 2147483647, %v1911
        %vm2253 = vcmp.lt.f32.partialorder %v2252, 0.0004427343
        %v2254 = vsel %vm2253, %v2251, %v2248
        %v2255 = vadd.f32 %v1913, 1.0
        %v2256 = vlog2.pop %v2255
        %v2257 = vmul.f32 %v2256, 0.6931472
        %v2258 = vmul.f32 -0.5, %v1913
        %v2259 = vadd.f32 %v2258, 1.0
        %v2260 = vmul.f32 %v2259, %v1913
        %v2261 = vand.u32 2147483647, %v1913
        %vm2262 = vcmp.lt.f32.partialorder %v2261, 0.0004427343
        %v2263 = vsel %vm2262, %v2260, %v2257
        %v2264 = vadd.f32 %v1915, 1.0
        %v2265 = vlog2.pop %v2264
        %v2266 = vmul.f32 %v2265, 0.6931472
        %v2267 = vmul.f32 -0.5, %v1915
        %v2268 = vadd.f32 %v2267, 1.0
        %v2269 = vmul.f32 %v2268, %v1915
        %v2270 = vand.u32 2147483647, %v1915
        %vm2271 = vcmp.lt.f32.partialorder %v2270, 0.0004427343
        %v2272 = vsel %vm2271, %v2269, %v2266
        %v2273 = vadd.f32 %v1917, 1.0
        %v2274 = vlog2.pop %v2273
        %v2275 = vmul.f32 %v2274, 0.6931472
        %v2276 = vmul.f32 -0.5, %v1917
        %v2277 = vadd.f32 %v2276, 1.0
        %v2278 = vmul.f32 %v2277, %v1917
        %v2279 = vand.u32 2147483647, %v1917
        %vm2280 = vcmp.lt.f32.partialorder %v2279, 0.0004427343
        %v2281 = vsel %vm2280, %v2278, %v2275
        %v2282 = vadd.f32 %v1919, 1.0
        %v2283 = vlog2.pop %v2282
        %v2284 = vmul.f32 %v2283, 0.6931472
        %v2285 = vmul.f32 -0.5, %v1919
        %v2286 = vadd.f32 %v2285, 1.0
        %v2287 = vmul.f32 %v2286, %v1919
        %v2288 = vand.u32 2147483647, %v1919
        %vm2289 = vcmp.lt.f32.partialorder %v2288, 0.0004427343
        %v2290 = vsel %vm2289, %v2287, %v2284
        %v2291 = vadd.f32 %v1921, 1.0
        %v2292 = vlog2.pop %v2291
        %v2293 = vmul.f32 %v2292, 0.6931472
        %v2294 = vmul.f32 -0.5, %v1921
        %v2295 = vadd.f32 %v2294, 1.0
        %v2296 = vmul.f32 %v2295, %v1921
        %v2297 = vand.u32 2147483647, %v1921
        %vm2298 = vcmp.lt.f32.partialorder %v2297, 0.0004427343
        %v2299 = vsel %vm2298, %v2296, %v2293
        %v2300 = vadd.f32 %v1923, 1.0
        %v2301 = vlog2.pop %v2300
        %v2302 = vmul.f32 %v2301, 0.6931472
        %v2303 = vmul.f32 -0.5, %v1923
        %v2304 = vadd.f32 %v2303, 1.0
        %v2305 = vmul.f32 %v2304, %v1923
        %v2306 = vand.u32 2147483647, %v1923
        %vm2307 = vcmp.lt.f32.partialorder %v2306, 0.0004427343
        %v2308 = vsel %vm2307, %v2305, %v2302
        %v2309 = vadd.f32 %v1925, 1.0
        %v2310 = vlog2.pop %v2309
        %v2311 = vmul.f32 %v2310, 0.6931472
        %v2312 = vmul.f32 -0.5, %v1925
        %v2313 = vadd.f32 %v2312, 1.0
        %v2314 = vmul.f32 %v2313, %v1925
        %v2315 = vand.u32 2147483647, %v1925
        %vm2316 = vcmp.lt.f32.partialorder %v2315, 0.0004427343
        %v2317 = vsel %vm2316, %v2314, %v2311
        %v2318 = vadd.f32 %v1927, 1.0
        %v2319 = vlog2.pop %v2318
        %v2320 = vmul.f32 %v2319, 0.6931472
        %v2321 = vmul.f32 -0.5, %v1927
        %v2322 = vadd.f32 %v2321, 1.0
        %v2323 = vmul.f32 %v2322, %v1927
        %v2324 = vand.u32 2147483647, %v1927
        %vm2325 = vcmp.lt.f32.partialorder %v2324, 0.0004427343
        %v2326 = vsel %vm2325, %v2323, %v2320
        %v2327 = vadd.f32 %v1929, 1.0
        %v2328 = vlog2.pop %v2327
        %v2329 = vmul.f32 %v2328, 0.6931472
        %v2330 = vmul.f32 -0.5, %v1929
        %v2331 = vadd.f32 %v2330, 1.0
        %v2332 = vmul.f32 %v2331, %v1929
        %v2333 = vand.u32 2147483647, %v1929
        %vm2334 = vcmp.lt.f32.partialorder %v2333, 0.0004427343
        %v2335 = vsel %vm2334, %v2332, %v2329
        %v2336 = vadd.f32 %v1931, 1.0
        %v2337 = vlog2.pop %v2336
        %v2338 = vmul.f32 %v2337, 0.6931472
        %v2339 = vmul.f32 -0.5, %v1931
        %v2340 = vadd.f32 %v2339, 1.0
        %v2341 = vmul.f32 %v2340, %v1931
        %v2342 = vand.u32 2147483647, %v1931
        %vm2343 = vcmp.lt.f32.partialorder %v2342, 0.0004427343
        %v2344 = vsel %vm2343, %v2341, %v2338
        %v2345 = vadd.f32 %v1933, 1.0
        %v2346 = vlog2.pop %v2345
        %v2347 = vmul.f32 %v2346, 0.6931472
        %v2348 = vmul.f32 -0.5, %v1933
        %v2349 = vadd.f32 %v2348, 1.0
        %v2350 = vmul.f32 %v2349, %v1933
        %v2351 = vand.u32 2147483647, %v1933
        %vm2352 = vcmp.lt.f32.partialorder %v2351, 0.0004427343
        %v2353 = vsel %vm2352, %v2350, %v2347
        %v2354 = vadd.f32 %v1935, 1.0
        %v2355 = vlog2.pop %v2354
        %v2356 = vmul.f32 %v2355, 0.6931472
        %v2357 = vmul.f32 -0.5, %v1935
        %v2358 = vadd.f32 %v2357, 1.0
        %v2359 = vmul.f32 %v2358, %v1935
        %v2360 = vand.u32 2147483647, %v1935
        %vm2361 = vcmp.lt.f32.partialorder %v2360, 0.0004427343
        %v2362 = vsel %vm2361, %v2359, %v2356
        %v2363 = vadd.f32 %v1937, 1.0
        %v2364 = vlog2.pop %v2363
        %v2365 = vmul.f32 %v2364, 0.6931472
        %v2366 = vmul.f32 -0.5, %v1937
        %v2367 = vadd.f32 %v2366, 1.0
        %v2368 = vmul.f32 %v2367, %v1937
        %v2369 = vand.u32 2147483647, %v1937
        %vm2370 = vcmp.lt.f32.partialorder %v2369, 0.0004427343
        %v2371 = vsel %vm2370, %v2368, %v2365
        %v2372 = vadd.f32 %v1939, 1.0
        %v2373 = vlog2.pop %v2372
        %v2374 = vmul.f32 %v2373, 0.6931472
        %v2375 = vmul.f32 -0.5, %v1939
        %v2376 = vadd.f32 %v2375, 1.0
        %v2377 = vmul.f32 %v2376, %v1939
        %v2378 = vand.u32 2147483647, %v1939
        %vm2379 = vcmp.lt.f32.partialorder %v2378, 0.0004427343
        %v2380 = vsel %vm2379, %v2377, %v2374
        %v2381 = vadd.f32 %v1941, 1.0
        %v2382 = vlog2.pop %v2381
        %v2383 = vmul.f32 %v2382, 0.6931472
        %v2384 = vmul.f32 -0.5, %v1941
        %v2385 = vadd.f32 %v2384, 1.0
        %v2386 = vmul.f32 %v2385, %v1941
        %v2387 = vand.u32 2147483647, %v1941
        %vm2388 = vcmp.lt.f32.partialorder %v2387, 0.0004427343
        %v2389 = vsel %vm2388, %v2386, %v2383
        %v2390 = vadd.f32 %v1943, 1.0
        %v2391 = vlog2.pop %v2390
        %v2392 = vmul.f32 %v2391, 0.6931472
        %v2393 = vmul.f32 -0.5, %v1943
        %v2394 = vadd.f32 %v2393, 1.0
        %v2395 = vmul.f32 %v2394, %v1943
        %v2396 = vand.u32 2147483647, %v1943
        %vm2397 = vcmp.lt.f32.partialorder %v2396, 0.0004427343
        %v2398 = vsel %vm2397, %v2395, %v2392
        %v2399 = vadd.f32 %v1945, 1.0
        %v2400 = vlog2.pop %v2399
        %v2401 = vmul.f32 %v2400, 0.6931472
        %v2402 = vmul.f32 -0.5, %v1945
        %v2403 = vadd.f32 %v2402, 1.0
        %v2404 = vmul.f32 %v2403, %v1945
        %v2405 = vand.u32 2147483647, %v1945
        %vm2406 = vcmp.lt.f32.partialorder %v2405, 0.0004427343
        %v2407 = vsel %vm2406, %v2404, %v2401
        %v2408 = vadd.f32 %v1947, 1.0
        %v2409 = vlog2.pop %v2408
        %v2410 = vmul.f32 %v2409, 0.6931472
        %v2411 = vmul.f32 -0.5, %v1947
        %v2412 = vadd.f32 %v2411, 1.0
        %v2413 = vmul.f32 %v2412, %v1947
        %v2414 = vand.u32 2147483647, %v1947
        %vm2415 = vcmp.lt.f32.partialorder %v2414, 0.0004427343
        %v2416 = vsel %vm2415, %v2413, %v2410
        %v2417 = vadd.f32 %v1949, 1.0
        %v2418 = vlog2.pop %v2417
        %v2419 = vmul.f32 %v2418, 0.6931472
        %v2420 = vmul.f32 -0.5, %v1949
        %v2421 = vadd.f32 %v2420, 1.0
        %v2422 = vmul.f32 %v2421, %v1949
        %v2423 = vand.u32 2147483647, %v1949
        %vm2424 = vcmp.lt.f32.partialorder %v2423, 0.0004427343
        %v2425 = vsel %vm2424, %v2422, %v2419
        %v2426 = vadd.f32 %v1951, 1.0
        %v2427 = vlog2.pop %v2426
        %v2428 = vmul.f32 %v2427, 0.6931472
        %v2429 = vmul.f32 -0.5, %v1951
        %v2430 = vadd.f32 %v2429, 1.0
        %v2431 = vmul.f32 %v2430, %v1951
        %v2432 = vand.u32 2147483647, %v1951
        %vm2433 = vcmp.lt.f32.partialorder %v2432, 0.0004427343
        %v2434 = vsel %vm2433, %v2431, %v2428
        %v2435 = vadd.f32 %v1953, 1.0
        %v2436 = vlog2.pop %v2435
        %v2437 = vmul.f32 %v2436, 0.6931472
        %v2438 = vmul.f32 -0.5, %v1953
        %v2439 = vadd.f32 %v2438, 1.0
        %v2440 = vmul.f32 %v2439, %v1953
        %v2441 = vand.u32 2147483647, %v1953
        %vm2442 = vcmp.lt.f32.partialorder %v2441, 0.0004427343
        %v2443 = vsel %vm2442, %v2440, %v2437
        %v2444 = vadd.f32 %v1955, 1.0
        %v2445 = vlog2.pop %v2444
        %v2446 = vmul.f32 %v2445, 0.6931472
        %v2447 = vmul.f32 -0.5, %v1955
        %v2448 = vadd.f32 %v2447, 1.0
        %v2449 = vmul.f32 %v2448, %v1955
        %v2450 = vand.u32 2147483647, %v1955
        %vm2451 = vcmp.lt.f32.partialorder %v2450, 0.0004427343
        %v2452 = vsel %vm2451, %v2449, %v2446
        %v2453 = vadd.f32 %v1957, 1.0
        %v2454 = vlog2.pop %v2453
        %v2455 = vmul.f32 %v2454, 0.6931472
        %v2456 = vmul.f32 -0.5, %v1957
        %v2457 = vadd.f32 %v2456, 1.0
        %v2458 = vmul.f32 %v2457, %v1957
        %v2459 = vand.u32 2147483647, %v1957
        %vm2460 = vcmp.lt.f32.partialorder %v2459, 0.0004427343
        %v2461 = vsel %vm2460, %v2458, %v2455
        %v2462 = vadd.f32 %v1959, 1.0
        %v2463 = vlog2.pop %v2462
        %v2464 = vmul.f32 %v2463, 0.6931472
        %v2465 = vmul.f32 -0.5, %v1959
        %v2466 = vadd.f32 %v2465, 1.0
        %v2467 = vmul.f32 %v2466, %v1959
        %v2468 = vand.u32 2147483647, %v1959
        %vm2469 = vcmp.lt.f32.partialorder %v2468, 0.0004427343
        %v2470 = vsel %vm2469, %v2467, %v2464
        %v2471 = vadd.f32 %v1961, 1.0
        %v2472 = vlog2.pop %v2471
        %v2473 = vmul.f32 %v2472, 0.6931472
        %v2474 = vmul.f32 -0.5, %v1961
        %v2475 = vadd.f32 %v2474, 1.0
        %v2476 = vmul.f32 %v2475, %v1961
        %v2477 = vand.u32 2147483647, %v1961
        %vm2478 = vcmp.lt.f32.partialorder %v2477, 0.0004427343
        %v2479 = vsel %vm2478, %v2476, %v2473
        %v2480 = vadd.f32 %v1963, 1.0
        %v2481 = vlog2.pop %v2480
        %v2482 = vmul.f32 %v2481, 0.6931472
        %v2483 = vmul.f32 -0.5, %v1963
        %v2484 = vadd.f32 %v2483, 1.0
        %v2485 = vmul.f32 %v2484, %v1963
        %v2486 = vand.u32 2147483647, %v1963
        %vm2487 = vcmp.lt.f32.partialorder %v2486, 0.0004427343
        %v2488 = vsel %vm2487, %v2485, %v2482
        %v2489 = vadd.f32 %v1965, 1.0
        %v2490 = vlog2.pop %v2489
        %v2491 = vmul.f32 %v2490, 0.6931472
        %v2492 = vmul.f32 -0.5, %v1965
        %v2493 = vadd.f32 %v2492, 1.0
        %v2494 = vmul.f32 %v2493, %v1965
        %v2495 = vand.u32 2147483647, %v1965
        %vm2496 = vcmp.lt.f32.partialorder %v2495, 0.0004427343
        %v2497 = vsel %vm2496, %v2494, %v2491
        %v2498 = vadd.f32 %v1967, 1.0
        %v2499 = vlog2.pop %v2498
        %v2500 = vmul.f32 %v2499, 0.6931472
        %v2501 = vmul.f32 -0.5, %v1967
        %v2502 = vadd.f32 %v2501, 1.0
        %v2503 = vmul.f32 %v2502, %v1967
        %v2504 = vand.u32 2147483647, %v1967
        %vm2505 = vcmp.lt.f32.partialorder %v2504, 0.0004427343
        %v2506 = vsel %vm2505, %v2503, %v2500
        %v2507 = vadd.f32 %v1969, 1.0
        %v2508 = vlog2.pop %v2507
        %v2509 = vmul.f32 %v2508, 0.6931472
        %v2510 = vmul.f32 -0.5, %v1969
        %v2511 = vadd.f32 %v2510, 1.0
        %v2512 = vmul.f32 %v2511, %v1969
        %v2513 = vand.u32 2147483647, %v1969
        %vm2514 = vcmp.lt.f32.partialorder %v2513, 0.0004427343
        %v2515 = vsel %vm2514, %v2512, %v2509
        %v2516 = vadd.f32 %v1971, 1.0
        %v2517 = vlog2.pop %v2516
        %v2518 = vmul.f32 %v2517, 0.6931472
        %v2519 = vmul.f32 -0.5, %v1971
        %v2520 = vadd.f32 %v2519, 1.0
        %v2521 = vmul.f32 %v2520, %v1971
        %v2522 = vand.u32 2147483647, %v1971
        %vm2523 = vcmp.lt.f32.partialorder %v2522, 0.0004427343
        %v2524 = vsel %vm2523, %v2521, %v2518
        %v2525 = vadd.f32 %v1973, 1.0
        %v2526 = vlog2.pop %v2525
        %v2527 = vmul.f32 %v2526, 0.6931472
        %v2528 = vmul.f32 -0.5, %v1973
        %v2529 = vadd.f32 %v2528, 1.0
        %v2530 = vmul.f32 %v2529, %v1973
        %v2531 = vand.u32 2147483647, %v1973
        %vm2532 = vcmp.lt.f32.partialorder %v2531, 0.0004427343
        %v2533 = vsel %vm2532, %v2530, %v2527
        %v2534 = vadd.f32 %v1975, 1.0
        %v2535 = vlog2.pop %v2534
        %v2536 = vmul.f32 %v2535, 0.6931472
        %v2537 = vmul.f32 -0.5, %v1975
        %v2538 = vadd.f32 %v2537, 1.0
        %v2539 = vmul.f32 %v2538, %v1975
        %v2540 = vand.u32 2147483647, %v1975
        %vm2541 = vcmp.lt.f32.partialorder %v2540, 0.0004427343
        %v2542 = vsel %vm2541, %v2539, %v2536
        %v2543 = vadd.f32 %v1977, 1.0
        %v2544 = vlog2.pop %v2543
        %v2545 = vmul.f32 %v2544, 0.6931472
        %v2546 = vmul.f32 -0.5, %v1977
        %v2547 = vadd.f32 %v2546, 1.0
        %v2548 = vmul.f32 %v2547, %v1977
        %v2549 = vand.u32 2147483647, %v1977
        %vm2550 = vcmp.lt.f32.partialorder %v2549, 0.0004427343
        %v2551 = vsel %vm2550, %v2548, %v2545
        %v2552 = vadd.f32 %v1979, 1.0
        %v2553 = vlog2.pop %v2552
        %v2554 = vmul.f32 %v2553, 0.6931472
        %v2555 = vmul.f32 -0.5, %v1979
        %v2556 = vadd.f32 %v2555, 1.0
        %v2557 = vmul.f32 %v2556, %v1979
        %v2558 = vand.u32 2147483647, %v1979
        %vm2559 = vcmp.lt.f32.partialorder %v2558, 0.0004427343
        %v2560 = vsel %vm2559, %v2557, %v2554
        %v2561 = vadd.f32 %v1981, 1.0
        %v2562 = vlog2.pop %v2561
        %v2563 = vmul.f32 %v2562, 0.6931472
        %v2564 = vmul.f32 -0.5, %v1981
        %v2565 = vadd.f32 %v2564, 1.0
        %v2566 = vmul.f32 %v2565, %v1981
        %v2567 = vand.u32 2147483647, %v1981
        %vm2568 = vcmp.lt.f32.partialorder %v2567, 0.0004427343
        %v2569 = vsel %vm2568, %v2566, %v2563
        %v2570 = vadd.f32 %v1983, 1.0
        %v2571 = vlog2.pop %v2570
        %v2572 = vmul.f32 %v2571, 0.6931472
        %v2573 = vmul.f32 -0.5, %v1983
        %v2574 = vadd.f32 %v2573, 1.0
        %v2575 = vmul.f32 %v2574, %v1983
        %v2576 = vand.u32 2147483647, %v1983
        %vm2577 = vcmp.lt.f32.partialorder %v2576, 0.0004427343
        %v2578 = vsel %vm2577, %v2575, %v2572
        %v2579 = vadd.f32 %v1985, 1.0
        %v2580 = vlog2.pop %v2579
        %v2581 = vmul.f32 %v2580, 0.6931472
        %v2582 = vmul.f32 -0.5, %v1985
        %v2583 = vadd.f32 %v2582, 1.0
        %v2584 = vmul.f32 %v2583, %v1985
        %v2585 = vand.u32 2147483647, %v1985
        %vm2586 = vcmp.lt.f32.partialorder %v2585, 0.0004427343
        %v2587 = vsel %vm2586, %v2584, %v2581
        %v2588 = vadd.f32 %v1987, 1.0
        %v2589 = vlog2.pop %v2588
        %v2590 = vmul.f32 %v2589, 0.6931472
        %v2591 = vmul.f32 -0.5, %v1987
        %v2592 = vadd.f32 %v2591, 1.0
        %v2593 = vmul.f32 %v2592, %v1987
        %v2594 = vand.u32 2147483647, %v1987
        %vm2595 = vcmp.lt.f32.partialorder %v2594, 0.0004427343
        %v2596 = vsel %vm2595, %v2593, %v2590
        %v2597 = vadd.f32 %v1989, 1.0
        %v2598 = vlog2.pop %v2597
        %v2599 = vmul.f32 %v2598, 0.6931472
        %v2600 = vmul.f32 -0.5, %v1989
        %v2601 = vadd.f32 %v2600, 1.0
        %v2602 = vmul.f32 %v2601, %v1989
        %v2603 = vand.u32 2147483647, %v1989
        %vm2604 = vcmp.lt.f32.partialorder %v2603, 0.0004427343
        %v2605 = vsel %vm2604, %v2602, %v2599
        %v2606 = vadd.f32 %v1991, 1.0
        %v2607 = vlog2.pop %v2606
        %v2608 = vmul.f32 %v2607, 0.6931472
        %v2609 = vmul.f32 -0.5, %v1991
        %v2610 = vadd.f32 %v2609, 1.0
        %v2611 = vmul.f32 %v2610, %v1991
        %v2612 = vand.u32 2147483647, %v1991
        %vm2613 = vcmp.lt.f32.partialorder %v2612, 0.0004427343
        %v2614 = vsel %vm2613, %v2611, %v2608
        %v2615 = vadd.f32 %v1993, 1.0
        %v2616 = vlog2.pop %v2615
        %v2617 = vmul.f32 %v2616, 0.6931472
        %v2618 = vmul.f32 -0.5, %v1993
        %v2619 = vadd.f32 %v2618, 1.0
        %v2620 = vmul.f32 %v2619, %v1993
        %v2621 = vand.u32 2147483647, %v1993
        %vm2622 = vcmp.lt.f32.partialorder %v2621, 0.0004427343
        %v2623 = vsel %vm2622, %v2620, %v2617
        %v2624 = vadd.f32 %v1995, 1.0
        %v2625 = vlog2.pop %v2624
        %v2626 = vmul.f32 %v2625, 0.6931472
        %v2627 = vmul.f32 -0.5, %v1995
        %v2628 = vadd.f32 %v2627, 1.0
        %v2629 = vmul.f32 %v2628, %v1995
        %v2630 = vand.u32 2147483647, %v1995
        %vm2631 = vcmp.lt.f32.partialorder %v2630, 0.0004427343
        %v2632 = vsel %vm2631, %v2629, %v2626
        %v2633 = vadd.f32 %v1997, 1.0
        %v2634 = vlog2.pop %v2633
        %v2635 = vmul.f32 %v2634, 0.6931472
        %v2636 = vmul.f32 -0.5, %v1997
        %v2637 = vadd.f32 %v2636, 1.0
        %v2638 = vmul.f32 %v2637, %v1997
        %v2639 = vand.u32 2147483647, %v1997
        %vm2640 = vcmp.lt.f32.partialorder %v2639, 0.0004427343
        %v2641 = vsel %vm2640, %v2638, %v2635
        %v2642 = vadd.f32 %v1999, 1.0
        %v2643 = vlog2.pop %v2642
        %v2644 = vmul.f32 %v2643, 0.6931472
        %v2645 = vmul.f32 -0.5, %v1999
        %v2646 = vadd.f32 %v2645, 1.0
        %v2647 = vmul.f32 %v2646, %v1999
        %v2648 = vand.u32 2147483647, %v1999
        %vm2649 = vcmp.lt.f32.partialorder %v2648, 0.0004427343
        %v2650 = vsel %vm2649, %v2647, %v2644
        %v2651 = vadd.f32 %v2001, 1.0
        %v2652 = vlog2.pop %v2651
        %v2653 = vmul.f32 %v2652, 0.6931472
        %v2654 = vmul.f32 -0.5, %v2001
        %v2655 = vadd.f32 %v2654, 1.0
        %v2656 = vmul.f32 %v2655, %v2001
        %v2657 = vand.u32 2147483647, %v2001
        %vm2658 = vcmp.lt.f32.partialorder %v2657, 0.0004427343
        %v2659 = vsel %vm2658, %v2656, %v2653
        %v2660 = vadd.f32 %v2003, 1.0
        %v2661 = vlog2.pop %v2660
        %v2662 = vmul.f32 %v2661, 0.6931472
        %v2663 = vmul.f32 -0.5, %v2003
        %v2664 = vadd.f32 %v2663, 1.0
        %v2665 = vmul.f32 %v2664, %v2003
        %v2666 = vand.u32 2147483647, %v2003
        %vm2667 = vcmp.lt.f32.partialorder %v2666, 0.0004427343
        %v2668 = vsel %vm2667, %v2665, %v2662
        %v2669 = vadd.f32 %v2005, 1.0
        %v2670 = vlog2.pop %v2669
        %v2671 = vmul.f32 %v2670, 0.6931472
        %v2672 = vmul.f32 -0.5, %v2005
        %v2673 = vadd.f32 %v2672, 1.0
        %v2674 = vmul.f32 %v2673, %v2005
        %v2675 = vand.u32 2147483647, %v2005
        %vm2676 = vcmp.lt.f32.partialorder %v2675, 0.0004427343
        %v2677 = vsel %vm2676, %v2674, %v2671
        %v2678 = vadd.f32 %v2007, 1.0
        %v2679 = vlog2.pop %v2678
        %v2680 = vmul.f32 %v2679, 0.6931472
        %v2681 = vmul.f32 -0.5, %v2007
        %v2682 = vadd.f32 %v2681, 1.0
        %v2683 = vmul.f32 %v2682, %v2007
        %v2684 = vand.u32 2147483647, %v2007
        %vm2685 = vcmp.lt.f32.partialorder %v2684, 0.0004427343
        %v2686 = vsel %vm2685, %v2683, %v2680
        %v2687 = vadd.f32 %v2009, 1.0
        %v2688 = vlog2.pop %v2687
        %v2689 = vmul.f32 %v2688, 0.6931472
        %v2690 = vmul.f32 -0.5, %v2009
        %v2691 = vadd.f32 %v2690, 1.0
        %v2692 = vmul.f32 %v2691, %v2009
        %v2693 = vand.u32 2147483647, %v2009
        %vm2694 = vcmp.lt.f32.partialorder %v2693, 0.0004427343
        %v2695 = vsel %vm2694, %v2692, %v2689
        %v2696 = vadd.f32 %v2011, 1.0
        %v2697 = vlog2.pop %v2696
        %v2698 = vmul.f32 %v2697, 0.6931472
        %v2699 = vmul.f32 -0.5, %v2011
        %v2700 = vadd.f32 %v2699, 1.0
        %v2701 = vmul.f32 %v2700, %v2011
        %v2702 = vand.u32 2147483647, %v2011
        %vm2703 = vcmp.lt.f32.partialorder %v2702, 0.0004427343
        %v2704 = vsel %vm2703, %v2701, %v2698
        %v2705 = vadd.f32 %v2013, 1.0
        %v2706 = vlog2.pop %v2705
        %v2707 = vmul.f32 %v2706, 0.6931472
        %v2708 = vmul.f32 -0.5, %v2013
        %v2709 = vadd.f32 %v2708, 1.0
        %v2710 = vmul.f32 %v2709, %v2013
        %v2711 = vand.u32 2147483647, %v2013
        %vm2712 = vcmp.lt.f32.partialorder %v2711, 0.0004427343
        %v2713 = vsel %vm2712, %v2710, %v2707
        %v2714 = vadd.f32 %v2015, 1.0
        %v2715 = vlog2.pop %v2714
        %v2716 = vmul.f32 %v2715, 0.6931472
        %v2717 = vmul.f32 -0.5, %v2015
        %v2718 = vadd.f32 %v2717, 1.0
        %v2719 = vmul.f32 %v2718, %v2015
        %v2720 = vand.u32 2147483647, %v2015
        %vm2721 = vcmp.lt.f32.partialorder %v2720, 0.0004427343
        %v2722 = vsel %vm2721, %v2719, %v2716
        %v2723 = vadd.f32 %v2017, 1.0
        %v2724 = vlog2.pop %v2723
        %v2725 = vmul.f32 %v2724, 0.6931472
        %v2726 = vmul.f32 -0.5, %v2017
        %v2727 = vadd.f32 %v2726, 1.0
        %v2728 = vmul.f32 %v2727, %v2017
        %v2729 = vand.u32 2147483647, %v2017
        %vm2730 = vcmp.lt.f32.partialorder %v2729, 0.0004427343
        %v2731 = vsel %vm2730, %v2728, %v2725
        %v2732 = vadd.f32 %v2019, 1.0
        %v2733 = vlog2.pop %v2732
        %v2734 = vmul.f32 %v2733, 0.6931472
        %v2735 = vmul.f32 -0.5, %v2019
        %v2736 = vadd.f32 %v2735, 1.0
        %v2737 = vmul.f32 %v2736, %v2019
        %v2738 = vand.u32 2147483647, %v2019
        %vm2739 = vcmp.lt.f32.partialorder %v2738, 0.0004427343
        %v2740 = vsel %vm2739, %v2737, %v2734
        %v2741 = vadd.f32 %v2021, 1.0
        %v2742 = vlog2.pop %v2741
        %v2743 = vmul.f32 %v2742, 0.6931472
        %v2744 = vmul.f32 -0.5, %v2021
        %v2745 = vadd.f32 %v2744, 1.0
        %v2746 = vmul.f32 %v2745, %v2021
        %v2747 = vand.u32 2147483647, %v2021
        %vm2748 = vcmp.lt.f32.partialorder %v2747, 0.0004427343
        %v2749 = vsel %vm2748, %v2746, %v2743
        %v2750 = vadd.f32 %v2023, 1.0
        %v2751 = vlog2.pop %v2750
        %v2752 = vmul.f32 %v2751, 0.6931472
        %v2753 = vmul.f32 -0.5, %v2023
        %v2754 = vadd.f32 %v2753, 1.0
        %v2755 = vmul.f32 %v2754, %v2023
        %v2756 = vand.u32 2147483647, %v2023
        %vm2757 = vcmp.lt.f32.partialorder %v2756, 0.0004427343
        %v2758 = vsel %vm2757, %v2755, %v2752
        %v2759 = vadd.f32 %v2025, 1.0
        %v2760 = vlog2.pop %v2759
        %v2761 = vmul.f32 %v2760, 0.6931472
        %v2762 = vmul.f32 -0.5, %v2025
        %v2763 = vadd.f32 %v2762, 1.0
        %v2764 = vmul.f32 %v2763, %v2025
        %v2765 = vand.u32 2147483647, %v2025
        %vm2766 = vcmp.lt.f32.partialorder %v2765, 0.0004427343
        %v2767 = vsel %vm2766, %v2764, %v2761
        %v2768 = vadd.f32 %v2027, 1.0
        %v2769 = vlog2.pop %v2768
        %v2770 = vmul.f32 %v2769, 0.6931472
        %v2771 = vmul.f32 -0.5, %v2027
        %v2772 = vadd.f32 %v2771, 1.0
        %v2773 = vmul.f32 %v2772, %v2027
        %v2774 = vand.u32 2147483647, %v2027
        %vm2775 = vcmp.lt.f32.partialorder %v2774, 0.0004427343
        %v2776 = vsel %vm2775, %v2773, %v2770
        %v2777 = vadd.f32 %v2029, 1.0
        %v2778 = vlog2.pop %v2777
        %v2779 = vmul.f32 %v2778, 0.6931472
        %v2780 = vmul.f32 -0.5, %v2029
        %v2781 = vadd.f32 %v2780, 1.0
        %v2782 = vmul.f32 %v2781, %v2029
        %v2783 = vand.u32 2147483647, %v2029
        %vm2784 = vcmp.lt.f32.partialorder %v2783, 0.0004427343
        %v2785 = vsel %vm2784, %v2782, %v2779
        %v2786 = vadd.f32 %v2031, 1.0
        %v2787 = vlog2.pop %v2786
        %v2788 = vmul.f32 %v2787, 0.6931472
        %v2789 = vmul.f32 -0.5, %v2031
        %v2790 = vadd.f32 %v2789, 1.0
        %v2791 = vmul.f32 %v2790, %v2031
        %v2792 = vand.u32 2147483647, %v2031
        %vm2793 = vcmp.lt.f32.partialorder %v2792, 0.0004427343
        %v2794 = vsel %vm2793, %v2791, %v2788
        %v2795 = vadd.f32 %v2033, 1.0
        %v2796 = vlog2.pop %v2795
        %v2797 = vmul.f32 %v2796, 0.6931472
        %v2798 = vmul.f32 -0.5, %v2033
        %v2799 = vadd.f32 %v2798, 1.0
        %v2800 = vmul.f32 %v2799, %v2033
        %v2801 = vand.u32 2147483647, %v2033
        %vm2802 = vcmp.lt.f32.partialorder %v2801, 0.0004427343
        %v2803 = vsel %vm2802, %v2800, %v2797
        %v2804 = vadd.f32 %v2035, 1.0
        %v2805 = vlog2.pop %v2804
        %v2806 = vmul.f32 %v2805, 0.6931472
        %v2807 = vmul.f32 -0.5, %v2035
        %v2808 = vadd.f32 %v2807, 1.0
        %v2809 = vmul.f32 %v2808, %v2035
        %v2810 = vand.u32 2147483647, %v2035
        %vm2811 = vcmp.lt.f32.partialorder %v2810, 0.0004427343
        %v2812 = vsel %vm2811, %v2809, %v2806
        %v2813 = vadd.f32 %v2037, 1.0
        %v2814 = vlog2.pop %v2813
        %v2815 = vmul.f32 %v2814, 0.6931472
        %v2816 = vmul.f32 -0.5, %v2037
        %v2817 = vadd.f32 %v2816, 1.0
        %v2818 = vmul.f32 %v2817, %v2037
        %v2819 = vand.u32 2147483647, %v2037
        %vm2820 = vcmp.lt.f32.partialorder %v2819, 0.0004427343
        %v2821 = vsel %vm2820, %v2818, %v2815
        %v2822 = vadd.f32 %v2039, 1.0
        %v2823 = vlog2.pop %v2822
        %v2824 = vmul.f32 %v2823, 0.6931472
        %v2825 = vmul.f32 -0.5, %v2039
        %v2826 = vadd.f32 %v2825, 1.0
        %v2827 = vmul.f32 %v2826, %v2039
        %v2828 = vand.u32 2147483647, %v2039
        %vm2829 = vcmp.lt.f32.partialorder %v2828, 0.0004427343
        %v2830 = vsel %vm2829, %v2827, %v2824
        %v2831 = vadd.f32 %v2041, 1.0
        %v2832 = vlog2.pop %v2831
        %v2833 = vmul.f32 %v2832, 0.6931472
        %v2834 = vmul.f32 -0.5, %v2041
        %v2835 = vadd.f32 %v2834, 1.0
        %v2836 = vmul.f32 %v2835, %v2041
        %v2837 = vand.u32 2147483647, %v2041
        %vm2838 = vcmp.lt.f32.partialorder %v2837, 0.0004427343
        %v2839 = vsel %vm2838, %v2836, %v2833
        %v2840 = vadd.f32 %v2043, 1.0
        %v2841 = vlog2.pop %v2840
        %v2842 = vmul.f32 %v2841, 0.6931472
        %v2843 = vmul.f32 -0.5, %v2043
        %v2844 = vadd.f32 %v2843, 1.0
        %v2845 = vmul.f32 %v2844, %v2043
        %v2846 = vand.u32 2147483647, %v2043
        %vm2847 = vcmp.lt.f32.partialorder %v2846, 0.0004427343
        %v2848 = vsel %vm2847, %v2845, %v2842
        %v2849 = vadd.f32 %v2045, 1.0
        %v2850 = vlog2.pop %v2849
        %v2851 = vmul.f32 %v2850, 0.6931472
        %v2852 = vmul.f32 -0.5, %v2045
        %v2853 = vadd.f32 %v2852, 1.0
        %v2854 = vmul.f32 %v2853, %v2045
        %v2855 = vand.u32 2147483647, %v2045
        %vm2856 = vcmp.lt.f32.partialorder %v2855, 0.0004427343
        %v2857 = vsel %vm2856, %v2854, %v2851
        %v2858 = vadd.f32 %v2047, 1.0
        %v2859 = vlog2.pop %v2858
        %v2860 = vmul.f32 %v2859, 0.6931472
        %v2861 = vmul.f32 -0.5, %v2047
        %v2862 = vadd.f32 %v2861, 1.0
        %v2863 = vmul.f32 %v2862, %v2047
        %v2864 = vand.u32 2147483647, %v2047
        %vm2865 = vcmp.lt.f32.partialorder %v2864, 0.0004427343
        %v2866 = vsel %vm2865, %v2863, %v2860
        %v2867 = vadd.f32 %v2049, 1.0
        %v2868 = vlog2.pop %v2867
        %v2869 = vmul.f32 %v2868, 0.6931472
        %v2870 = vmul.f32 -0.5, %v2049
        %v2871 = vadd.f32 %v2870, 1.0
        %v2872 = vmul.f32 %v2871, %v2049
        %v2873 = vand.u32 2147483647, %v2049
        %vm2874 = vcmp.lt.f32.partialorder %v2873, 0.0004427343
        %v2875 = vsel %vm2874, %v2872, %v2869
        %v2876 = vadd.f32 %v2051, 1.0
        %v2877 = vlog2.pop %v2876
        %v2878 = vmul.f32 %v2877, 0.6931472
        %v2879 = vmul.f32 -0.5, %v2051
        %v2880 = vadd.f32 %v2879, 1.0
        %v2881 = vmul.f32 %v2880, %v2051
        %v2882 = vand.u32 2147483647, %v2051
        %vm2883 = vcmp.lt.f32.partialorder %v2882, 0.0004427343
        %v2884 = vsel %vm2883, %v2881, %v2878
        %v2885 = vadd.f32 %v2053, 1.0
        %v2886 = vlog2.pop %v2885
        %v2887 = vmul.f32 %v2886, 0.6931472
        %v2888 = vmul.f32 -0.5, %v2053
        %v2889 = vadd.f32 %v2888, 1.0
        %v2890 = vmul.f32 %v2889, %v2053
        %v2891 = vand.u32 2147483647, %v2053
        %vm2892 = vcmp.lt.f32.partialorder %v2891, 0.0004427343
        %v2893 = vsel %vm2892, %v2890, %v2887
        %v2894 = vadd.f32 %v2055, 1.0
        %v2895 = vlog2.pop %v2894
        %v2896 = vmul.f32 %v2895, 0.6931472
        %v2897 = vmul.f32 -0.5, %v2055
        %v2898 = vadd.f32 %v2897, 1.0
        %v2899 = vmul.f32 %v2898, %v2055
        %v2900 = vand.u32 2147483647, %v2055
        %vm2901 = vcmp.lt.f32.partialorder %v2900, 0.0004427343
        %v2902 = vsel %vm2901, %v2899, %v2896
        %v2903 = vadd.f32 %v2057, 1.0
        %v2904 = vlog2.pop %v2903
        %v2905 = vmul.f32 %v2904, 0.6931472
        %v2906 = vmul.f32 -0.5, %v2057
        %v2907 = vadd.f32 %v2906, 1.0
        %v2908 = vmul.f32 %v2907, %v2057
        %v2909 = vand.u32 2147483647, %v2057
        %vm2910 = vcmp.lt.f32.partialorder %v2909, 0.0004427343
        %v2911 = vsel %vm2910, %v2908, %v2905
        %v2912 = vadd.f32 %v2059, 1.0
        %v2913 = vlog2.pop %v2912
        %v2914 = vmul.f32 %v2913, 0.6931472
        %v2915 = vmul.f32 -0.5, %v2059
        %v2916 = vadd.f32 %v2915, 1.0
        %v2917 = vmul.f32 %v2916, %v2059
        %v2918 = vand.u32 2147483647, %v2059
        %vm2919 = vcmp.lt.f32.partialorder %v2918, 0.0004427343
        %v2920 = vsel %vm2919, %v2917, %v2914
        %v2921 = vadd.f32 %v2061, 1.0
        %v2922 = vlog2.pop %v2921
        %v2923 = vmul.f32 %v2922, 0.6931472
        %v2924 = vmul.f32 -0.5, %v2061
        %v2925 = vadd.f32 %v2924, 1.0
        %v2926 = vmul.f32 %v2925, %v2061
        %v2927 = vand.u32 2147483647, %v2061
        %vm2928 = vcmp.lt.f32.partialorder %v2927, 0.0004427343
        %v2929 = vsel %vm2928, %v2926, %v2923
        %v2930 = vadd.f32 %v2063, 1.0
        %v2931 = vlog2.pop %v2930
        %v2932 = vmul.f32 %v2931, 0.6931472
        %v2933 = vmul.f32 -0.5, %v2063
        %v2934 = vadd.f32 %v2933, 1.0
        %v2935 = vmul.f32 %v2934, %v2063
        %v2936 = vand.u32 2147483647, %v2063
        %vm2937 = vcmp.lt.f32.partialorder %v2936, 0.0004427343
        %v2938 = vsel %vm2937, %v2935, %v2932
        %v2939 = vadd.f32 %v2065, 1.0
        %v2940 = vlog2.pop %v2939
        %v2941 = vmul.f32 %v2940, 0.6931472
        %v2942 = vmul.f32 -0.5, %v2065
        %v2943 = vadd.f32 %v2942, 1.0
        %v2944 = vmul.f32 %v2943, %v2065
        %v2945 = vand.u32 2147483647, %v2065
        %vm2946 = vcmp.lt.f32.partialorder %v2945, 0.0004427343
        %v2947 = vsel %vm2946, %v2944, %v2941
        %v2948 = vadd.f32 %v2067, 1.0
        %v2949 = vlog2.pop %v2948
        %v2950 = vmul.f32 %v2949, 0.6931472
        %v2951 = vmul.f32 -0.5, %v2067
        %v2952 = vadd.f32 %v2951, 1.0
        %v2953 = vmul.f32 %v2952, %v2067
        %v2954 = vand.u32 2147483647, %v2067
        %vm2955 = vcmp.lt.f32.partialorder %v2954, 0.0004427343
        %v2956 = vsel %vm2955, %v2953, %v2950
        %v2957 = vadd.f32 %v2069, 1.0
        %v2958 = vlog2.pop %v2957
        %v2959 = vmul.f32 %v2958, 0.6931472
        %v2960 = vmul.f32 -0.5, %v2069
        %v2961 = vadd.f32 %v2960, 1.0
        %v2962 = vmul.f32 %v2961, %v2069
        %v2963 = vand.u32 2147483647, %v2069
        %vm2964 = vcmp.lt.f32.partialorder %v2963, 0.0004427343
        %v2965 = vsel %vm2964, %v2962, %v2959
        %v2966 = vadd.f32 %v2071, 1.0
        %v2967 = vlog2.pop %v2966
        %v2968 = vmul.f32 %v2967, 0.6931472
        %v2969 = vmul.f32 -0.5, %v2071
        %v2970 = vadd.f32 %v2969, 1.0
        %v2971 = vmul.f32 %v2970, %v2071
        %v2972 = vand.u32 2147483647, %v2071
        %vm2973 = vcmp.lt.f32.partialorder %v2972, 0.0004427343
        %v2974 = vsel %vm2973, %v2971, %v2968
        %v2975 = vadd.f32 %v2073, 1.0
        %v2976 = vlog2.pop %v2975
        %v2977 = vmul.f32 %v2976, 0.6931472
        %v2978 = vmul.f32 -0.5, %v2073
        %v2979 = vadd.f32 %v2978, 1.0
        %v2980 = vmul.f32 %v2979, %v2073
        %v2981 = vand.u32 2147483647, %v2073
        %vm2982 = vcmp.lt.f32.partialorder %v2981, 0.0004427343
        %v2983 = vsel %vm2982, %v2980, %v2977
        %v2984 = vadd.f32 %v2075, 1.0
        %v2985 = vlog2.pop %v2984
        %v2986 = vmul.f32 %v2985, 0.6931472
        %v2987 = vmul.f32 -0.5, %v2075
        %v2988 = vadd.f32 %v2987, 1.0
        %v2989 = vmul.f32 %v2988, %v2075
        %v2990 = vand.u32 2147483647, %v2075
        %vm2991 = vcmp.lt.f32.partialorder %v2990, 0.0004427343
        %v2992 = vsel %vm2991, %v2989, %v2986
        %v2993 = vadd.f32 %v2077, 1.0
        %v2994 = vlog2.pop %v2993
        %v2995 = vmul.f32 %v2994, 0.6931472
        %v2996 = vmul.f32 -0.5, %v2077
        %v2997 = vadd.f32 %v2996, 1.0
        %v2998 = vmul.f32 %v2997, %v2077
        %v2999 = vand.u32 2147483647, %v2077
        %vm3000 = vcmp.lt.f32.partialorder %v2999, 0.0004427343
        %v3001 = vsel %vm3000, %v2998, %v2995
        %v3002 = vadd.f32 %v2079, 1.0
        %v3003 = vlog2.pop %v3002
        %v3004 = vmul.f32 %v3003, 0.6931472
        %v3005 = vmul.f32 -0.5, %v2079
        %v3006 = vadd.f32 %v3005, 1.0
        %v3007 = vmul.f32 %v3006, %v2079
        %v3008 = vand.u32 2147483647, %v2079
        %vm3009 = vcmp.lt.f32.partialorder %v3008, 0.0004427343
        %v3010 = vsel %vm3009, %v3007, %v3004
        %v3011 = vadd.f32 %v2081, 1.0
        %v3012 = vlog2.pop %v3011
        %v3013 = vmul.f32 %v3012, 0.6931472
        %v3014 = vmul.f32 -0.5, %v2081
        %v3015 = vadd.f32 %v3014, 1.0
        %v3016 = vmul.f32 %v3015, %v2081
        %v3017 = vand.u32 2147483647, %v2081
        %vm3018 = vcmp.lt.f32.partialorder %v3017, 0.0004427343
        %v3019 = vsel %vm3018, %v3016, %v3013
        %v3020 = vadd.f32 %v2083, 1.0
        %v3021 = vlog2.pop %v3020
        %v3022 = vmul.f32 %v3021, 0.6931472
        %v3023 = vmul.f32 -0.5, %v2083
        %v3024 = vadd.f32 %v3023, 1.0
        %v3025 = vmul.f32 %v3024, %v2083
        %v3026 = vand.u32 2147483647, %v2083
        %vm3027 = vcmp.lt.f32.partialorder %v3026, 0.0004427343
        %v3028 = vsel %vm3027, %v3025, %v3022
        %v3029 = vadd.f32 %v2085, 1.0
        %v3030 = vlog2.pop %v3029
        %v3031 = vmul.f32 %v3030, 0.6931472
        %v3032 = vmul.f32 -0.5, %v2085
        %v3033 = vadd.f32 %v3032, 1.0
        %v3034 = vmul.f32 %v3033, %v2085
        %v3035 = vand.u32 2147483647, %v2085
        %vm3036 = vcmp.lt.f32.partialorder %v3035, 0.0004427343
        %v3037 = vsel %vm3036, %v3034, %v3031
        %v3038 = vadd.f32 %v2087, 1.0
        %v3039 = vlog2.pop %v3038
        %v3040 = vmul.f32 %v3039, 0.6931472
        %v3041 = vmul.f32 -0.5, %v2087
        %v3042 = vadd.f32 %v3041, 1.0
        %v3043 = vmul.f32 %v3042, %v2087
        %v3044 = vand.u32 2147483647, %v2087
        %vm3045 = vcmp.lt.f32.partialorder %v3044, 0.0004427343
        %v3046 = vsel %vm3045, %v3043, %v3040
        %v3047 = vadd.f32 %v2089, 1.0
        %v3048 = vlog2.pop %v3047
        %v3049 = vmul.f32 %v3048, 0.6931472
        %v3050 = vmul.f32 -0.5, %v2089
        %v3051 = vadd.f32 %v3050, 1.0
        %v3052 = vmul.f32 %v3051, %v2089
        %v3053 = vand.u32 2147483647, %v2089
        %vm3054 = vcmp.lt.f32.partialorder %v3053, 0.0004427343
        %v3055 = vsel %vm3054, %v3052, %v3049
        %v3056 = vadd.f32 %v2091, 1.0
        %v3057 = vlog2.pop %v3056
        %v3058 = vmul.f32 %v3057, 0.6931472
        %v3059 = vmul.f32 -0.5, %v2091
        %v3060 = vadd.f32 %v3059, 1.0
        %v3061 = vmul.f32 %v3060, %v2091
        %v3062 = vand.u32 2147483647, %v2091
        %vm3063 = vcmp.lt.f32.partialorder %v3062, 0.0004427343
        %v3064 = vsel %vm3063, %v3061, %v3058
        %v3065 = vadd.f32 %v2093, 1.0
        %v3066 = vlog2.pop %v3065
        %v3067 = vmul.f32 %v3066, 0.6931472
        %v3068 = vmul.f32 -0.5, %v2093
        %v3069 = vadd.f32 %v3068, 1.0
        %v3070 = vmul.f32 %v3069, %v2093
        %v3071 = vand.u32 2147483647, %v2093
        %vm3072 = vcmp.lt.f32.partialorder %v3071, 0.0004427343
        %v3073 = vsel %vm3072, %v3070, %v3067
        %v3074 = vadd.f32 %v2095, 1.0
        %v3075 = vlog2.pop %v3074
        %v3076 = vmul.f32 %v3075, 0.6931472
        %v3077 = vmul.f32 -0.5, %v2095
        %v3078 = vadd.f32 %v3077, 1.0
        %v3079 = vmul.f32 %v3078, %v2095
        %v3080 = vand.u32 2147483647, %v2095
        %vm3081 = vcmp.lt.f32.partialorder %v3080, 0.0004427343
        %v3082 = vsel %vm3081, %v3079, %v3076
        %v3083 = vadd.f32 %v2097, 1.0
        %v3084 = vlog2.pop %v3083
        %v3085 = vmul.f32 %v3084, 0.6931472
        %v3086 = vmul.f32 -0.5, %v2097
        %v3087 = vadd.f32 %v3086, 1.0
        %v3088 = vmul.f32 %v3087, %v2097
        %v3089 = vand.u32 2147483647, %v2097
        %vm3090 = vcmp.lt.f32.partialorder %v3089, 0.0004427343
        %v3091 = vsel %vm3090, %v3088, %v3085
        %v3092 = vadd.f32 %v2099, 1.0
        %v3093 = vlog2.pop %v3092
        %v3094 = vmul.f32 %v3093, 0.6931472
        %v3095 = vmul.f32 -0.5, %v2099
        %v3096 = vadd.f32 %v3095, 1.0
        %v3097 = vmul.f32 %v3096, %v2099
        %v3098 = vand.u32 2147483647, %v2099
        %vm3099 = vcmp.lt.f32.partialorder %v3098, 0.0004427343
        %v3100 = vsel %vm3099, %v3097, %v3094
        %v3101 = vadd.f32 %v2101, 1.0
        %v3102 = vlog2.pop %v3101
        %v3103 = vmul.f32 %v3102, 0.6931472
        %v3104 = vmul.f32 -0.5, %v2101
        %v3105 = vadd.f32 %v3104, 1.0
        %v3106 = vmul.f32 %v3105, %v2101
        %v3107 = vand.u32 2147483647, %v2101
        %vm3108 = vcmp.lt.f32.partialorder %v3107, 0.0004427343
        %v3109 = vsel %vm3108, %v3106, %v3103
        %v3110 = vadd.f32 %v1542, %v2110
        %v3111 = vadd.f32 %v1543, %v2119
        %v3112 = vadd.f32 %v1544, %v2128
        %v3113 = vadd.f32 %v1545, %v2137
        %v3114 = vadd.f32 %v1546, %v2146
        %v3115 = vadd.f32 %v1547, %v2155
        %v3116 = vadd.f32 %v1548, %v2164
        %v3117 = vadd.f32 %v1549, %v2173
        %v3118 = vadd.f32 %v1550, %v2182
        %v3119 = vadd.f32 %v1551, %v2191
        %v3120 = vadd.f32 %v1552, %v2200
        %v3121 = vadd.f32 %v1553, %v2209
        %v3122 = vadd.f32 %v1554, %v2218
        %v3123 = vadd.f32 %v1555, %v2227
        %v3124 = vadd.f32 %v1556, %v2236
        %v3125 = vadd.f32 %v1557, %v2245
        %v3126 = vadd.f32 %v1558, %v2254
        %v3127 = vadd.f32 %v1559, %v2263
        %v3128 = vadd.f32 %v1560, %v2272
        %v3129 = vadd.f32 %v1561, %v2281
        %v3130 = vadd.f32 %v1562, %v2290
        %v3131 = vadd.f32 %v1563, %v2299
        %v3132 = vadd.f32 %v1564, %v2308
        %v3133 = vadd.f32 %v1565, %v2317
        %v3134 = vadd.f32 %v1566, %v2326
        %v3135 = vadd.f32 %v1567, %v2335
        %v3136 = vadd.f32 %v1568, %v2344
        %v3137 = vadd.f32 %v1569, %v2353
        %v3138 = vadd.f32 %v1570, %v2362
        %v3139 = vadd.f32 %v1571, %v2371
        %v3140 = vadd.f32 %v1572, %v2380
        %v3141 = vadd.f32 %v1573, %v2389
        %v3142 = vadd.f32 %v1574, %v2398
        %v3143 = vadd.f32 %v1575, %v2407
        %v3144 = vadd.f32 %v1576, %v2416
        %v3145 = vadd.f32 %v1577, %v2425
        %v3146 = vadd.f32 %v1578, %v2434
        %v3147 = vadd.f32 %v1579, %v2443
        %v3148 = vadd.f32 %v1580, %v2452
        %v3149 = vadd.f32 %v1581, %v2461
        %v3150 = vadd.f32 %v1582, %v2470
        %v3151 = vadd.f32 %v1583, %v2479
        %v3152 = vadd.f32 %v1584, %v2488
        %v3153 = vadd.f32 %v1585, %v2497
        %v3154 = vadd.f32 %v1586, %v2506
        %v3155 = vadd.f32 %v1587, %v2515
        %v3156 = vadd.f32 %v1588, %v2524
        %v3157 = vadd.f32 %v1589, %v2533
        %v3158 = vadd.f32 %v1590, %v2542
        %v3159 = vadd.f32 %v1591, %v2551
        %v3160 = vadd.f32 %v1592, %v2560
        %v3161 = vadd.f32 %v1593, %v2569
        %v3162 = vadd.f32 %v1594, %v2578
        %v3163 = vadd.f32 %v1595, %v2587
        %v3164 = vadd.f32 %v1596, %v2596
        %v3165 = vadd.f32 %v1597, %v2605
        %v3166 = vadd.f32 %v1598, %v2614
        %v3167 = vadd.f32 %v1599, %v2623
        %v3168 = vadd.f32 %v1600, %v2632
        %v3169 = vadd.f32 %v1601, %v2641
        %v3170 = vadd.f32 %v1602, %v2650
        %v3171 = vadd.f32 %v1603, %v2659
        %v3172 = vadd.f32 %v1604, %v2668
        %v3173 = vadd.f32 %v1605, %v2677
        %v3174 = vadd.f32 %v1606, %v2686
        %v3175 = vadd.f32 %v1607, %v2695
        %v3176 = vadd.f32 %v1608, %v2704
        %v3177 = vadd.f32 %v1609, %v2713
        %v3178 = vadd.f32 %v1610, %v2722
        %v3179 = vadd.f32 %v1611, %v2731
        %v3180 = vadd.f32 %v1612, %v2740
        %v3181 = vadd.f32 %v1613, %v2749
        %v3182 = vadd.f32 %v1614, %v2758
        %v3183 = vadd.f32 %v1615, %v2767
        %v3184 = vadd.f32 %v1616, %v2776
        %v3185 = vadd.f32 %v1617, %v2785
        %v3186 = vadd.f32 %v1618, %v2794
        %v3187 = vadd.f32 %v1619, %v2803
        %v3188 = vadd.f32 %v1620, %v2812
        %v3189 = vadd.f32 %v1621, %v2821
        %v3190 = vadd.f32 %v1622, %v2830
        %v3191 = vadd.f32 %v1623, %v2839
        %v3192 = vadd.f32 %v1624, %v2848
        %v3193 = vadd.f32 %v1625, %v2857
        %v3194 = vadd.f32 %v1626, %v2866
        %v3195 = vadd.f32 %v1627, %v2875
        %v3196 = vadd.f32 %v1628, %v2884
        %v3197 = vadd.f32 %v1629, %v2893
        %v3198 = vadd.f32 %v1630, %v2902
        %v3199 = vadd.f32 %v1631, %v2911
        %v3200 = vadd.f32 %v1632, %v2920
        %v3201 = vadd.f32 %v1633, %v2929
        %v3202 = vadd.f32 %v1634, %v2938
        %v3203 = vadd.f32 %v1635, %v2947
        %v3204 = vadd.f32 %v1636, %v2956
        %v3205 = vadd.f32 %v1637, %v2965
        %v3206 = vadd.f32 %v1638, %v2974
        %v3207 = vadd.f32 %v1639, %v2983
        %v3208 = vadd.f32 %v1640, %v2992
        %v3209 = vadd.f32 %v1641, %v3001
        %v3210 = vadd.f32 %v1642, %v3010
        %v3211 = vadd.f32 %v1643, %v3019
        %v3212 = vadd.f32 %v1644, %v3028
        %v3213 = vadd.f32 %v1645, %v3037
        %v3214 = vadd.f32 %v1646, %v3046
        %v3215 = vadd.f32 %v1647, %v3055
        %v3216 = vadd.f32 %v1648, %v3064
        %v3217 = vadd.f32 %v1649, %v3073
        %v3218 = vadd.f32 %v1650, %v3082
        %v3219 = vadd.f32 %v1651, %v3091
        %v3220 = vadd.f32 %v1652, %v3100
        %v3221 = vadd.f32 %v1653, %v3109
        %v3222 = vsub.f32 %v3110, 0.6931472
        %v3223 = vsub.f32 %v3111, 0.6931472
        %v3224 = vsub.f32 %v3112, 0.6931472
        %v3225 = vsub.f32 %v3113, 0.6931472
        %v3226 = vsub.f32 %v3114, 0.6931472
        %v3227 = vsub.f32 %v3115, 0.6931472
        %v3228 = vsub.f32 %v3116, 0.6931472
        %v3229 = vsub.f32 %v3117, 0.6931472
        %v3230 = vsub.f32 %v3118, 0.6931472
        %v3231 = vsub.f32 %v3119, 0.6931472
        %v3232 = vsub.f32 %v3120, 0.6931472
        %v3233 = vsub.f32 %v3121, 0.6931472
        %v3234 = vsub.f32 %v3122, 0.6931472
        %v3235 = vsub.f32 %v3123, 0.6931472
        %v3236 = vsub.f32 %v3124, 0.6931472
        %v3237 = vsub.f32 %v3125, 0.6931472
        %v3238 = vsub.f32 %v3126, 0.6931472
        %v3239 = vsub.f32 %v3127, 0.6931472
        %v3240 = vsub.f32 %v3128, 0.6931472
        %v3241 = vsub.f32 %v3129, 0.6931472
        %v3242 = vsub.f32 %v3130, 0.6931472
        %v3243 = vsub.f32 %v3131, 0.6931472
        %v3244 = vsub.f32 %v3132, 0.6931472
        %v3245 = vsub.f32 %v3133, 0.6931472
        %v3246 = vsub.f32 %v3134, 0.6931472
        %v3247 = vsub.f32 %v3135, 0.6931472
        %v3248 = vsub.f32 %v3136, 0.6931472
        %v3249 = vsub.f32 %v3137, 0.6931472
        %v3250 = vsub.f32 %v3138, 0.6931472
        %v3251 = vsub.f32 %v3139, 0.6931472
        %v3252 = vsub.f32 %v3140, 0.6931472
        %v3253 = vsub.f32 %v3141, 0.6931472
        %v3254 = vsub.f32 %v3142, 0.6931472
        %v3255 = vsub.f32 %v3143, 0.6931472
        %v3256 = vsub.f32 %v3144, 0.6931472
        %v3257 = vsub.f32 %v3145, 0.6931472
        %v3258 = vsub.f32 %v3146, 0.6931472
        %v3259 = vsub.f32 %v3147, 0.6931472
        %v3260 = vsub.f32 %v3148, 0.6931472
        %v3261 = vsub.f32 %v3149, 0.6931472
        %v3262 = vsub.f32 %v3150, 0.6931472
        %v3263 = vsub.f32 %v3151, 0.6931472
        %v3264 = vsub.f32 %v3152, 0.6931472
        %v3265 = vsub.f32 %v3153, 0.6931472
        %v3266 = vsub.f32 %v3154, 0.6931472
        %v3267 = vsub.f32 %v3155, 0.6931472
        %v3268 = vsub.f32 %v3156, 0.6931472
        %v3269 = vsub.f32 %v3157, 0.6931472
        %v3270 = vsub.f32 %v3158, 0.6931472
        %v3271 = vsub.f32 %v3159, 0.6931472
        %v3272 = vsub.f32 %v3160, 0.6931472
        %v3273 = vsub.f32 %v3161, 0.6931472
        %v3274 = vsub.f32 %v3162, 0.6931472
        %v3275 = vsub.f32 %v3163, 0.6931472
        %v3276 = vsub.f32 %v3164, 0.6931472
        %v3277 = vsub.f32 %v3165, 0.6931472
        %v3278 = vsub.f32 %v3166, 0.6931472
        %v3279 = vsub.f32 %v3167, 0.6931472
        %v3280 = vsub.f32 %v3168, 0.6931472
        %v3281 = vsub.f32 %v3169, 0.6931472
        %v3282 = vsub.f32 %v3170, 0.6931472
        %v3283 = vsub.f32 %v3171, 0.6931472
        %v3284 = vsub.f32 %v3172, 0.6931472
        %v3285 = vsub.f32 %v3173, 0.6931472
        %v3286 = vsub.f32 %v3174, 0.6931472
        %v3287 = vsub.f32 %v3175, 0.6931472
        %v3288 = vsub.f32 %v3176, 0.6931472
        %v3289 = vsub.f32 %v3177, 0.6931472
        %v3290 = vsub.f32 %v3178, 0.6931472
        %v3291 = vsub.f32 %v3179, 0.6931472
        %v3292 = vsub.f32 %v3180, 0.6931472
        %v3293 = vsub.f32 %v3181, 0.6931472
        %v3294 = vsub.f32 %v3182, 0.6931472
        %v3295 = vsub.f32 %v3183, 0.6931472
        %v3296 = vsub.f32 %v3184, 0.6931472
        %v3297 = vsub.f32 %v3185, 0.6931472
        %v3298 = vsub.f32 %v3186, 0.6931472
        %v3299 = vsub.f32 %v3187, 0.6931472
        %v3300 = vsub.f32 %v3188, 0.6931472
        %v3301 = vsub.f32 %v3189, 0.6931472
        %v3302 = vsub.f32 %v3190, 0.6931472
        %v3303 = vsub.f32 %v3191, 0.6931472
        %v3304 = vsub.f32 %v3192, 0.6931472
        %v3305 = vsub.f32 %v3193, 0.6931472
        %v3306 = vsub.f32 %v3194, 0.6931472
        %v3307 = vsub.f32 %v3195, 0.6931472
        %v3308 = vsub.f32 %v3196, 0.6931472
        %v3309 = vsub.f32 %v3197, 0.6931472
        %v3310 = vsub.f32 %v3198, 0.6931472
        %v3311 = vsub.f32 %v3199, 0.6931472
        %v3312 = vsub.f32 %v3200, 0.6931472
        %v3313 = vsub.f32 %v3201, 0.6931472
        %v3314 = vsub.f32 %v3202, 0.6931472
        %v3315 = vsub.f32 %v3203, 0.6931472
        %v3316 = vsub.f32 %v3204, 0.6931472
        %v3317 = vsub.f32 %v3205, 0.6931472
        %v3318 = vsub.f32 %v3206, 0.6931472
        %v3319 = vsub.f32 %v3207, 0.6931472
        %v3320 = vsub.f32 %v3208, 0.6931472
        %v3321 = vsub.f32 %v3209, 0.6931472
        %v3322 = vsub.f32 %v3210, 0.6931472
        %v3323 = vsub.f32 %v3211, 0.6931472
        %v3324 = vsub.f32 %v3212, 0.6931472
        %v3325 = vsub.f32 %v3213, 0.6931472
        %v3326 = vsub.f32 %v3214, 0.6931472
        %v3327 = vsub.f32 %v3215, 0.6931472
        %v3328 = vsub.f32 %v3216, 0.6931472
        %v3329 = vsub.f32 %v3217, 0.6931472
        %v3330 = vsub.f32 %v3218, 0.6931472
        %v3331 = vsub.f32 %v3219, 0.6931472
        %v3332 = vsub.f32 %v3220, 0.6931472
        %v3333 = vsub.f32 %v3221, 0.6931472
        %v3334 = vpack.c.bf16 %v3223, %v3222
        %v3335 = vpack.c.bf16 %v3225, %v3224
        %v3336 = vpack.c.bf16 %v3227, %v3226
        %v3337 = vpack.c.bf16 %v3229, %v3228
        %v3338 = vpack.c.bf16 %v3231, %v3230
        %v3339 = vpack.c.bf16 %v3233, %v3232
        %v3340 = vpack.c.bf16 %v3235, %v3234
        %v3341 = vpack.c.bf16 %v3237, %v3236
        %v3342 = vpack.c.bf16 %v3239, %v3238
        %v3343 = vpack.c.bf16 %v3241, %v3240
        %v3344 = vpack.c.bf16 %v3243, %v3242
        %v3345 = vpack.c.bf16 %v3245, %v3244
        %v3346 = vpack.c.bf16 %v3247, %v3246
        %v3347 = vpack.c.bf16 %v3249, %v3248
        %v3348 = vpack.c.bf16 %v3251, %v3250
        %v3349 = vpack.c.bf16 %v3253, %v3252
        %v3350 = vpack.c.bf16 %v3255, %v3254
        %v3351 = vpack.c.bf16 %v3257, %v3256
        %v3352 = vpack.c.bf16 %v3259, %v3258
        %v3353 = vpack.c.bf16 %v3261, %v3260
        %v3354 = vpack.c.bf16 %v3263, %v3262
        %v3355 = vpack.c.bf16 %v3265, %v3264
        %v3356 = vpack.c.bf16 %v3267, %v3266
        %v3357 = vpack.c.bf16 %v3269, %v3268
        %v3358 = vpack.c.bf16 %v3271, %v3270
        %v3359 = vpack.c.bf16 %v3273, %v3272
        %v3360 = vpack.c.bf16 %v3275, %v3274
        %v3361 = vpack.c.bf16 %v3277, %v3276
        %v3362 = vpack.c.bf16 %v3279, %v3278
        %v3363 = vpack.c.bf16 %v3281, %v3280
        %v3364 = vpack.c.bf16 %v3283, %v3282
        %v3365 = vpack.c.bf16 %v3285, %v3284
        %v3366 = vpack.c.bf16 %v3287, %v3286
        %v3367 = vpack.c.bf16 %v3289, %v3288
        %v3368 = vpack.c.bf16 %v3291, %v3290
        %v3369 = vpack.c.bf16 %v3293, %v3292
        %v3370 = vpack.c.bf16 %v3295, %v3294
        %v3371 = vpack.c.bf16 %v3297, %v3296
        %v3372 = vpack.c.bf16 %v3299, %v3298
        %v3373 = vpack.c.bf16 %v3301, %v3300
        %v3374 = vpack.c.bf16 %v3303, %v3302
        %v3375 = vpack.c.bf16 %v3305, %v3304
        %v3376 = vpack.c.bf16 %v3307, %v3306
        %v3377 = vpack.c.bf16 %v3309, %v3308
        %v3378 = vpack.c.bf16 %v3311, %v3310
        %v3379 = vpack.c.bf16 %v3313, %v3312
        %v3380 = vpack.c.bf16 %v3315, %v3314
        %v3381 = vpack.c.bf16 %v3317, %v3316
        %v3382 = vpack.c.bf16 %v3319, %v3318
        %v3383 = vpack.c.bf16 %v3321, %v3320
        %v3384 = vpack.c.bf16 %v3323, %v3322
        %v3385 = vpack.c.bf16 %v3325, %v3324
        %v3386 = vpack.c.bf16 %v3327, %v3326
        %v3387 = vpack.c.bf16 %v3329, %v3328
        %v3388 = vpack.c.bf16 %v3331, %v3330
        %v3389 = vpack.c.bf16 %v3333, %v3332
        %v3390 = vlaneseq
        %v3391 = vshrl.u32 %v3390, 7
        %v3392 = vsub.s32 1, %v3391
        %v3393 = vrot.slane %v601, %v3392
        %v3410 = vunpack.c.l.b16 %v525
        %v3411 = vunpack.c.l.b16 %v526
        %v3412 = vunpack.c.l.b16 %v527
        %v3413 = vunpack.c.l.b16 %v528
        %v3414 = vunpack.c.l.b16 %v529
        %v3415 = vunpack.c.l.b16 %v530
        %v3416 = vunpack.c.l.b16 %v531
        %v3417 = vunpack.c.l.b16 %v532
        %v3418 = vunpack.c.l.b16 %v533
        %v3419 = vunpack.c.l.b16 %v534
        %v3420 = vunpack.c.l.b16 %v535
        %v3421 = vunpack.c.l.b16 %v536
        %v3422 = vunpack.c.l.b16 %v537
        %v3423 = vunpack.c.l.b16 %v538
        %v3424 = vunpack.c.l.b16 %v539
        %v3425 = vunpack.c.l.b16 %v540
        %v3426 = vpack.c.b16 %v3411, %v3410
        %v3427 = vpack.c.b16 %v3413, %v3412
        %v3428 = vpack.c.b16 %v3415, %v3414
        %v3429 = vpack.c.b16 %v3417, %v3416
        %v3430 = vpack.c.b16 %v3419, %v3418
        %v3431 = vpack.c.b16 %v3421, %v3420
        %v3432 = vpack.c.b16 %v3423, %v3422
        %v3433 = vpack.c.b16 %v3425, %v3424
        %3442 = vmatprep.subr.bf16.mxu0 0
        %3443 = vmatpush1.bf16.msra.mxu0 %v3433
        %3444 = vmatprep.subr.bf16.mxu0 0
        %3445 = vmatpush1.bf16.msra.mxu0 %v3432
        %3446 = vmatprep.subr.bf16.mxu0 0
        %3447 = vmatpush1.bf16.msra.mxu0 %v3431
        %3448 = vmatprep.subr.bf16.mxu0 0
        %3449 = vmatpush1.bf16.msra.mxu0 %v3430
        %3450 = vmatprep.subr.bf16.mxu0 0
        %3451 = vmatpush1.bf16.msra.mxu0 %v3429
        %3452 = vmatprep.subr.bf16.mxu0 0
        %3453 = vmatpush1.bf16.msra.mxu0 %v3428
        %3454 = vmatprep.subr.bf16.mxu0 0
        %3455 = vmatpush1.bf16.msra.mxu0 %v3427
        %3456 = vmatprep.subr.bf16.mxu0 0
        %3457 = vmatpush1.bf16.msra.mxu0 %v3426
        %3458 = vmatprep.subr.bf16.mxu0 0
        %3459 = vmatpush2.bf16.msra.mxu0 0
        %3460 = vmatprep.subr.bf16.mxu0 0
        %3461 = vmatpush2.bf16.msra.mxu0 0
        %3462 = vmatprep.subr.bf16.mxu0 0
        %3463 = vmatpush2.bf16.msra.mxu0 0
        %3464 = vmatprep.subr.bf16.mxu0 0
        %3465 = vmatpush2.bf16.msra.mxu0 0
        %3466 = vmatprep.subr.bf16.mxu0 0
        %3467 = vmatpush2.bf16.msra.mxu0 0
        %3468 = vmatprep.subr.bf16.mxu0 0
        %3469 = vmatpush2.bf16.msra.mxu0 0
        %3470 = vmatprep.subr.bf16.mxu0 0
        %3471 = vmatpush2.bf16.msra.mxu0 0
        %3472 = vmatprep.subr.bf16.mxu0 0
        %3473 = vmatpush2.bf16.msra.mxu0 0
        %3474 = vmatprep.mubr.bf16.mxu0 0
        %3475 = vmatmul.mubr.bf16.gmra.mxu0 %v3334
        %v3476 = vpop.f32.mrf.mxu0
        %v3477 = vadd.f32 %v3393, %v3476
        %v3478 = vpop.f32.mrf.mxu0
        %v3479 = vpop.f32.mrf.mxu0
        %v3480 = vadd.f32 %v3393, %v3479
        %v3481 = vpop.f32.mrf.mxu0
        %3482 = vmatprep.mubr.bf16.mxu0 0
        %3483 = vmatmul.mubr.bf16.gmra.mxu0 %v3335
        %v3484 = vpop.f32.mrf.mxu0
        %v3485 = vadd.f32 %v3393, %v3484
        %v3486 = vpop.f32.mrf.mxu0
        %v3487 = vpop.f32.mrf.mxu0
        %v3488 = vadd.f32 %v3393, %v3487
        %v3489 = vpop.f32.mrf.mxu0
        %3490 = vmatprep.mubr.bf16.mxu0 0
        %3491 = vmatmul.mubr.bf16.gmra.mxu0 %v3336
        %v3492 = vpop.f32.mrf.mxu0
        %v3493 = vadd.f32 %v3393, %v3492
        %v3494 = vpop.f32.mrf.mxu0
        %v3495 = vpop.f32.mrf.mxu0
        %v3496 = vadd.f32 %v3393, %v3495
        %v3497 = vpop.f32.mrf.mxu0
        %3498 = vmatprep.mubr.bf16.mxu0 0
        %3499 = vmatmul.mubr.bf16.gmra.mxu0 %v3337
        %v3500 = vpop.f32.mrf.mxu0
        %v3501 = vadd.f32 %v3393, %v3500
        %v3502 = vpop.f32.mrf.mxu0
        %v3503 = vpop.f32.mrf.mxu0
        %v3504 = vadd.f32 %v3393, %v3503
        %v3505 = vpop.f32.mrf.mxu0
        %3506 = vmatprep.mubr.bf16.mxu0 0
        %3507 = vmatmul.mubr.bf16.gmra.mxu0 %v3338
        %v3508 = vpop.f32.mrf.mxu0
        %v3509 = vadd.f32 %v3393, %v3508
        %v3510 = vpop.f32.mrf.mxu0
        %v3511 = vpop.f32.mrf.mxu0
        %v3512 = vadd.f32 %v3393, %v3511
        %v3513 = vpop.f32.mrf.mxu0
        %3514 = vmatprep.mubr.bf16.mxu0 0
        %3515 = vmatmul.mubr.bf16.gmra.mxu0 %v3339
        %v3516 = vpop.f32.mrf.mxu0
        %v3517 = vadd.f32 %v3393, %v3516
        %v3518 = vpop.f32.mrf.mxu0
        %v3519 = vpop.f32.mrf.mxu0
        %v3520 = vadd.f32 %v3393, %v3519
        %v3521 = vpop.f32.mrf.mxu0
        %3522 = vmatprep.mubr.bf16.mxu0 0
        %3523 = vmatmul.mubr.bf16.gmra.mxu0 %v3340
        %v3524 = vpop.f32.mrf.mxu0
        %v3525 = vadd.f32 %v3393, %v3524
        %v3526 = vpop.f32.mrf.mxu0
        %v3527 = vpop.f32.mrf.mxu0
        %v3528 = vadd.f32 %v3393, %v3527
        %v3529 = vpop.f32.mrf.mxu0
        %3530 = vmatprep.mubr.bf16.mxu0 0
        %3531 = vmatmul.mubr.bf16.gmra.mxu0 %v3341
        %v3532 = vpop.f32.mrf.mxu0
        %v3533 = vadd.f32 %v3393, %v3532
        %v3534 = vpop.f32.mrf.mxu0
        %v3535 = vpop.f32.mrf.mxu0
        %v3536 = vadd.f32 %v3393, %v3535
        %v3537 = vpop.f32.mrf.mxu0
        %3538 = vmatprep.mubr.bf16.mxu0 0
        %3539 = vmatmul.mubr.bf16.gmra.mxu0 %v3342
        %v3540 = vpop.f32.mrf.mxu0
        %v3541 = vadd.f32 %v3393, %v3540
        %v3542 = vpop.f32.mrf.mxu0
        %v3543 = vpop.f32.mrf.mxu0
        %v3544 = vadd.f32 %v3393, %v3543
        %v3545 = vpop.f32.mrf.mxu0
        %3546 = vmatprep.mubr.bf16.mxu0 0
        %3547 = vmatmul.mubr.bf16.gmra.mxu0 %v3343
        %v3548 = vpop.f32.mrf.mxu0
        %v3549 = vadd.f32 %v3393, %v3548
        %v3550 = vpop.f32.mrf.mxu0
        %v3551 = vpop.f32.mrf.mxu0
        %v3552 = vadd.f32 %v3393, %v3551
        %v3553 = vpop.f32.mrf.mxu0
        %3554 = vmatprep.mubr.bf16.mxu0 0
        %3555 = vmatmul.mubr.bf16.gmra.mxu0 %v3344
        %v3556 = vpop.f32.mrf.mxu0
        %v3557 = vadd.f32 %v3393, %v3556
        %v3558 = vpop.f32.mrf.mxu0
        %v3559 = vpop.f32.mrf.mxu0
        %v3560 = vadd.f32 %v3393, %v3559
        %v3561 = vpop.f32.mrf.mxu0
        %3562 = vmatprep.mubr.bf16.mxu0 0
        %3563 = vmatmul.mubr.bf16.gmra.mxu0 %v3345
        %v3564 = vpop.f32.mrf.mxu0
        %v3565 = vadd.f32 %v3393, %v3564
        %v3566 = vpop.f32.mrf.mxu0
        %v3567 = vpop.f32.mrf.mxu0
        %v3568 = vadd.f32 %v3393, %v3567
        %v3569 = vpop.f32.mrf.mxu0
        %3570 = vmatprep.mubr.bf16.mxu0 0
        %3571 = vmatmul.mubr.bf16.gmra.mxu0 %v3346
        %v3572 = vpop.f32.mrf.mxu0
        %v3573 = vadd.f32 %v3393, %v3572
        %v3574 = vpop.f32.mrf.mxu0
        %v3575 = vpop.f32.mrf.mxu0
        %v3576 = vadd.f32 %v3393, %v3575
        %v3577 = vpop.f32.mrf.mxu0
        %3578 = vmatprep.mubr.bf16.mxu0 0
        %3579 = vmatmul.mubr.bf16.gmra.mxu0 %v3347
        %v3580 = vpop.f32.mrf.mxu0
        %v3581 = vadd.f32 %v3393, %v3580
        %v3582 = vpop.f32.mrf.mxu0
        %v3583 = vpop.f32.mrf.mxu0
        %v3584 = vadd.f32 %v3393, %v3583
        %v3585 = vpop.f32.mrf.mxu0
        %3586 = vmatprep.mubr.bf16.mxu0 0
        %3587 = vmatmul.mubr.bf16.gmra.mxu0 %v3348
        %v3588 = vpop.f32.mrf.mxu0
        %v3589 = vadd.f32 %v3393, %v3588
        %v3590 = vpop.f32.mrf.mxu0
        %v3591 = vpop.f32.mrf.mxu0
        %v3592 = vadd.f32 %v3393, %v3591
        %v3593 = vpop.f32.mrf.mxu0
        %3594 = vmatprep.mubr.bf16.mxu0 0
        %3595 = vmatmul.mubr.bf16.gmra.mxu0 %v3349
        %v3596 = vpop.f32.mrf.mxu0
        %v3597 = vadd.f32 %v3393, %v3596
        %v3598 = vpop.f32.mrf.mxu0
        %v3599 = vpop.f32.mrf.mxu0
        %v3600 = vadd.f32 %v3393, %v3599
        %v3601 = vpop.f32.mrf.mxu0
        %3602 = vmatprep.mubr.bf16.mxu0 0
        %3603 = vmatmul.mubr.bf16.gmra.mxu0 %v3350
        %v3604 = vpop.f32.mrf.mxu0
        %v3605 = vadd.f32 %v3393, %v3604
        %v3606 = vpop.f32.mrf.mxu0
        %v3607 = vpop.f32.mrf.mxu0
        %v3608 = vadd.f32 %v3393, %v3607
        %v3609 = vpop.f32.mrf.mxu0
        %3610 = vmatprep.mubr.bf16.mxu0 0
        %3611 = vmatmul.mubr.bf16.gmra.mxu0 %v3351
        %v3612 = vpop.f32.mrf.mxu0
        %v3613 = vadd.f32 %v3393, %v3612
        %v3614 = vpop.f32.mrf.mxu0
        %v3615 = vpop.f32.mrf.mxu0
        %v3616 = vadd.f32 %v3393, %v3615
        %v3617 = vpop.f32.mrf.mxu0
        %3618 = vmatprep.mubr.bf16.mxu0 0
        %3619 = vmatmul.mubr.bf16.gmra.mxu0 %v3352
        %v3620 = vpop.f32.mrf.mxu0
        %v3621 = vadd.f32 %v3393, %v3620
        %v3622 = vpop.f32.mrf.mxu0
        %v3623 = vpop.f32.mrf.mxu0
        %v3624 = vadd.f32 %v3393, %v3623
        %v3625 = vpop.f32.mrf.mxu0
        %3626 = vmatprep.mubr.bf16.mxu0 0
        %3627 = vmatmul.mubr.bf16.gmra.mxu0 %v3353
        %v3628 = vpop.f32.mrf.mxu0
        %v3629 = vadd.f32 %v3393, %v3628
        %v3630 = vpop.f32.mrf.mxu0
        %v3631 = vpop.f32.mrf.mxu0
        %v3632 = vadd.f32 %v3393, %v3631
        %v3633 = vpop.f32.mrf.mxu0
        %3634 = vmatprep.mubr.bf16.mxu0 0
        %3635 = vmatmul.mubr.bf16.gmra.mxu0 %v3354
        %v3636 = vpop.f32.mrf.mxu0
        %v3637 = vadd.f32 %v3393, %v3636
        %v3638 = vpop.f32.mrf.mxu0
        %v3639 = vpop.f32.mrf.mxu0
        %v3640 = vadd.f32 %v3393, %v3639
        %v3641 = vpop.f32.mrf.mxu0
        %3642 = vmatprep.mubr.bf16.mxu0 0
        %3643 = vmatmul.mubr.bf16.gmra.mxu0 %v3355
        %v3644 = vpop.f32.mrf.mxu0
        %v3645 = vadd.f32 %v3393, %v3644
        %v3646 = vpop.f32.mrf.mxu0
        %v3647 = vpop.f32.mrf.mxu0
        %v3648 = vadd.f32 %v3393, %v3647
        %v3649 = vpop.f32.mrf.mxu0
        %3650 = vmatprep.mubr.bf16.mxu0 0
        %3651 = vmatmul.mubr.bf16.gmra.mxu0 %v3356
        %v3652 = vpop.f32.mrf.mxu0
        %v3653 = vadd.f32 %v3393, %v3652
        %v3654 = vpop.f32.mrf.mxu0
        %v3655 = vpop.f32.mrf.mxu0
        %v3656 = vadd.f32 %v3393, %v3655
        %v3657 = vpop.f32.mrf.mxu0
        %3658 = vmatprep.mubr.bf16.mxu0 0
        %3659 = vmatmul.mubr.bf16.gmra.mxu0 %v3357
        %v3660 = vpop.f32.mrf.mxu0
        %v3661 = vadd.f32 %v3393, %v3660
        %v3662 = vpop.f32.mrf.mxu0
        %v3663 = vpop.f32.mrf.mxu0
        %v3664 = vadd.f32 %v3393, %v3663
        %v3665 = vpop.f32.mrf.mxu0
        %3666 = vmatprep.mubr.bf16.mxu0 0
        %3667 = vmatmul.mubr.bf16.gmra.mxu0 %v3358
        %v3668 = vpop.f32.mrf.mxu0
        %v3669 = vadd.f32 %v3393, %v3668
        %v3670 = vpop.f32.mrf.mxu0
        %v3671 = vpop.f32.mrf.mxu0
        %v3672 = vadd.f32 %v3393, %v3671
        %v3673 = vpop.f32.mrf.mxu0
        %3674 = vmatprep.mubr.bf16.mxu0 0
        %3675 = vmatmul.mubr.bf16.gmra.mxu0 %v3359
        %v3676 = vpop.f32.mrf.mxu0
        %v3677 = vadd.f32 %v3393, %v3676
        %v3678 = vpop.f32.mrf.mxu0
        %v3679 = vpop.f32.mrf.mxu0
        %v3680 = vadd.f32 %v3393, %v3679
        %v3681 = vpop.f32.mrf.mxu0
        %3682 = vmatprep.mubr.bf16.mxu0 0
        %3683 = vmatmul.mubr.bf16.gmra.mxu0 %v3360
        %v3684 = vpop.f32.mrf.mxu0
        %v3685 = vadd.f32 %v3393, %v3684
        %v3686 = vpop.f32.mrf.mxu0
        %v3687 = vpop.f32.mrf.mxu0
        %v3688 = vadd.f32 %v3393, %v3687
        %v3689 = vpop.f32.mrf.mxu0
        %3690 = vmatprep.mubr.bf16.mxu0 0
        %3691 = vmatmul.mubr.bf16.gmra.mxu0 %v3361
        %v3692 = vpop.f32.mrf.mxu0
        %v3693 = vadd.f32 %v3393, %v3692
        %v3694 = vpop.f32.mrf.mxu0
        %v3695 = vpop.f32.mrf.mxu0
        %v3696 = vadd.f32 %v3393, %v3695
        %v3697 = vpop.f32.mrf.mxu0
        %3698 = vmatprep.mubr.bf16.mxu0 0
        %3699 = vmatmul.mubr.bf16.gmra.mxu0 %v3362
        %v3700 = vpop.f32.mrf.mxu0
        %v3701 = vadd.f32 %v3393, %v3700
        %v3702 = vpop.f32.mrf.mxu0
        %v3703 = vpop.f32.mrf.mxu0
        %v3704 = vadd.f32 %v3393, %v3703
        %v3705 = vpop.f32.mrf.mxu0
        %3706 = vmatprep.mubr.bf16.mxu0 0
        %3707 = vmatmul.mubr.bf16.gmra.mxu0 %v3363
        %v3708 = vpop.f32.mrf.mxu0
        %v3709 = vadd.f32 %v3393, %v3708
        %v3710 = vpop.f32.mrf.mxu0
        %v3711 = vpop.f32.mrf.mxu0
        %v3712 = vadd.f32 %v3393, %v3711
        %v3713 = vpop.f32.mrf.mxu0
        %3714 = vmatprep.mubr.bf16.mxu0 0
        %3715 = vmatmul.mubr.bf16.gmra.mxu0 %v3364
        %v3716 = vpop.f32.mrf.mxu0
        %v3717 = vadd.f32 %v3393, %v3716
        %v3718 = vpop.f32.mrf.mxu0
        %v3719 = vpop.f32.mrf.mxu0
        %v3720 = vadd.f32 %v3393, %v3719
        %v3721 = vpop.f32.mrf.mxu0
        %3722 = vmatprep.mubr.bf16.mxu0 0
        %3723 = vmatmul.mubr.bf16.gmra.mxu0 %v3365
        %v3724 = vpop.f32.mrf.mxu0
        %v3725 = vadd.f32 %v3393, %v3724
        %v3726 = vpop.f32.mrf.mxu0
        %v3727 = vpop.f32.mrf.mxu0
        %v3728 = vadd.f32 %v3393, %v3727
        %v3729 = vpop.f32.mrf.mxu0
        %3730 = vmatprep.mubr.bf16.mxu0 0
        %3731 = vmatmul.mubr.bf16.gmra.mxu0 %v3366
        %v3732 = vpop.f32.mrf.mxu0
        %v3733 = vadd.f32 %v3393, %v3732
        %v3734 = vpop.f32.mrf.mxu0
        %v3735 = vpop.f32.mrf.mxu0
        %v3736 = vadd.f32 %v3393, %v3735
        %v3737 = vpop.f32.mrf.mxu0
        %3738 = vmatprep.mubr.bf16.mxu0 0
        %3739 = vmatmul.mubr.bf16.gmra.mxu0 %v3367
        %v3740 = vpop.f32.mrf.mxu0
        %v3741 = vadd.f32 %v3393, %v3740
        %v3742 = vpop.f32.mrf.mxu0
        %v3743 = vpop.f32.mrf.mxu0
        %v3744 = vadd.f32 %v3393, %v3743
        %v3745 = vpop.f32.mrf.mxu0
        %3746 = vmatprep.mubr.bf16.mxu0 0
        %3747 = vmatmul.mubr.bf16.gmra.mxu0 %v3368
        %v3748 = vpop.f32.mrf.mxu0
        %v3749 = vadd.f32 %v3393, %v3748
        %v3750 = vpop.f32.mrf.mxu0
        %v3751 = vpop.f32.mrf.mxu0
        %v3752 = vadd.f32 %v3393, %v3751
        %v3753 = vpop.f32.mrf.mxu0
        %3754 = vmatprep.mubr.bf16.mxu0 0
        %3755 = vmatmul.mubr.bf16.gmra.mxu0 %v3369
        %v3756 = vpop.f32.mrf.mxu0
        %v3757 = vadd.f32 %v3393, %v3756
        %v3758 = vpop.f32.mrf.mxu0
        %v3759 = vpop.f32.mrf.mxu0
        %v3760 = vadd.f32 %v3393, %v3759
        %v3761 = vpop.f32.mrf.mxu0
        %3762 = vmatprep.mubr.bf16.mxu0 0
        %3763 = vmatmul.mubr.bf16.gmra.mxu0 %v3370
        %v3764 = vpop.f32.mrf.mxu0
        %v3765 = vadd.f32 %v3393, %v3764
        %v3766 = vpop.f32.mrf.mxu0
        %v3767 = vpop.f32.mrf.mxu0
        %v3768 = vadd.f32 %v3393, %v3767
        %v3769 = vpop.f32.mrf.mxu0
        %3770 = vmatprep.mubr.bf16.mxu0 0
        %3771 = vmatmul.mubr.bf16.gmra.mxu0 %v3371
        %v3772 = vpop.f32.mrf.mxu0
        %v3773 = vadd.f32 %v3393, %v3772
        %v3774 = vpop.f32.mrf.mxu0
        %v3775 = vpop.f32.mrf.mxu0
        %v3776 = vadd.f32 %v3393, %v3775
        %v3777 = vpop.f32.mrf.mxu0
        %3778 = vmatprep.mubr.bf16.mxu0 0
        %3779 = vmatmul.mubr.bf16.gmra.mxu0 %v3372
        %v3780 = vpop.f32.mrf.mxu0
        %v3781 = vadd.f32 %v3393, %v3780
        %v3782 = vpop.f32.mrf.mxu0
        %v3783 = vpop.f32.mrf.mxu0
        %v3784 = vadd.f32 %v3393, %v3783
        %v3785 = vpop.f32.mrf.mxu0
        %3786 = vmatprep.mubr.bf16.mxu0 0
        %3787 = vmatmul.mubr.bf16.gmra.mxu0 %v3373
        %v3788 = vpop.f32.mrf.mxu0
        %v3789 = vadd.f32 %v3393, %v3788
        %v3790 = vpop.f32.mrf.mxu0
        %v3791 = vpop.f32.mrf.mxu0
        %v3792 = vadd.f32 %v3393, %v3791
        %v3793 = vpop.f32.mrf.mxu0
        %3794 = vmatprep.mubr.bf16.mxu0 0
        %3795 = vmatmul.mubr.bf16.gmra.mxu0 %v3374
        %v3796 = vpop.f32.mrf.mxu0
        %v3797 = vadd.f32 %v3393, %v3796
        %v3798 = vpop.f32.mrf.mxu0
        %v3799 = vpop.f32.mrf.mxu0
        %v3800 = vadd.f32 %v3393, %v3799
        %v3801 = vpop.f32.mrf.mxu0
        %3802 = vmatprep.mubr.bf16.mxu0 0
        %3803 = vmatmul.mubr.bf16.gmra.mxu0 %v3375
        %v3804 = vpop.f32.mrf.mxu0
        %v3805 = vadd.f32 %v3393, %v3804
        %v3806 = vpop.f32.mrf.mxu0
        %v3807 = vpop.f32.mrf.mxu0
        %v3808 = vadd.f32 %v3393, %v3807
        %v3809 = vpop.f32.mrf.mxu0
        %3810 = vmatprep.mubr.bf16.mxu0 0
        %3811 = vmatmul.mubr.bf16.gmra.mxu0 %v3376
        %v3812 = vpop.f32.mrf.mxu0
        %v3813 = vadd.f32 %v3393, %v3812
        %v3814 = vpop.f32.mrf.mxu0
        %v3815 = vpop.f32.mrf.mxu0
        %v3816 = vadd.f32 %v3393, %v3815
        %v3817 = vpop.f32.mrf.mxu0
        %3818 = vmatprep.mubr.bf16.mxu0 0
        %3819 = vmatmul.mubr.bf16.gmra.mxu0 %v3377
        %v3820 = vpop.f32.mrf.mxu0
        %v3821 = vadd.f32 %v3393, %v3820
        %v3822 = vpop.f32.mrf.mxu0
        %v3823 = vpop.f32.mrf.mxu0
        %v3824 = vadd.f32 %v3393, %v3823
        %v3825 = vpop.f32.mrf.mxu0
        %3826 = vmatprep.mubr.bf16.mxu0 0
        %3827 = vmatmul.mubr.bf16.gmra.mxu0 %v3378
        %v3828 = vpop.f32.mrf.mxu0
        %v3829 = vadd.f32 %v3393, %v3828
        %v3830 = vpop.f32.mrf.mxu0
        %v3831 = vpop.f32.mrf.mxu0
        %v3832 = vadd.f32 %v3393, %v3831
        %v3833 = vpop.f32.mrf.mxu0
        %3834 = vmatprep.mubr.bf16.mxu0 0
        %3835 = vmatmul.mubr.bf16.gmra.mxu0 %v3379
        %v3836 = vpop.f32.mrf.mxu0
        %v3837 = vadd.f32 %v3393, %v3836
        %v3838 = vpop.f32.mrf.mxu0
        %v3839 = vpop.f32.mrf.mxu0
        %v3840 = vadd.f32 %v3393, %v3839
        %v3841 = vpop.f32.mrf.mxu0
        %3842 = vmatprep.mubr.bf16.mxu0 0
        %3843 = vmatmul.mubr.bf16.gmra.mxu0 %v3380
        %v3844 = vpop.f32.mrf.mxu0
        %v3845 = vadd.f32 %v3393, %v3844
        %v3846 = vpop.f32.mrf.mxu0
        %v3847 = vpop.f32.mrf.mxu0
        %v3848 = vadd.f32 %v3393, %v3847
        %v3849 = vpop.f32.mrf.mxu0
        %3850 = vmatprep.mubr.bf16.mxu0 0
        %3851 = vmatmul.mubr.bf16.gmra.mxu0 %v3381
        %v3852 = vpop.f32.mrf.mxu0
        %v3853 = vadd.f32 %v3393, %v3852
        %v3854 = vpop.f32.mrf.mxu0
        %v3855 = vpop.f32.mrf.mxu0
        %v3856 = vadd.f32 %v3393, %v3855
        %v3857 = vpop.f32.mrf.mxu0
        %3858 = vmatprep.mubr.bf16.mxu0 0
        %3859 = vmatmul.mubr.bf16.gmra.mxu0 %v3382
        %v3860 = vpop.f32.mrf.mxu0
        %v3861 = vadd.f32 %v3393, %v3860
        %v3862 = vpop.f32.mrf.mxu0
        %v3863 = vpop.f32.mrf.mxu0
        %v3864 = vadd.f32 %v3393, %v3863
        %v3865 = vpop.f32.mrf.mxu0
        %3866 = vmatprep.mubr.bf16.mxu0 0
        %3867 = vmatmul.mubr.bf16.gmra.mxu0 %v3383
        %v3868 = vpop.f32.mrf.mxu0
        %v3869 = vadd.f32 %v3393, %v3868
        %v3870 = vpop.f32.mrf.mxu0
        %v3871 = vpop.f32.mrf.mxu0
        %v3872 = vadd.f32 %v3393, %v3871
        %v3873 = vpop.f32.mrf.mxu0
        %3874 = vmatprep.mubr.bf16.mxu0 0
        %3875 = vmatmul.mubr.bf16.gmra.mxu0 %v3384
        %v3876 = vpop.f32.mrf.mxu0
        %v3877 = vadd.f32 %v3393, %v3876
        %v3878 = vpop.f32.mrf.mxu0
        %v3879 = vpop.f32.mrf.mxu0
        %v3880 = vadd.f32 %v3393, %v3879
        %v3881 = vpop.f32.mrf.mxu0
        %3882 = vmatprep.mubr.bf16.mxu0 0
        %3883 = vmatmul.mubr.bf16.gmra.mxu0 %v3385
        %v3884 = vpop.f32.mrf.mxu0
        %v3885 = vadd.f32 %v3393, %v3884
        %v3886 = vpop.f32.mrf.mxu0
        %v3887 = vpop.f32.mrf.mxu0
        %v3888 = vadd.f32 %v3393, %v3887
        %v3889 = vpop.f32.mrf.mxu0
        %3890 = vmatprep.mubr.bf16.mxu0 0
        %3891 = vmatmul.mubr.bf16.gmra.mxu0 %v3386
        %v3892 = vpop.f32.mrf.mxu0
        %v3893 = vadd.f32 %v3393, %v3892
        %v3894 = vpop.f32.mrf.mxu0
        %v3895 = vpop.f32.mrf.mxu0
        %v3896 = vadd.f32 %v3393, %v3895
        %v3897 = vpop.f32.mrf.mxu0
        %3898 = vmatprep.mubr.bf16.mxu0 0
        %3899 = vmatmul.mubr.bf16.gmra.mxu0 %v3387
        %v3900 = vpop.f32.mrf.mxu0
        %v3901 = vadd.f32 %v3393, %v3900
        %v3902 = vpop.f32.mrf.mxu0
        %v3903 = vpop.f32.mrf.mxu0
        %v3904 = vadd.f32 %v3393, %v3903
        %v3905 = vpop.f32.mrf.mxu0
        %3906 = vmatprep.mubr.bf16.mxu0 0
        %3907 = vmatmul.mubr.bf16.gmra.mxu0 %v3388
        %v3908 = vpop.f32.mrf.mxu0
        %v3909 = vadd.f32 %v3393, %v3908
        %v3910 = vpop.f32.mrf.mxu0
        %v3911 = vpop.f32.mrf.mxu0
        %v3912 = vadd.f32 %v3393, %v3911
        %v3913 = vpop.f32.mrf.mxu0
        %3914 = vmatprep.mubr.bf16.mxu0 0
        %3915 = vmatmul.mubr.bf16.gmra.mxu0 %v3389
        %v3916 = vpop.f32.mrf.mxu0
        %v3917 = vadd.f32 %v3393, %v3916
        %v3918 = vpop.f32.mrf.mxu0
        %v3919 = vpop.f32.mrf.mxu0
        %v3920 = vadd.f32 %v3393, %v3919
        %v3921 = vpop.f32.mrf.mxu0
        %3922 = vdwg.mxu0
        %v3923 = vpack.c.bf16 %v332, %v331
        %v3924 = vpack.c.bf16 %v334, %v333
        %v3925 = vpack.c.bf16 %v336, %v335
        %v3926 = vpack.c.bf16 %v338, %v337
        %v3927 = vpack.c.bf16 %v340, %v339
        %v3928 = vpack.c.bf16 %v342, %v341
        %v3929 = vpack.c.bf16 %v344, %v343
        %v3930 = vpack.c.bf16 %v346, %v345
        %v3939 = vunpack.c.l.b16 %v541
        %v3940 = vunpack.c.l.b16 %v542
        %v3941 = vunpack.c.l.b16 %v543
        %v3942 = vunpack.c.l.b16 %v544
        %v3943 = vunpack.c.l.b16 %v545
        %v3944 = vunpack.c.l.b16 %v546
        %v3945 = vunpack.c.l.b16 %v547
        %v3946 = vunpack.c.l.b16 %v548
        %v3947 = vpack.c.b16 %v3940, %v3939
        %v3948 = vpack.c.b16 %v3942, %v3941
        %v3949 = vpack.c.b16 %v3944, %v3943
        %v3950 = vpack.c.b16 %v3946, %v3945
        %vm3955 = vcmask 523264
        %v3957 = vsel %vm3955, %v3923, 0
        %v3960 = vsel %vm3955, %v3924, 0
        %v3963 = vsel %vm3955, %v3925, 0
        %v3966 = vsel %vm3955, %v3926, 0
        %v3969 = vsel %vm3955, %v3927, 0
        %v3972 = vsel %vm3955, %v3928, 0
        %v3975 = vsel %vm3955, %v3929, 0
        %v3978 = vsel %vm3955, %v3930, 0
        %3980 = vmatprep.subr.bf16.mxu0 0
        %3981 = vmatpush1.bf16.msra.mxu0 0
        %3982 = vmatprep.subr.bf16.mxu0 0
        %3983 = vmatpush1.bf16.msra.mxu0 0
        %3984 = vmatprep.subr.bf16.mxu0 0
        %3985 = vmatpush1.bf16.msra.mxu0 0
        %3986 = vmatprep.subr.bf16.mxu0 0
        %3987 = vmatpush1.bf16.msra.mxu0 0
        %3988 = vmatprep.subr.bf16.mxu0 0
        %3989 = vmatpush1.bf16.msra.mxu0 %v3950
        %3990 = vmatprep.subr.bf16.mxu0 0
        %3991 = vmatpush1.bf16.msra.mxu0 %v3949
        %3992 = vmatprep.subr.bf16.mxu0 0
        %3993 = vmatpush1.bf16.msra.mxu0 %v3948
        %3994 = vmatprep.subr.bf16.mxu0 0
        %3995 = vmatpush1.bf16.msra.mxu0 %v3947
        %3996 = vmatprep.subr.bf16.mxu0 0
        %3997 = vmatpush2.bf16.msra.mxu0 0
        %3998 = vmatprep.subr.bf16.mxu0 0
        %3999 = vmatpush2.bf16.msra.mxu0 0
        %4000 = vmatprep.subr.bf16.mxu0 0
        %4001 = vmatpush2.bf16.msra.mxu0 0
        %4002 = vmatprep.subr.bf16.mxu0 0
        %4003 = vmatpush2.bf16.msra.mxu0 0
        %4004 = vmatprep.subr.bf16.mxu0 0
        %4005 = vmatpush2.bf16.msra.mxu0 0
        %4006 = vmatprep.subr.bf16.mxu0 0
        %4007 = vmatpush2.bf16.msra.mxu0 0
        %4008 = vmatprep.subr.bf16.mxu0 0
        %4009 = vmatpush2.bf16.msra.mxu0 0
        %4010 = vmatprep.subr.bf16.mxu0 0
        %4011 = vmatpush2.bf16.msra.mxu0 0
        %4012 = vmatprep.mubr.bf16.mxu0 0
        %4013 = vmatmul.mubr.bf16.gmra.mxu0 %v3957
        %v4014 = vpop.f32.mrf.mxu0
        %v4015 = vadd.f32 0.0, %v4014
        %v4016 = vpop.f32.mrf.mxu0
        %v4017 = vpop.f32.mrf.mxu0
        %v4018 = vadd.f32 0.0, %v4017
        %v4019 = vpop.f32.mrf.mxu0
        %4020 = vmatprep.mubr.bf16.mxu0 0
        %4021 = vmatmul.mubr.bf16.gmra.mxu0 %v3960
        %v4022 = vpop.f32.mrf.mxu0
        %v4023 = vadd.f32 0.0, %v4022
        %v4024 = vpop.f32.mrf.mxu0
        %v4025 = vpop.f32.mrf.mxu0
        %v4026 = vadd.f32 0.0, %v4025
        %v4027 = vpop.f32.mrf.mxu0
        %4028 = vmatprep.mubr.bf16.mxu0 0
        %4029 = vmatmul.mubr.bf16.gmra.mxu0 %v3963
        %v4030 = vpop.f32.mrf.mxu0
        %v4031 = vadd.f32 0.0, %v4030
        %v4032 = vpop.f32.mrf.mxu0
        %v4033 = vpop.f32.mrf.mxu0
        %v4034 = vadd.f32 0.0, %v4033
        %v4035 = vpop.f32.mrf.mxu0
        %4036 = vmatprep.mubr.bf16.mxu0 0
        %4037 = vmatmul.mubr.bf16.gmra.mxu0 %v3966
        %v4038 = vpop.f32.mrf.mxu0
        %v4039 = vadd.f32 0.0, %v4038
        %v4040 = vpop.f32.mrf.mxu0
        %v4041 = vpop.f32.mrf.mxu0
        %v4042 = vadd.f32 0.0, %v4041
        %v4043 = vpop.f32.mrf.mxu0
        %4044 = vmatprep.mubr.bf16.mxu0 0
        %4045 = vmatmul.mubr.bf16.gmra.mxu0 %v3969
        %v4046 = vpop.f32.mrf.mxu0
        %v4047 = vadd.f32 0.0, %v4046
        %v4048 = vpop.f32.mrf.mxu0
        %v4049 = vpop.f32.mrf.mxu0
        %v4050 = vadd.f32 0.0, %v4049
        %v4051 = vpop.f32.mrf.mxu0
        %4052 = vmatprep.mubr.bf16.mxu0 0
        %4053 = vmatmul.mubr.bf16.gmra.mxu0 %v3972
        %v4054 = vpop.f32.mrf.mxu0
        %v4055 = vadd.f32 0.0, %v4054
        %v4056 = vpop.f32.mrf.mxu0
        %v4057 = vpop.f32.mrf.mxu0
        %v4058 = vadd.f32 0.0, %v4057
        %v4059 = vpop.f32.mrf.mxu0
        %4060 = vmatprep.mubr.bf16.mxu0 0
        %4061 = vmatmul.mubr.bf16.gmra.mxu0 %v3975
        %v4062 = vpop.f32.mrf.mxu0
        %v4063 = vadd.f32 0.0, %v4062
        %v4064 = vpop.f32.mrf.mxu0
        %v4065 = vpop.f32.mrf.mxu0
        %v4066 = vadd.f32 0.0, %v4065
        %v4067 = vpop.f32.mrf.mxu0
        %4068 = vmatprep.mubr.bf16.mxu0 0
        %4069 = vmatmul.mubr.bf16.gmra.mxu0 %v3978
        %v4070 = vpop.f32.mrf.mxu0
        %v4071 = vadd.f32 0.0, %v4070
        %v4072 = vpop.f32.mrf.mxu0
        %v4073 = vpop.f32.mrf.mxu0
        %v4074 = vadd.f32 0.0, %v4073
        %v4075 = vpop.f32.mrf.mxu0
        %4076 = vdwg.mxu0
        %v4077 = vpack.c.bf16 %v4018, %v4015
        %v4078 = vpack.c.bf16 %v4026, %v4023
        %v4079 = vpack.c.bf16 %v4034, %v4031
        %v4080 = vpack.c.bf16 %v4042, %v4039
        %v4081 = vpack.c.bf16 %v4050, %v4047
        %v4082 = vpack.c.bf16 %v4058, %v4055
        %v4083 = vpack.c.bf16 %v4066, %v4063
        %v4084 = vpack.c.bf16 %v4074, %v4071
        %v4085 = vunpack.c.l.b16 %v347
        %v4086 = vunpack.c.l.b16 %v348
        %v4087 = vunpack.c.l.b16 %v349
        %v4088 = vunpack.c.l.b16 %v350
        %v4089 = vunpack.c.l.b16 %v351
        %v4090 = vunpack.c.l.b16 %v352
        %v4091 = vunpack.c.l.b16 %v353
        %v4092 = vunpack.c.l.b16 %v354
        %v4093 = vunpack.c.l.b16 %v355
        %v4094 = vunpack.c.l.b16 %v356
        %v4095 = vunpack.c.l.b16 %v357
        %v4096 = vunpack.c.l.b16 %v358
        %v4097 = vunpack.c.l.b16 %v359
        %v4098 = vunpack.c.l.b16 %v360
        %v4099 = vunpack.c.l.b16 %v361
        %v4100 = vunpack.c.l.b16 %v362
        %v4101 = vunpack.c.l.b16 %v363
        %v4102 = vunpack.c.l.b16 %v364
        %v4103 = vunpack.c.l.b16 %v365
        %v4104 = vunpack.c.l.b16 %v366
        %v4105 = vunpack.c.l.b16 %v367
        %v4106 = vunpack.c.l.b16 %v368
        %v4107 = vunpack.c.l.b16 %v369
        %v4108 = vunpack.c.l.b16 %v370
        %v4109 = vunpack.c.l.b16 %v371
        %v4110 = vunpack.c.l.b16 %v372
        %v4111 = vunpack.c.l.b16 %v373
        %v4112 = vunpack.c.l.b16 %v374
        %v4113 = vunpack.c.l.b16 %v375
        %v4114 = vunpack.c.l.b16 %v376
        %v4115 = vunpack.c.l.b16 %v377
        %v4116 = vunpack.c.l.b16 %v378
        %v4117 = vunpack.c.l.b16 %v379
        %v4118 = vunpack.c.l.b16 %v380
        %v4119 = vunpack.c.l.b16 %v381
        %v4120 = vunpack.c.l.b16 %v382
        %v4121 = vunpack.c.l.b16 %v383
        %v4122 = vunpack.c.l.b16 %v384
        %v4123 = vunpack.c.l.b16 %v385
        %v4124 = vunpack.c.l.b16 %v386
        %v4125 = vunpack.c.l.b16 %v387
        %v4126 = vunpack.c.l.b16 %v388
        %v4127 = vunpack.c.l.b16 %v389
        %v4128 = vunpack.c.l.b16 %v390
        %v4129 = vunpack.c.l.b16 %v391
        %v4130 = vunpack.c.l.b16 %v392
        %v4131 = vunpack.c.l.b16 %v393
        %v4132 = vunpack.c.l.b16 %v394
        %v4133 = vunpack.c.l.b16 %v395
        %v4134 = vunpack.c.l.b16 %v396
        %v4135 = vunpack.c.l.b16 %v397
        %v4136 = vunpack.c.l.b16 %v398
        %v4137 = vunpack.c.l.b16 %v399
        %v4138 = vunpack.c.l.b16 %v400
        %v4139 = vunpack.c.l.b16 %v401
        %v4140 = vunpack.c.l.b16 %v402
        %v4141 = vunpack.c.l.b16 %v403
        %v4142 = vunpack.c.l.b16 %v404
        %v4143 = vunpack.c.l.b16 %v405
        %v4144 = vunpack.c.l.b16 %v406
        %v4145 = vunpack.c.l.b16 %v407
        %v4146 = vunpack.c.l.b16 %v408
        %v4147 = vunpack.c.l.b16 %v409
        %v4148 = vunpack.c.l.b16 %v410
        %v4149 = vunpack.c.l.b16 %v411
        %v4150 = vunpack.c.l.b16 %v412
        %v4151 = vunpack.c.l.b16 %v413
        %v4152 = vunpack.c.l.b16 %v414
        %v4153 = vunpack.c.l.b16 %v415
        %v4154 = vunpack.c.l.b16 %v416
        %v4155 = vunpack.c.l.b16 %v417
        %v4156 = vunpack.c.l.b16 %v418
        %v4157 = vunpack.c.l.b16 %v419
        %v4158 = vunpack.c.l.b16 %v420
        %v4159 = vunpack.c.l.b16 %v421
        %v4160 = vunpack.c.l.b16 %v422
        %v4161 = vunpack.c.l.b16 %v423
        %v4162 = vunpack.c.l.b16 %v424
        %v4163 = vunpack.c.l.b16 %v425
        %v4164 = vunpack.c.l.b16 %v426
        %v4165 = vunpack.c.l.b16 %v427
        %v4166 = vunpack.c.l.b16 %v428
        %v4167 = vunpack.c.l.b16 %v429
        %v4168 = vunpack.c.l.b16 %v430
        %v4169 = vunpack.c.l.b16 %v431
        %v4170 = vunpack.c.l.b16 %v432
        %v4171 = vunpack.c.l.b16 %v433
        %v4172 = vunpack.c.l.b16 %v434
        %v4173 = vunpack.c.l.b16 %v435
        %v4174 = vunpack.c.l.b16 %v436
        %v4175 = vunpack.c.l.b16 %v437
        %v4176 = vunpack.c.l.b16 %v438
        %v4177 = vunpack.c.l.b16 %v439
        %v4178 = vunpack.c.l.b16 %v440
        %v4179 = vunpack.c.l.b16 %v441
        %v4180 = vunpack.c.l.b16 %v442
        %v4181 = vunpack.c.l.b16 %v443
        %v4182 = vunpack.c.l.b16 %v444
        %v4183 = vunpack.c.l.b16 %v445
        %v4184 = vunpack.c.l.b16 %v446
        %v4185 = vunpack.c.l.b16 %v447
        %v4186 = vunpack.c.l.b16 %v448
        %v4187 = vunpack.c.l.b16 %v449
        %v4188 = vunpack.c.l.b16 %v450
        %v4189 = vunpack.c.l.b16 %v451
        %v4190 = vunpack.c.l.b16 %v452
        %v4191 = vunpack.c.l.b16 %v453
        %v4192 = vunpack.c.l.b16 %v454
        %v4193 = vunpack.c.l.b16 %v455
        %v4194 = vunpack.c.l.b16 %v456
        %v4195 = vunpack.c.l.b16 %v457
        %v4196 = vunpack.c.l.b16 %v458
        %v4197 = vpack.c.b16 %v4086, %v4085
        %v4198 = vpack.c.b16 %v4088, %v4087
        %v4199 = vpack.c.b16 %v4090, %v4089
        %v4200 = vpack.c.b16 %v4092, %v4091
        %v4201 = vpack.c.b16 %v4094, %v4093
        %v4202 = vpack.c.b16 %v4096, %v4095
        %v4203 = vpack.c.b16 %v4098, %v4097
        %v4204 = vpack.c.b16 %v4100, %v4099
        %v4205 = vpack.c.b16 %v4102, %v4101
        %v4206 = vpack.c.b16 %v4104, %v4103
        %v4207 = vpack.c.b16 %v4106, %v4105
        %v4208 = vpack.c.b16 %v4108, %v4107
        %v4209 = vpack.c.b16 %v4110, %v4109
        %v4210 = vpack.c.b16 %v4112, %v4111
        %v4211 = vpack.c.b16 %v4114, %v4113
        %v4212 = vpack.c.b16 %v4116, %v4115
        %v4213 = vpack.c.b16 %v4118, %v4117
        %v4214 = vpack.c.b16 %v4120, %v4119
        %v4215 = vpack.c.b16 %v4122, %v4121
        %v4216 = vpack.c.b16 %v4124, %v4123
        %v4217 = vpack.c.b16 %v4126, %v4125
        %v4218 = vpack.c.b16 %v4128, %v4127
        %v4219 = vpack.c.b16 %v4130, %v4129
        %v4220 = vpack.c.b16 %v4132, %v4131
        %v4221 = vpack.c.b16 %v4134, %v4133
        %v4222 = vpack.c.b16 %v4136, %v4135
        %v4223 = vpack.c.b16 %v4138, %v4137
        %v4224 = vpack.c.b16 %v4140, %v4139
        %v4225 = vpack.c.b16 %v4142, %v4141
        %v4226 = vpack.c.b16 %v4144, %v4143
        %v4227 = vpack.c.b16 %v4146, %v4145
        %v4228 = vpack.c.b16 %v4148, %v4147
        %v4229 = vpack.c.b16 %v4150, %v4149
        %v4230 = vpack.c.b16 %v4152, %v4151
        %v4231 = vpack.c.b16 %v4154, %v4153
        %v4232 = vpack.c.b16 %v4156, %v4155
        %v4233 = vpack.c.b16 %v4158, %v4157
        %v4234 = vpack.c.b16 %v4160, %v4159
        %v4235 = vpack.c.b16 %v4162, %v4161
        %v4236 = vpack.c.b16 %v4164, %v4163
        %v4237 = vpack.c.b16 %v4166, %v4165
        %v4238 = vpack.c.b16 %v4168, %v4167
        %v4239 = vpack.c.b16 %v4170, %v4169
        %v4240 = vpack.c.b16 %v4172, %v4171
        %v4241 = vpack.c.b16 %v4174, %v4173
        %v4242 = vpack.c.b16 %v4176, %v4175
        %v4243 = vpack.c.b16 %v4178, %v4177
        %v4244 = vpack.c.b16 %v4180, %v4179
        %v4245 = vpack.c.b16 %v4182, %v4181
        %v4246 = vpack.c.b16 %v4184, %v4183
        %v4247 = vpack.c.b16 %v4186, %v4185
        %v4248 = vpack.c.b16 %v4188, %v4187
        %v4249 = vpack.c.b16 %v4190, %v4189
        %v4250 = vpack.c.b16 %v4192, %v4191
        %v4251 = vpack.c.b16 %v4194, %v4193
        %v4252 = vpack.c.b16 %v4196, %v4195
        %4309 = vmatprep.subr.bf16.mxu0 0
        %4310 = vmatpush1.bf16.msra.mxu0 %v4084
        %4311 = vmatprep.subr.bf16.mxu0 0
        %4312 = vmatpush1.bf16.msra.mxu0 %v4083
        %4313 = vmatprep.subr.bf16.mxu0 0
        %4314 = vmatpush1.bf16.msra.mxu0 %v4082
        %4315 = vmatprep.subr.bf16.mxu0 0
        %4316 = vmatpush1.bf16.msra.mxu0 %v4081
        %4317 = vmatprep.subr.bf16.mxu0 0
        %4318 = vmatpush1.bf16.msra.mxu0 %v4080
        %4319 = vmatprep.subr.bf16.mxu0 0
        %4320 = vmatpush1.bf16.msra.mxu0 %v4079
        %4321 = vmatprep.subr.bf16.mxu0 0
        %4322 = vmatpush1.bf16.msra.mxu0 %v4078
        %4323 = vmatprep.subr.bf16.mxu0 0
        %4324 = vmatpush1.bf16.msra.mxu0 %v4077
        %4325 = vmatprep.subr.bf16.mxu0 0
        %4326 = vmatpush2.bf16.msra.mxu0 0
        %4327 = vmatprep.subr.bf16.mxu0 0
        %4328 = vmatpush2.bf16.msra.mxu0 0
        %4329 = vmatprep.subr.bf16.mxu0 0
        %4330 = vmatpush2.bf16.msra.mxu0 0
        %4331 = vmatprep.subr.bf16.mxu0 0
        %4332 = vmatpush2.bf16.msra.mxu0 0
        %4333 = vmatprep.subr.bf16.mxu0 0
        %4334 = vmatpush2.bf16.msra.mxu0 0
        %4335 = vmatprep.subr.bf16.mxu0 0
        %4336 = vmatpush2.bf16.msra.mxu0 0
        %4337 = vmatprep.subr.bf16.mxu0 0
        %4338 = vmatpush2.bf16.msra.mxu0 0
        %4339 = vmatprep.subr.bf16.mxu0 0
        %4340 = vmatpush2.bf16.msra.mxu0 0
        %4341 = vmatprep.mubr.bf16.mxu0 0
        %4342 = vmatmul.mubr.bf16.gmra.mxu0 %v4197
        %v4343 = vpop.f32.mrf.mxu0
        %v4344 = vadd.f32 0.0, %v4343
        %v4345 = vpop.f32.mrf.mxu0
        %v4346 = vpop.f32.mrf.mxu0
        %v4347 = vadd.f32 0.0, %v4346
        %v4348 = vpop.f32.mrf.mxu0
        %4349 = vmatprep.mubr.bf16.mxu0 0
        %4350 = vmatmul.mubr.bf16.gmra.mxu0 %v4198
        %v4351 = vpop.f32.mrf.mxu0
        %v4352 = vadd.f32 0.0, %v4351
        %v4353 = vpop.f32.mrf.mxu0
        %v4354 = vpop.f32.mrf.mxu0
        %v4355 = vadd.f32 0.0, %v4354
        %v4356 = vpop.f32.mrf.mxu0
        %4357 = vmatprep.mubr.bf16.mxu0 0
        %4358 = vmatmul.mubr.bf16.gmra.mxu0 %v4199
        %v4359 = vpop.f32.mrf.mxu0
        %v4360 = vadd.f32 0.0, %v4359
        %v4361 = vpop.f32.mrf.mxu0
        %v4362 = vpop.f32.mrf.mxu0
        %v4363 = vadd.f32 0.0, %v4362
        %v4364 = vpop.f32.mrf.mxu0
        %4365 = vmatprep.mubr.bf16.mxu0 0
        %4366 = vmatmul.mubr.bf16.gmra.mxu0 %v4200
        %v4367 = vpop.f32.mrf.mxu0
        %v4368 = vadd.f32 0.0, %v4367
        %v4369 = vpop.f32.mrf.mxu0
        %v4370 = vpop.f32.mrf.mxu0
        %v4371 = vadd.f32 0.0, %v4370
        %v4372 = vpop.f32.mrf.mxu0
        %4373 = vmatprep.mubr.bf16.mxu0 0
        %4374 = vmatmul.mubr.bf16.gmra.mxu0 %v4201
        %v4375 = vpop.f32.mrf.mxu0
        %v4376 = vadd.f32 0.0, %v4375
        %v4377 = vpop.f32.mrf.mxu0
        %v4378 = vpop.f32.mrf.mxu0
        %v4379 = vadd.f32 0.0, %v4378
        %v4380 = vpop.f32.mrf.mxu0
        %4381 = vmatprep.mubr.bf16.mxu0 0
        %4382 = vmatmul.mubr.bf16.gmra.mxu0 %v4202
        %v4383 = vpop.f32.mrf.mxu0
        %v4384 = vadd.f32 0.0, %v4383
        %v4385 = vpop.f32.mrf.mxu0
        %v4386 = vpop.f32.mrf.mxu0
        %v4387 = vadd.f32 0.0, %v4386
        %v4388 = vpop.f32.mrf.mxu0
        %4389 = vmatprep.mubr.bf16.mxu0 0
        %4390 = vmatmul.mubr.bf16.gmra.mxu0 %v4203
        %v4391 = vpop.f32.mrf.mxu0
        %v4392 = vadd.f32 0.0, %v4391
        %v4393 = vpop.f32.mrf.mxu0
        %v4394 = vpop.f32.mrf.mxu0
        %v4395 = vadd.f32 0.0, %v4394
        %v4396 = vpop.f32.mrf.mxu0
        %4397 = vmatprep.mubr.bf16.mxu0 0
        %4398 = vmatmul.mubr.bf16.gmra.mxu0 %v4204
        %v4399 = vpop.f32.mrf.mxu0
        %v4400 = vadd.f32 0.0, %v4399
        %v4401 = vpop.f32.mrf.mxu0
        %v4402 = vpop.f32.mrf.mxu0
        %v4403 = vadd.f32 0.0, %v4402
        %v4404 = vpop.f32.mrf.mxu0
        %4405 = vmatprep.mubr.bf16.mxu0 0
        %4406 = vmatmul.mubr.bf16.gmra.mxu0 %v4205
        %v4407 = vpop.f32.mrf.mxu0
        %v4408 = vadd.f32 0.0, %v4407
        %v4409 = vpop.f32.mrf.mxu0
        %v4410 = vpop.f32.mrf.mxu0
        %v4411 = vadd.f32 0.0, %v4410
        %v4412 = vpop.f32.mrf.mxu0
        %4413 = vmatprep.mubr.bf16.mxu0 0
        %4414 = vmatmul.mubr.bf16.gmra.mxu0 %v4206
        %v4415 = vpop.f32.mrf.mxu0
        %v4416 = vadd.f32 0.0, %v4415
        %v4417 = vpop.f32.mrf.mxu0
        %v4418 = vpop.f32.mrf.mxu0
        %v4419 = vadd.f32 0.0, %v4418
        %v4420 = vpop.f32.mrf.mxu0
        %4421 = vmatprep.mubr.bf16.mxu0 0
        %4422 = vmatmul.mubr.bf16.gmra.mxu0 %v4207
        %v4423 = vpop.f32.mrf.mxu0
        %v4424 = vadd.f32 0.0, %v4423
        %v4425 = vpop.f32.mrf.mxu0
        %v4426 = vpop.f32.mrf.mxu0
        %v4427 = vadd.f32 0.0, %v4426
        %v4428 = vpop.f32.mrf.mxu0
        %4429 = vmatprep.mubr.bf16.mxu0 0
        %4430 = vmatmul.mubr.bf16.gmra.mxu0 %v4208
        %v4431 = vpop.f32.mrf.mxu0
        %v4432 = vadd.f32 0.0, %v4431
        %v4433 = vpop.f32.mrf.mxu0
        %v4434 = vpop.f32.mrf.mxu0
        %v4435 = vadd.f32 0.0, %v4434
        %v4436 = vpop.f32.mrf.mxu0
        %4437 = vmatprep.mubr.bf16.mxu0 0
        %4438 = vmatmul.mubr.bf16.gmra.mxu0 %v4209
        %v4439 = vpop.f32.mrf.mxu0
        %v4440 = vadd.f32 0.0, %v4439
        %v4441 = vpop.f32.mrf.mxu0
        %v4442 = vpop.f32.mrf.mxu0
        %v4443 = vadd.f32 0.0, %v4442
        %v4444 = vpop.f32.mrf.mxu0
        %4445 = vmatprep.mubr.bf16.mxu0 0
        %4446 = vmatmul.mubr.bf16.gmra.mxu0 %v4210
        %v4447 = vpop.f32.mrf.mxu0
        %v4448 = vadd.f32 0.0, %v4447
        %v4449 = vpop.f32.mrf.mxu0
        %v4450 = vpop.f32.mrf.mxu0
        %v4451 = vadd.f32 0.0, %v4450
        %v4452 = vpop.f32.mrf.mxu0
        %4453 = vmatprep.mubr.bf16.mxu0 0
        %4454 = vmatmul.mubr.bf16.gmra.mxu0 %v4211
        %v4455 = vpop.f32.mrf.mxu0
        %v4456 = vadd.f32 0.0, %v4455
        %v4457 = vpop.f32.mrf.mxu0
        %v4458 = vpop.f32.mrf.mxu0
        %v4459 = vadd.f32 0.0, %v4458
        %v4460 = vpop.f32.mrf.mxu0
        %4461 = vmatprep.mubr.bf16.mxu0 0
        %4462 = vmatmul.mubr.bf16.gmra.mxu0 %v4212
        %v4463 = vpop.f32.mrf.mxu0
        %v4464 = vadd.f32 0.0, %v4463
        %v4465 = vpop.f32.mrf.mxu0
        %v4466 = vpop.f32.mrf.mxu0
        %v4467 = vadd.f32 0.0, %v4466
        %v4468 = vpop.f32.mrf.mxu0
        %4469 = vmatprep.mubr.bf16.mxu0 0
        %4470 = vmatmul.mubr.bf16.gmra.mxu0 %v4213
        %v4471 = vpop.f32.mrf.mxu0
        %v4472 = vadd.f32 0.0, %v4471
        %v4473 = vpop.f32.mrf.mxu0
        %v4474 = vpop.f32.mrf.mxu0
        %v4475 = vadd.f32 0.0, %v4474
        %v4476 = vpop.f32.mrf.mxu0
        %4477 = vmatprep.mubr.bf16.mxu0 0
        %4478 = vmatmul.mubr.bf16.gmra.mxu0 %v4214
        %v4479 = vpop.f32.mrf.mxu0
        %v4480 = vadd.f32 0.0, %v4479
        %v4481 = vpop.f32.mrf.mxu0
        %v4482 = vpop.f32.mrf.mxu0
        %v4483 = vadd.f32 0.0, %v4482
        %v4484 = vpop.f32.mrf.mxu0
        %4485 = vmatprep.mubr.bf16.mxu0 0
        %4486 = vmatmul.mubr.bf16.gmra.mxu0 %v4215
        %v4487 = vpop.f32.mrf.mxu0
        %v4488 = vadd.f32 0.0, %v4487
        %v4489 = vpop.f32.mrf.mxu0
        %v4490 = vpop.f32.mrf.mxu0
        %v4491 = vadd.f32 0.0, %v4490
        %v4492 = vpop.f32.mrf.mxu0
        %4493 = vmatprep.mubr.bf16.mxu0 0
        %4494 = vmatmul.mubr.bf16.gmra.mxu0 %v4216
        %v4495 = vpop.f32.mrf.mxu0
        %v4496 = vadd.f32 0.0, %v4495
        %v4497 = vpop.f32.mrf.mxu0
        %v4498 = vpop.f32.mrf.mxu0
        %v4499 = vadd.f32 0.0, %v4498
        %v4500 = vpop.f32.mrf.mxu0
        %4501 = vmatprep.mubr.bf16.mxu0 0
        %4502 = vmatmul.mubr.bf16.gmra.mxu0 %v4217
        %v4503 = vpop.f32.mrf.mxu0
        %v4504 = vadd.f32 0.0, %v4503
        %v4505 = vpop.f32.mrf.mxu0
        %v4506 = vpop.f32.mrf.mxu0
        %v4507 = vadd.f32 0.0, %v4506
        %v4508 = vpop.f32.mrf.mxu0
        %4509 = vmatprep.mubr.bf16.mxu0 0
        %4510 = vmatmul.mubr.bf16.gmra.mxu0 %v4218
        %v4511 = vpop.f32.mrf.mxu0
        %v4512 = vadd.f32 0.0, %v4511
        %v4513 = vpop.f32.mrf.mxu0
        %v4514 = vpop.f32.mrf.mxu0
        %v4515 = vadd.f32 0.0, %v4514
        %v4516 = vpop.f32.mrf.mxu0
        %4517 = vmatprep.mubr.bf16.mxu0 0
        %4518 = vmatmul.mubr.bf16.gmra.mxu0 %v4219
        %v4519 = vpop.f32.mrf.mxu0
        %v4520 = vadd.f32 0.0, %v4519
        %v4521 = vpop.f32.mrf.mxu0
        %v4522 = vpop.f32.mrf.mxu0
        %v4523 = vadd.f32 0.0, %v4522
        %v4524 = vpop.f32.mrf.mxu0
        %4525 = vmatprep.mubr.bf16.mxu0 0
        %4526 = vmatmul.mubr.bf16.gmra.mxu0 %v4220
        %v4527 = vpop.f32.mrf.mxu0
        %v4528 = vadd.f32 0.0, %v4527
        %v4529 = vpop.f32.mrf.mxu0
        %v4530 = vpop.f32.mrf.mxu0
        %v4531 = vadd.f32 0.0, %v4530
        %v4532 = vpop.f32.mrf.mxu0
        %4533 = vmatprep.mubr.bf16.mxu0 0
        %4534 = vmatmul.mubr.bf16.gmra.mxu0 %v4221
        %v4535 = vpop.f32.mrf.mxu0
        %v4536 = vadd.f32 0.0, %v4535
        %v4537 = vpop.f32.mrf.mxu0
        %v4538 = vpop.f32.mrf.mxu0
        %v4539 = vadd.f32 0.0, %v4538
        %v4540 = vpop.f32.mrf.mxu0
        %4541 = vmatprep.mubr.bf16.mxu0 0
        %4542 = vmatmul.mubr.bf16.gmra.mxu0 %v4222
        %v4543 = vpop.f32.mrf.mxu0
        %v4544 = vadd.f32 0.0, %v4543
        %v4545 = vpop.f32.mrf.mxu0
        %v4546 = vpop.f32.mrf.mxu0
        %v4547 = vadd.f32 0.0, %v4546
        %v4548 = vpop.f32.mrf.mxu0
        %4549 = vmatprep.mubr.bf16.mxu0 0
        %4550 = vmatmul.mubr.bf16.gmra.mxu0 %v4223
        %v4551 = vpop.f32.mrf.mxu0
        %v4552 = vadd.f32 0.0, %v4551
        %v4553 = vpop.f32.mrf.mxu0
        %v4554 = vpop.f32.mrf.mxu0
        %v4555 = vadd.f32 0.0, %v4554
        %v4556 = vpop.f32.mrf.mxu0
        %4557 = vmatprep.mubr.bf16.mxu0 0
        %4558 = vmatmul.mubr.bf16.gmra.mxu0 %v4224
        %v4559 = vpop.f32.mrf.mxu0
        %v4560 = vadd.f32 0.0, %v4559
        %v4561 = vpop.f32.mrf.mxu0
        %v4562 = vpop.f32.mrf.mxu0
        %v4563 = vadd.f32 0.0, %v4562
        %v4564 = vpop.f32.mrf.mxu0
        %4565 = vmatprep.mubr.bf16.mxu0 0
        %4566 = vmatmul.mubr.bf16.gmra.mxu0 %v4225
        %v4567 = vpop.f32.mrf.mxu0
        %v4568 = vadd.f32 0.0, %v4567
        %v4569 = vpop.f32.mrf.mxu0
        %v4570 = vpop.f32.mrf.mxu0
        %v4571 = vadd.f32 0.0, %v4570
        %v4572 = vpop.f32.mrf.mxu0
        %4573 = vmatprep.mubr.bf16.mxu0 0
        %4574 = vmatmul.mubr.bf16.gmra.mxu0 %v4226
        %v4575 = vpop.f32.mrf.mxu0
        %v4576 = vadd.f32 0.0, %v4575
        %v4577 = vpop.f32.mrf.mxu0
        %v4578 = vpop.f32.mrf.mxu0
        %v4579 = vadd.f32 0.0, %v4578
        %v4580 = vpop.f32.mrf.mxu0
        %4581 = vmatprep.mubr.bf16.mxu0 0
        %4582 = vmatmul.mubr.bf16.gmra.mxu0 %v4227
        %v4583 = vpop.f32.mrf.mxu0
        %v4584 = vadd.f32 0.0, %v4583
        %v4585 = vpop.f32.mrf.mxu0
        %v4586 = vpop.f32.mrf.mxu0
        %v4587 = vadd.f32 0.0, %v4586
        %v4588 = vpop.f32.mrf.mxu0
        %4589 = vmatprep.mubr.bf16.mxu0 0
        %4590 = vmatmul.mubr.bf16.gmra.mxu0 %v4228
        %v4591 = vpop.f32.mrf.mxu0
        %v4592 = vadd.f32 0.0, %v4591
        %v4593 = vpop.f32.mrf.mxu0
        %v4594 = vpop.f32.mrf.mxu0
        %v4595 = vadd.f32 0.0, %v4594
        %v4596 = vpop.f32.mrf.mxu0
        %4597 = vmatprep.mubr.bf16.mxu0 0
        %4598 = vmatmul.mubr.bf16.gmra.mxu0 %v4229
        %v4599 = vpop.f32.mrf.mxu0
        %v4600 = vadd.f32 0.0, %v4599
        %v4601 = vpop.f32.mrf.mxu0
        %v4602 = vpop.f32.mrf.mxu0
        %v4603 = vadd.f32 0.0, %v4602
        %v4604 = vpop.f32.mrf.mxu0
        %4605 = vmatprep.mubr.bf16.mxu0 0
        %4606 = vmatmul.mubr.bf16.gmra.mxu0 %v4230
        %v4607 = vpop.f32.mrf.mxu0
        %v4608 = vadd.f32 0.0, %v4607
        %v4609 = vpop.f32.mrf.mxu0
        %v4610 = vpop.f32.mrf.mxu0
        %v4611 = vadd.f32 0.0, %v4610
        %v4612 = vpop.f32.mrf.mxu0
        %4613 = vmatprep.mubr.bf16.mxu0 0
        %4614 = vmatmul.mubr.bf16.gmra.mxu0 %v4231
        %v4615 = vpop.f32.mrf.mxu0
        %v4616 = vadd.f32 0.0, %v4615
        %v4617 = vpop.f32.mrf.mxu0
        %v4618 = vpop.f32.mrf.mxu0
        %v4619 = vadd.f32 0.0, %v4618
        %v4620 = vpop.f32.mrf.mxu0
        %4621 = vmatprep.mubr.bf16.mxu0 0
        %4622 = vmatmul.mubr.bf16.gmra.mxu0 %v4232
        %v4623 = vpop.f32.mrf.mxu0
        %v4624 = vadd.f32 0.0, %v4623
        %v4625 = vpop.f32.mrf.mxu0
        %v4626 = vpop.f32.mrf.mxu0
        %v4627 = vadd.f32 0.0, %v4626
        %v4628 = vpop.f32.mrf.mxu0
        %4629 = vmatprep.mubr.bf16.mxu0 0
        %4630 = vmatmul.mubr.bf16.gmra.mxu0 %v4233
        %v4631 = vpop.f32.mrf.mxu0
        %v4632 = vadd.f32 0.0, %v4631
        %v4633 = vpop.f32.mrf.mxu0
        %v4634 = vpop.f32.mrf.mxu0
        %v4635 = vadd.f32 0.0, %v4634
        %v4636 = vpop.f32.mrf.mxu0
        %4637 = vmatprep.mubr.bf16.mxu0 0
        %4638 = vmatmul.mubr.bf16.gmra.mxu0 %v4234
        %v4639 = vpop.f32.mrf.mxu0
        %v4640 = vadd.f32 0.0, %v4639
        %v4641 = vpop.f32.mrf.mxu0
        %v4642 = vpop.f32.mrf.mxu0
        %v4643 = vadd.f32 0.0, %v4642
        %v4644 = vpop.f32.mrf.mxu0
        %4645 = vmatprep.mubr.bf16.mxu0 0
        %4646 = vmatmul.mubr.bf16.gmra.mxu0 %v4235
        %v4647 = vpop.f32.mrf.mxu0
        %v4648 = vadd.f32 0.0, %v4647
        %v4649 = vpop.f32.mrf.mxu0
        %v4650 = vpop.f32.mrf.mxu0
        %v4651 = vadd.f32 0.0, %v4650
        %v4652 = vpop.f32.mrf.mxu0
        %4653 = vmatprep.mubr.bf16.mxu0 0
        %4654 = vmatmul.mubr.bf16.gmra.mxu0 %v4236
        %v4655 = vpop.f32.mrf.mxu0
        %v4656 = vadd.f32 0.0, %v4655
        %v4657 = vpop.f32.mrf.mxu0
        %v4658 = vpop.f32.mrf.mxu0
        %v4659 = vadd.f32 0.0, %v4658
        %v4660 = vpop.f32.mrf.mxu0
        %4661 = vmatprep.mubr.bf16.mxu0 0
        %4662 = vmatmul.mubr.bf16.gmra.mxu0 %v4237
        %v4663 = vpop.f32.mrf.mxu0
        %v4664 = vadd.f32 0.0, %v4663
        %v4665 = vpop.f32.mrf.mxu0
        %v4666 = vpop.f32.mrf.mxu0
        %v4667 = vadd.f32 0.0, %v4666
        %v4668 = vpop.f32.mrf.mxu0
        %4669 = vmatprep.mubr.bf16.mxu0 0
        %4670 = vmatmul.mubr.bf16.gmra.mxu0 %v4238
        %v4671 = vpop.f32.mrf.mxu0
        %v4672 = vadd.f32 0.0, %v4671
        %v4673 = vpop.f32.mrf.mxu0
        %v4674 = vpop.f32.mrf.mxu0
        %v4675 = vadd.f32 0.0, %v4674
        %v4676 = vpop.f32.mrf.mxu0
        %4677 = vmatprep.mubr.bf16.mxu0 0
        %4678 = vmatmul.mubr.bf16.gmra.mxu0 %v4239
        %v4679 = vpop.f32.mrf.mxu0
        %v4680 = vadd.f32 0.0, %v4679
        %v4681 = vpop.f32.mrf.mxu0
        %v4682 = vpop.f32.mrf.mxu0
        %v4683 = vadd.f32 0.0, %v4682
        %v4684 = vpop.f32.mrf.mxu0
        %4685 = vmatprep.mubr.bf16.mxu0 0
        %4686 = vmatmul.mubr.bf16.gmra.mxu0 %v4240
        %v4687 = vpop.f32.mrf.mxu0
        %v4688 = vadd.f32 0.0, %v4687
        %v4689 = vpop.f32.mrf.mxu0
        %v4690 = vpop.f32.mrf.mxu0
        %v4691 = vadd.f32 0.0, %v4690
        %v4692 = vpop.f32.mrf.mxu0
        %4693 = vmatprep.mubr.bf16.mxu0 0
        %4694 = vmatmul.mubr.bf16.gmra.mxu0 %v4241
        %v4695 = vpop.f32.mrf.mxu0
        %v4696 = vadd.f32 0.0, %v4695
        %v4697 = vpop.f32.mrf.mxu0
        %v4698 = vpop.f32.mrf.mxu0
        %v4699 = vadd.f32 0.0, %v4698
        %v4700 = vpop.f32.mrf.mxu0
        %4701 = vmatprep.mubr.bf16.mxu0 0
        %4702 = vmatmul.mubr.bf16.gmra.mxu0 %v4242
        %v4703 = vpop.f32.mrf.mxu0
        %v4704 = vadd.f32 0.0, %v4703
        %v4705 = vpop.f32.mrf.mxu0
        %v4706 = vpop.f32.mrf.mxu0
        %v4707 = vadd.f32 0.0, %v4706
        %v4708 = vpop.f32.mrf.mxu0
        %4709 = vmatprep.mubr.bf16.mxu0 0
        %4710 = vmatmul.mubr.bf16.gmra.mxu0 %v4243
        %v4711 = vpop.f32.mrf.mxu0
        %v4712 = vadd.f32 0.0, %v4711
        %v4713 = vpop.f32.mrf.mxu0
        %v4714 = vpop.f32.mrf.mxu0
        %v4715 = vadd.f32 0.0, %v4714
        %v4716 = vpop.f32.mrf.mxu0
        %4717 = vmatprep.mubr.bf16.mxu0 0
        %4718 = vmatmul.mubr.bf16.gmra.mxu0 %v4244
        %v4719 = vpop.f32.mrf.mxu0
        %v4720 = vadd.f32 0.0, %v4719
        %v4721 = vpop.f32.mrf.mxu0
        %v4722 = vpop.f32.mrf.mxu0
        %v4723 = vadd.f32 0.0, %v4722
        %v4724 = vpop.f32.mrf.mxu0
        %4725 = vmatprep.mubr.bf16.mxu0 0
        %4726 = vmatmul.mubr.bf16.gmra.mxu0 %v4245
        %v4727 = vpop.f32.mrf.mxu0
        %v4728 = vadd.f32 0.0, %v4727
        %v4729 = vpop.f32.mrf.mxu0
        %v4730 = vpop.f32.mrf.mxu0
        %v4731 = vadd.f32 0.0, %v4730
        %v4732 = vpop.f32.mrf.mxu0
        %4733 = vmatprep.mubr.bf16.mxu0 0
        %4734 = vmatmul.mubr.bf16.gmra.mxu0 %v4246
        %v4735 = vpop.f32.mrf.mxu0
        %v4736 = vadd.f32 0.0, %v4735
        %v4737 = vpop.f32.mrf.mxu0
        %v4738 = vpop.f32.mrf.mxu0
        %v4739 = vadd.f32 0.0, %v4738
        %v4740 = vpop.f32.mrf.mxu0
        %4741 = vmatprep.mubr.bf16.mxu0 0
        %4742 = vmatmul.mubr.bf16.gmra.mxu0 %v4247
        %v4743 = vpop.f32.mrf.mxu0
        %v4744 = vadd.f32 0.0, %v4743
        %v4745 = vpop.f32.mrf.mxu0
        %v4746 = vpop.f32.mrf.mxu0
        %v4747 = vadd.f32 0.0, %v4746
        %v4748 = vpop.f32.mrf.mxu0
        %4749 = vmatprep.mubr.bf16.mxu0 0
        %4750 = vmatmul.mubr.bf16.gmra.mxu0 %v4248
        %v4751 = vpop.f32.mrf.mxu0
        %v4752 = vadd.f32 0.0, %v4751
        %v4753 = vpop.f32.mrf.mxu0
        %v4754 = vpop.f32.mrf.mxu0
        %v4755 = vadd.f32 0.0, %v4754
        %v4756 = vpop.f32.mrf.mxu0
        %4757 = vmatprep.mubr.bf16.mxu0 0
        %4758 = vmatmul.mubr.bf16.gmra.mxu0 %v4249
        %v4759 = vpop.f32.mrf.mxu0
        %v4760 = vadd.f32 0.0, %v4759
        %v4761 = vpop.f32.mrf.mxu0
        %v4762 = vpop.f32.mrf.mxu0
        %v4763 = vadd.f32 0.0, %v4762
        %v4764 = vpop.f32.mrf.mxu0
        %4765 = vmatprep.mubr.bf16.mxu0 0
        %4766 = vmatmul.mubr.bf16.gmra.mxu0 %v4250
        %v4767 = vpop.f32.mrf.mxu0
        %v4768 = vadd.f32 0.0, %v4767
        %v4769 = vpop.f32.mrf.mxu0
        %v4770 = vpop.f32.mrf.mxu0
        %v4771 = vadd.f32 0.0, %v4770
        %v4772 = vpop.f32.mrf.mxu0
        %4773 = vmatprep.mubr.bf16.mxu0 0
        %4774 = vmatmul.mubr.bf16.gmra.mxu0 %v4251
        %v4775 = vpop.f32.mrf.mxu0
        %v4776 = vadd.f32 0.0, %v4775
        %v4777 = vpop.f32.mrf.mxu0
        %v4778 = vpop.f32.mrf.mxu0
        %v4779 = vadd.f32 0.0, %v4778
        %v4780 = vpop.f32.mrf.mxu0
        %4781 = vmatprep.mubr.bf16.mxu0 0
        %4782 = vmatmul.mubr.bf16.gmra.mxu0 %v4252
        %v4783 = vpop.f32.mrf.mxu0
        %v4784 = vadd.f32 0.0, %v4783
        %v4785 = vpop.f32.mrf.mxu0
        %v4786 = vpop.f32.mrf.mxu0
        %v4787 = vadd.f32 0.0, %v4786
        %v4788 = vpop.f32.mrf.mxu0
        %4789 = vdwg.mxu0
        %v4790 = vmul.f32 %v4344, %v3477
        %v4791 = vmul.f32 %v4347, %v3480
        %v4792 = vmul.f32 %v4352, %v3485
        %v4793 = vmul.f32 %v4355, %v3488
        %v4794 = vmul.f32 %v4360, %v3493
        %v4795 = vmul.f32 %v4363, %v3496
        %v4796 = vmul.f32 %v4368, %v3501
        %v4797 = vmul.f32 %v4371, %v3504
        %v4798 = vmul.f32 %v4376, %v3509
        %v4799 = vmul.f32 %v4379, %v3512
        %v4800 = vmul.f32 %v4384, %v3517
        %v4801 = vmul.f32 %v4387, %v3520
        %v4802 = vmul.f32 %v4392, %v3525
        %v4803 = vmul.f32 %v4395, %v3528
        %v4804 = vmul.f32 %v4400, %v3533
        %v4805 = vmul.f32 %v4403, %v3536
        %v4806 = vmul.f32 %v4408, %v3541
        %v4807 = vmul.f32 %v4411, %v3544
        %v4808 = vmul.f32 %v4416, %v3549
        %v4809 = vmul.f32 %v4419, %v3552
        %v4810 = vmul.f32 %v4424, %v3557
        %v4811 = vmul.f32 %v4427, %v3560
        %v4812 = vmul.f32 %v4432, %v3565
        %v4813 = vmul.f32 %v4435, %v3568
        %v4814 = vmul.f32 %v4440, %v3573
        %v4815 = vmul.f32 %v4443, %v3576
        %v4816 = vmul.f32 %v4448, %v3581
        %v4817 = vmul.f32 %v4451, %v3584
        %v4818 = vmul.f32 %v4456, %v3589
        %v4819 = vmul.f32 %v4459, %v3592
        %v4820 = vmul.f32 %v4464, %v3597
        %v4821 = vmul.f32 %v4467, %v3600
        %v4822 = vmul.f32 %v4472, %v3605
        %v4823 = vmul.f32 %v4475, %v3608
        %v4824 = vmul.f32 %v4480, %v3613
        %v4825 = vmul.f32 %v4483, %v3616
        %v4826 = vmul.f32 %v4488, %v3621
        %v4827 = vmul.f32 %v4491, %v3624
        %v4828 = vmul.f32 %v4496, %v3629
        %v4829 = vmul.f32 %v4499, %v3632
        %v4830 = vmul.f32 %v4504, %v3637
        %v4831 = vmul.f32 %v4507, %v3640
        %v4832 = vmul.f32 %v4512, %v3645
        %v4833 = vmul.f32 %v4515, %v3648
        %v4834 = vmul.f32 %v4520, %v3653
        %v4835 = vmul.f32 %v4523, %v3656
        %v4836 = vmul.f32 %v4528, %v3661
        %v4837 = vmul.f32 %v4531, %v3664
        %v4838 = vmul.f32 %v4536, %v3669
        %v4839 = vmul.f32 %v4539, %v3672
        %v4840 = vmul.f32 %v4544, %v3677
        %v4841 = vmul.f32 %v4547, %v3680
        %v4842 = vmul.f32 %v4552, %v3685
        %v4843 = vmul.f32 %v4555, %v3688
        %v4844 = vmul.f32 %v4560, %v3693
        %v4845 = vmul.f32 %v4563, %v3696
        %v4846 = vmul.f32 %v4568, %v3701
        %v4847 = vmul.f32 %v4571, %v3704
        %v4848 = vmul.f32 %v4576, %v3709
        %v4849 = vmul.f32 %v4579, %v3712
        %v4850 = vmul.f32 %v4584, %v3717
        %v4851 = vmul.f32 %v4587, %v3720
        %v4852 = vmul.f32 %v4592, %v3725
        %v4853 = vmul.f32 %v4595, %v3728
        %v4854 = vmul.f32 %v4600, %v3733
        %v4855 = vmul.f32 %v4603, %v3736
        %v4856 = vmul.f32 %v4608, %v3741
        %v4857 = vmul.f32 %v4611, %v3744
        %v4858 = vmul.f32 %v4616, %v3749
        %v4859 = vmul.f32 %v4619, %v3752
        %v4860 = vmul.f32 %v4624, %v3757
        %v4861 = vmul.f32 %v4627, %v3760
        %v4862 = vmul.f32 %v4632, %v3765
        %v4863 = vmul.f32 %v4635, %v3768
        %v4864 = vmul.f32 %v4640, %v3773
        %v4865 = vmul.f32 %v4643, %v3776
        %v4866 = vmul.f32 %v4648, %v3781
        %v4867 = vmul.f32 %v4651, %v3784
        %v4868 = vmul.f32 %v4656, %v3789
        %v4869 = vmul.f32 %v4659, %v3792
        %v4870 = vmul.f32 %v4664, %v3797
        %v4871 = vmul.f32 %v4667, %v3800
        %v4872 = vmul.f32 %v4672, %v3805
        %v4873 = vmul.f32 %v4675, %v3808
        %v4874 = vmul.f32 %v4680, %v3813
        %v4875 = vmul.f32 %v4683, %v3816
        %v4876 = vmul.f32 %v4688, %v3821
        %v4877 = vmul.f32 %v4691, %v3824
        %v4878 = vmul.f32 %v4696, %v3829
        %v4879 = vmul.f32 %v4699, %v3832
        %v4880 = vmul.f32 %v4704, %v3837
        %v4881 = vmul.f32 %v4707, %v3840
        %v4882 = vmul.f32 %v4712, %v3845
        %v4883 = vmul.f32 %v4715, %v3848
        %v4884 = vmul.f32 %v4720, %v3853
        %v4885 = vmul.f32 %v4723, %v3856
        %v4886 = vmul.f32 %v4728, %v3861
        %v4887 = vmul.f32 %v4731, %v3864
        %v4888 = vmul.f32 %v4736, %v3869
        %v4889 = vmul.f32 %v4739, %v3872
        %v4890 = vmul.f32 %v4744, %v3877
        %v4891 = vmul.f32 %v4747, %v3880
        %v4892 = vmul.f32 %v4752, %v3885
        %v4893 = vmul.f32 %v4755, %v3888
        %v4894 = vmul.f32 %v4760, %v3893
        %v4895 = vmul.f32 %v4763, %v3896
        %v4896 = vmul.f32 %v4768, %v3901
        %v4897 = vmul.f32 %v4771, %v3904
        %v4898 = vmul.f32 %v4776, %v3909
        %v4899 = vmul.f32 %v4779, %v3912
        %v4900 = vmul.f32 %v4784, %v3917
        %v4901 = vmul.f32 %v4787, %v3920
        %v4902 = vpack.c.bf16 %v4791, %v4790
        %v4903 = vpack.c.bf16 %v4793, %v4792
        %v4904 = vpack.c.bf16 %v4795, %v4794
        %v4905 = vpack.c.bf16 %v4797, %v4796
        %v4906 = vpack.c.bf16 %v4799, %v4798
        %v4907 = vpack.c.bf16 %v4801, %v4800
        %v4908 = vpack.c.bf16 %v4803, %v4802
        %v4909 = vpack.c.bf16 %v4805, %v4804
        %v4910 = vpack.c.bf16 %v4807, %v4806
        %v4911 = vpack.c.bf16 %v4809, %v4808
        %v4912 = vpack.c.bf16 %v4811, %v4810
        %v4913 = vpack.c.bf16 %v4813, %v4812
        %v4914 = vpack.c.bf16 %v4815, %v4814
        %v4915 = vpack.c.bf16 %v4817, %v4816
        %v4916 = vpack.c.bf16 %v4819, %v4818
        %v4917 = vpack.c.bf16 %v4821, %v4820
        %v4918 = vpack.c.bf16 %v4823, %v4822
        %v4919 = vpack.c.bf16 %v4825, %v4824
        %v4920 = vpack.c.bf16 %v4827, %v4826
        %v4921 = vpack.c.bf16 %v4829, %v4828
        %v4922 = vpack.c.bf16 %v4831, %v4830
        %v4923 = vpack.c.bf16 %v4833, %v4832
        %v4924 = vpack.c.bf16 %v4835, %v4834
        %v4925 = vpack.c.bf16 %v4837, %v4836
        %v4926 = vpack.c.bf16 %v4839, %v4838
        %v4927 = vpack.c.bf16 %v4841, %v4840
        %v4928 = vpack.c.bf16 %v4843, %v4842
        %v4929 = vpack.c.bf16 %v4845, %v4844
        %v4930 = vpack.c.bf16 %v4847, %v4846
        %v4931 = vpack.c.bf16 %v4849, %v4848
        %v4932 = vpack.c.bf16 %v4851, %v4850
        %v4933 = vpack.c.bf16 %v4853, %v4852
        %v4934 = vpack.c.bf16 %v4855, %v4854
        %v4935 = vpack.c.bf16 %v4857, %v4856
        %v4936 = vpack.c.bf16 %v4859, %v4858
        %v4937 = vpack.c.bf16 %v4861, %v4860
        %v4938 = vpack.c.bf16 %v4863, %v4862
        %v4939 = vpack.c.bf16 %v4865, %v4864
        %v4940 = vpack.c.bf16 %v4867, %v4866
        %v4941 = vpack.c.bf16 %v4869, %v4868
        %v4942 = vpack.c.bf16 %v4871, %v4870
        %v4943 = vpack.c.bf16 %v4873, %v4872
        %v4944 = vpack.c.bf16 %v4875, %v4874
        %v4945 = vpack.c.bf16 %v4877, %v4876
        %v4946 = vpack.c.bf16 %v4879, %v4878
        %v4947 = vpack.c.bf16 %v4881, %v4880
        %v4948 = vpack.c.bf16 %v4883, %v4882
        %v4949 = vpack.c.bf16 %v4885, %v4884
        %v4950 = vpack.c.bf16 %v4887, %v4886
        %v4951 = vpack.c.bf16 %v4889, %v4888
        %v4952 = vpack.c.bf16 %v4891, %v4890
        %v4953 = vpack.c.bf16 %v4893, %v4892
        %v4954 = vpack.c.bf16 %v4895, %v4894
        %v4955 = vpack.c.bf16 %v4897, %v4896
        %v4956 = vpack.c.bf16 %v4899, %v4898
        %v4957 = vpack.c.bf16 %v4901, %v4900
        %v5022 = vunpack.c.l.b16 %v459
        %v5023 = vunpack.c.h.b16 %v459
        %v5024 = vunpack.c.l.b16 %v460
        %v5025 = vunpack.c.h.b16 %v460
        %v5026 = vunpack.c.l.b16 %v461
        %v5027 = vunpack.c.h.b16 %v461
        %v5028 = vunpack.c.l.b16 %v462
        %v5029 = vunpack.c.l.b16 %v463
        %v5030 = vunpack.c.h.b16 %v463
        %v5031 = vunpack.c.l.b16 %v464
        %v5032 = vunpack.c.h.b16 %v464
        %v5033 = vunpack.c.l.b16 %v465
        %v5034 = vunpack.c.h.b16 %v465
        %v5035 = vunpack.c.l.b16 %v466
        %v5036 = vunpack.c.l.b16 %v467
        %v5037 = vunpack.c.h.b16 %v467
        %v5038 = vunpack.c.l.b16 %v468
        %v5039 = vunpack.c.h.b16 %v468
        %v5040 = vunpack.c.l.b16 %v469
        %v5041 = vunpack.c.h.b16 %v469
        %v5042 = vunpack.c.l.b16 %v470
        %v5043 = vunpack.c.l.b16 %v471
        %v5044 = vunpack.c.h.b16 %v471
        %v5045 = vunpack.c.l.b16 %v472
        %v5046 = vunpack.c.h.b16 %v472
        %v5047 = vunpack.c.l.b16 %v473
        %v5048 = vunpack.c.h.b16 %v473
        %v5049 = vunpack.c.l.b16 %v474
        %v5050 = vunpack.c.l.b16 %v475
        %v5051 = vunpack.c.h.b16 %v475
        %v5052 = vunpack.c.l.b16 %v476
        %v5053 = vunpack.c.h.b16 %v476
        %v5054 = vunpack.c.l.b16 %v477
        %v5055 = vunpack.c.h.b16 %v477
        %v5056 = vunpack.c.l.b16 %v478
        %v5057 = vunpack.c.l.b16 %v479
        %v5058 = vunpack.c.h.b16 %v479
        %v5059 = vunpack.c.l.b16 %v480
        %v5060 = vunpack.c.h.b16 %v480
        %v5061 = vunpack.c.l.b16 %v481
        %v5062 = vunpack.c.h.b16 %v481
        %v5063 = vunpack.c.l.b16 %v482
        %v5064 = vunpack.c.l.b16 %v483
        %v5065 = vunpack.c.h.b16 %v483
        %v5066 = vunpack.c.l.b16 %v484
        %v5067 = vunpack.c.h.b16 %v484
        %v5068 = vunpack.c.l.b16 %v485
        %v5069 = vunpack.c.h.b16 %v485
        %v5070 = vunpack.c.l.b16 %v486
        %v5071 = vunpack.c.l.b16 %v487
        %v5072 = vunpack.c.h.b16 %v487
        %v5073 = vunpack.c.l.b16 %v488
        %v5074 = vunpack.c.h.b16 %v488
        %v5075 = vunpack.c.l.b16 %v489
        %v5076 = vunpack.c.h.b16 %v489
        %v5077 = vunpack.c.l.b16 %v490
        %v5078 = vunpack.c.l.b16 %v491
        %v5079 = vunpack.c.h.b16 %v491
        %v5080 = vunpack.c.l.b16 %v492
        %v5081 = vunpack.c.h.b16 %v492
        %v5082 = vunpack.c.l.b16 %v493
        %v5083 = vunpack.c.h.b16 %v493
        %v5084 = vunpack.c.l.b16 %v494
        %v5085 = vunpack.c.l.b16 %v495
        %v5086 = vunpack.c.h.b16 %v495
        %v5087 = vunpack.c.l.b16 %v496
        %v5088 = vunpack.c.h.b16 %v496
        %v5089 = vunpack.c.l.b16 %v497
        %v5090 = vunpack.c.h.b16 %v497
        %v5091 = vunpack.c.l.b16 %v498
        %v5092 = vunpack.c.l.b16 %v499
        %v5093 = vunpack.c.h.b16 %v499
        %v5094 = vunpack.c.l.b16 %v500
        %v5095 = vunpack.c.h.b16 %v500
        %v5096 = vunpack.c.l.b16 %v501
        %v5097 = vunpack.c.h.b16 %v501
        %v5098 = vunpack.c.l.b16 %v502
        %v5099 = vunpack.c.l.b16 %v503
        %v5100 = vunpack.c.h.b16 %v503
        %v5101 = vunpack.c.l.b16 %v504
        %v5102 = vunpack.c.h.b16 %v504
        %v5103 = vunpack.c.l.b16 %v505
        %v5104 = vunpack.c.h.b16 %v505
        %v5105 = vunpack.c.l.b16 %v506
        %v5106 = vunpack.c.l.b16 %v507
        %v5107 = vunpack.c.h.b16 %v507
        %v5108 = vunpack.c.l.b16 %v508
        %v5109 = vunpack.c.h.b16 %v508
        %v5110 = vunpack.c.l.b16 %v509
        %v5111 = vunpack.c.h.b16 %v509
        %v5112 = vunpack.c.l.b16 %v510
        %v5113 = vunpack.c.l.b16 %v511
        %v5114 = vunpack.c.h.b16 %v511
        %v5115 = vunpack.c.l.b16 %v512
        %v5116 = vunpack.c.h.b16 %v512
        %v5117 = vunpack.c.l.b16 %v513
        %v5118 = vunpack.c.h.b16 %v513
        %v5119 = vunpack.c.l.b16 %v514
        %v5120 = vunpack.c.l.b16 %v515
        %v5121 = vunpack.c.h.b16 %v515
        %v5122 = vunpack.c.l.b16 %v516
        %v5123 = vunpack.c.h.b16 %v516
        %v5124 = vunpack.c.l.b16 %v517
        %v5125 = vunpack.c.h.b16 %v517
        %v5126 = vunpack.c.l.b16 %v518
        %v5127 = vunpack.c.l.b16 %v519
        %v5128 = vunpack.c.h.b16 %v519
        %v5129 = vunpack.c.l.b16 %v520
        %v5130 = vunpack.c.h.b16 %v520
        %v5131 = vunpack.c.l.b16 %v521
        %v5132 = vunpack.c.h.b16 %v521
        %v5133 = vunpack.c.l.b16 %v522
        %v5134 = vpack.c.b16 %v5029, %v5022
        %v5135 = vpack.c.b16 %v5030, %v5023
        %v5136 = vpack.c.b16 %v5031, %v5024
        %v5137 = vpack.c.b16 %v5032, %v5025
        %v5138 = vpack.c.b16 %v5033, %v5026
        %v5139 = vpack.c.b16 %v5034, %v5027
        %v5140 = vpack.c.b16 %v5035, %v5028
        %v5141 = vpack.c.b16 %v5043, %v5036
        %v5142 = vpack.c.b16 %v5044, %v5037
        %v5143 = vpack.c.b16 %v5045, %v5038
        %v5144 = vpack.c.b16 %v5046, %v5039
        %v5145 = vpack.c.b16 %v5047, %v5040
        %v5146 = vpack.c.b16 %v5048, %v5041
        %v5147 = vpack.c.b16 %v5049, %v5042
        %v5148 = vpack.c.b16 %v5057, %v5050
        %v5149 = vpack.c.b16 %v5058, %v5051
        %v5150 = vpack.c.b16 %v5059, %v5052
        %v5151 = vpack.c.b16 %v5060, %v5053
        %v5152 = vpack.c.b16 %v5061, %v5054
        %v5153 = vpack.c.b16 %v5062, %v5055
        %v5154 = vpack.c.b16 %v5063, %v5056
        %v5155 = vpack.c.b16 %v5071, %v5064
        %v5156 = vpack.c.b16 %v5072, %v5065
        %v5157 = vpack.c.b16 %v5073, %v5066
        %v5158 = vpack.c.b16 %v5074, %v5067
        %v5159 = vpack.c.b16 %v5075, %v5068
        %v5160 = vpack.c.b16 %v5076, %v5069
        %v5161 = vpack.c.b16 %v5077, %v5070
        %v5162 = vpack.c.b16 %v5085, %v5078
        %v5163 = vpack.c.b16 %v5086, %v5079
        %v5164 = vpack.c.b16 %v5087, %v5080
        %v5165 = vpack.c.b16 %v5088, %v5081
        %v5166 = vpack.c.b16 %v5089, %v5082
        %v5167 = vpack.c.b16 %v5090, %v5083
        %v5168 = vpack.c.b16 %v5091, %v5084
        %v5169 = vpack.c.b16 %v5099, %v5092
        %v5170 = vpack.c.b16 %v5100, %v5093
        %v5171 = vpack.c.b16 %v5101, %v5094
        %v5172 = vpack.c.b16 %v5102, %v5095
        %v5173 = vpack.c.b16 %v5103, %v5096
        %v5174 = vpack.c.b16 %v5104, %v5097
        %v5175 = vpack.c.b16 %v5105, %v5098
        %v5176 = vpack.c.b16 %v5113, %v5106
        %v5177 = vpack.c.b16 %v5114, %v5107
        %v5178 = vpack.c.b16 %v5115, %v5108
        %v5179 = vpack.c.b16 %v5116, %v5109
        %v5180 = vpack.c.b16 %v5117, %v5110
        %v5181 = vpack.c.b16 %v5118, %v5111
        %v5182 = vpack.c.b16 %v5119, %v5112
        %v5183 = vpack.c.b16 %v5127, %v5120
        %v5184 = vpack.c.b16 %v5128, %v5121
        %v5185 = vpack.c.b16 %v5129, %v5122
        %v5186 = vpack.c.b16 %v5130, %v5123
        %v5187 = vpack.c.b16 %v5131, %v5124
        %v5188 = vpack.c.b16 %v5132, %v5125
        %v5189 = vpack.c.b16 %v5133, %v5126
        %5246 = vmatprep.subr.bf16.mxu0 0
        %5247 = vmatpush1.bf16.msra.mxu0 %v4909
        %5248 = vmatprep.subr.bf16.mxu0 0
        %5249 = vmatpush1.bf16.msra.mxu0 %v4908
        %5250 = vmatprep.subr.bf16.mxu0 0
        %5251 = vmatpush1.bf16.msra.mxu0 %v4907
        %5252 = vmatprep.subr.bf16.mxu0 0
        %5253 = vmatpush1.bf16.msra.mxu0 %v4906
        %5254 = vmatprep.subr.bf16.mxu0 0
        %5255 = vmatpush1.bf16.msra.mxu0 %v4905
        %5256 = vmatprep.subr.bf16.mxu0 0
        %5257 = vmatpush1.bf16.msra.mxu0 %v4904
        %5258 = vmatprep.subr.bf16.mxu0 0
        %5259 = vmatpush1.bf16.msra.mxu0 %v4903
        %5260 = vmatprep.subr.bf16.mxu0 0
        %5261 = vmatpush1.bf16.msra.mxu0 %v4902
        %5262 = vmatprep.subr.bf16.mxu0 0
        %5263 = vmatpush2.bf16.msra.mxu0 %v4917
        %5264 = vmatprep.subr.bf16.mxu0 0
        %5265 = vmatpush2.bf16.msra.mxu0 %v4916
        %5266 = vmatprep.subr.bf16.mxu0 0
        %5267 = vmatpush2.bf16.msra.mxu0 %v4915
        %5268 = vmatprep.subr.bf16.mxu0 0
        %5269 = vmatpush2.bf16.msra.mxu0 %v4914
        %5270 = vmatprep.subr.bf16.mxu0 0
        %5271 = vmatpush2.bf16.msra.mxu0 %v4913
        %5272 = vmatprep.subr.bf16.mxu0 0
        %5273 = vmatpush2.bf16.msra.mxu0 %v4912
        %5274 = vmatprep.subr.bf16.mxu0 0
        %5275 = vmatpush2.bf16.msra.mxu0 %v4911
        %5276 = vmatprep.subr.bf16.mxu0 0
        %5277 = vmatpush2.bf16.msra.mxu0 %v4910
        %5278 = vmatprep.mubr.bf16.mxu0 %v5135
        %5279 = vmatmul.mubr.bf16.gmra.mxu0 %v5134
        %v5280 = vpop.f32.mrf.mxu0
        %v5281 = vadd.f32 0.0, %v5280
        %v5282 = vpop.f32.mrf.mxu0
        %v5283 = vpop.f32.mrf.mxu0
        %v5284 = vadd.f32 0.0, %v5283
        %v5285 = vpop.f32.mrf.mxu0
        %5286 = vmatprep.mubr.bf16.mxu0 %v5142
        %5287 = vmatmul.mubr.bf16.gmra.mxu0 %v5141
        %v5288 = vpop.f32.mrf.mxu0
        %v5289 = vadd.f32 0.0, %v5288
        %v5290 = vpop.f32.mrf.mxu0
        %v5291 = vpop.f32.mrf.mxu0
        %v5292 = vadd.f32 0.0, %v5291
        %v5293 = vpop.f32.mrf.mxu0
        %5294 = vmatprep.mubr.bf16.mxu0 %v5149
        %5295 = vmatmul.mubr.bf16.gmra.mxu0 %v5148
        %v5296 = vpop.f32.mrf.mxu0
        %v5297 = vadd.f32 0.0, %v5296
        %v5298 = vpop.f32.mrf.mxu0
        %v5299 = vpop.f32.mrf.mxu0
        %v5300 = vadd.f32 0.0, %v5299
        %v5301 = vpop.f32.mrf.mxu0
        %5302 = vmatprep.mubr.bf16.mxu0 %v5156
        %5303 = vmatmul.mubr.bf16.gmra.mxu0 %v5155
        %v5304 = vpop.f32.mrf.mxu0
        %v5305 = vadd.f32 0.0, %v5304
        %v5306 = vpop.f32.mrf.mxu0
        %v5307 = vpop.f32.mrf.mxu0
        %v5308 = vadd.f32 0.0, %v5307
        %v5309 = vpop.f32.mrf.mxu0
        %5310 = vmatprep.mubr.bf16.mxu0 %v5163
        %5311 = vmatmul.mubr.bf16.gmra.mxu0 %v5162
        %v5312 = vpop.f32.mrf.mxu0
        %v5313 = vadd.f32 0.0, %v5312
        %v5314 = vpop.f32.mrf.mxu0
        %v5315 = vpop.f32.mrf.mxu0
        %v5316 = vadd.f32 0.0, %v5315
        %v5317 = vpop.f32.mrf.mxu0
        %5318 = vmatprep.mubr.bf16.mxu0 %v5170
        %5319 = vmatmul.mubr.bf16.gmra.mxu0 %v5169
        %v5320 = vpop.f32.mrf.mxu0
        %v5321 = vadd.f32 0.0, %v5320
        %v5322 = vpop.f32.mrf.mxu0
        %v5323 = vpop.f32.mrf.mxu0
        %v5324 = vadd.f32 0.0, %v5323
        %v5325 = vpop.f32.mrf.mxu0
        %5326 = vmatprep.mubr.bf16.mxu0 %v5177
        %5327 = vmatmul.mubr.bf16.gmra.mxu0 %v5176
        %v5328 = vpop.f32.mrf.mxu0
        %v5329 = vadd.f32 0.0, %v5328
        %v5330 = vpop.f32.mrf.mxu0
        %v5331 = vpop.f32.mrf.mxu0
        %v5332 = vadd.f32 0.0, %v5331
        %v5333 = vpop.f32.mrf.mxu0
        %5334 = vmatprep.mubr.bf16.mxu0 %v5184
        %5335 = vmatmul.mubr.bf16.gmra.mxu0 %v5183
        %v5336 = vpop.f32.mrf.mxu0
        %v5337 = vadd.f32 0.0, %v5336
        %v5338 = vpop.f32.mrf.mxu0
        %v5339 = vpop.f32.mrf.mxu0
        %v5340 = vadd.f32 0.0, %v5339
        %v5341 = vpop.f32.mrf.mxu0
        %5342 = vdwg.mxu0
        %5343 = vmatprep.subr.bf16.mxu0 0
        %5344 = vmatpush1.bf16.msra.mxu0 %v4925
        %5345 = vmatprep.subr.bf16.mxu0 0
        %5346 = vmatpush1.bf16.msra.mxu0 %v4924
        %5347 = vmatprep.subr.bf16.mxu0 0
        %5348 = vmatpush1.bf16.msra.mxu0 %v4923
        %5349 = vmatprep.subr.bf16.mxu0 0
        %5350 = vmatpush1.bf16.msra.mxu0 %v4922
        %5351 = vmatprep.subr.bf16.mxu0 0
        %5352 = vmatpush1.bf16.msra.mxu0 %v4921
        %5353 = vmatprep.subr.bf16.mxu0 0
        %5354 = vmatpush1.bf16.msra.mxu0 %v4920
        %5355 = vmatprep.subr.bf16.mxu0 0
        %5356 = vmatpush1.bf16.msra.mxu0 %v4919
        %5357 = vmatprep.subr.bf16.mxu0 0
        %5358 = vmatpush1.bf16.msra.mxu0 %v4918
        %5359 = vmatprep.subr.bf16.mxu0 0
        %5360 = vmatpush2.bf16.msra.mxu0 %v4933
        %5361 = vmatprep.subr.bf16.mxu0 0
        %5362 = vmatpush2.bf16.msra.mxu0 %v4932
        %5363 = vmatprep.subr.bf16.mxu0 0
        %5364 = vmatpush2.bf16.msra.mxu0 %v4931
        %5365 = vmatprep.subr.bf16.mxu0 0
        %5366 = vmatpush2.bf16.msra.mxu0 %v4930
        %5367 = vmatprep.subr.bf16.mxu0 0
        %5368 = vmatpush2.bf16.msra.mxu0 %v4929
        %5369 = vmatprep.subr.bf16.mxu0 0
        %5370 = vmatpush2.bf16.msra.mxu0 %v4928
        %5371 = vmatprep.subr.bf16.mxu0 0
        %5372 = vmatpush2.bf16.msra.mxu0 %v4927
        %5373 = vmatprep.subr.bf16.mxu0 0
        %5374 = vmatpush2.bf16.msra.mxu0 %v4926
        %5375 = vmatprep.mubr.bf16.mxu0 %v5137
        %5376 = vmatmul.mubr.bf16.gmra.mxu0 %v5136
        %v5377 = vpop.f32.mrf.mxu0
        %v5378 = vadd.f32 %v5281, %v5377
        %v5379 = vpop.f32.mrf.mxu0
        %v5380 = vpop.f32.mrf.mxu0
        %v5381 = vadd.f32 %v5284, %v5380
        %v5382 = vpop.f32.mrf.mxu0
        %5383 = vmatprep.mubr.bf16.mxu0 %v5144
        %5384 = vmatmul.mubr.bf16.gmra.mxu0 %v5143
        %v5385 = vpop.f32.mrf.mxu0
        %v5386 = vadd.f32 %v5289, %v5385
        %v5387 = vpop.f32.mrf.mxu0
        %v5388 = vpop.f32.mrf.mxu0
        %v5389 = vadd.f32 %v5292, %v5388
        %v5390 = vpop.f32.mrf.mxu0
        %5391 = vmatprep.mubr.bf16.mxu0 %v5151
        %5392 = vmatmul.mubr.bf16.gmra.mxu0 %v5150
        %v5393 = vpop.f32.mrf.mxu0
        %v5394 = vadd.f32 %v5297, %v5393
        %v5395 = vpop.f32.mrf.mxu0
        %v5396 = vpop.f32.mrf.mxu0
        %v5397 = vadd.f32 %v5300, %v5396
        %v5398 = vpop.f32.mrf.mxu0
        %5399 = vmatprep.mubr.bf16.mxu0 %v5158
        %5400 = vmatmul.mubr.bf16.gmra.mxu0 %v5157
        %v5401 = vpop.f32.mrf.mxu0
        %v5402 = vadd.f32 %v5305, %v5401
        %v5403 = vpop.f32.mrf.mxu0
        %v5404 = vpop.f32.mrf.mxu0
        %v5405 = vadd.f32 %v5308, %v5404
        %v5406 = vpop.f32.mrf.mxu0
        %5407 = vmatprep.mubr.bf16.mxu0 %v5165
        %5408 = vmatmul.mubr.bf16.gmra.mxu0 %v5164
        %v5409 = vpop.f32.mrf.mxu0
        %v5410 = vadd.f32 %v5313, %v5409
        %v5411 = vpop.f32.mrf.mxu0
        %v5412 = vpop.f32.mrf.mxu0
        %v5413 = vadd.f32 %v5316, %v5412
        %v5414 = vpop.f32.mrf.mxu0
        %5415 = vmatprep.mubr.bf16.mxu0 %v5172
        %5416 = vmatmul.mubr.bf16.gmra.mxu0 %v5171
        %v5417 = vpop.f32.mrf.mxu0
        %v5418 = vadd.f32 %v5321, %v5417
        %v5419 = vpop.f32.mrf.mxu0
        %v5420 = vpop.f32.mrf.mxu0
        %v5421 = vadd.f32 %v5324, %v5420
        %v5422 = vpop.f32.mrf.mxu0
        %5423 = vmatprep.mubr.bf16.mxu0 %v5179
        %5424 = vmatmul.mubr.bf16.gmra.mxu0 %v5178
        %v5425 = vpop.f32.mrf.mxu0
        %v5426 = vadd.f32 %v5329, %v5425
        %v5427 = vpop.f32.mrf.mxu0
        %v5428 = vpop.f32.mrf.mxu0
        %v5429 = vadd.f32 %v5332, %v5428
        %v5430 = vpop.f32.mrf.mxu0
        %5431 = vmatprep.mubr.bf16.mxu0 %v5186
        %5432 = vmatmul.mubr.bf16.gmra.mxu0 %v5185
        %v5433 = vpop.f32.mrf.mxu0
        %v5434 = vadd.f32 %v5337, %v5433
        %v5435 = vpop.f32.mrf.mxu0
        %v5436 = vpop.f32.mrf.mxu0
        %v5437 = vadd.f32 %v5340, %v5436
        %v5438 = vpop.f32.mrf.mxu0
        %5439 = vdwg.mxu0
        %5440 = vmatprep.subr.bf16.mxu0 0
        %5441 = vmatpush1.bf16.msra.mxu0 %v4941
        %5442 = vmatprep.subr.bf16.mxu0 0
        %5443 = vmatpush1.bf16.msra.mxu0 %v4940
        %5444 = vmatprep.subr.bf16.mxu0 0
        %5445 = vmatpush1.bf16.msra.mxu0 %v4939
        %5446 = vmatprep.subr.bf16.mxu0 0
        %5447 = vmatpush1.bf16.msra.mxu0 %v4938
        %5448 = vmatprep.subr.bf16.mxu0 0
        %5449 = vmatpush1.bf16.msra.mxu0 %v4937
        %5450 = vmatprep.subr.bf16.mxu0 0
        %5451 = vmatpush1.bf16.msra.mxu0 %v4936
        %5452 = vmatprep.subr.bf16.mxu0 0
        %5453 = vmatpush1.bf16.msra.mxu0 %v4935
        %5454 = vmatprep.subr.bf16.mxu0 0
        %5455 = vmatpush1.bf16.msra.mxu0 %v4934
        %5456 = vmatprep.subr.bf16.mxu0 0
        %5457 = vmatpush2.bf16.msra.mxu0 %v4949
        %5458 = vmatprep.subr.bf16.mxu0 0
        %5459 = vmatpush2.bf16.msra.mxu0 %v4948
        %5460 = vmatprep.subr.bf16.mxu0 0
        %5461 = vmatpush2.bf16.msra.mxu0 %v4947
        %5462 = vmatprep.subr.bf16.mxu0 0
        %5463 = vmatpush2.bf16.msra.mxu0 %v4946
        %5464 = vmatprep.subr.bf16.mxu0 0
        %5465 = vmatpush2.bf16.msra.mxu0 %v4945
        %5466 = vmatprep.subr.bf16.mxu0 0
        %5467 = vmatpush2.bf16.msra.mxu0 %v4944
        %5468 = vmatprep.subr.bf16.mxu0 0
        %5469 = vmatpush2.bf16.msra.mxu0 %v4943
        %5470 = vmatprep.subr.bf16.mxu0 0
        %5471 = vmatpush2.bf16.msra.mxu0 %v4942
        %5472 = vmatprep.mubr.bf16.mxu0 %v5139
        %5473 = vmatmul.mubr.bf16.gmra.mxu0 %v5138
        %v5474 = vpop.f32.mrf.mxu0
        %v5475 = vadd.f32 %v5378, %v5474
        %v5476 = vpop.f32.mrf.mxu0
        %v5477 = vpop.f32.mrf.mxu0
        %v5478 = vadd.f32 %v5381, %v5477
        %v5479 = vpop.f32.mrf.mxu0
        %5480 = vmatprep.mubr.bf16.mxu0 %v5146
        %5481 = vmatmul.mubr.bf16.gmra.mxu0 %v5145
        %v5482 = vpop.f32.mrf.mxu0
        %v5483 = vadd.f32 %v5386, %v5482
        %v5484 = vpop.f32.mrf.mxu0
        %v5485 = vpop.f32.mrf.mxu0
        %v5486 = vadd.f32 %v5389, %v5485
        %v5487 = vpop.f32.mrf.mxu0
        %5488 = vmatprep.mubr.bf16.mxu0 %v5153
        %5489 = vmatmul.mubr.bf16.gmra.mxu0 %v5152
        %v5490 = vpop.f32.mrf.mxu0
        %v5491 = vadd.f32 %v5394, %v5490
        %v5492 = vpop.f32.mrf.mxu0
        %v5493 = vpop.f32.mrf.mxu0
        %v5494 = vadd.f32 %v5397, %v5493
        %v5495 = vpop.f32.mrf.mxu0
        %5496 = vmatprep.mubr.bf16.mxu0 %v5160
        %5497 = vmatmul.mubr.bf16.gmra.mxu0 %v5159
        %v5498 = vpop.f32.mrf.mxu0
        %v5499 = vadd.f32 %v5402, %v5498
        %v5500 = vpop.f32.mrf.mxu0
        %v5501 = vpop.f32.mrf.mxu0
        %v5502 = vadd.f32 %v5405, %v5501
        %v5503 = vpop.f32.mrf.mxu0
        %5504 = vmatprep.mubr.bf16.mxu0 %v5167
        %5505 = vmatmul.mubr.bf16.gmra.mxu0 %v5166
        %v5506 = vpop.f32.mrf.mxu0
        %v5507 = vadd.f32 %v5410, %v5506
        %v5508 = vpop.f32.mrf.mxu0
        %v5509 = vpop.f32.mrf.mxu0
        %v5510 = vadd.f32 %v5413, %v5509
        %v5511 = vpop.f32.mrf.mxu0
        %5512 = vmatprep.mubr.bf16.mxu0 %v5174
        %5513 = vmatmul.mubr.bf16.gmra.mxu0 %v5173
        %v5514 = vpop.f32.mrf.mxu0
        %v5515 = vadd.f32 %v5418, %v5514
        %v5516 = vpop.f32.mrf.mxu0
        %v5517 = vpop.f32.mrf.mxu0
        %v5518 = vadd.f32 %v5421, %v5517
        %v5519 = vpop.f32.mrf.mxu0
        %5520 = vmatprep.mubr.bf16.mxu0 %v5181
        %5521 = vmatmul.mubr.bf16.gmra.mxu0 %v5180
        %v5522 = vpop.f32.mrf.mxu0
        %v5523 = vadd.f32 %v5426, %v5522
        %v5524 = vpop.f32.mrf.mxu0
        %v5525 = vpop.f32.mrf.mxu0
        %v5526 = vadd.f32 %v5429, %v5525
        %v5527 = vpop.f32.mrf.mxu0
        %5528 = vmatprep.mubr.bf16.mxu0 %v5188
        %5529 = vmatmul.mubr.bf16.gmra.mxu0 %v5187
        %v5530 = vpop.f32.mrf.mxu0
        %v5531 = vadd.f32 %v5434, %v5530
        %v5532 = vpop.f32.mrf.mxu0
        %v5533 = vpop.f32.mrf.mxu0
        %v5534 = vadd.f32 %v5437, %v5533
        %v5535 = vpop.f32.mrf.mxu0
        %5536 = vdwg.mxu0
        %5537 = vmatprep.subr.bf16.mxu0 0
        %5538 = vmatpush1.bf16.msra.mxu0 %v4957
        %5539 = vmatprep.subr.bf16.mxu0 0
        %5540 = vmatpush1.bf16.msra.mxu0 %v4956
        %5541 = vmatprep.subr.bf16.mxu0 0
        %5542 = vmatpush1.bf16.msra.mxu0 %v4955
        %5543 = vmatprep.subr.bf16.mxu0 0
        %5544 = vmatpush1.bf16.msra.mxu0 %v4954
        %5545 = vmatprep.subr.bf16.mxu0 0
        %5546 = vmatpush1.bf16.msra.mxu0 %v4953
        %5547 = vmatprep.subr.bf16.mxu0 0
        %5548 = vmatpush1.bf16.msra.mxu0 %v4952
        %5549 = vmatprep.subr.bf16.mxu0 0
        %5550 = vmatpush1.bf16.msra.mxu0 %v4951
        %5551 = vmatprep.subr.bf16.mxu0 0
        %5552 = vmatpush1.bf16.msra.mxu0 %v4950
        %5553 = vmatprep.subr.bf16.mxu0 0
        %5554 = vmatpush2.bf16.msra.mxu0 0
        %5555 = vmatprep.subr.bf16.mxu0 0
        %5556 = vmatpush2.bf16.msra.mxu0 0
        %5557 = vmatprep.subr.bf16.mxu0 0
        %5558 = vmatpush2.bf16.msra.mxu0 0
        %5559 = vmatprep.subr.bf16.mxu0 0
        %5560 = vmatpush2.bf16.msra.mxu0 0
        %5561 = vmatprep.subr.bf16.mxu0 0
        %5562 = vmatpush2.bf16.msra.mxu0 0
        %5563 = vmatprep.subr.bf16.mxu0 0
        %5564 = vmatpush2.bf16.msra.mxu0 0
        %5565 = vmatprep.subr.bf16.mxu0 0
        %5566 = vmatpush2.bf16.msra.mxu0 0
        %5567 = vmatprep.subr.bf16.mxu0 0
        %5568 = vmatpush2.bf16.msra.mxu0 0
        %5569 = vmatprep.mubr.bf16.mxu0 0
        %5570 = vmatmul.mubr.bf16.gmra.mxu0 %v5140
        %v5571 = vpop.f32.mrf.mxu0
        %v5572 = vadd.f32 %v5475, %v5571
        %v5573 = vpop.f32.mrf.mxu0
        %v5574 = vpop.f32.mrf.mxu0
        %v5575 = vadd.f32 %v5478, %v5574
        %v5576 = vpop.f32.mrf.mxu0
        %5577 = vmatprep.mubr.bf16.mxu0 0
        %5578 = vmatmul.mubr.bf16.gmra.mxu0 %v5147
        %v5579 = vpop.f32.mrf.mxu0
        %v5580 = vadd.f32 %v5483, %v5579
        %v5581 = vpop.f32.mrf.mxu0
        %v5582 = vpop.f32.mrf.mxu0
        %v5583 = vadd.f32 %v5486, %v5582
        %v5584 = vpop.f32.mrf.mxu0
        %5585 = vmatprep.mubr.bf16.mxu0 0
        %5586 = vmatmul.mubr.bf16.gmra.mxu0 %v5154
        %v5587 = vpop.f32.mrf.mxu0
        %v5588 = vadd.f32 %v5491, %v5587
        %v5589 = vpop.f32.mrf.mxu0
        %v5590 = vpop.f32.mrf.mxu0
        %v5591 = vadd.f32 %v5494, %v5590
        %v5592 = vpop.f32.mrf.mxu0
        %5593 = vmatprep.mubr.bf16.mxu0 0
        %5594 = vmatmul.mubr.bf16.gmra.mxu0 %v5161
        %v5595 = vpop.f32.mrf.mxu0
        %v5596 = vadd.f32 %v5499, %v5595
        %v5597 = vpop.f32.mrf.mxu0
        %v5598 = vpop.f32.mrf.mxu0
        %v5599 = vadd.f32 %v5502, %v5598
        %v5600 = vpop.f32.mrf.mxu0
        %5601 = vmatprep.mubr.bf16.mxu0 0
        %5602 = vmatmul.mubr.bf16.gmra.mxu0 %v5168
        %v5603 = vpop.f32.mrf.mxu0
        %v5604 = vadd.f32 %v5507, %v5603
        %v5605 = vpop.f32.mrf.mxu0
        %v5606 = vpop.f32.mrf.mxu0
        %v5607 = vadd.f32 %v5510, %v5606
        %v5608 = vpop.f32.mrf.mxu0
        %5609 = vmatprep.mubr.bf16.mxu0 0
        %5610 = vmatmul.mubr.bf16.gmra.mxu0 %v5175
        %v5611 = vpop.f32.mrf.mxu0
        %v5612 = vadd.f32 %v5515, %v5611
        %v5613 = vpop.f32.mrf.mxu0
        %v5614 = vpop.f32.mrf.mxu0
        %v5615 = vadd.f32 %v5518, %v5614
        %v5616 = vpop.f32.mrf.mxu0
        %5617 = vmatprep.mubr.bf16.mxu0 0
        %5618 = vmatmul.mubr.bf16.gmra.mxu0 %v5182
        %v5619 = vpop.f32.mrf.mxu0
        %v5620 = vadd.f32 %v5523, %v5619
        %v5621 = vpop.f32.mrf.mxu0
        %v5622 = vpop.f32.mrf.mxu0
        %v5623 = vadd.f32 %v5526, %v5622
        %v5624 = vpop.f32.mrf.mxu0
        %5625 = vmatprep.mubr.bf16.mxu0 0
        %5626 = vmatmul.mubr.bf16.gmra.mxu0 %v5189
        %v5627 = vpop.f32.mrf.mxu0
        %v5628 = vadd.f32 %v5531, %v5627
        %v5629 = vpop.f32.mrf.mxu0
        %v5630 = vpop.f32.mrf.mxu0
        %v5631 = vadd.f32 %v5534, %v5630
        %v5632 = vpop.f32.mrf.mxu0
        %5633 = vdwg.mxu0
        %v5634 = vpack.c.bf16 %v5575, %v5572
        %v5635 = vpack.c.bf16 %v5583, %v5580
        %v5636 = vpack.c.bf16 %v5591, %v5588
        %v5637 = vpack.c.bf16 %v5599, %v5596
        %v5638 = vpack.c.bf16 %v5607, %v5604
        %v5639 = vpack.c.bf16 %v5615, %v5612
        %v5640 = vpack.c.bf16 %v5623, %v5620
        %v5641 = vpack.c.bf16 %v5631, %v5628
        %v5642 = vlaneseq
        %v5643 = vshrl.u32 %v5642, 7
        %v5644 = vsub.s32 2, %v5643
        %v5645 = vrot.slane %v601, %v5644
        %v5654 = vunpack.c.l.b16 %v549
        %v5655 = vunpack.c.l.b16 %v550
        %v5656 = vunpack.c.l.b16 %v551
        %v5657 = vunpack.c.l.b16 %v552
        %v5658 = vunpack.c.l.b16 %v553
        %v5659 = vunpack.c.l.b16 %v554
        %v5660 = vunpack.c.l.b16 %v555
        %v5661 = vunpack.c.l.b16 %v556
        %v5662 = vpack.c.b16 %v5655, %v5654
        %v5663 = vpack.c.b16 %v5657, %v5656
        %v5664 = vpack.c.b16 %v5659, %v5658
        %v5665 = vpack.c.b16 %v5661, %v5660
        %v5671 = vsel %vm3955, %v5634, 0
        %v5674 = vsel %vm3955, %v5635, 0
        %v5677 = vsel %vm3955, %v5636, 0
        %v5680 = vsel %vm3955, %v5637, 0
        %v5683 = vsel %vm3955, %v5638, 0
        %v5686 = vsel %vm3955, %v5639, 0
        %v5689 = vsel %vm3955, %v5640, 0
        %v5692 = vsel %vm3955, %v5641, 0
        %5694 = vmatprep.subr.bf16.mxu0 0
        %5695 = vmatpush1.bf16.msra.mxu0 0
        %5696 = vmatprep.subr.bf16.mxu0 0
        %5697 = vmatpush1.bf16.msra.mxu0 0
        %5698 = vmatprep.subr.bf16.mxu0 0
        %5699 = vmatpush1.bf16.msra.mxu0 0
        %5700 = vmatprep.subr.bf16.mxu0 0
        %5701 = vmatpush1.bf16.msra.mxu0 0
        %5702 = vmatprep.subr.bf16.mxu0 0
        %5703 = vmatpush1.bf16.msra.mxu0 %v5665
        %5704 = vmatprep.subr.bf16.mxu0 0
        %5705 = vmatpush1.bf16.msra.mxu0 %v5664
        %5706 = vmatprep.subr.bf16.mxu0 0
        %5707 = vmatpush1.bf16.msra.mxu0 %v5663
        %5708 = vmatprep.subr.bf16.mxu0 0
        %5709 = vmatpush1.bf16.msra.mxu0 %v5662
        %5710 = vmatprep.subr.bf16.mxu0 0
        %5711 = vmatpush2.bf16.msra.mxu0 0
        %5712 = vmatprep.subr.bf16.mxu0 0
        %5713 = vmatpush2.bf16.msra.mxu0 0
        %5714 = vmatprep.subr.bf16.mxu0 0
        %5715 = vmatpush2.bf16.msra.mxu0 0
        %5716 = vmatprep.subr.bf16.mxu0 0
        %5717 = vmatpush2.bf16.msra.mxu0 0
        %5718 = vmatprep.subr.bf16.mxu0 0
        %5719 = vmatpush2.bf16.msra.mxu0 0
        %5720 = vmatprep.subr.bf16.mxu0 0
        %5721 = vmatpush2.bf16.msra.mxu0 0
        %5722 = vmatprep.subr.bf16.mxu0 0
        %5723 = vmatpush2.bf16.msra.mxu0 0
        %5724 = vmatprep.subr.bf16.mxu0 0
        %5725 = vmatpush2.bf16.msra.mxu0 0
        %5726 = vmatprep.mubr.bf16.mxu0 0
        %5727 = vmatmul.mubr.bf16.gmra.mxu0 %v5671
        %v5728 = vpop.f32.mrf.mxu0
        %v5729 = vadd.f32 %v5645, %v5728
        %v5730 = vpop.f32.mrf.mxu0
        %v5731 = vpop.f32.mrf.mxu0
        %v5732 = vadd.f32 %v5645, %v5731
        %v5733 = vpop.f32.mrf.mxu0
        %5734 = vmatprep.mubr.bf16.mxu0 0
        %5735 = vmatmul.mubr.bf16.gmra.mxu0 %v5674
        %v5736 = vpop.f32.mrf.mxu0
        %v5737 = vadd.f32 %v5645, %v5736
        %v5738 = vpop.f32.mrf.mxu0
        %v5739 = vpop.f32.mrf.mxu0
        %v5740 = vadd.f32 %v5645, %v5739
        %v5741 = vpop.f32.mrf.mxu0
        %5742 = vmatprep.mubr.bf16.mxu0 0
        %5743 = vmatmul.mubr.bf16.gmra.mxu0 %v5677
        %v5744 = vpop.f32.mrf.mxu0
        %v5745 = vadd.f32 %v5645, %v5744
        %v5746 = vpop.f32.mrf.mxu0
        %v5747 = vpop.f32.mrf.mxu0
        %v5748 = vadd.f32 %v5645, %v5747
        %v5749 = vpop.f32.mrf.mxu0
        %5750 = vmatprep.mubr.bf16.mxu0 0
        %5751 = vmatmul.mubr.bf16.gmra.mxu0 %v5680
        %v5752 = vpop.f32.mrf.mxu0
        %v5753 = vadd.f32 %v5645, %v5752
        %v5754 = vpop.f32.mrf.mxu0
        %v5755 = vpop.f32.mrf.mxu0
        %v5756 = vadd.f32 %v5645, %v5755
        %v5757 = vpop.f32.mrf.mxu0
        %5758 = vmatprep.mubr.bf16.mxu0 0
        %5759 = vmatmul.mubr.bf16.gmra.mxu0 %v5683
        %v5760 = vpop.f32.mrf.mxu0
        %v5761 = vadd.f32 %v5645, %v5760
        %v5762 = vpop.f32.mrf.mxu0
        %v5763 = vpop.f32.mrf.mxu0
        %v5764 = vadd.f32 %v5645, %v5763
        %v5765 = vpop.f32.mrf.mxu0
        %5766 = vmatprep.mubr.bf16.mxu0 0
        %5767 = vmatmul.mubr.bf16.gmra.mxu0 %v5686
        %v5768 = vpop.f32.mrf.mxu0
        %v5769 = vadd.f32 %v5645, %v5768
        %v5770 = vpop.f32.mrf.mxu0
        %v5771 = vpop.f32.mrf.mxu0
        %v5772 = vadd.f32 %v5645, %v5771
        %v5773 = vpop.f32.mrf.mxu0
        %5774 = vmatprep.mubr.bf16.mxu0 0
        %5775 = vmatmul.mubr.bf16.gmra.mxu0 %v5689
        %v5776 = vpop.f32.mrf.mxu0
        %v5777 = vadd.f32 %v5645, %v5776
        %v5778 = vpop.f32.mrf.mxu0
        %v5779 = vpop.f32.mrf.mxu0
        %v5780 = vadd.f32 %v5645, %v5779
        %v5781 = vpop.f32.mrf.mxu0
        %5782 = vmatprep.mubr.bf16.mxu0 0
        %5783 = vmatmul.mubr.bf16.gmra.mxu0 %v5692
        %v5784 = vpop.f32.mrf.mxu0
        %v5785 = vadd.f32 %v5645, %v5784
        %v5786 = vpop.f32.mrf.mxu0
        %v5787 = vpop.f32.mrf.mxu0
        %v5788 = vadd.f32 %v5645, %v5787
        %v5789 = vpop.f32.mrf.mxu0
        %5790 = vdwg.mxu0
        %v5791 = vmax.f32 %v5729, 0.0
        %v5792 = vmax.f32 %v5732, 0.0
        %v5793 = vmax.f32 %v5737, 0.0
        %v5794 = vmax.f32 %v5740, 0.0
        %v5795 = vmax.f32 %v5745, 0.0
        %v5796 = vmax.f32 %v5748, 0.0
        %v5797 = vmax.f32 %v5753, 0.0
        %v5798 = vmax.f32 %v5756, 0.0
        %v5799 = vmax.f32 %v5761, 0.0
        %v5800 = vmax.f32 %v5764, 0.0
        %v5801 = vmax.f32 %v5769, 0.0
        %v5802 = vmax.f32 %v5772, 0.0
        %v5803 = vmax.f32 %v5777, 0.0
        %v5804 = vmax.f32 %v5780, 0.0
        %v5805 = vmax.f32 %v5785, 0.0
        %v5806 = vmax.f32 %v5788, 0.0
        %v5807 = vand.u32 2147483647, %v5729
        %v5808 = vand.u32 2147483647, %v5732
        %v5809 = vand.u32 2147483647, %v5737
        %v5810 = vand.u32 2147483647, %v5740
        %v5811 = vand.u32 2147483647, %v5745
        %v5812 = vand.u32 2147483647, %v5748
        %v5813 = vand.u32 2147483647, %v5753
        %v5814 = vand.u32 2147483647, %v5756
        %v5815 = vand.u32 2147483647, %v5761
        %v5816 = vand.u32 2147483647, %v5764
        %v5817 = vand.u32 2147483647, %v5769
        %v5818 = vand.u32 2147483647, %v5772
        %v5819 = vand.u32 2147483647, %v5777
        %v5820 = vand.u32 2147483647, %v5780
        %v5821 = vand.u32 2147483647, %v5785
        %v5822 = vand.u32 2147483647, %v5788
        %v5823 = vsub.f32 0.0, %v5807
        %v5824 = vsub.f32 0.0, %v5808
        %v5825 = vsub.f32 0.0, %v5809
        %v5826 = vsub.f32 0.0, %v5810
        %v5827 = vsub.f32 0.0, %v5811
        %v5828 = vsub.f32 0.0, %v5812
        %v5829 = vsub.f32 0.0, %v5813
        %v5830 = vsub.f32 0.0, %v5814
        %v5831 = vsub.f32 0.0, %v5815
        %v5832 = vsub.f32 0.0, %v5816
        %v5833 = vsub.f32 0.0, %v5817
        %v5834 = vsub.f32 0.0, %v5818
        %v5835 = vsub.f32 0.0, %v5819
        %v5836 = vsub.f32 0.0, %v5820
        %v5837 = vsub.f32 0.0, %v5821
        %v5838 = vsub.f32 0.0, %v5822
        %v5839 = vmul.f32 %v5823, 1.442695
        %v5840 = vpow.pop %v5839
        %v5841 = vmul.f32 %v5824, 1.442695
        %v5842 = vpow.pop %v5841
        %v5843 = vmul.f32 %v5825, 1.442695
        %v5844 = vpow.pop %v5843
        %v5845 = vmul.f32 %v5826, 1.442695
        %v5846 = vpow.pop %v5845
        %v5847 = vmul.f32 %v5827, 1.442695
        %v5848 = vpow.pop %v5847
        %v5849 = vmul.f32 %v5828, 1.442695
        %v5850 = vpow.pop %v5849
        %v5851 = vmul.f32 %v5829, 1.442695
        %v5852 = vpow.pop %v5851
        %v5853 = vmul.f32 %v5830, 1.442695
        %v5854 = vpow.pop %v5853
        %v5855 = vmul.f32 %v5831, 1.442695
        %v5856 = vpow.pop %v5855
        %v5857 = vmul.f32 %v5832, 1.442695
        %v5858 = vpow.pop %v5857
        %v5859 = vmul.f32 %v5833, 1.442695
        %v5860 = vpow.pop %v5859
        %v5861 = vmul.f32 %v5834, 1.442695
        %v5862 = vpow.pop %v5861
        %v5863 = vmul.f32 %v5835, 1.442695
        %v5864 = vpow.pop %v5863
        %v5865 = vmul.f32 %v5836, 1.442695
        %v5866 = vpow.pop %v5865
        %v5867 = vmul.f32 %v5837, 1.442695
        %v5868 = vpow.pop %v5867
        %v5869 = vmul.f32 %v5838, 1.442695
        %v5870 = vpow.pop %v5869
        %v5871 = vadd.f32 %v5840, 1.0
        %v5872 = vlog2.pop %v5871
        %v5873 = vmul.f32 %v5872, 0.6931472
        %v5874 = vmul.f32 -0.5, %v5840
        %v5875 = vadd.f32 %v5874, 1.0
        %v5876 = vmul.f32 %v5875, %v5840
        %v5877 = vand.u32 2147483647, %v5840
        %vm5878 = vcmp.lt.f32.partialorder %v5877, 0.0004427343
        %v5879 = vsel %vm5878, %v5876, %v5873
        %v5880 = vadd.f32 %v5842, 1.0
        %v5881 = vlog2.pop %v5880
        %v5882 = vmul.f32 %v5881, 0.6931472
        %v5883 = vmul.f32 -0.5, %v5842
        %v5884 = vadd.f32 %v5883, 1.0
        %v5885 = vmul.f32 %v5884, %v5842
        %v5886 = vand.u32 2147483647, %v5842
        %vm5887 = vcmp.lt.f32.partialorder %v5886, 0.0004427343
        %v5888 = vsel %vm5887, %v5885, %v5882
        %v5889 = vadd.f32 %v5844, 1.0
        %v5890 = vlog2.pop %v5889
        %v5891 = vmul.f32 %v5890, 0.6931472
        %v5892 = vmul.f32 -0.5, %v5844
        %v5893 = vadd.f32 %v5892, 1.0
        %v5894 = vmul.f32 %v5893, %v5844
        %v5895 = vand.u32 2147483647, %v5844
        %vm5896 = vcmp.lt.f32.partialorder %v5895, 0.0004427343
        %v5897 = vsel %vm5896, %v5894, %v5891
        %v5898 = vadd.f32 %v5846, 1.0
        %v5899 = vlog2.pop %v5898
        %v5900 = vmul.f32 %v5899, 0.6931472
        %v5901 = vmul.f32 -0.5, %v5846
        %v5902 = vadd.f32 %v5901, 1.0
        %v5903 = vmul.f32 %v5902, %v5846
        %v5904 = vand.u32 2147483647, %v5846
        %vm5905 = vcmp.lt.f32.partialorder %v5904, 0.0004427343
        %v5906 = vsel %vm5905, %v5903, %v5900
        %v5907 = vadd.f32 %v5848, 1.0
        %v5908 = vlog2.pop %v5907
        %v5909 = vmul.f32 %v5908, 0.6931472
        %v5910 = vmul.f32 -0.5, %v5848
        %v5911 = vadd.f32 %v5910, 1.0
        %v5912 = vmul.f32 %v5911, %v5848
        %v5913 = vand.u32 2147483647, %v5848
        %vm5914 = vcmp.lt.f32.partialorder %v5913, 0.0004427343
        %v5915 = vsel %vm5914, %v5912, %v5909
        %v5916 = vadd.f32 %v5850, 1.0
        %v5917 = vlog2.pop %v5916
        %v5918 = vmul.f32 %v5917, 0.6931472
        %v5919 = vmul.f32 -0.5, %v5850
        %v5920 = vadd.f32 %v5919, 1.0
        %v5921 = vmul.f32 %v5920, %v5850
        %v5922 = vand.u32 2147483647, %v5850
        %vm5923 = vcmp.lt.f32.partialorder %v5922, 0.0004427343
        %v5924 = vsel %vm5923, %v5921, %v5918
        %v5925 = vadd.f32 %v5852, 1.0
        %v5926 = vlog2.pop %v5925
        %v5927 = vmul.f32 %v5926, 0.6931472
        %v5928 = vmul.f32 -0.5, %v5852
        %v5929 = vadd.f32 %v5928, 1.0
        %v5930 = vmul.f32 %v5929, %v5852
        %v5931 = vand.u32 2147483647, %v5852
        %vm5932 = vcmp.lt.f32.partialorder %v5931, 0.0004427343
        %v5933 = vsel %vm5932, %v5930, %v5927
        %v5934 = vadd.f32 %v5854, 1.0
        %v5935 = vlog2.pop %v5934
        %v5936 = vmul.f32 %v5935, 0.6931472
        %v5937 = vmul.f32 -0.5, %v5854
        %v5938 = vadd.f32 %v5937, 1.0
        %v5939 = vmul.f32 %v5938, %v5854
        %v5940 = vand.u32 2147483647, %v5854
        %vm5941 = vcmp.lt.f32.partialorder %v5940, 0.0004427343
        %v5942 = vsel %vm5941, %v5939, %v5936
        %v5943 = vadd.f32 %v5856, 1.0
        %v5944 = vlog2.pop %v5943
        %v5945 = vmul.f32 %v5944, 0.6931472
        %v5946 = vmul.f32 -0.5, %v5856
        %v5947 = vadd.f32 %v5946, 1.0
        %v5948 = vmul.f32 %v5947, %v5856
        %v5949 = vand.u32 2147483647, %v5856
        %vm5950 = vcmp.lt.f32.partialorder %v5949, 0.0004427343
        %v5951 = vsel %vm5950, %v5948, %v5945
        %v5952 = vadd.f32 %v5858, 1.0
        %v5953 = vlog2.pop %v5952
        %v5954 = vmul.f32 %v5953, 0.6931472
        %v5955 = vmul.f32 -0.5, %v5858
        %v5956 = vadd.f32 %v5955, 1.0
        %v5957 = vmul.f32 %v5956, %v5858
        %v5958 = vand.u32 2147483647, %v5858
        %vm5959 = vcmp.lt.f32.partialorder %v5958, 0.0004427343
        %v5960 = vsel %vm5959, %v5957, %v5954
        %v5961 = vadd.f32 %v5860, 1.0
        %v5962 = vlog2.pop %v5961
        %v5963 = vmul.f32 %v5962, 0.6931472
        %v5964 = vmul.f32 -0.5, %v5860
        %v5965 = vadd.f32 %v5964, 1.0
        %v5966 = vmul.f32 %v5965, %v5860
        %v5967 = vand.u32 2147483647, %v5860
        %vm5968 = vcmp.lt.f32.partialorder %v5967, 0.0004427343
        %v5969 = vsel %vm5968, %v5966, %v5963
        %v5970 = vadd.f32 %v5862, 1.0
        %v5971 = vlog2.pop %v5970
        %v5972 = vmul.f32 %v5971, 0.6931472
        %v5973 = vmul.f32 -0.5, %v5862
        %v5974 = vadd.f32 %v5973, 1.0
        %v5975 = vmul.f32 %v5974, %v5862
        %v5976 = vand.u32 2147483647, %v5862
        %vm5977 = vcmp.lt.f32.partialorder %v5976, 0.0004427343
        %v5978 = vsel %vm5977, %v5975, %v5972
        %v5979 = vadd.f32 %v5864, 1.0
        %v5980 = vlog2.pop %v5979
        %v5981 = vmul.f32 %v5980, 0.6931472
        %v5982 = vmul.f32 -0.5, %v5864
        %v5983 = vadd.f32 %v5982, 1.0
        %v5984 = vmul.f32 %v5983, %v5864
        %v5985 = vand.u32 2147483647, %v5864
        %vm5986 = vcmp.lt.f32.partialorder %v5985, 0.0004427343
        %v5987 = vsel %vm5986, %v5984, %v5981
        %v5988 = vadd.f32 %v5866, 1.0
        %v5989 = vlog2.pop %v5988
        %v5990 = vmul.f32 %v5989, 0.6931472
        %v5991 = vmul.f32 -0.5, %v5866
        %v5992 = vadd.f32 %v5991, 1.0
        %v5993 = vmul.f32 %v5992, %v5866
        %v5994 = vand.u32 2147483647, %v5866
        %vm5995 = vcmp.lt.f32.partialorder %v5994, 0.0004427343
        %v5996 = vsel %vm5995, %v5993, %v5990
        %v5997 = vadd.f32 %v5868, 1.0
        %v5998 = vlog2.pop %v5997
        %v5999 = vmul.f32 %v5998, 0.6931472
        %v6000 = vmul.f32 -0.5, %v5868
        %v6001 = vadd.f32 %v6000, 1.0
        %v6002 = vmul.f32 %v6001, %v5868
        %v6003 = vand.u32 2147483647, %v5868
        %vm6004 = vcmp.lt.f32.partialorder %v6003, 0.0004427343
        %v6005 = vsel %vm6004, %v6002, %v5999
        %v6006 = vadd.f32 %v5870, 1.0
        %v6007 = vlog2.pop %v6006
        %v6008 = vmul.f32 %v6007, 0.6931472
        %v6009 = vmul.f32 -0.5, %v5870
        %v6010 = vadd.f32 %v6009, 1.0
        %v6011 = vmul.f32 %v6010, %v5870
        %v6012 = vand.u32 2147483647, %v5870
        %vm6013 = vcmp.lt.f32.partialorder %v6012, 0.0004427343
        %v6014 = vsel %vm6013, %v6011, %v6008
        %v6015 = vadd.f32 %v5791, %v5879
        %v6016 = vadd.f32 %v5792, %v5888
        %v6017 = vadd.f32 %v5793, %v5897
        %v6018 = vadd.f32 %v5794, %v5906
        %v6019 = vadd.f32 %v5795, %v5915
        %v6020 = vadd.f32 %v5796, %v5924
        %v6021 = vadd.f32 %v5797, %v5933
        %v6022 = vadd.f32 %v5798, %v5942
        %v6023 = vadd.f32 %v5799, %v5951
        %v6024 = vadd.f32 %v5800, %v5960
        %v6025 = vadd.f32 %v5801, %v5969
        %v6026 = vadd.f32 %v5802, %v5978
        %v6027 = vadd.f32 %v5803, %v5987
        %v6028 = vadd.f32 %v5804, %v5996
        %v6029 = vadd.f32 %v5805, %v6005
        %v6030 = vadd.f32 %v5806, %v6014
        %v6031 = vsub.f32 %v6015, 0.6931472
        %v6032 = vsub.f32 %v6016, 0.6931472
        %v6033 = vsub.f32 %v6017, 0.6931472
        %v6034 = vsub.f32 %v6018, 0.6931472
        %v6035 = vsub.f32 %v6019, 0.6931472
        %v6036 = vsub.f32 %v6020, 0.6931472
        %v6037 = vsub.f32 %v6021, 0.6931472
        %v6038 = vsub.f32 %v6022, 0.6931472
        %v6039 = vsub.f32 %v6023, 0.6931472
        %v6040 = vsub.f32 %v6024, 0.6931472
        %v6041 = vsub.f32 %v6025, 0.6931472
        %v6042 = vsub.f32 %v6026, 0.6931472
        %v6043 = vsub.f32 %v6027, 0.6931472
        %v6044 = vsub.f32 %v6028, 0.6931472
        %v6045 = vsub.f32 %v6029, 0.6931472
        %v6046 = vsub.f32 %v6030, 0.6931472
        %v6047 = vpack.c.bf16 %v6032, %v6031
        %v6048 = vpack.c.bf16 %v6034, %v6033
        %v6049 = vpack.c.bf16 %v6036, %v6035
        %v6050 = vpack.c.bf16 %v6038, %v6037
        %v6051 = vpack.c.bf16 %v6040, %v6039
        %v6052 = vpack.c.bf16 %v6042, %v6041
        %v6053 = vpack.c.bf16 %v6044, %v6043
        %v6054 = vpack.c.bf16 %v6046, %v6045
        %v6055 = vlaneseq
        %v6056 = vshrl.u32 %v6055, 7
        %v6057 = vsub.s32 4, %v6056
        %v6058 = vrot.slane %v601, %v6057
        %v6067 = vunpack.c.l.b16 %v557
        %v6068 = vunpack.c.l.b16 %v558
        %v6069 = vunpack.c.l.b16 %v559
        %v6070 = vunpack.c.l.b16 %v560
        %v6071 = vunpack.c.l.b16 %v561
        %v6072 = vunpack.c.l.b16 %v562
        %v6073 = vunpack.c.l.b16 %v563
        %v6074 = vunpack.c.l.b16 %v564
        %v6075 = vpack.c.b16 %v6068, %v6067
        %v6076 = vpack.c.b16 %v6070, %v6069
        %v6077 = vpack.c.b16 %v6072, %v6071
        %v6078 = vpack.c.b16 %v6074, %v6073
        %v6084 = vsel %vm3955, %v6047, 0
        %v6087 = vsel %vm3955, %v6048, 0
        %v6090 = vsel %vm3955, %v6049, 0
        %v6093 = vsel %vm3955, %v6050, 0
        %v6096 = vsel %vm3955, %v6051, 0
        %v6099 = vsel %vm3955, %v6052, 0
        %v6102 = vsel %vm3955, %v6053, 0
        %v6105 = vsel %vm3955, %v6054, 0
        %6107 = vmatprep.subr.bf16.mxu0 0
        %6108 = vmatpush1.bf16.msra.mxu0 0
        %6109 = vmatprep.subr.bf16.mxu0 0
        %6110 = vmatpush1.bf16.msra.mxu0 0
        %6111 = vmatprep.subr.bf16.mxu0 0
        %6112 = vmatpush1.bf16.msra.mxu0 0
        %6113 = vmatprep.subr.bf16.mxu0 0
        %6114 = vmatpush1.bf16.msra.mxu0 0
        %6115 = vmatprep.subr.bf16.mxu0 0
        %6116 = vmatpush1.bf16.msra.mxu0 %v6078
        %6117 = vmatprep.subr.bf16.mxu0 0
        %6118 = vmatpush1.bf16.msra.mxu0 %v6077
        %6119 = vmatprep.subr.bf16.mxu0 0
        %6120 = vmatpush1.bf16.msra.mxu0 %v6076
        %6121 = vmatprep.subr.bf16.mxu0 0
        %6122 = vmatpush1.bf16.msra.mxu0 %v6075
        %6123 = vmatprep.subr.bf16.mxu0 0
        %6124 = vmatpush2.bf16.msra.mxu0 0
        %6125 = vmatprep.subr.bf16.mxu0 0
        %6126 = vmatpush2.bf16.msra.mxu0 0
        %6127 = vmatprep.subr.bf16.mxu0 0
        %6128 = vmatpush2.bf16.msra.mxu0 0
        %6129 = vmatprep.subr.bf16.mxu0 0
        %6130 = vmatpush2.bf16.msra.mxu0 0
        %6131 = vmatprep.subr.bf16.mxu0 0
        %6132 = vmatpush2.bf16.msra.mxu0 0
        %6133 = vmatprep.subr.bf16.mxu0 0
        %6134 = vmatpush2.bf16.msra.mxu0 0
        %6135 = vmatprep.subr.bf16.mxu0 0
        %6136 = vmatpush2.bf16.msra.mxu0 0
        %6137 = vmatprep.subr.bf16.mxu0 0
        %6138 = vmatpush2.bf16.msra.mxu0 0
        %6139 = vmatprep.mubr.bf16.mxu0 0
        %6140 = vmatmul.mubr.bf16.gmra.mxu0 %v6084
        %v6141 = vpop.f32.mrf.mxu0
        %v6142 = vadd.f32 %v6058, %v6141
        %v6143 = vpop.f32.mrf.mxu0
        %v6144 = vpop.f32.mrf.mxu0
        %v6145 = vadd.f32 %v6058, %v6144
        %v6146 = vpop.f32.mrf.mxu0
        %6147 = vmatprep.mubr.bf16.mxu0 0
        %6148 = vmatmul.mubr.bf16.gmra.mxu0 %v6087
        %v6149 = vpop.f32.mrf.mxu0
        %v6150 = vadd.f32 %v6058, %v6149
        %v6151 = vpop.f32.mrf.mxu0
        %v6152 = vpop.f32.mrf.mxu0
        %v6153 = vadd.f32 %v6058, %v6152
        %v6154 = vpop.f32.mrf.mxu0
        %6155 = vmatprep.mubr.bf16.mxu0 0
        %6156 = vmatmul.mubr.bf16.gmra.mxu0 %v6090
        %v6157 = vpop.f32.mrf.mxu0
        %v6158 = vadd.f32 %v6058, %v6157
        %v6159 = vpop.f32.mrf.mxu0
        %v6160 = vpop.f32.mrf.mxu0
        %v6161 = vadd.f32 %v6058, %v6160
        %v6162 = vpop.f32.mrf.mxu0
        %6163 = vmatprep.mubr.bf16.mxu0 0
        %6164 = vmatmul.mubr.bf16.gmra.mxu0 %v6093
        %v6165 = vpop.f32.mrf.mxu0
        %v6166 = vadd.f32 %v6058, %v6165
        %v6167 = vpop.f32.mrf.mxu0
        %v6168 = vpop.f32.mrf.mxu0
        %v6169 = vadd.f32 %v6058, %v6168
        %v6170 = vpop.f32.mrf.mxu0
        %6171 = vmatprep.mubr.bf16.mxu0 0
        %6172 = vmatmul.mubr.bf16.gmra.mxu0 %v6096
        %v6173 = vpop.f32.mrf.mxu0
        %v6174 = vadd.f32 %v6058, %v6173
        %v6175 = vpop.f32.mrf.mxu0
        %v6176 = vpop.f32.mrf.mxu0
        %v6177 = vadd.f32 %v6058, %v6176
        %v6178 = vpop.f32.mrf.mxu0
        %6179 = vmatprep.mubr.bf16.mxu0 0
        %6180 = vmatmul.mubr.bf16.gmra.mxu0 %v6099
        %v6181 = vpop.f32.mrf.mxu0
        %v6182 = vadd.f32 %v6058, %v6181
        %v6183 = vpop.f32.mrf.mxu0
        %v6184 = vpop.f32.mrf.mxu0
        %v6185 = vadd.f32 %v6058, %v6184
        %v6186 = vpop.f32.mrf.mxu0
        %6187 = vmatprep.mubr.bf16.mxu0 0
        %6188 = vmatmul.mubr.bf16.gmra.mxu0 %v6102
        %v6189 = vpop.f32.mrf.mxu0
        %v6190 = vadd.f32 %v6058, %v6189
        %v6191 = vpop.f32.mrf.mxu0
        %v6192 = vpop.f32.mrf.mxu0
        %v6193 = vadd.f32 %v6058, %v6192
        %v6194 = vpop.f32.mrf.mxu0
        %6195 = vmatprep.mubr.bf16.mxu0 0
        %6196 = vmatmul.mubr.bf16.gmra.mxu0 %v6105
        %v6197 = vpop.f32.mrf.mxu0
        %v6198 = vadd.f32 %v6058, %v6197
        %v6199 = vpop.f32.mrf.mxu0
        %v6200 = vpop.f32.mrf.mxu0
        %v6201 = vadd.f32 %v6058, %v6200
        %v6202 = vpop.f32.mrf.mxu0
        %6203 = vdwg.mxu0
        %v6204 = vadd.f32 %v331, %v6142
        %v6205 = vadd.f32 %v332, %v6145
        %v6206 = vadd.f32 %v333, %v6150
        %v6207 = vadd.f32 %v334, %v6153
        %v6208 = vadd.f32 %v335, %v6158
        %v6209 = vadd.f32 %v336, %v6161
        %v6210 = vadd.f32 %v337, %v6166
        %v6211 = vadd.f32 %v338, %v6169
        %v6212 = vadd.f32 %v339, %v6174
        %v6213 = vadd.f32 %v340, %v6177
        %v6214 = vadd.f32 %v341, %v6182
        %v6215 = vadd.f32 %v342, %v6185
        %v6216 = vadd.f32 %v343, %v6190
        %v6217 = vadd.f32 %v344, %v6193
        %v6218 = vadd.f32 %v345, %v6198
        %v6219 = vadd.f32 %v346, %v6201
        %v6220 = vpack.c.bf16 %v6205, %v6204
        %v6221 = vpack.c.bf16 %v6207, %v6206
        %v6222 = vpack.c.bf16 %v6209, %v6208
        %v6223 = vpack.c.bf16 %v6211, %v6210
        %v6224 = vpack.c.bf16 %v6213, %v6212
        %v6225 = vpack.c.bf16 %v6215, %v6214
        %v6226 = vpack.c.bf16 %v6217, %v6216
        %v6227 = vpack.c.bf16 %v6219, %v6218
        %v6236 = vunpack.c.l.b16 %v565
        %v6237 = vunpack.c.l.b16 %v566
        %v6238 = vunpack.c.l.b16 %v567
        %v6239 = vunpack.c.l.b16 %v568
        %v6240 = vunpack.c.l.b16 %v569
        %v6241 = vunpack.c.l.b16 %v570
        %v6242 = vunpack.c.l.b16 %v571
        %v6243 = vunpack.c.l.b16 %v572
        %v6244 = vpack.c.b16 %v6237, %v6236
        %v6245 = vpack.c.b16 %v6239, %v6238
        %v6246 = vpack.c.b16 %v6241, %v6240
        %v6247 = vpack.c.b16 %v6243, %v6242
        %v6253 = vsel %vm3955, %v6220, 0
        %v6256 = vsel %vm3955, %v6221, 0
        %v6259 = vsel %vm3955, %v6222, 0
        %v6262 = vsel %vm3955, %v6223, 0
        %v6265 = vsel %vm3955, %v6224, 0
        %v6268 = vsel %vm3955, %v6225, 0
        %v6271 = vsel %vm3955, %v6226, 0
        %v6274 = vsel %vm3955, %v6227, 0
        %6276 = vmatprep.subr.bf16.mxu0 0
        %6277 = vmatpush1.bf16.msra.mxu0 0
        %6278 = vmatprep.subr.bf16.mxu0 0
        %6279 = vmatpush1.bf16.msra.mxu0 0
        %6280 = vmatprep.subr.bf16.mxu0 0
        %6281 = vmatpush1.bf16.msra.mxu0 0
        %6282 = vmatprep.subr.bf16.mxu0 0
        %6283 = vmatpush1.bf16.msra.mxu0 0
        %6284 = vmatprep.subr.bf16.mxu0 0
        %6285 = vmatpush1.bf16.msra.mxu0 %v6247
        %6286 = vmatprep.subr.bf16.mxu0 0
        %6287 = vmatpush1.bf16.msra.mxu0 %v6246
        %6288 = vmatprep.subr.bf16.mxu0 0
        %6289 = vmatpush1.bf16.msra.mxu0 %v6245
        %6290 = vmatprep.subr.bf16.mxu0 0
        %6291 = vmatpush1.bf16.msra.mxu0 %v6244
        %6292 = vmatprep.subr.bf16.mxu0 0
        %6293 = vmatpush2.bf16.msra.mxu0 0
        %6294 = vmatprep.subr.bf16.mxu0 0
        %6295 = vmatpush2.bf16.msra.mxu0 0
        %6296 = vmatprep.subr.bf16.mxu0 0
        %6297 = vmatpush2.bf16.msra.mxu0 0
        %6298 = vmatprep.subr.bf16.mxu0 0
        %6299 = vmatpush2.bf16.msra.mxu0 0
        %6300 = vmatprep.subr.bf16.mxu0 0
        %6301 = vmatpush2.bf16.msra.mxu0 0
        %6302 = vmatprep.subr.bf16.mxu0 0
        %6303 = vmatpush2.bf16.msra.mxu0 0
        %6304 = vmatprep.subr.bf16.mxu0 0
        %6305 = vmatpush2.bf16.msra.mxu0 0
        %6306 = vmatprep.subr.bf16.mxu0 0
        %6307 = vmatpush2.bf16.msra.mxu0 0
        %6308 = vmatprep.mubr.bf16.mxu0 0
        %6309 = vmatmul.mubr.bf16.gmra.mxu0 %v6253
        %v6310 = vpop.f32.mrf.mxu0
        %v6311 = vadd.f32 0.0, %v6310
        %v6312 = vpop.f32.mrf.mxu0
        %v6313 = vpop.f32.mrf.mxu0
        %v6314 = vadd.f32 0.0, %v6313
        %v6315 = vpop.f32.mrf.mxu0
        %6316 = vmatprep.mubr.bf16.mxu0 0
        %6317 = vmatmul.mubr.bf16.gmra.mxu0 %v6256
        %v6318 = vpop.f32.mrf.mxu0
        %v6319 = vadd.f32 0.0, %v6318
        %v6320 = vpop.f32.mrf.mxu0
        %v6321 = vpop.f32.mrf.mxu0
        %v6322 = vadd.f32 0.0, %v6321
        %v6323 = vpop.f32.mrf.mxu0
        %6324 = vmatprep.mubr.bf16.mxu0 0
        %6325 = vmatmul.mubr.bf16.gmra.mxu0 %v6259
        %v6326 = vpop.f32.mrf.mxu0
        %v6327 = vadd.f32 0.0, %v6326
        %v6328 = vpop.f32.mrf.mxu0
        %v6329 = vpop.f32.mrf.mxu0
        %v6330 = vadd.f32 0.0, %v6329
        %v6331 = vpop.f32.mrf.mxu0
        %6332 = vmatprep.mubr.bf16.mxu0 0
        %6333 = vmatmul.mubr.bf16.gmra.mxu0 %v6262
        %v6334 = vpop.f32.mrf.mxu0
        %v6335 = vadd.f32 0.0, %v6334
        %v6336 = vpop.f32.mrf.mxu0
        %v6337 = vpop.f32.mrf.mxu0
        %v6338 = vadd.f32 0.0, %v6337
        %v6339 = vpop.f32.mrf.mxu0
        %6340 = vmatprep.mubr.bf16.mxu0 0
        %6341 = vmatmul.mubr.bf16.gmra.mxu0 %v6265
        %v6342 = vpop.f32.mrf.mxu0
        %v6343 = vadd.f32 0.0, %v6342
        %v6344 = vpop.f32.mrf.mxu0
        %v6345 = vpop.f32.mrf.mxu0
        %v6346 = vadd.f32 0.0, %v6345
        %v6347 = vpop.f32.mrf.mxu0
        %6348 = vmatprep.mubr.bf16.mxu0 0
        %6349 = vmatmul.mubr.bf16.gmra.mxu0 %v6268
        %v6350 = vpop.f32.mrf.mxu0
        %v6351 = vadd.f32 0.0, %v6350
        %v6352 = vpop.f32.mrf.mxu0
        %v6353 = vpop.f32.mrf.mxu0
        %v6354 = vadd.f32 0.0, %v6353
        %v6355 = vpop.f32.mrf.mxu0
        %6356 = vmatprep.mubr.bf16.mxu0 0
        %6357 = vmatmul.mubr.bf16.gmra.mxu0 %v6271
        %v6358 = vpop.f32.mrf.mxu0
        %v6359 = vadd.f32 0.0, %v6358
        %v6360 = vpop.f32.mrf.mxu0
        %v6361 = vpop.f32.mrf.mxu0
        %v6362 = vadd.f32 0.0, %v6361
        %v6363 = vpop.f32.mrf.mxu0
        %6364 = vmatprep.mubr.bf16.mxu0 0
        %6365 = vmatmul.mubr.bf16.gmra.mxu0 %v6274
        %v6366 = vpop.f32.mrf.mxu0
        %v6367 = vadd.f32 0.0, %v6366
        %v6368 = vpop.f32.mrf.mxu0
        %v6369 = vpop.f32.mrf.mxu0
        %v6370 = vadd.f32 0.0, %v6369
        %v6371 = vpop.f32.mrf.mxu0
        %6372 = vdwg.mxu0
        %v6373 = vpack.c.bf16 %v6314, %v6311
        %v6374 = vpack.c.bf16 %v6322, %v6319
        %v6375 = vpack.c.bf16 %v6330, %v6327
        %v6376 = vpack.c.bf16 %v6338, %v6335
        %v6377 = vpack.c.bf16 %v6346, %v6343
        %v6378 = vpack.c.bf16 %v6354, %v6351
        %v6379 = vpack.c.bf16 %v6362, %v6359
        %v6380 = vpack.c.bf16 %v6370, %v6367
        %6381 = vmatprep.subr.bf16.mxu0 0
        %6382 = vmatpush1.bf16.msra.mxu0 %v6380
        %6383 = vmatprep.subr.bf16.mxu0 0
        %6384 = vmatpush1.bf16.msra.mxu0 %v6379
        %6385 = vmatprep.subr.bf16.mxu0 0
        %6386 = vmatpush1.bf16.msra.mxu0 %v6378
        %6387 = vmatprep.subr.bf16.mxu0 0
        %6388 = vmatpush1.bf16.msra.mxu0 %v6377
        %6389 = vmatprep.subr.bf16.mxu0 0
        %6390 = vmatpush1.bf16.msra.mxu0 %v6376
        %6391 = vmatprep.subr.bf16.mxu0 0
        %6392 = vmatpush1.bf16.msra.mxu0 %v6375
        %6393 = vmatprep.subr.bf16.mxu0 0
        %6394 = vmatpush1.bf16.msra.mxu0 %v6374
        %6395 = vmatprep.subr.bf16.mxu0 0
        %6396 = vmatpush1.bf16.msra.mxu0 %v6373
        %6397 = vmatprep.subr.bf16.mxu0 0
        %6398 = vmatpush2.bf16.msra.mxu0 0
        %6399 = vmatprep.subr.bf16.mxu0 0
        %6400 = vmatpush2.bf16.msra.mxu0 0
        %6401 = vmatprep.subr.bf16.mxu0 0
        %6402 = vmatpush2.bf16.msra.mxu0 0
        %6403 = vmatprep.subr.bf16.mxu0 0
        %6404 = vmatpush2.bf16.msra.mxu0 0
        %6405 = vmatprep.subr.bf16.mxu0 0
        %6406 = vmatpush2.bf16.msra.mxu0 0
        %6407 = vmatprep.subr.bf16.mxu0 0
        %6408 = vmatpush2.bf16.msra.mxu0 0
        %6409 = vmatprep.subr.bf16.mxu0 0
        %6410 = vmatpush2.bf16.msra.mxu0 0
        %6411 = vmatprep.subr.bf16.mxu0 0
        %6412 = vmatpush2.bf16.msra.mxu0 0
        %6413 = vmatprep.mubr.bf16.mxu0 0
        %6414 = vmatmul.mubr.bf16.gmra.mxu0 %v4197
        %v6415 = vpop.f32.mrf.mxu0
        %v6416 = vadd.f32 0.0, %v6415
        %v6417 = vpop.f32.mrf.mxu0
        %v6418 = vpop.f32.mrf.mxu0
        %v6419 = vadd.f32 0.0, %v6418
        %v6420 = vpop.f32.mrf.mxu0
        %6421 = vmatprep.mubr.bf16.mxu0 0
        %6422 = vmatmul.mubr.bf16.gmra.mxu0 %v4198
        %v6423 = vpop.f32.mrf.mxu0
        %v6424 = vadd.f32 0.0, %v6423
        %v6425 = vpop.f32.mrf.mxu0
        %v6426 = vpop.f32.mrf.mxu0
        %v6427 = vadd.f32 0.0, %v6426
        %v6428 = vpop.f32.mrf.mxu0
        %6429 = vmatprep.mubr.bf16.mxu0 0
        %6430 = vmatmul.mubr.bf16.gmra.mxu0 %v4199
        %v6431 = vpop.f32.mrf.mxu0
        %v6432 = vadd.f32 0.0, %v6431
        %v6433 = vpop.f32.mrf.mxu0
        %v6434 = vpop.f32.mrf.mxu0
        %v6435 = vadd.f32 0.0, %v6434
        %v6436 = vpop.f32.mrf.mxu0
        %6437 = vmatprep.mubr.bf16.mxu0 0
        %6438 = vmatmul.mubr.bf16.gmra.mxu0 %v4200
        %v6439 = vpop.f32.mrf.mxu0
        %v6440 = vadd.f32 0.0, %v6439
        %v6441 = vpop.f32.mrf.mxu0
        %v6442 = vpop.f32.mrf.mxu0
        %v6443 = vadd.f32 0.0, %v6442
        %v6444 = vpop.f32.mrf.mxu0
        %6445 = vmatprep.mubr.bf16.mxu0 0
        %6446 = vmatmul.mubr.bf16.gmra.mxu0 %v4201
        %v6447 = vpop.f32.mrf.mxu0
        %v6448 = vadd.f32 0.0, %v6447
        %v6449 = vpop.f32.mrf.mxu0
        %v6450 = vpop.f32.mrf.mxu0
        %v6451 = vadd.f32 0.0, %v6450
        %v6452 = vpop.f32.mrf.mxu0
        %6453 = vmatprep.mubr.bf16.mxu0 0
        %6454 = vmatmul.mubr.bf16.gmra.mxu0 %v4202
        %v6455 = vpop.f32.mrf.mxu0
        %v6456 = vadd.f32 0.0, %v6455
        %v6457 = vpop.f32.mrf.mxu0
        %v6458 = vpop.f32.mrf.mxu0
        %v6459 = vadd.f32 0.0, %v6458
        %v6460 = vpop.f32.mrf.mxu0
        %6461 = vmatprep.mubr.bf16.mxu0 0
        %6462 = vmatmul.mubr.bf16.gmra.mxu0 %v4203
        %v6463 = vpop.f32.mrf.mxu0
        %v6464 = vadd.f32 0.0, %v6463
        %v6465 = vpop.f32.mrf.mxu0
        %v6466 = vpop.f32.mrf.mxu0
        %v6467 = vadd.f32 0.0, %v6466
        %v6468 = vpop.f32.mrf.mxu0
        %6469 = vmatprep.mubr.bf16.mxu0 0
        %6470 = vmatmul.mubr.bf16.gmra.mxu0 %v4204
        %v6471 = vpop.f32.mrf.mxu0
        %v6472 = vadd.f32 0.0, %v6471
        %v6473 = vpop.f32.mrf.mxu0
        %v6474 = vpop.f32.mrf.mxu0
        %v6475 = vadd.f32 0.0, %v6474
        %v6476 = vpop.f32.mrf.mxu0
        %6477 = vmatprep.mubr.bf16.mxu0 0
        %6478 = vmatmul.mubr.bf16.gmra.mxu0 %v4205
        %v6479 = vpop.f32.mrf.mxu0
        %v6480 = vadd.f32 0.0, %v6479
        %v6481 = vpop.f32.mrf.mxu0
        %v6482 = vpop.f32.mrf.mxu0
        %v6483 = vadd.f32 0.0, %v6482
        %v6484 = vpop.f32.mrf.mxu0
        %6485 = vmatprep.mubr.bf16.mxu0 0
        %6486 = vmatmul.mubr.bf16.gmra.mxu0 %v4206
        %v6487 = vpop.f32.mrf.mxu0
        %v6488 = vadd.f32 0.0, %v6487
        %v6489 = vpop.f32.mrf.mxu0
        %v6490 = vpop.f32.mrf.mxu0
        %v6491 = vadd.f32 0.0, %v6490
        %v6492 = vpop.f32.mrf.mxu0
        %6493 = vmatprep.mubr.bf16.mxu0 0
        %6494 = vmatmul.mubr.bf16.gmra.mxu0 %v4207
        %v6495 = vpop.f32.mrf.mxu0
        %v6496 = vadd.f32 0.0, %v6495
        %v6497 = vpop.f32.mrf.mxu0
        %v6498 = vpop.f32.mrf.mxu0
        %v6499 = vadd.f32 0.0, %v6498
        %v6500 = vpop.f32.mrf.mxu0
        %6501 = vmatprep.mubr.bf16.mxu0 0
        %6502 = vmatmul.mubr.bf16.gmra.mxu0 %v4208
        %v6503 = vpop.f32.mrf.mxu0
        %v6504 = vadd.f32 0.0, %v6503
        %v6505 = vpop.f32.mrf.mxu0
        %v6506 = vpop.f32.mrf.mxu0
        %v6507 = vadd.f32 0.0, %v6506
        %v6508 = vpop.f32.mrf.mxu0
        %6509 = vmatprep.mubr.bf16.mxu0 0
        %6510 = vmatmul.mubr.bf16.gmra.mxu0 %v4209
        %v6511 = vpop.f32.mrf.mxu0
        %v6512 = vadd.f32 0.0, %v6511
        %v6513 = vpop.f32.mrf.mxu0
        %v6514 = vpop.f32.mrf.mxu0
        %v6515 = vadd.f32 0.0, %v6514
        %v6516 = vpop.f32.mrf.mxu0
        %6517 = vmatprep.mubr.bf16.mxu0 0
        %6518 = vmatmul.mubr.bf16.gmra.mxu0 %v4210
        %v6519 = vpop.f32.mrf.mxu0
        %v6520 = vadd.f32 0.0, %v6519
        %v6521 = vpop.f32.mrf.mxu0
        %v6522 = vpop.f32.mrf.mxu0
        %v6523 = vadd.f32 0.0, %v6522
        %v6524 = vpop.f32.mrf.mxu0
        %6525 = vmatprep.mubr.bf16.mxu0 0
        %6526 = vmatmul.mubr.bf16.gmra.mxu0 %v4211
        %v6527 = vpop.f32.mrf.mxu0
        %v6528 = vadd.f32 0.0, %v6527
        %v6529 = vpop.f32.mrf.mxu0
        %v6530 = vpop.f32.mrf.mxu0
        %v6531 = vadd.f32 0.0, %v6530
        %v6532 = vpop.f32.mrf.mxu0
        %6533 = vmatprep.mubr.bf16.mxu0 0
        %6534 = vmatmul.mubr.bf16.gmra.mxu0 %v4212
        %v6535 = vpop.f32.mrf.mxu0
        %v6536 = vadd.f32 0.0, %v6535
        %v6537 = vpop.f32.mrf.mxu0
        %v6538 = vpop.f32.mrf.mxu0
        %v6539 = vadd.f32 0.0, %v6538
        %v6540 = vpop.f32.mrf.mxu0
        %6541 = vmatprep.mubr.bf16.mxu0 0
        %6542 = vmatmul.mubr.bf16.gmra.mxu0 %v4213
        %v6543 = vpop.f32.mrf.mxu0
        %v6544 = vadd.f32 0.0, %v6543
        %v6545 = vpop.f32.mrf.mxu0
        %v6546 = vpop.f32.mrf.mxu0
        %v6547 = vadd.f32 0.0, %v6546
        %v6548 = vpop.f32.mrf.mxu0
        %6549 = vmatprep.mubr.bf16.mxu0 0
        %6550 = vmatmul.mubr.bf16.gmra.mxu0 %v4214
        %v6551 = vpop.f32.mrf.mxu0
        %v6552 = vadd.f32 0.0, %v6551
        %v6553 = vpop.f32.mrf.mxu0
        %v6554 = vpop.f32.mrf.mxu0
        %v6555 = vadd.f32 0.0, %v6554
        %v6556 = vpop.f32.mrf.mxu0
        %6557 = vmatprep.mubr.bf16.mxu0 0
        %6558 = vmatmul.mubr.bf16.gmra.mxu0 %v4215
        %v6559 = vpop.f32.mrf.mxu0
        %v6560 = vadd.f32 0.0, %v6559
        %v6561 = vpop.f32.mrf.mxu0
        %v6562 = vpop.f32.mrf.mxu0
        %v6563 = vadd.f32 0.0, %v6562
        %v6564 = vpop.f32.mrf.mxu0
        %6565 = vmatprep.mubr.bf16.mxu0 0
        %6566 = vmatmul.mubr.bf16.gmra.mxu0 %v4216
        %v6567 = vpop.f32.mrf.mxu0
        %v6568 = vadd.f32 0.0, %v6567
        %v6569 = vpop.f32.mrf.mxu0
        %v6570 = vpop.f32.mrf.mxu0
        %v6571 = vadd.f32 0.0, %v6570
        %v6572 = vpop.f32.mrf.mxu0
        %6573 = vmatprep.mubr.bf16.mxu0 0
        %6574 = vmatmul.mubr.bf16.gmra.mxu0 %v4217
        %v6575 = vpop.f32.mrf.mxu0
        %v6576 = vadd.f32 0.0, %v6575
        %v6577 = vpop.f32.mrf.mxu0
        %v6578 = vpop.f32.mrf.mxu0
        %v6579 = vadd.f32 0.0, %v6578
        %v6580 = vpop.f32.mrf.mxu0
        %6581 = vmatprep.mubr.bf16.mxu0 0
        %6582 = vmatmul.mubr.bf16.gmra.mxu0 %v4218
        %v6583 = vpop.f32.mrf.mxu0
        %v6584 = vadd.f32 0.0, %v6583
        %v6585 = vpop.f32.mrf.mxu0
        %v6586 = vpop.f32.mrf.mxu0
        %v6587 = vadd.f32 0.0, %v6586
        %v6588 = vpop.f32.mrf.mxu0
        %6589 = vmatprep.mubr.bf16.mxu0 0
        %6590 = vmatmul.mubr.bf16.gmra.mxu0 %v4219
        %v6591 = vpop.f32.mrf.mxu0
        %v6592 = vadd.f32 0.0, %v6591
        %v6593 = vpop.f32.mrf.mxu0
        %v6594 = vpop.f32.mrf.mxu0
        %v6595 = vadd.f32 0.0, %v6594
        %v6596 = vpop.f32.mrf.mxu0
        %6597 = vmatprep.mubr.bf16.mxu0 0
        %6598 = vmatmul.mubr.bf16.gmra.mxu0 %v4220
        %v6599 = vpop.f32.mrf.mxu0
        %v6600 = vadd.f32 0.0, %v6599
        %v6601 = vpop.f32.mrf.mxu0
        %v6602 = vpop.f32.mrf.mxu0
        %v6603 = vadd.f32 0.0, %v6602
        %v6604 = vpop.f32.mrf.mxu0
        %6605 = vmatprep.mubr.bf16.mxu0 0
        %6606 = vmatmul.mubr.bf16.gmra.mxu0 %v4221
        %v6607 = vpop.f32.mrf.mxu0
        %v6608 = vadd.f32 0.0, %v6607
        %v6609 = vpop.f32.mrf.mxu0
        %v6610 = vpop.f32.mrf.mxu0
        %v6611 = vadd.f32 0.0, %v6610
        %v6612 = vpop.f32.mrf.mxu0
        %6613 = vmatprep.mubr.bf16.mxu0 0
        %6614 = vmatmul.mubr.bf16.gmra.mxu0 %v4222
        %v6615 = vpop.f32.mrf.mxu0
        %v6616 = vadd.f32 0.0, %v6615
        %v6617 = vpop.f32.mrf.mxu0
        %v6618 = vpop.f32.mrf.mxu0
        %v6619 = vadd.f32 0.0, %v6618
        %v6620 = vpop.f32.mrf.mxu0
        %6621 = vmatprep.mubr.bf16.mxu0 0
        %6622 = vmatmul.mubr.bf16.gmra.mxu0 %v4223
        %v6623 = vpop.f32.mrf.mxu0
        %v6624 = vadd.f32 0.0, %v6623
        %v6625 = vpop.f32.mrf.mxu0
        %v6626 = vpop.f32.mrf.mxu0
        %v6627 = vadd.f32 0.0, %v6626
        %v6628 = vpop.f32.mrf.mxu0
        %6629 = vmatprep.mubr.bf16.mxu0 0
        %6630 = vmatmul.mubr.bf16.gmra.mxu0 %v4224
        %v6631 = vpop.f32.mrf.mxu0
        %v6632 = vadd.f32 0.0, %v6631
        %v6633 = vpop.f32.mrf.mxu0
        %v6634 = vpop.f32.mrf.mxu0
        %v6635 = vadd.f32 0.0, %v6634
        %v6636 = vpop.f32.mrf.mxu0
        %6637 = vmatprep.mubr.bf16.mxu0 0
        %6638 = vmatmul.mubr.bf16.gmra.mxu0 %v4225
        %v6639 = vpop.f32.mrf.mxu0
        %v6640 = vadd.f32 0.0, %v6639
        %v6641 = vpop.f32.mrf.mxu0
        %v6642 = vpop.f32.mrf.mxu0
        %v6643 = vadd.f32 0.0, %v6642
        %v6644 = vpop.f32.mrf.mxu0
        %6645 = vmatprep.mubr.bf16.mxu0 0
        %6646 = vmatmul.mubr.bf16.gmra.mxu0 %v4226
        %v6647 = vpop.f32.mrf.mxu0
        %v6648 = vadd.f32 0.0, %v6647
        %v6649 = vpop.f32.mrf.mxu0
        %v6650 = vpop.f32.mrf.mxu0
        %v6651 = vadd.f32 0.0, %v6650
        %v6652 = vpop.f32.mrf.mxu0
        %6653 = vmatprep.mubr.bf16.mxu0 0
        %6654 = vmatmul.mubr.bf16.gmra.mxu0 %v4227
        %v6655 = vpop.f32.mrf.mxu0
        %v6656 = vadd.f32 0.0, %v6655
        %v6657 = vpop.f32.mrf.mxu0
        %v6658 = vpop.f32.mrf.mxu0
        %v6659 = vadd.f32 0.0, %v6658
        %v6660 = vpop.f32.mrf.mxu0
        %6661 = vmatprep.mubr.bf16.mxu0 0
        %6662 = vmatmul.mubr.bf16.gmra.mxu0 %v4228
        %v6663 = vpop.f32.mrf.mxu0
        %v6664 = vadd.f32 0.0, %v6663
        %v6665 = vpop.f32.mrf.mxu0
        %v6666 = vpop.f32.mrf.mxu0
        %v6667 = vadd.f32 0.0, %v6666
        %v6668 = vpop.f32.mrf.mxu0
        %6669 = vmatprep.mubr.bf16.mxu0 0
        %6670 = vmatmul.mubr.bf16.gmra.mxu0 %v4229
        %v6671 = vpop.f32.mrf.mxu0
        %v6672 = vadd.f32 0.0, %v6671
        %v6673 = vpop.f32.mrf.mxu0
        %v6674 = vpop.f32.mrf.mxu0
        %v6675 = vadd.f32 0.0, %v6674
        %v6676 = vpop.f32.mrf.mxu0
        %6677 = vmatprep.mubr.bf16.mxu0 0
        %6678 = vmatmul.mubr.bf16.gmra.mxu0 %v4230
        %v6679 = vpop.f32.mrf.mxu0
        %v6680 = vadd.f32 0.0, %v6679
        %v6681 = vpop.f32.mrf.mxu0
        %v6682 = vpop.f32.mrf.mxu0
        %v6683 = vadd.f32 0.0, %v6682
        %v6684 = vpop.f32.mrf.mxu0
        %6685 = vmatprep.mubr.bf16.mxu0 0
        %6686 = vmatmul.mubr.bf16.gmra.mxu0 %v4231
        %v6687 = vpop.f32.mrf.mxu0
        %v6688 = vadd.f32 0.0, %v6687
        %v6689 = vpop.f32.mrf.mxu0
        %v6690 = vpop.f32.mrf.mxu0
        %v6691 = vadd.f32 0.0, %v6690
        %v6692 = vpop.f32.mrf.mxu0
        %6693 = vmatprep.mubr.bf16.mxu0 0
        %6694 = vmatmul.mubr.bf16.gmra.mxu0 %v4232
        %v6695 = vpop.f32.mrf.mxu0
        %v6696 = vadd.f32 0.0, %v6695
        %v6697 = vpop.f32.mrf.mxu0
        %v6698 = vpop.f32.mrf.mxu0
        %v6699 = vadd.f32 0.0, %v6698
        %v6700 = vpop.f32.mrf.mxu0
        %6701 = vmatprep.mubr.bf16.mxu0 0
        %6702 = vmatmul.mubr.bf16.gmra.mxu0 %v4233
        %v6703 = vpop.f32.mrf.mxu0
        %v6704 = vadd.f32 0.0, %v6703
        %v6705 = vpop.f32.mrf.mxu0
        %v6706 = vpop.f32.mrf.mxu0
        %v6707 = vadd.f32 0.0, %v6706
        %v6708 = vpop.f32.mrf.mxu0
        %6709 = vmatprep.mubr.bf16.mxu0 0
        %6710 = vmatmul.mubr.bf16.gmra.mxu0 %v4234
        %v6711 = vpop.f32.mrf.mxu0
        %v6712 = vadd.f32 0.0, %v6711
        %v6713 = vpop.f32.mrf.mxu0
        %v6714 = vpop.f32.mrf.mxu0
        %v6715 = vadd.f32 0.0, %v6714
        %v6716 = vpop.f32.mrf.mxu0
        %6717 = vmatprep.mubr.bf16.mxu0 0
        %6718 = vmatmul.mubr.bf16.gmra.mxu0 %v4235
        %v6719 = vpop.f32.mrf.mxu0
        %v6720 = vadd.f32 0.0, %v6719
        %v6721 = vpop.f32.mrf.mxu0
        %v6722 = vpop.f32.mrf.mxu0
        %v6723 = vadd.f32 0.0, %v6722
        %v6724 = vpop.f32.mrf.mxu0
        %6725 = vmatprep.mubr.bf16.mxu0 0
        %6726 = vmatmul.mubr.bf16.gmra.mxu0 %v4236
        %v6727 = vpop.f32.mrf.mxu0
        %v6728 = vadd.f32 0.0, %v6727
        %v6729 = vpop.f32.mrf.mxu0
        %v6730 = vpop.f32.mrf.mxu0
        %v6731 = vadd.f32 0.0, %v6730
        %v6732 = vpop.f32.mrf.mxu0
        %6733 = vmatprep.mubr.bf16.mxu0 0
        %6734 = vmatmul.mubr.bf16.gmra.mxu0 %v4237
        %v6735 = vpop.f32.mrf.mxu0
        %v6736 = vadd.f32 0.0, %v6735
        %v6737 = vpop.f32.mrf.mxu0
        %v6738 = vpop.f32.mrf.mxu0
        %v6739 = vadd.f32 0.0, %v6738
        %v6740 = vpop.f32.mrf.mxu0
        %6741 = vmatprep.mubr.bf16.mxu0 0
        %6742 = vmatmul.mubr.bf16.gmra.mxu0 %v4238
        %v6743 = vpop.f32.mrf.mxu0
        %v6744 = vadd.f32 0.0, %v6743
        %v6745 = vpop.f32.mrf.mxu0
        %v6746 = vpop.f32.mrf.mxu0
        %v6747 = vadd.f32 0.0, %v6746
        %v6748 = vpop.f32.mrf.mxu0
        %6749 = vmatprep.mubr.bf16.mxu0 0
        %6750 = vmatmul.mubr.bf16.gmra.mxu0 %v4239
        %v6751 = vpop.f32.mrf.mxu0
        %v6752 = vadd.f32 0.0, %v6751
        %v6753 = vpop.f32.mrf.mxu0
        %v6754 = vpop.f32.mrf.mxu0
        %v6755 = vadd.f32 0.0, %v6754
        %v6756 = vpop.f32.mrf.mxu0
        %6757 = vmatprep.mubr.bf16.mxu0 0
        %6758 = vmatmul.mubr.bf16.gmra.mxu0 %v4240
        %v6759 = vpop.f32.mrf.mxu0
        %v6760 = vadd.f32 0.0, %v6759
        %v6761 = vpop.f32.mrf.mxu0
        %v6762 = vpop.f32.mrf.mxu0
        %v6763 = vadd.f32 0.0, %v6762
        %v6764 = vpop.f32.mrf.mxu0
        %6765 = vmatprep.mubr.bf16.mxu0 0
        %6766 = vmatmul.mubr.bf16.gmra.mxu0 %v4241
        %v6767 = vpop.f32.mrf.mxu0
        %v6768 = vadd.f32 0.0, %v6767
        %v6769 = vpop.f32.mrf.mxu0
        %v6770 = vpop.f32.mrf.mxu0
        %v6771 = vadd.f32 0.0, %v6770
        %v6772 = vpop.f32.mrf.mxu0
        %6773 = vmatprep.mubr.bf16.mxu0 0
        %6774 = vmatmul.mubr.bf16.gmra.mxu0 %v4242
        %v6775 = vpop.f32.mrf.mxu0
        %v6776 = vadd.f32 0.0, %v6775
        %v6777 = vpop.f32.mrf.mxu0
        %v6778 = vpop.f32.mrf.mxu0
        %v6779 = vadd.f32 0.0, %v6778
        %v6780 = vpop.f32.mrf.mxu0
        %6781 = vmatprep.mubr.bf16.mxu0 0
        %6782 = vmatmul.mubr.bf16.gmra.mxu0 %v4243
        %v6783 = vpop.f32.mrf.mxu0
        %v6784 = vadd.f32 0.0, %v6783
        %v6785 = vpop.f32.mrf.mxu0
        %v6786 = vpop.f32.mrf.mxu0
        %v6787 = vadd.f32 0.0, %v6786
        %v6788 = vpop.f32.mrf.mxu0
        %6789 = vmatprep.mubr.bf16.mxu0 0
        %6790 = vmatmul.mubr.bf16.gmra.mxu0 %v4244
        %v6791 = vpop.f32.mrf.mxu0
        %v6792 = vadd.f32 0.0, %v6791
        %v6793 = vpop.f32.mrf.mxu0
        %v6794 = vpop.f32.mrf.mxu0
        %v6795 = vadd.f32 0.0, %v6794
        %v6796 = vpop.f32.mrf.mxu0
        %6797 = vmatprep.mubr.bf16.mxu0 0
        %6798 = vmatmul.mubr.bf16.gmra.mxu0 %v4245
        %v6799 = vpop.f32.mrf.mxu0
        %v6800 = vadd.f32 0.0, %v6799
        %v6801 = vpop.f32.mrf.mxu0
        %v6802 = vpop.f32.mrf.mxu0
        %v6803 = vadd.f32 0.0, %v6802
        %v6804 = vpop.f32.mrf.mxu0
        %6805 = vmatprep.mubr.bf16.mxu0 0
        %6806 = vmatmul.mubr.bf16.gmra.mxu0 %v4246
        %v6807 = vpop.f32.mrf.mxu0
        %v6808 = vadd.f32 0.0, %v6807
        %v6809 = vpop.f32.mrf.mxu0
        %v6810 = vpop.f32.mrf.mxu0
        %v6811 = vadd.f32 0.0, %v6810
        %v6812 = vpop.f32.mrf.mxu0
        %6813 = vmatprep.mubr.bf16.mxu0 0
        %6814 = vmatmul.mubr.bf16.gmra.mxu0 %v4247
        %v6815 = vpop.f32.mrf.mxu0
        %v6816 = vadd.f32 0.0, %v6815
        %v6817 = vpop.f32.mrf.mxu0
        %v6818 = vpop.f32.mrf.mxu0
        %v6819 = vadd.f32 0.0, %v6818
        %v6820 = vpop.f32.mrf.mxu0
        %6821 = vmatprep.mubr.bf16.mxu0 0
        %6822 = vmatmul.mubr.bf16.gmra.mxu0 %v4248
        %v6823 = vpop.f32.mrf.mxu0
        %v6824 = vadd.f32 0.0, %v6823
        %v6825 = vpop.f32.mrf.mxu0
        %v6826 = vpop.f32.mrf.mxu0
        %v6827 = vadd.f32 0.0, %v6826
        %v6828 = vpop.f32.mrf.mxu0
        %6829 = vmatprep.mubr.bf16.mxu0 0
        %6830 = vmatmul.mubr.bf16.gmra.mxu0 %v4249
        %v6831 = vpop.f32.mrf.mxu0
        %v6832 = vadd.f32 0.0, %v6831
        %v6833 = vpop.f32.mrf.mxu0
        %v6834 = vpop.f32.mrf.mxu0
        %v6835 = vadd.f32 0.0, %v6834
        %v6836 = vpop.f32.mrf.mxu0
        %6837 = vmatprep.mubr.bf16.mxu0 0
        %6838 = vmatmul.mubr.bf16.gmra.mxu0 %v4250
        %v6839 = vpop.f32.mrf.mxu0
        %v6840 = vadd.f32 0.0, %v6839
        %v6841 = vpop.f32.mrf.mxu0
        %v6842 = vpop.f32.mrf.mxu0
        %v6843 = vadd.f32 0.0, %v6842
        %v6844 = vpop.f32.mrf.mxu0
        %6845 = vmatprep.mubr.bf16.mxu0 0
        %6846 = vmatmul.mubr.bf16.gmra.mxu0 %v4251
        %v6847 = vpop.f32.mrf.mxu0
        %v6848 = vadd.f32 0.0, %v6847
        %v6849 = vpop.f32.mrf.mxu0
        %v6850 = vpop.f32.mrf.mxu0
        %v6851 = vadd.f32 0.0, %v6850
        %v6852 = vpop.f32.mrf.mxu0
        %6853 = vmatprep.mubr.bf16.mxu0 0
        %6854 = vmatmul.mubr.bf16.gmra.mxu0 %v4252
        %v6855 = vpop.f32.mrf.mxu0
        %v6856 = vadd.f32 0.0, %v6855
        %v6857 = vpop.f32.mrf.mxu0
        %v6858 = vpop.f32.mrf.mxu0
        %v6859 = vadd.f32 0.0, %v6858
        %v6860 = vpop.f32.mrf.mxu0
        %6861 = vdwg.mxu0
        %6974 = vrot.lane.b32.xlu0 %v3477, 64
        %v6975 = vpop.permute.xlu0 %6974
        %6976 = vrot.lane.b32.xlu0 %v3480, 64
        %v6977 = vpop.permute.xlu0 %6976
        %6978 = vrot.lane.b32.xlu0 %v3485, 64
        %v6979 = vpop.permute.xlu0 %6978
        %6980 = vrot.lane.b32.xlu0 %v3488, 64
        %v6981 = vpop.permute.xlu0 %6980
        %6982 = vrot.lane.b32.xlu0 %v3493, 64
        %v6983 = vpop.permute.xlu0 %6982
        %6984 = vrot.lane.b32.xlu0 %v3496, 64
        %v6985 = vpop.permute.xlu0 %6984
        %6986 = vrot.lane.b32.xlu0 %v3501, 64
        %v6987 = vpop.permute.xlu0 %6986
        %6988 = vrot.lane.b32.xlu0 %v3504, 64
        %v6989 = vpop.permute.xlu0 %6988
        %6990 = vrot.lane.b32.xlu0 %v3509, 64
        %v6991 = vpop.permute.xlu0 %6990
        %6992 = vrot.lane.b32.xlu0 %v3512, 64
        %v6993 = vpop.permute.xlu0 %6992
        %6994 = vrot.lane.b32.xlu0 %v3517, 64
        %v6995 = vpop.permute.xlu0 %6994
        %6996 = vrot.lane.b32.xlu0 %v3520, 64
        %v6997 = vpop.permute.xlu0 %6996
        %6998 = vrot.lane.b32.xlu0 %v3525, 64
        %v6999 = vpop.permute.xlu0 %6998
        %7000 = vrot.lane.b32.xlu0 %v3528, 64
        %v7001 = vpop.permute.xlu0 %7000
        %7002 = vrot.lane.b32.xlu0 %v3533, 64
        %v7003 = vpop.permute.xlu0 %7002
        %7004 = vrot.lane.b32.xlu0 %v3536, 64
        %v7005 = vpop.permute.xlu0 %7004
        %7006 = vrot.lane.b32.xlu0 %v3541, 64
        %v7007 = vpop.permute.xlu0 %7006
        %7008 = vrot.lane.b32.xlu0 %v3544, 64
        %v7009 = vpop.permute.xlu0 %7008
        %7010 = vrot.lane.b32.xlu0 %v3549, 64
        %v7011 = vpop.permute.xlu0 %7010
        %7012 = vrot.lane.b32.xlu0 %v3552, 64
        %v7013 = vpop.permute.xlu0 %7012
        %7014 = vrot.lane.b32.xlu0 %v3557, 64
        %v7015 = vpop.permute.xlu0 %7014
        %7016 = vrot.lane.b32.xlu0 %v3560, 64
        %v7017 = vpop.permute.xlu0 %7016
        %7018 = vrot.lane.b32.xlu0 %v3565, 64
        %v7019 = vpop.permute.xlu0 %7018
        %7020 = vrot.lane.b32.xlu0 %v3568, 64
        %v7021 = vpop.permute.xlu0 %7020
        %7022 = vrot.lane.b32.xlu0 %v3573, 64
        %v7023 = vpop.permute.xlu0 %7022
        %7024 = vrot.lane.b32.xlu0 %v3576, 64
        %v7025 = vpop.permute.xlu0 %7024
        %7026 = vrot.lane.b32.xlu0 %v3581, 64
        %v7027 = vpop.permute.xlu0 %7026
        %7028 = vrot.lane.b32.xlu0 %v3584, 64
        %v7029 = vpop.permute.xlu0 %7028
        %7030 = vrot.lane.b32.xlu0 %v3589, 64
        %v7031 = vpop.permute.xlu0 %7030
        %7032 = vrot.lane.b32.xlu0 %v3592, 64
        %v7033 = vpop.permute.xlu0 %7032
        %7034 = vrot.lane.b32.xlu0 %v3597, 64
        %v7035 = vpop.permute.xlu0 %7034
        %7036 = vrot.lane.b32.xlu0 %v3600, 64
        %v7037 = vpop.permute.xlu0 %7036
        %7038 = vrot.lane.b32.xlu0 %v3605, 64
        %v7039 = vpop.permute.xlu0 %7038
        %7040 = vrot.lane.b32.xlu0 %v3608, 64
        %v7041 = vpop.permute.xlu0 %7040
        %7042 = vrot.lane.b32.xlu0 %v3613, 64
        %v7043 = vpop.permute.xlu0 %7042
        %7044 = vrot.lane.b32.xlu0 %v3616, 64
        %v7045 = vpop.permute.xlu0 %7044
        %7046 = vrot.lane.b32.xlu0 %v3621, 64
        %v7047 = vpop.permute.xlu0 %7046
        %7048 = vrot.lane.b32.xlu0 %v3624, 64
        %v7049 = vpop.permute.xlu0 %7048
        %7050 = vrot.lane.b32.xlu0 %v3629, 64
        %v7051 = vpop.permute.xlu0 %7050
        %7052 = vrot.lane.b32.xlu0 %v3632, 64
        %v7053 = vpop.permute.xlu0 %7052
        %7054 = vrot.lane.b32.xlu0 %v3637, 64
        %v7055 = vpop.permute.xlu0 %7054
        %7056 = vrot.lane.b32.xlu0 %v3640, 64
        %v7057 = vpop.permute.xlu0 %7056
        %7058 = vrot.lane.b32.xlu0 %v3645, 64
        %v7059 = vpop.permute.xlu0 %7058
        %7060 = vrot.lane.b32.xlu0 %v3648, 64
        %v7061 = vpop.permute.xlu0 %7060
        %7062 = vrot.lane.b32.xlu0 %v3653, 64
        %v7063 = vpop.permute.xlu0 %7062
        %7064 = vrot.lane.b32.xlu0 %v3656, 64
        %v7065 = vpop.permute.xlu0 %7064
        %7066 = vrot.lane.b32.xlu0 %v3661, 64
        %v7067 = vpop.permute.xlu0 %7066
        %7068 = vrot.lane.b32.xlu0 %v3664, 64
        %v7069 = vpop.permute.xlu0 %7068
        %7070 = vrot.lane.b32.xlu0 %v3669, 64
        %v7071 = vpop.permute.xlu0 %7070
        %7072 = vrot.lane.b32.xlu0 %v3672, 64
        %v7073 = vpop.permute.xlu0 %7072
        %7074 = vrot.lane.b32.xlu0 %v3677, 64
        %v7075 = vpop.permute.xlu0 %7074
        %7076 = vrot.lane.b32.xlu0 %v3680, 64
        %v7077 = vpop.permute.xlu0 %7076
        %7078 = vrot.lane.b32.xlu0 %v3685, 64
        %v7079 = vpop.permute.xlu0 %7078
        %7080 = vrot.lane.b32.xlu0 %v3688, 64
        %v7081 = vpop.permute.xlu0 %7080
        %7082 = vrot.lane.b32.xlu0 %v3693, 64
        %v7083 = vpop.permute.xlu0 %7082
        %7084 = vrot.lane.b32.xlu0 %v3696, 64
        %v7085 = vpop.permute.xlu0 %7084
        %7086 = vrot.lane.b32.xlu0 %v3701, 64
        %v7087 = vpop.permute.xlu0 %7086
        %7088 = vrot.lane.b32.xlu0 %v3704, 64
        %v7089 = vpop.permute.xlu0 %7088
        %7090 = vrot.lane.b32.xlu0 %v3709, 64
        %v7091 = vpop.permute.xlu0 %7090
        %7092 = vrot.lane.b32.xlu0 %v3712, 64
        %v7093 = vpop.permute.xlu0 %7092
        %7094 = vrot.lane.b32.xlu0 %v3717, 64
        %v7095 = vpop.permute.xlu0 %7094
        %7096 = vrot.lane.b32.xlu0 %v3720, 64
        %v7097 = vpop.permute.xlu0 %7096
        %7098 = vrot.lane.b32.xlu0 %v3725, 64
        %v7099 = vpop.permute.xlu0 %7098
        %7100 = vrot.lane.b32.xlu0 %v3728, 64
        %v7101 = vpop.permute.xlu0 %7100
        %7102 = vrot.lane.b32.xlu0 %v3733, 64
        %v7103 = vpop.permute.xlu0 %7102
        %7104 = vrot.lane.b32.xlu0 %v3736, 64
        %v7105 = vpop.permute.xlu0 %7104
        %7106 = vrot.lane.b32.xlu0 %v3741, 64
        %v7107 = vpop.permute.xlu0 %7106
        %7108 = vrot.lane.b32.xlu0 %v3744, 64
        %v7109 = vpop.permute.xlu0 %7108
        %7110 = vrot.lane.b32.xlu0 %v3749, 64
        %v7111 = vpop.permute.xlu0 %7110
        %7112 = vrot.lane.b32.xlu0 %v3752, 64
        %v7113 = vpop.permute.xlu0 %7112
        %7114 = vrot.lane.b32.xlu0 %v3757, 64
        %v7115 = vpop.permute.xlu0 %7114
        %7116 = vrot.lane.b32.xlu0 %v3760, 64
        %v7117 = vpop.permute.xlu0 %7116
        %7118 = vrot.lane.b32.xlu0 %v3765, 64
        %v7119 = vpop.permute.xlu0 %7118
        %7120 = vrot.lane.b32.xlu0 %v3768, 64
        %v7121 = vpop.permute.xlu0 %7120
        %7122 = vrot.lane.b32.xlu0 %v3773, 64
        %v7123 = vpop.permute.xlu0 %7122
        %7124 = vrot.lane.b32.xlu0 %v3776, 64
        %v7125 = vpop.permute.xlu0 %7124
        %7126 = vrot.lane.b32.xlu0 %v3781, 64
        %v7127 = vpop.permute.xlu0 %7126
        %7128 = vrot.lane.b32.xlu0 %v3784, 64
        %v7129 = vpop.permute.xlu0 %7128
        %7130 = vrot.lane.b32.xlu0 %v3789, 64
        %v7131 = vpop.permute.xlu0 %7130
        %7132 = vrot.lane.b32.xlu0 %v3792, 64
        %v7133 = vpop.permute.xlu0 %7132
        %7134 = vrot.lane.b32.xlu0 %v3797, 64
        %v7135 = vpop.permute.xlu0 %7134
        %7136 = vrot.lane.b32.xlu0 %v3800, 64
        %v7137 = vpop.permute.xlu0 %7136
        %7138 = vrot.lane.b32.xlu0 %v3805, 64
        %v7139 = vpop.permute.xlu0 %7138
        %7140 = vrot.lane.b32.xlu0 %v3808, 64
        %v7141 = vpop.permute.xlu0 %7140
        %7142 = vrot.lane.b32.xlu0 %v3813, 64
        %v7143 = vpop.permute.xlu0 %7142
        %7144 = vrot.lane.b32.xlu0 %v3816, 64
        %v7145 = vpop.permute.xlu0 %7144
        %7146 = vrot.lane.b32.xlu0 %v3821, 64
        %v7147 = vpop.permute.xlu0 %7146
        %7148 = vrot.lane.b32.xlu0 %v3824, 64
        %v7149 = vpop.permute.xlu0 %7148
        %7150 = vrot.lane.b32.xlu0 %v3829, 64
        %v7151 = vpop.permute.xlu0 %7150
        %7152 = vrot.lane.b32.xlu0 %v3832, 64
        %v7153 = vpop.permute.xlu0 %7152
        %7154 = vrot.lane.b32.xlu0 %v3837, 64
        %v7155 = vpop.permute.xlu0 %7154
        %7156 = vrot.lane.b32.xlu0 %v3840, 64
        %v7157 = vpop.permute.xlu0 %7156
        %7158 = vrot.lane.b32.xlu0 %v3845, 64
        %v7159 = vpop.permute.xlu0 %7158
        %7160 = vrot.lane.b32.xlu0 %v3848, 64
        %v7161 = vpop.permute.xlu0 %7160
        %7162 = vrot.lane.b32.xlu0 %v3853, 64
        %v7163 = vpop.permute.xlu0 %7162
        %7164 = vrot.lane.b32.xlu0 %v3856, 64
        %v7165 = vpop.permute.xlu0 %7164
        %7166 = vrot.lane.b32.xlu0 %v3861, 64
        %v7167 = vpop.permute.xlu0 %7166
        %7168 = vrot.lane.b32.xlu0 %v3864, 64
        %v7169 = vpop.permute.xlu0 %7168
        %7170 = vrot.lane.b32.xlu0 %v3869, 64
        %v7171 = vpop.permute.xlu0 %7170
        %7172 = vrot.lane.b32.xlu0 %v3872, 64
        %v7173 = vpop.permute.xlu0 %7172
        %7174 = vrot.lane.b32.xlu0 %v3877, 64
        %v7175 = vpop.permute.xlu0 %7174
        %7176 = vrot.lane.b32.xlu0 %v3880, 64
        %v7177 = vpop.permute.xlu0 %7176
        %7178 = vrot.lane.b32.xlu0 %v3885, 64
        %v7179 = vpop.permute.xlu0 %7178
        %7180 = vrot.lane.b32.xlu0 %v3888, 64
        %v7181 = vpop.permute.xlu0 %7180
        %7182 = vrot.lane.b32.xlu0 %v3893, 64
        %v7183 = vpop.permute.xlu0 %7182
        %7184 = vrot.lane.b32.xlu0 %v3896, 64
        %v7185 = vpop.permute.xlu0 %7184
        %7186 = vrot.lane.b32.xlu0 %v3901, 64
        %v7187 = vpop.permute.xlu0 %7186
        %7188 = vrot.lane.b32.xlu0 %v3904, 64
        %v7189 = vpop.permute.xlu0 %7188
        %7190 = vrot.lane.b32.xlu0 %v3909, 64
        %v7191 = vpop.permute.xlu0 %7190
        %7192 = vrot.lane.b32.xlu0 %v3912, 64
        %v7193 = vpop.permute.xlu0 %7192
        %7194 = vrot.lane.b32.xlu0 %v3917, 64
        %v7195 = vpop.permute.xlu0 %7194
        %7196 = vrot.lane.b32.xlu0 %v3920, 64
        %v7197 = vpop.permute.xlu0 %7196
        %v7310 = vmul.f32 %v6416, %v6975
        %v7311 = vmul.f32 %v6419, %v6977
        %v7312 = vmul.f32 %v6424, %v6979
        %v7313 = vmul.f32 %v6427, %v6981
        %v7314 = vmul.f32 %v6432, %v6983
        %v7315 = vmul.f32 %v6435, %v6985
        %v7316 = vmul.f32 %v6440, %v6987
        %v7317 = vmul.f32 %v6443, %v6989
        %v7318 = vmul.f32 %v6448, %v6991
        %v7319 = vmul.f32 %v6451, %v6993
        %v7320 = vmul.f32 %v6456, %v6995
        %v7321 = vmul.f32 %v6459, %v6997
        %v7322 = vmul.f32 %v6464, %v6999
        %v7323 = vmul.f32 %v6467, %v7001
        %v7324 = vmul.f32 %v6472, %v7003
        %v7325 = vmul.f32 %v6475, %v7005
        %v7326 = vmul.f32 %v6480, %v7007
        %v7327 = vmul.f32 %v6483, %v7009
        %v7328 = vmul.f32 %v6488, %v7011
        %v7329 = vmul.f32 %v6491, %v7013
        %v7330 = vmul.f32 %v6496, %v7015
        %v7331 = vmul.f32 %v6499, %v7017
        %v7332 = vmul.f32 %v6504, %v7019
        %v7333 = vmul.f32 %v6507, %v7021
        %v7334 = vmul.f32 %v6512, %v7023
        %v7335 = vmul.f32 %v6515, %v7025
        %v7336 = vmul.f32 %v6520, %v7027
        %v7337 = vmul.f32 %v6523, %v7029
        %v7338 = vmul.f32 %v6528, %v7031
        %v7339 = vmul.f32 %v6531, %v7033
        %v7340 = vmul.f32 %v6536, %v7035
        %v7341 = vmul.f32 %v6539, %v7037
        %v7342 = vmul.f32 %v6544, %v7039
        %v7343 = vmul.f32 %v6547, %v7041
        %v7344 = vmul.f32 %v6552, %v7043
        %v7345 = vmul.f32 %v6555, %v7045
        %v7346 = vmul.f32 %v6560, %v7047
        %v7347 = vmul.f32 %v6563, %v7049
        %v7348 = vmul.f32 %v6568, %v7051
        %v7349 = vmul.f32 %v6571, %v7053
        %v7350 = vmul.f32 %v6576, %v7055
        %v7351 = vmul.f32 %v6579, %v7057
        %v7352 = vmul.f32 %v6584, %v7059
        %v7353 = vmul.f32 %v6587, %v7061
        %v7354 = vmul.f32 %v6592, %v7063
        %v7355 = vmul.f32 %v6595, %v7065
        %v7356 = vmul.f32 %v6600, %v7067
        %v7357 = vmul.f32 %v6603, %v7069
        %v7358 = vmul.f32 %v6608, %v7071
        %v7359 = vmul.f32 %v6611, %v7073
        %v7360 = vmul.f32 %v6616, %v7075
        %v7361 = vmul.f32 %v6619, %v7077
        %v7362 = vmul.f32 %v6624, %v7079
        %v7363 = vmul.f32 %v6627, %v7081
        %v7364 = vmul.f32 %v6632, %v7083
        %v7365 = vmul.f32 %v6635, %v7085
        %v7366 = vmul.f32 %v6640, %v7087
        %v7367 = vmul.f32 %v6643, %v7089
        %v7368 = vmul.f32 %v6648, %v7091
        %v7369 = vmul.f32 %v6651, %v7093
        %v7370 = vmul.f32 %v6656, %v7095
        %v7371 = vmul.f32 %v6659, %v7097
        %v7372 = vmul.f32 %v6664, %v7099
        %v7373 = vmul.f32 %v6667, %v7101
        %v7374 = vmul.f32 %v6672, %v7103
        %v7375 = vmul.f32 %v6675, %v7105
        %v7376 = vmul.f32 %v6680, %v7107
        %v7377 = vmul.f32 %v6683, %v7109
        %v7378 = vmul.f32 %v6688, %v7111
        %v7379 = vmul.f32 %v6691, %v7113
        %v7380 = vmul.f32 %v6696, %v7115
        %v7381 = vmul.f32 %v6699, %v7117
        %v7382 = vmul.f32 %v6704, %v7119
        %v7383 = vmul.f32 %v6707, %v7121
        %v7384 = vmul.f32 %v6712, %v7123
        %v7385 = vmul.f32 %v6715, %v7125
        %v7386 = vmul.f32 %v6720, %v7127
        %v7387 = vmul.f32 %v6723, %v7129
        %v7388 = vmul.f32 %v6728, %v7131
        %v7389 = vmul.f32 %v6731, %v7133
        %v7390 = vmul.f32 %v6736, %v7135
        %v7391 = vmul.f32 %v6739, %v7137
        %v7392 = vmul.f32 %v6744, %v7139
        %v7393 = vmul.f32 %v6747, %v7141
        %v7394 = vmul.f32 %v6752, %v7143
        %v7395 = vmul.f32 %v6755, %v7145
        %v7396 = vmul.f32 %v6760, %v7147
        %v7397 = vmul.f32 %v6763, %v7149
        %v7398 = vmul.f32 %v6768, %v7151
        %v7399 = vmul.f32 %v6771, %v7153
        %v7400 = vmul.f32 %v6776, %v7155
        %v7401 = vmul.f32 %v6779, %v7157
        %v7402 = vmul.f32 %v6784, %v7159
        %v7403 = vmul.f32 %v6787, %v7161
        %v7404 = vmul.f32 %v6792, %v7163
        %v7405 = vmul.f32 %v6795, %v7165
        %v7406 = vmul.f32 %v6800, %v7167
        %v7407 = vmul.f32 %v6803, %v7169
        %v7408 = vmul.f32 %v6808, %v7171
        %v7409 = vmul.f32 %v6811, %v7173
        %v7410 = vmul.f32 %v6816, %v7175
        %v7411 = vmul.f32 %v6819, %v7177
        %v7412 = vmul.f32 %v6824, %v7179
        %v7413 = vmul.f32 %v6827, %v7181
        %v7414 = vmul.f32 %v6832, %v7183
        %v7415 = vmul.f32 %v6835, %v7185
        %v7416 = vmul.f32 %v6840, %v7187
        %v7417 = vmul.f32 %v6843, %v7189
        %v7418 = vmul.f32 %v6848, %v7191
        %v7419 = vmul.f32 %v6851, %v7193
        %v7420 = vmul.f32 %v6856, %v7195
        %v7421 = vmul.f32 %v6859, %v7197
        %v7422 = vpack.c.bf16 %v7311, %v7310
        %v7423 = vpack.c.bf16 %v7313, %v7312
        %v7424 = vpack.c.bf16 %v7315, %v7314
        %v7425 = vpack.c.bf16 %v7317, %v7316
        %v7426 = vpack.c.bf16 %v7319, %v7318
        %v7427 = vpack.c.bf16 %v7321, %v7320
        %v7428 = vpack.c.bf16 %v7323, %v7322
        %v7429 = vpack.c.bf16 %v7325, %v7324
        %v7430 = vpack.c.bf16 %v7327, %v7326
        %v7431 = vpack.c.bf16 %v7329, %v7328
        %v7432 = vpack.c.bf16 %v7331, %v7330
        %v7433 = vpack.c.bf16 %v7333, %v7332
        %v7434 = vpack.c.bf16 %v7335, %v7334
        %v7435 = vpack.c.bf16 %v7337, %v7336
        %v7436 = vpack.c.bf16 %v7339, %v7338
        %v7437 = vpack.c.bf16 %v7341, %v7340
        %v7438 = vpack.c.bf16 %v7343, %v7342
        %v7439 = vpack.c.bf16 %v7345, %v7344
        %v7440 = vpack.c.bf16 %v7347, %v7346
        %v7441 = vpack.c.bf16 %v7349, %v7348
        %v7442 = vpack.c.bf16 %v7351, %v7350
        %v7443 = vpack.c.bf16 %v7353, %v7352
        %v7444 = vpack.c.bf16 %v7355, %v7354
        %v7445 = vpack.c.bf16 %v7357, %v7356
        %v7446 = vpack.c.bf16 %v7359, %v7358
        %v7447 = vpack.c.bf16 %v7361, %v7360
        %v7448 = vpack.c.bf16 %v7363, %v7362
        %v7449 = vpack.c.bf16 %v7365, %v7364
        %v7450 = vpack.c.bf16 %v7367, %v7366
        %v7451 = vpack.c.bf16 %v7369, %v7368
        %v7452 = vpack.c.bf16 %v7371, %v7370
        %v7453 = vpack.c.bf16 %v7373, %v7372
        %v7454 = vpack.c.bf16 %v7375, %v7374
        %v7455 = vpack.c.bf16 %v7377, %v7376
        %v7456 = vpack.c.bf16 %v7379, %v7378
        %v7457 = vpack.c.bf16 %v7381, %v7380
        %v7458 = vpack.c.bf16 %v7383, %v7382
        %v7459 = vpack.c.bf16 %v7385, %v7384
        %v7460 = vpack.c.bf16 %v7387, %v7386
        %v7461 = vpack.c.bf16 %v7389, %v7388
        %v7462 = vpack.c.bf16 %v7391, %v7390
        %v7463 = vpack.c.bf16 %v7393, %v7392
        %v7464 = vpack.c.bf16 %v7395, %v7394
        %v7465 = vpack.c.bf16 %v7397, %v7396
        %v7466 = vpack.c.bf16 %v7399, %v7398
        %v7467 = vpack.c.bf16 %v7401, %v7400
        %v7468 = vpack.c.bf16 %v7403, %v7402
        %v7469 = vpack.c.bf16 %v7405, %v7404
        %v7470 = vpack.c.bf16 %v7407, %v7406
        %v7471 = vpack.c.bf16 %v7409, %v7408
        %v7472 = vpack.c.bf16 %v7411, %v7410
        %v7473 = vpack.c.bf16 %v7413, %v7412
        %v7474 = vpack.c.bf16 %v7415, %v7414
        %v7475 = vpack.c.bf16 %v7417, %v7416
        %v7476 = vpack.c.bf16 %v7419, %v7418
        %v7477 = vpack.c.bf16 %v7421, %v7420
        %7478 = vmatprep.subr.bf16.mxu0 0
        %7479 = vmatpush1.bf16.msra.mxu0 %v7429
        %7480 = vmatprep.subr.bf16.mxu0 0
        %7481 = vmatpush1.bf16.msra.mxu0 %v7428
        %7482 = vmatprep.subr.bf16.mxu0 0
        %7483 = vmatpush1.bf16.msra.mxu0 %v7427
        %7484 = vmatprep.subr.bf16.mxu0 0
        %7485 = vmatpush1.bf16.msra.mxu0 %v7426
        %7486 = vmatprep.subr.bf16.mxu0 0
        %7487 = vmatpush1.bf16.msra.mxu0 %v7425
        %7488 = vmatprep.subr.bf16.mxu0 0
        %7489 = vmatpush1.bf16.msra.mxu0 %v7424
        %7490 = vmatprep.subr.bf16.mxu0 0
        %7491 = vmatpush1.bf16.msra.mxu0 %v7423
        %7492 = vmatprep.subr.bf16.mxu0 0
        %7493 = vmatpush1.bf16.msra.mxu0 %v7422
        %7494 = vmatprep.subr.bf16.mxu0 0
        %7495 = vmatpush2.bf16.msra.mxu0 %v7437
        %7496 = vmatprep.subr.bf16.mxu0 0
        %7497 = vmatpush2.bf16.msra.mxu0 %v7436
        %7498 = vmatprep.subr.bf16.mxu0 0
        %7499 = vmatpush2.bf16.msra.mxu0 %v7435
        %7500 = vmatprep.subr.bf16.mxu0 0
        %7501 = vmatpush2.bf16.msra.mxu0 %v7434
        %7502 = vmatprep.subr.bf16.mxu0 0
        %7503 = vmatpush2.bf16.msra.mxu0 %v7433
        %7504 = vmatprep.subr.bf16.mxu0 0
        %7505 = vmatpush2.bf16.msra.mxu0 %v7432
        %7506 = vmatprep.subr.bf16.mxu0 0
        %7507 = vmatpush2.bf16.msra.mxu0 %v7431
        %7508 = vmatprep.subr.bf16.mxu0 0
        %7509 = vmatpush2.bf16.msra.mxu0 %v7430
        %7510 = vmatprep.mubr.bf16.mxu0 %v5135
        %7511 = vmatmul.mubr.bf16.gmra.mxu0 %v5134
        %v7512 = vpop.f32.mrf.mxu0
        %v7513 = vadd.f32 0.0, %v7512
        %v7514 = vpop.f32.mrf.mxu0
        %v7515 = vpop.f32.mrf.mxu0
        %v7516 = vadd.f32 0.0, %v7515
        %v7517 = vpop.f32.mrf.mxu0
        %7518 = vmatprep.mubr.bf16.mxu0 %v5142
        %7519 = vmatmul.mubr.bf16.gmra.mxu0 %v5141
        %v7520 = vpop.f32.mrf.mxu0
        %v7521 = vadd.f32 0.0, %v7520
        %v7522 = vpop.f32.mrf.mxu0
        %v7523 = vpop.f32.mrf.mxu0
        %v7524 = vadd.f32 0.0, %v7523
        %v7525 = vpop.f32.mrf.mxu0
        %7526 = vmatprep.mubr.bf16.mxu0 %v5149
        %7527 = vmatmul.mubr.bf16.gmra.mxu0 %v5148
        %v7528 = vpop.f32.mrf.mxu0
        %v7529 = vadd.f32 0.0, %v7528
        %v7530 = vpop.f32.mrf.mxu0
        %v7531 = vpop.f32.mrf.mxu0
        %v7532 = vadd.f32 0.0, %v7531
        %v7533 = vpop.f32.mrf.mxu0
        %7534 = vmatprep.mubr.bf16.mxu0 %v5156
        %7535 = vmatmul.mubr.bf16.gmra.mxu0 %v5155
        %v7536 = vpop.f32.mrf.mxu0
        %v7537 = vadd.f32 0.0, %v7536
        %v7538 = vpop.f32.mrf.mxu0
        %v7539 = vpop.f32.mrf.mxu0
        %v7540 = vadd.f32 0.0, %v7539
        %v7541 = vpop.f32.mrf.mxu0
        %7542 = vmatprep.mubr.bf16.mxu0 %v5163
        %7543 = vmatmul.mubr.bf16.gmra.mxu0 %v5162
        %v7544 = vpop.f32.mrf.mxu0
        %v7545 = vadd.f32 0.0, %v7544
        %v7546 = vpop.f32.mrf.mxu0
        %v7547 = vpop.f32.mrf.mxu0
        %v7548 = vadd.f32 0.0, %v7547
        %v7549 = vpop.f32.mrf.mxu0
        %7550 = vmatprep.mubr.bf16.mxu0 %v5170
        %7551 = vmatmul.mubr.bf16.gmra.mxu0 %v5169
        %v7552 = vpop.f32.mrf.mxu0
        %v7553 = vadd.f32 0.0, %v7552
        %v7554 = vpop.f32.mrf.mxu0
        %v7555 = vpop.f32.mrf.mxu0
        %v7556 = vadd.f32 0.0, %v7555
        %v7557 = vpop.f32.mrf.mxu0
        %7558 = vmatprep.mubr.bf16.mxu0 %v5177
        %7559 = vmatmul.mubr.bf16.gmra.mxu0 %v5176
        %v7560 = vpop.f32.mrf.mxu0
        %v7561 = vadd.f32 0.0, %v7560
        %v7562 = vpop.f32.mrf.mxu0
        %v7563 = vpop.f32.mrf.mxu0
        %v7564 = vadd.f32 0.0, %v7563
        %v7565 = vpop.f32.mrf.mxu0
        %7566 = vmatprep.mubr.bf16.mxu0 %v5184
        %7567 = vmatmul.mubr.bf16.gmra.mxu0 %v5183
        %v7568 = vpop.f32.mrf.mxu0
        %v7569 = vadd.f32 0.0, %v7568
        %v7570 = vpop.f32.mrf.mxu0
        %v7571 = vpop.f32.mrf.mxu0
        %v7572 = vadd.f32 0.0, %v7571
        %v7573 = vpop.f32.mrf.mxu0
        %7574 = vdwg.mxu0
        %7575 = vmatprep.subr.bf16.mxu0 0
        %7576 = vmatpush1.bf16.msra.mxu0 %v7445
        %7577 = vmatprep.subr.bf16.mxu0 0
        %7578 = vmatpush1.bf16.msra.mxu0 %v7444
        %7579 = vmatprep.subr.bf16.mxu0 0
        %7580 = vmatpush1.bf16.msra.mxu0 %v7443
        %7581 = vmatprep.subr.bf16.mxu0 0
        %7582 = vmatpush1.bf16.msra.mxu0 %v7442
        %7583 = vmatprep.subr.bf16.mxu0 0
        %7584 = vmatpush1.bf16.msra.mxu0 %v7441
        %7585 = vmatprep.subr.bf16.mxu0 0
        %7586 = vmatpush1.bf16.msra.mxu0 %v7440
        %7587 = vmatprep.subr.bf16.mxu0 0
        %7588 = vmatpush1.bf16.msra.mxu0 %v7439
        %7589 = vmatprep.subr.bf16.mxu0 0
        %7590 = vmatpush1.bf16.msra.mxu0 %v7438
        %7591 = vmatprep.subr.bf16.mxu0 0
        %7592 = vmatpush2.bf16.msra.mxu0 %v7453
        %7593 = vmatprep.subr.bf16.mxu0 0
        %7594 = vmatpush2.bf16.msra.mxu0 %v7452
        %7595 = vmatprep.subr.bf16.mxu0 0
        %7596 = vmatpush2.bf16.msra.mxu0 %v7451
        %7597 = vmatprep.subr.bf16.mxu0 0
        %7598 = vmatpush2.bf16.msra.mxu0 %v7450
        %7599 = vmatprep.subr.bf16.mxu0 0
        %7600 = vmatpush2.bf16.msra.mxu0 %v7449
        %7601 = vmatprep.subr.bf16.mxu0 0
        %7602 = vmatpush2.bf16.msra.mxu0 %v7448
        %7603 = vmatprep.subr.bf16.mxu0 0
        %7604 = vmatpush2.bf16.msra.mxu0 %v7447
        %7605 = vmatprep.subr.bf16.mxu0 0
        %7606 = vmatpush2.bf16.msra.mxu0 %v7446
        %7607 = vmatprep.mubr.bf16.mxu0 %v5137
        %7608 = vmatmul.mubr.bf16.gmra.mxu0 %v5136
        %v7609 = vpop.f32.mrf.mxu0
        %v7610 = vadd.f32 %v7513, %v7609
        %v7611 = vpop.f32.mrf.mxu0
        %v7612 = vpop.f32.mrf.mxu0
        %v7613 = vadd.f32 %v7516, %v7612
        %v7614 = vpop.f32.mrf.mxu0
        %7615 = vmatprep.mubr.bf16.mxu0 %v5144
        %7616 = vmatmul.mubr.bf16.gmra.mxu0 %v5143
        %v7617 = vpop.f32.mrf.mxu0
        %v7618 = vadd.f32 %v7521, %v7617
        %v7619 = vpop.f32.mrf.mxu0
        %v7620 = vpop.f32.mrf.mxu0
        %v7621 = vadd.f32 %v7524, %v7620
        %v7622 = vpop.f32.mrf.mxu0
        %7623 = vmatprep.mubr.bf16.mxu0 %v5151
        %7624 = vmatmul.mubr.bf16.gmra.mxu0 %v5150
        %v7625 = vpop.f32.mrf.mxu0
        %v7626 = vadd.f32 %v7529, %v7625
        %v7627 = vpop.f32.mrf.mxu0
        %v7628 = vpop.f32.mrf.mxu0
        %v7629 = vadd.f32 %v7532, %v7628
        %v7630 = vpop.f32.mrf.mxu0
        %7631 = vmatprep.mubr.bf16.mxu0 %v5158
        %7632 = vmatmul.mubr.bf16.gmra.mxu0 %v5157
        %v7633 = vpop.f32.mrf.mxu0
        %v7634 = vadd.f32 %v7537, %v7633
        %v7635 = vpop.f32.mrf.mxu0
        %v7636 = vpop.f32.mrf.mxu0
        %v7637 = vadd.f32 %v7540, %v7636
        %v7638 = vpop.f32.mrf.mxu0
        %7639 = vmatprep.mubr.bf16.mxu0 %v5165
        %7640 = vmatmul.mubr.bf16.gmra.mxu0 %v5164
        %v7641 = vpop.f32.mrf.mxu0
        %v7642 = vadd.f32 %v7545, %v7641
        %v7643 = vpop.f32.mrf.mxu0
        %v7644 = vpop.f32.mrf.mxu0
        %v7645 = vadd.f32 %v7548, %v7644
        %v7646 = vpop.f32.mrf.mxu0
        %7647 = vmatprep.mubr.bf16.mxu0 %v5172
        %7648 = vmatmul.mubr.bf16.gmra.mxu0 %v5171
        %v7649 = vpop.f32.mrf.mxu0
        %v7650 = vadd.f32 %v7553, %v7649
        %v7651 = vpop.f32.mrf.mxu0
        %v7652 = vpop.f32.mrf.mxu0
        %v7653 = vadd.f32 %v7556, %v7652
        %v7654 = vpop.f32.mrf.mxu0
        %7655 = vmatprep.mubr.bf16.mxu0 %v5179
        %7656 = vmatmul.mubr.bf16.gmra.mxu0 %v5178
        %v7657 = vpop.f32.mrf.mxu0
        %v7658 = vadd.f32 %v7561, %v7657
        %v7659 = vpop.f32.mrf.mxu0
        %v7660 = vpop.f32.mrf.mxu0
        %v7661 = vadd.f32 %v7564, %v7660
        %v7662 = vpop.f32.mrf.mxu0
        %7663 = vmatprep.mubr.bf16.mxu0 %v5186
        %7664 = vmatmul.mubr.bf16.gmra.mxu0 %v5185
        %v7665 = vpop.f32.mrf.mxu0
        %v7666 = vadd.f32 %v7569, %v7665
        %v7667 = vpop.f32.mrf.mxu0
        %v7668 = vpop.f32.mrf.mxu0
        %v7669 = vadd.f32 %v7572, %v7668
        %v7670 = vpop.f32.mrf.mxu0
        %7671 = vdwg.mxu0
        %7672 = vmatprep.subr.bf16.mxu0 0
        %7673 = vmatpush1.bf16.msra.mxu0 %v7461
        %7674 = vmatprep.subr.bf16.mxu0 0
        %7675 = vmatpush1.bf16.msra.mxu0 %v7460
        %7676 = vmatprep.subr.bf16.mxu0 0
        %7677 = vmatpush1.bf16.msra.mxu0 %v7459
        %7678 = vmatprep.subr.bf16.mxu0 0
        %7679 = vmatpush1.bf16.msra.mxu0 %v7458
        %7680 = vmatprep.subr.bf16.mxu0 0
        %7681 = vmatpush1.bf16.msra.mxu0 %v7457
        %7682 = vmatprep.subr.bf16.mxu0 0
        %7683 = vmatpush1.bf16.msra.mxu0 %v7456
        %7684 = vmatprep.subr.bf16.mxu0 0
        %7685 = vmatpush1.bf16.msra.mxu0 %v7455
        %7686 = vmatprep.subr.bf16.mxu0 0
        %7687 = vmatpush1.bf16.msra.mxu0 %v7454
        %7688 = vmatprep.subr.bf16.mxu0 0
        %7689 = vmatpush2.bf16.msra.mxu0 %v7469
        %7690 = vmatprep.subr.bf16.mxu0 0
        %7691 = vmatpush2.bf16.msra.mxu0 %v7468
        %7692 = vmatprep.subr.bf16.mxu0 0
        %7693 = vmatpush2.bf16.msra.mxu0 %v7467
        %7694 = vmatprep.subr.bf16.mxu0 0
        %7695 = vmatpush2.bf16.msra.mxu0 %v7466
        %7696 = vmatprep.subr.bf16.mxu0 0
        %7697 = vmatpush2.bf16.msra.mxu0 %v7465
        %7698 = vmatprep.subr.bf16.mxu0 0
        %7699 = vmatpush2.bf16.msra.mxu0 %v7464
        %7700 = vmatprep.subr.bf16.mxu0 0
        %7701 = vmatpush2.bf16.msra.mxu0 %v7463
        %7702 = vmatprep.subr.bf16.mxu0 0
        %7703 = vmatpush2.bf16.msra.mxu0 %v7462
        %7704 = vmatprep.mubr.bf16.mxu0 %v5139
        %7705 = vmatmul.mubr.bf16.gmra.mxu0 %v5138
        %v7706 = vpop.f32.mrf.mxu0
        %v7707 = vadd.f32 %v7610, %v7706
        %v7708 = vpop.f32.mrf.mxu0
        %v7709 = vpop.f32.mrf.mxu0
        %v7710 = vadd.f32 %v7613, %v7709
        %v7711 = vpop.f32.mrf.mxu0
        %7712 = vmatprep.mubr.bf16.mxu0 %v5146
        %7713 = vmatmul.mubr.bf16.gmra.mxu0 %v5145
        %v7714 = vpop.f32.mrf.mxu0
        %v7715 = vadd.f32 %v7618, %v7714
        %v7716 = vpop.f32.mrf.mxu0
        %v7717 = vpop.f32.mrf.mxu0
        %v7718 = vadd.f32 %v7621, %v7717
        %v7719 = vpop.f32.mrf.mxu0
        %7720 = vmatprep.mubr.bf16.mxu0 %v5153
        %7721 = vmatmul.mubr.bf16.gmra.mxu0 %v5152
        %v7722 = vpop.f32.mrf.mxu0
        %v7723 = vadd.f32 %v7626, %v7722
        %v7724 = vpop.f32.mrf.mxu0
        %v7725 = vpop.f32.mrf.mxu0
        %v7726 = vadd.f32 %v7629, %v7725
        %v7727 = vpop.f32.mrf.mxu0
        %7728 = vmatprep.mubr.bf16.mxu0 %v5160
        %7729 = vmatmul.mubr.bf16.gmra.mxu0 %v5159
        %v7730 = vpop.f32.mrf.mxu0
        %v7731 = vadd.f32 %v7634, %v7730
        %v7732 = vpop.f32.mrf.mxu0
        %v7733 = vpop.f32.mrf.mxu0
        %v7734 = vadd.f32 %v7637, %v7733
        %v7735 = vpop.f32.mrf.mxu0
        %7736 = vmatprep.mubr.bf16.mxu0 %v5167
        %7737 = vmatmul.mubr.bf16.gmra.mxu0 %v5166
        %v7738 = vpop.f32.mrf.mxu0
        %v7739 = vadd.f32 %v7642, %v7738
        %v7740 = vpop.f32.mrf.mxu0
        %v7741 = vpop.f32.mrf.mxu0
        %v7742 = vadd.f32 %v7645, %v7741
        %v7743 = vpop.f32.mrf.mxu0
        %7744 = vmatprep.mubr.bf16.mxu0 %v5174
        %7745 = vmatmul.mubr.bf16.gmra.mxu0 %v5173
        %v7746 = vpop.f32.mrf.mxu0
        %v7747 = vadd.f32 %v7650, %v7746
        %v7748 = vpop.f32.mrf.mxu0
        %v7749 = vpop.f32.mrf.mxu0
        %v7750 = vadd.f32 %v7653, %v7749
        %v7751 = vpop.f32.mrf.mxu0
        %7752 = vmatprep.mubr.bf16.mxu0 %v5181
        %7753 = vmatmul.mubr.bf16.gmra.mxu0 %v5180
        %v7754 = vpop.f32.mrf.mxu0
        %v7755 = vadd.f32 %v7658, %v7754
        %v7756 = vpop.f32.mrf.mxu0
        %v7757 = vpop.f32.mrf.mxu0
        %v7758 = vadd.f32 %v7661, %v7757
        %v7759 = vpop.f32.mrf.mxu0
        %7760 = vmatprep.mubr.bf16.mxu0 %v5188
        %7761 = vmatmul.mubr.bf16.gmra.mxu0 %v5187
        %v7762 = vpop.f32.mrf.mxu0
        %v7763 = vadd.f32 %v7666, %v7762
        %v7764 = vpop.f32.mrf.mxu0
        %v7765 = vpop.f32.mrf.mxu0
        %v7766 = vadd.f32 %v7669, %v7765
        %v7767 = vpop.f32.mrf.mxu0
        %7768 = vdwg.mxu0
        %7769 = vmatprep.subr.bf16.mxu0 0
        %7770 = vmatpush1.bf16.msra.mxu0 %v7477
        %7771 = vmatprep.subr.bf16.mxu0 0
        %7772 = vmatpush1.bf16.msra.mxu0 %v7476
        %7773 = vmatprep.subr.bf16.mxu0 0
        %7774 = vmatpush1.bf16.msra.mxu0 %v7475
        %7775 = vmatprep.subr.bf16.mxu0 0
        %7776 = vmatpush1.bf16.msra.mxu0 %v7474
        %7777 = vmatprep.subr.bf16.mxu0 0
        %7778 = vmatpush1.bf16.msra.mxu0 %v7473
        %7779 = vmatprep.subr.bf16.mxu0 0
        %7780 = vmatpush1.bf16.msra.mxu0 %v7472
        %7781 = vmatprep.subr.bf16.mxu0 0
        %7782 = vmatpush1.bf16.msra.mxu0 %v7471
        %7783 = vmatprep.subr.bf16.mxu0 0
        %7784 = vmatpush1.bf16.msra.mxu0 %v7470
        %7785 = vmatprep.subr.bf16.mxu0 0
        %7786 = vmatpush2.bf16.msra.mxu0 0
        %7787 = vmatprep.subr.bf16.mxu0 0
        %7788 = vmatpush2.bf16.msra.mxu0 0
        %7789 = vmatprep.subr.bf16.mxu0 0
        %7790 = vmatpush2.bf16.msra.mxu0 0
        %7791 = vmatprep.subr.bf16.mxu0 0
        %7792 = vmatpush2.bf16.msra.mxu0 0
        %7793 = vmatprep.subr.bf16.mxu0 0
        %7794 = vmatpush2.bf16.msra.mxu0 0
        %7795 = vmatprep.subr.bf16.mxu0 0
        %7796 = vmatpush2.bf16.msra.mxu0 0
        %7797 = vmatprep.subr.bf16.mxu0 0
        %7798 = vmatpush2.bf16.msra.mxu0 0
        %7799 = vmatprep.subr.bf16.mxu0 0
        %7800 = vmatpush2.bf16.msra.mxu0 0
        %7801 = vmatprep.mubr.bf16.mxu0 0
        %7802 = vmatmul.mubr.bf16.gmra.mxu0 %v5140
        %v7803 = vpop.f32.mrf.mxu0
        %v7804 = vadd.f32 %v7707, %v7803
        %v7805 = vpop.f32.mrf.mxu0
        %v7806 = vpop.f32.mrf.mxu0
        %v7807 = vadd.f32 %v7710, %v7806
        %v7808 = vpop.f32.mrf.mxu0
        %7809 = vmatprep.mubr.bf16.mxu0 0
        %7810 = vmatmul.mubr.bf16.gmra.mxu0 %v5147
        %v7811 = vpop.f32.mrf.mxu0
        %v7812 = vadd.f32 %v7715, %v7811
        %v7813 = vpop.f32.mrf.mxu0
        %v7814 = vpop.f32.mrf.mxu0
        %v7815 = vadd.f32 %v7718, %v7814
        %v7816 = vpop.f32.mrf.mxu0
        %7817 = vmatprep.mubr.bf16.mxu0 0
        %7818 = vmatmul.mubr.bf16.gmra.mxu0 %v5154
        %v7819 = vpop.f32.mrf.mxu0
        %v7820 = vadd.f32 %v7723, %v7819
        %v7821 = vpop.f32.mrf.mxu0
        %v7822 = vpop.f32.mrf.mxu0
        %v7823 = vadd.f32 %v7726, %v7822
        %v7824 = vpop.f32.mrf.mxu0
        %7825 = vmatprep.mubr.bf16.mxu0 0
        %7826 = vmatmul.mubr.bf16.gmra.mxu0 %v5161
        %v7827 = vpop.f32.mrf.mxu0
        %v7828 = vadd.f32 %v7731, %v7827
        %v7829 = vpop.f32.mrf.mxu0
        %v7830 = vpop.f32.mrf.mxu0
        %v7831 = vadd.f32 %v7734, %v7830
        %v7832 = vpop.f32.mrf.mxu0
        %7833 = vmatprep.mubr.bf16.mxu0 0
        %7834 = vmatmul.mubr.bf16.gmra.mxu0 %v5168
        %v7835 = vpop.f32.mrf.mxu0
        %v7836 = vadd.f32 %v7739, %v7835
        %v7837 = vpop.f32.mrf.mxu0
        %v7838 = vpop.f32.mrf.mxu0
        %v7839 = vadd.f32 %v7742, %v7838
        %v7840 = vpop.f32.mrf.mxu0
        %7841 = vmatprep.mubr.bf16.mxu0 0
        %7842 = vmatmul.mubr.bf16.gmra.mxu0 %v5175
        %v7843 = vpop.f32.mrf.mxu0
        %v7844 = vadd.f32 %v7747, %v7843
        %v7845 = vpop.f32.mrf.mxu0
        %v7846 = vpop.f32.mrf.mxu0
        %v7847 = vadd.f32 %v7750, %v7846
        %v7848 = vpop.f32.mrf.mxu0
        %7849 = vmatprep.mubr.bf16.mxu0 0
        %7850 = vmatmul.mubr.bf16.gmra.mxu0 %v5182
        %v7851 = vpop.f32.mrf.mxu0
        %v7852 = vadd.f32 %v7755, %v7851
        %v7853 = vpop.f32.mrf.mxu0
        %v7854 = vpop.f32.mrf.mxu0
        %v7855 = vadd.f32 %v7758, %v7854
        %v7856 = vpop.f32.mrf.mxu0
        %7857 = vmatprep.mubr.bf16.mxu0 0
        %7858 = vmatmul.mubr.bf16.gmra.mxu0 %v5189
        %v7859 = vpop.f32.mrf.mxu0
        %v7860 = vadd.f32 %v7763, %v7859
        %v7861 = vpop.f32.mrf.mxu0
        %v7862 = vpop.f32.mrf.mxu0
        %v7863 = vadd.f32 %v7766, %v7862
        %v7864 = vpop.f32.mrf.mxu0
        %7865 = vdwg.mxu0
        %v7866 = vpack.c.bf16 %v7807, %v7804
        %v7867 = vpack.c.bf16 %v7815, %v7812
        %v7868 = vpack.c.bf16 %v7823, %v7820
        %v7869 = vpack.c.bf16 %v7831, %v7828
        %v7870 = vpack.c.bf16 %v7839, %v7836
        %v7871 = vpack.c.bf16 %v7847, %v7844
        %v7872 = vpack.c.bf16 %v7855, %v7852
        %v7873 = vpack.c.bf16 %v7863, %v7860
        %v7874 = vlaneseq
        %v7875 = vshrl.u32 %v7874, 7
        %v7876 = vsub.s32 3, %v7875
        %v7877 = vrot.slane %v601, %v7876
        %v7886 = vunpack.c.l.b16 %v573
        %v7887 = vunpack.c.l.b16 %v574
        %v7888 = vunpack.c.l.b16 %v575
        %v7889 = vunpack.c.l.b16 %v576
        %v7890 = vunpack.c.l.b16 %v577
        %v7891 = vunpack.c.l.b16 %v578
        %v7892 = vunpack.c.l.b16 %v579
        %v7893 = vunpack.c.l.b16 %v580
        %v7894 = vpack.c.b16 %v7887, %v7886
        %v7895 = vpack.c.b16 %v7889, %v7888
        %v7896 = vpack.c.b16 %v7891, %v7890
        %v7897 = vpack.c.b16 %v7893, %v7892
        %v7903 = vsel %vm3955, %v7866, 0
        %v7906 = vsel %vm3955, %v7867, 0
        %v7909 = vsel %vm3955, %v7868, 0
        %v7912 = vsel %vm3955, %v7869, 0
        %v7915 = vsel %vm3955, %v7870, 0
        %v7918 = vsel %vm3955, %v7871, 0
        %v7921 = vsel %vm3955, %v7872, 0
        %v7924 = vsel %vm3955, %v7873, 0
        %7926 = vmatprep.subr.bf16.mxu0 0
        %7927 = vmatpush1.bf16.msra.mxu0 0
        %7928 = vmatprep.subr.bf16.mxu0 0
        %7929 = vmatpush1.bf16.msra.mxu0 0
        %7930 = vmatprep.subr.bf16.mxu0 0
        %7931 = vmatpush1.bf16.msra.mxu0 0
        %7932 = vmatprep.subr.bf16.mxu0 0
        %7933 = vmatpush1.bf16.msra.mxu0 0
        %7934 = vmatprep.subr.bf16.mxu0 0
        %7935 = vmatpush1.bf16.msra.mxu0 %v7897
        %7936 = vmatprep.subr.bf16.mxu0 0
        %7937 = vmatpush1.bf16.msra.mxu0 %v7896
        %7938 = vmatprep.subr.bf16.mxu0 0
        %7939 = vmatpush1.bf16.msra.mxu0 %v7895
        %7940 = vmatprep.subr.bf16.mxu0 0
        %7941 = vmatpush1.bf16.msra.mxu0 %v7894
        %7942 = vmatprep.subr.bf16.mxu0 0
        %7943 = vmatpush2.bf16.msra.mxu0 0
        %7944 = vmatprep.subr.bf16.mxu0 0
        %7945 = vmatpush2.bf16.msra.mxu0 0
        %7946 = vmatprep.subr.bf16.mxu0 0
        %7947 = vmatpush2.bf16.msra.mxu0 0
        %7948 = vmatprep.subr.bf16.mxu0 0
        %7949 = vmatpush2.bf16.msra.mxu0 0
        %7950 = vmatprep.subr.bf16.mxu0 0
        %7951 = vmatpush2.bf16.msra.mxu0 0
        %7952 = vmatprep.subr.bf16.mxu0 0
        %7953 = vmatpush2.bf16.msra.mxu0 0
        %7954 = vmatprep.subr.bf16.mxu0 0
        %7955 = vmatpush2.bf16.msra.mxu0 0
        %7956 = vmatprep.subr.bf16.mxu0 0
        %7957 = vmatpush2.bf16.msra.mxu0 0
        %7958 = vmatprep.mubr.bf16.mxu0 0
        %7959 = vmatmul.mubr.bf16.gmra.mxu0 %v7903
        %v7960 = vpop.f32.mrf.mxu0
        %v7961 = vadd.f32 %v7877, %v7960
        %v7962 = vpop.f32.mrf.mxu0
        %v7963 = vpop.f32.mrf.mxu0
        %v7964 = vadd.f32 %v7877, %v7963
        %v7965 = vpop.f32.mrf.mxu0
        %7966 = vmatprep.mubr.bf16.mxu0 0
        %7967 = vmatmul.mubr.bf16.gmra.mxu0 %v7906
        %v7968 = vpop.f32.mrf.mxu0
        %v7969 = vadd.f32 %v7877, %v7968
        %v7970 = vpop.f32.mrf.mxu0
        %v7971 = vpop.f32.mrf.mxu0
        %v7972 = vadd.f32 %v7877, %v7971
        %v7973 = vpop.f32.mrf.mxu0
        %7974 = vmatprep.mubr.bf16.mxu0 0
        %7975 = vmatmul.mubr.bf16.gmra.mxu0 %v7909
        %v7976 = vpop.f32.mrf.mxu0
        %v7977 = vadd.f32 %v7877, %v7976
        %v7978 = vpop.f32.mrf.mxu0
        %v7979 = vpop.f32.mrf.mxu0
        %v7980 = vadd.f32 %v7877, %v7979
        %v7981 = vpop.f32.mrf.mxu0
        %7982 = vmatprep.mubr.bf16.mxu0 0
        %7983 = vmatmul.mubr.bf16.gmra.mxu0 %v7912
        %v7984 = vpop.f32.mrf.mxu0
        %v7985 = vadd.f32 %v7877, %v7984
        %v7986 = vpop.f32.mrf.mxu0
        %v7987 = vpop.f32.mrf.mxu0
        %v7988 = vadd.f32 %v7877, %v7987
        %v7989 = vpop.f32.mrf.mxu0
        %7990 = vmatprep.mubr.bf16.mxu0 0
        %7991 = vmatmul.mubr.bf16.gmra.mxu0 %v7915
        %v7992 = vpop.f32.mrf.mxu0
        %v7993 = vadd.f32 %v7877, %v7992
        %v7994 = vpop.f32.mrf.mxu0
        %v7995 = vpop.f32.mrf.mxu0
        %v7996 = vadd.f32 %v7877, %v7995
        %v7997 = vpop.f32.mrf.mxu0
        %7998 = vmatprep.mubr.bf16.mxu0 0
        %7999 = vmatmul.mubr.bf16.gmra.mxu0 %v7918
        %v8000 = vpop.f32.mrf.mxu0
        %v8001 = vadd.f32 %v7877, %v8000
        %v8002 = vpop.f32.mrf.mxu0
        %v8003 = vpop.f32.mrf.mxu0
        %v8004 = vadd.f32 %v7877, %v8003
        %v8005 = vpop.f32.mrf.mxu0
        %8006 = vmatprep.mubr.bf16.mxu0 0
        %8007 = vmatmul.mubr.bf16.gmra.mxu0 %v7921
        %v8008 = vpop.f32.mrf.mxu0
        %v8009 = vadd.f32 %v7877, %v8008
        %v8010 = vpop.f32.mrf.mxu0
        %v8011 = vpop.f32.mrf.mxu0
        %v8012 = vadd.f32 %v7877, %v8011
        %v8013 = vpop.f32.mrf.mxu0
        %8014 = vmatprep.mubr.bf16.mxu0 0
        %8015 = vmatmul.mubr.bf16.gmra.mxu0 %v7924
        %v8016 = vpop.f32.mrf.mxu0
        %v8017 = vadd.f32 %v7877, %v8016
        %v8018 = vpop.f32.mrf.mxu0
        %v8019 = vpop.f32.mrf.mxu0
        %v8020 = vadd.f32 %v7877, %v8019
        %v8021 = vpop.f32.mrf.mxu0
        %8022 = vdwg.mxu0
        %v8023 = vmax.f32 %v7961, 0.0
        %v8024 = vmax.f32 %v7964, 0.0
        %v8025 = vmax.f32 %v7969, 0.0
        %v8026 = vmax.f32 %v7972, 0.0
        %v8027 = vmax.f32 %v7977, 0.0
        %v8028 = vmax.f32 %v7980, 0.0
        %v8029 = vmax.f32 %v7985, 0.0
        %v8030 = vmax.f32 %v7988, 0.0
        %v8031 = vmax.f32 %v7993, 0.0
        %v8032 = vmax.f32 %v7996, 0.0
        %v8033 = vmax.f32 %v8001, 0.0
        %v8034 = vmax.f32 %v8004, 0.0
        %v8035 = vmax.f32 %v8009, 0.0
        %v8036 = vmax.f32 %v8012, 0.0
        %v8037 = vmax.f32 %v8017, 0.0
        %v8038 = vmax.f32 %v8020, 0.0
        %v8039 = vand.u32 2147483647, %v7961
        %v8040 = vand.u32 2147483647, %v7964
        %v8041 = vand.u32 2147483647, %v7969
        %v8042 = vand.u32 2147483647, %v7972
        %v8043 = vand.u32 2147483647, %v7977
        %v8044 = vand.u32 2147483647, %v7980
        %v8045 = vand.u32 2147483647, %v7985
        %v8046 = vand.u32 2147483647, %v7988
        %v8047 = vand.u32 2147483647, %v7993
        %v8048 = vand.u32 2147483647, %v7996
        %v8049 = vand.u32 2147483647, %v8001
        %v8050 = vand.u32 2147483647, %v8004
        %v8051 = vand.u32 2147483647, %v8009
        %v8052 = vand.u32 2147483647, %v8012
        %v8053 = vand.u32 2147483647, %v8017
        %v8054 = vand.u32 2147483647, %v8020
        %v8055 = vsub.f32 0.0, %v8039
        %v8056 = vsub.f32 0.0, %v8040
        %v8057 = vsub.f32 0.0, %v8041
        %v8058 = vsub.f32 0.0, %v8042
        %v8059 = vsub.f32 0.0, %v8043
        %v8060 = vsub.f32 0.0, %v8044
        %v8061 = vsub.f32 0.0, %v8045
        %v8062 = vsub.f32 0.0, %v8046
        %v8063 = vsub.f32 0.0, %v8047
        %v8064 = vsub.f32 0.0, %v8048
        %v8065 = vsub.f32 0.0, %v8049
        %v8066 = vsub.f32 0.0, %v8050
        %v8067 = vsub.f32 0.0, %v8051
        %v8068 = vsub.f32 0.0, %v8052
        %v8069 = vsub.f32 0.0, %v8053
        %v8070 = vsub.f32 0.0, %v8054
        %v8071 = vmul.f32 %v8055, 1.442695
        %v8072 = vpow.pop %v8071
        %v8073 = vmul.f32 %v8056, 1.442695
        %v8074 = vpow.pop %v8073
        %v8075 = vmul.f32 %v8057, 1.442695
        %v8076 = vpow.pop %v8075
        %v8077 = vmul.f32 %v8058, 1.442695
        %v8078 = vpow.pop %v8077
        %v8079 = vmul.f32 %v8059, 1.442695
        %v8080 = vpow.pop %v8079
        %v8081 = vmul.f32 %v8060, 1.442695
        %v8082 = vpow.pop %v8081
        %v8083 = vmul.f32 %v8061, 1.442695
        %v8084 = vpow.pop %v8083
        %v8085 = vmul.f32 %v8062, 1.442695
        %v8086 = vpow.pop %v8085
        %v8087 = vmul.f32 %v8063, 1.442695
        %v8088 = vpow.pop %v8087
        %v8089 = vmul.f32 %v8064, 1.442695
        %v8090 = vpow.pop %v8089
        %v8091 = vmul.f32 %v8065, 1.442695
        %v8092 = vpow.pop %v8091
        %v8093 = vmul.f32 %v8066, 1.442695
        %v8094 = vpow.pop %v8093
        %v8095 = vmul.f32 %v8067, 1.442695
        %v8096 = vpow.pop %v8095
        %v8097 = vmul.f32 %v8068, 1.442695
        %v8098 = vpow.pop %v8097
        %v8099 = vmul.f32 %v8069, 1.442695
        %v8100 = vpow.pop %v8099
        %v8101 = vmul.f32 %v8070, 1.442695
        %v8102 = vpow.pop %v8101
        %v8103 = vadd.f32 %v8072, 1.0
        %v8104 = vlog2.pop %v8103
        %v8105 = vmul.f32 %v8104, 0.6931472
        %v8106 = vmul.f32 -0.5, %v8072
        %v8107 = vadd.f32 %v8106, 1.0
        %v8108 = vmul.f32 %v8107, %v8072
        %v8109 = vand.u32 2147483647, %v8072
        %vm8110 = vcmp.lt.f32.partialorder %v8109, 0.0004427343
        %v8111 = vsel %vm8110, %v8108, %v8105
        %v8112 = vadd.f32 %v8074, 1.0
        %v8113 = vlog2.pop %v8112
        %v8114 = vmul.f32 %v8113, 0.6931472
        %v8115 = vmul.f32 -0.5, %v8074
        %v8116 = vadd.f32 %v8115, 1.0
        %v8117 = vmul.f32 %v8116, %v8074
        %v8118 = vand.u32 2147483647, %v8074
        %vm8119 = vcmp.lt.f32.partialorder %v8118, 0.0004427343
        %v8120 = vsel %vm8119, %v8117, %v8114
        %v8121 = vadd.f32 %v8076, 1.0
        %v8122 = vlog2.pop %v8121
        %v8123 = vmul.f32 %v8122, 0.6931472
        %v8124 = vmul.f32 -0.5, %v8076
        %v8125 = vadd.f32 %v8124, 1.0
        %v8126 = vmul.f32 %v8125, %v8076
        %v8127 = vand.u32 2147483647, %v8076
        %vm8128 = vcmp.lt.f32.partialorder %v8127, 0.0004427343
        %v8129 = vsel %vm8128, %v8126, %v8123
        %v8130 = vadd.f32 %v8078, 1.0
        %v8131 = vlog2.pop %v8130
        %v8132 = vmul.f32 %v8131, 0.6931472
        %v8133 = vmul.f32 -0.5, %v8078
        %v8134 = vadd.f32 %v8133, 1.0
        %v8135 = vmul.f32 %v8134, %v8078
        %v8136 = vand.u32 2147483647, %v8078
        %vm8137 = vcmp.lt.f32.partialorder %v8136, 0.0004427343
        %v8138 = vsel %vm8137, %v8135, %v8132
        %v8139 = vadd.f32 %v8080, 1.0
        %v8140 = vlog2.pop %v8139
        %v8141 = vmul.f32 %v8140, 0.6931472
        %v8142 = vmul.f32 -0.5, %v8080
        %v8143 = vadd.f32 %v8142, 1.0
        %v8144 = vmul.f32 %v8143, %v8080
        %v8145 = vand.u32 2147483647, %v8080
        %vm8146 = vcmp.lt.f32.partialorder %v8145, 0.0004427343
        %v8147 = vsel %vm8146, %v8144, %v8141
        %v8148 = vadd.f32 %v8082, 1.0
        %v8149 = vlog2.pop %v8148
        %v8150 = vmul.f32 %v8149, 0.6931472
        %v8151 = vmul.f32 -0.5, %v8082
        %v8152 = vadd.f32 %v8151, 1.0
        %v8153 = vmul.f32 %v8152, %v8082
        %v8154 = vand.u32 2147483647, %v8082
        %vm8155 = vcmp.lt.f32.partialorder %v8154, 0.0004427343
        %v8156 = vsel %vm8155, %v8153, %v8150
        %v8157 = vadd.f32 %v8084, 1.0
        %v8158 = vlog2.pop %v8157
        %v8159 = vmul.f32 %v8158, 0.6931472
        %v8160 = vmul.f32 -0.5, %v8084
        %v8161 = vadd.f32 %v8160, 1.0
        %v8162 = vmul.f32 %v8161, %v8084
        %v8163 = vand.u32 2147483647, %v8084
        %vm8164 = vcmp.lt.f32.partialorder %v8163, 0.0004427343
        %v8165 = vsel %vm8164, %v8162, %v8159
        %v8166 = vadd.f32 %v8086, 1.0
        %v8167 = vlog2.pop %v8166
        %v8168 = vmul.f32 %v8167, 0.6931472
        %v8169 = vmul.f32 -0.5, %v8086
        %v8170 = vadd.f32 %v8169, 1.0
        %v8171 = vmul.f32 %v8170, %v8086
        %v8172 = vand.u32 2147483647, %v8086
        %vm8173 = vcmp.lt.f32.partialorder %v8172, 0.0004427343
        %v8174 = vsel %vm8173, %v8171, %v8168
        %v8175 = vadd.f32 %v8088, 1.0
        %v8176 = vlog2.pop %v8175
        %v8177 = vmul.f32 %v8176, 0.6931472
        %v8178 = vmul.f32 -0.5, %v8088
        %v8179 = vadd.f32 %v8178, 1.0
        %v8180 = vmul.f32 %v8179, %v8088
        %v8181 = vand.u32 2147483647, %v8088
        %vm8182 = vcmp.lt.f32.partialorder %v8181, 0.0004427343
        %v8183 = vsel %vm8182, %v8180, %v8177
        %v8184 = vadd.f32 %v8090, 1.0
        %v8185 = vlog2.pop %v8184
        %v8186 = vmul.f32 %v8185, 0.6931472
        %v8187 = vmul.f32 -0.5, %v8090
        %v8188 = vadd.f32 %v8187, 1.0
        %v8189 = vmul.f32 %v8188, %v8090
        %v8190 = vand.u32 2147483647, %v8090
        %vm8191 = vcmp.lt.f32.partialorder %v8190, 0.0004427343
        %v8192 = vsel %vm8191, %v8189, %v8186
        %v8193 = vadd.f32 %v8092, 1.0
        %v8194 = vlog2.pop %v8193
        %v8195 = vmul.f32 %v8194, 0.6931472
        %v8196 = vmul.f32 -0.5, %v8092
        %v8197 = vadd.f32 %v8196, 1.0
        %v8198 = vmul.f32 %v8197, %v8092
        %v8199 = vand.u32 2147483647, %v8092
        %vm8200 = vcmp.lt.f32.partialorder %v8199, 0.0004427343
        %v8201 = vsel %vm8200, %v8198, %v8195
        %v8202 = vadd.f32 %v8094, 1.0
        %v8203 = vlog2.pop %v8202
        %v8204 = vmul.f32 %v8203, 0.6931472
        %v8205 = vmul.f32 -0.5, %v8094
        %v8206 = vadd.f32 %v8205, 1.0
        %v8207 = vmul.f32 %v8206, %v8094
        %v8208 = vand.u32 2147483647, %v8094
        %vm8209 = vcmp.lt.f32.partialorder %v8208, 0.0004427343
        %v8210 = vsel %vm8209, %v8207, %v8204
        %v8211 = vadd.f32 %v8096, 1.0
        %v8212 = vlog2.pop %v8211
        %v8213 = vmul.f32 %v8212, 0.6931472
        %v8214 = vmul.f32 -0.5, %v8096
        %v8215 = vadd.f32 %v8214, 1.0
        %v8216 = vmul.f32 %v8215, %v8096
        %v8217 = vand.u32 2147483647, %v8096
        %vm8218 = vcmp.lt.f32.partialorder %v8217, 0.0004427343
        %v8219 = vsel %vm8218, %v8216, %v8213
        %v8220 = vadd.f32 %v8098, 1.0
        %v8221 = vlog2.pop %v8220
        %v8222 = vmul.f32 %v8221, 0.6931472
        %v8223 = vmul.f32 -0.5, %v8098
        %v8224 = vadd.f32 %v8223, 1.0
        %v8225 = vmul.f32 %v8224, %v8098
        %v8226 = vand.u32 2147483647, %v8098
        %vm8227 = vcmp.lt.f32.partialorder %v8226, 0.0004427343
        %v8228 = vsel %vm8227, %v8225, %v8222
        %v8229 = vadd.f32 %v8100, 1.0
        %v8230 = vlog2.pop %v8229
        %v8231 = vmul.f32 %v8230, 0.6931472
        %v8232 = vmul.f32 -0.5, %v8100
        %v8233 = vadd.f32 %v8232, 1.0
        %v8234 = vmul.f32 %v8233, %v8100
        %v8235 = vand.u32 2147483647, %v8100
        %vm8236 = vcmp.lt.f32.partialorder %v8235, 0.0004427343
        %v8237 = vsel %vm8236, %v8234, %v8231
        %v8238 = vadd.f32 %v8102, 1.0
        %v8239 = vlog2.pop %v8238
        %v8240 = vmul.f32 %v8239, 0.6931472
        %v8241 = vmul.f32 -0.5, %v8102
        %v8242 = vadd.f32 %v8241, 1.0
        %v8243 = vmul.f32 %v8242, %v8102
        %v8244 = vand.u32 2147483647, %v8102
        %vm8245 = vcmp.lt.f32.partialorder %v8244, 0.0004427343
        %v8246 = vsel %vm8245, %v8243, %v8240
        %v8247 = vadd.f32 %v8023, %v8111
        %v8248 = vadd.f32 %v8024, %v8120
        %v8249 = vadd.f32 %v8025, %v8129
        %v8250 = vadd.f32 %v8026, %v8138
        %v8251 = vadd.f32 %v8027, %v8147
        %v8252 = vadd.f32 %v8028, %v8156
        %v8253 = vadd.f32 %v8029, %v8165
        %v8254 = vadd.f32 %v8030, %v8174
        %v8255 = vadd.f32 %v8031, %v8183
        %v8256 = vadd.f32 %v8032, %v8192
        %v8257 = vadd.f32 %v8033, %v8201
        %v8258 = vadd.f32 %v8034, %v8210
        %v8259 = vadd.f32 %v8035, %v8219
        %v8260 = vadd.f32 %v8036, %v8228
        %v8261 = vadd.f32 %v8037, %v8237
        %v8262 = vadd.f32 %v8038, %v8246
        %v8263 = vsub.f32 %v8247, 0.6931472
        %v8264 = vsub.f32 %v8248, 0.6931472
        %v8265 = vsub.f32 %v8249, 0.6931472
        %v8266 = vsub.f32 %v8250, 0.6931472
        %v8267 = vsub.f32 %v8251, 0.6931472
        %v8268 = vsub.f32 %v8252, 0.6931472
        %v8269 = vsub.f32 %v8253, 0.6931472
        %v8270 = vsub.f32 %v8254, 0.6931472
        %v8271 = vsub.f32 %v8255, 0.6931472
        %v8272 = vsub.f32 %v8256, 0.6931472
        %v8273 = vsub.f32 %v8257, 0.6931472
        %v8274 = vsub.f32 %v8258, 0.6931472
        %v8275 = vsub.f32 %v8259, 0.6931472
        %v8276 = vsub.f32 %v8260, 0.6931472
        %v8277 = vsub.f32 %v8261, 0.6931472
        %v8278 = vsub.f32 %v8262, 0.6931472
        %v8279 = vpack.c.bf16 %v8264, %v8263
        %v8280 = vpack.c.bf16 %v8266, %v8265
        %v8281 = vpack.c.bf16 %v8268, %v8267
        %v8282 = vpack.c.bf16 %v8270, %v8269
        %v8283 = vpack.c.bf16 %v8272, %v8271
        %v8284 = vpack.c.bf16 %v8274, %v8273
        %v8285 = vpack.c.bf16 %v8276, %v8275
        %v8286 = vpack.c.bf16 %v8278, %v8277
        %v8287 = vlaneseq
        %v8288 = vshrl.u32 %v8287, 7
        %v8289 = vsub.s32 5, %v8288
        %v8290 = vrot.slane %v601, %v8289
        %v8299 = vunpack.c.l.b16 %v581
        %v8300 = vunpack.c.l.b16 %v582
        %v8301 = vunpack.c.l.b16 %v583
        %v8302 = vunpack.c.l.b16 %v584
        %v8303 = vunpack.c.l.b16 %v585
        %v8304 = vunpack.c.l.b16 %v586
        %v8305 = vunpack.c.l.b16 %v587
        %v8306 = vunpack.c.l.b16 %v588
        %v8307 = vpack.c.b16 %v8300, %v8299
        %v8308 = vpack.c.b16 %v8302, %v8301
        %v8309 = vpack.c.b16 %v8304, %v8303
        %v8310 = vpack.c.b16 %v8306, %v8305
        %v8316 = vsel %vm3955, %v8279, 0
        %v8319 = vsel %vm3955, %v8280, 0
        %v8322 = vsel %vm3955, %v8281, 0
        %v8325 = vsel %vm3955, %v8282, 0
        %v8328 = vsel %vm3955, %v8283, 0
        %v8331 = vsel %vm3955, %v8284, 0
        %v8334 = vsel %vm3955, %v8285, 0
        %v8337 = vsel %vm3955, %v8286, 0
        %8339 = vmatprep.subr.bf16.mxu0 0
        %8340 = vmatpush1.bf16.msra.mxu0 0
        %8341 = vmatprep.subr.bf16.mxu0 0
        %8342 = vmatpush1.bf16.msra.mxu0 0
        %8343 = vmatprep.subr.bf16.mxu0 0
        %8344 = vmatpush1.bf16.msra.mxu0 0
        %8345 = vmatprep.subr.bf16.mxu0 0
        %8346 = vmatpush1.bf16.msra.mxu0 0
        %8347 = vmatprep.subr.bf16.mxu0 0
        %8348 = vmatpush1.bf16.msra.mxu0 %v8310
        %8349 = vmatprep.subr.bf16.mxu0 0
        %8350 = vmatpush1.bf16.msra.mxu0 %v8309
        %8351 = vmatprep.subr.bf16.mxu0 0
        %8352 = vmatpush1.bf16.msra.mxu0 %v8308
        %8353 = vmatprep.subr.bf16.mxu0 0
        %8354 = vmatpush1.bf16.msra.mxu0 %v8307
        %8355 = vmatprep.subr.bf16.mxu0 0
        %8356 = vmatpush2.bf16.msra.mxu0 0
        %8357 = vmatprep.subr.bf16.mxu0 0
        %8358 = vmatpush2.bf16.msra.mxu0 0
        %8359 = vmatprep.subr.bf16.mxu0 0
        %8360 = vmatpush2.bf16.msra.mxu0 0
        %8361 = vmatprep.subr.bf16.mxu0 0
        %8362 = vmatpush2.bf16.msra.mxu0 0
        %8363 = vmatprep.subr.bf16.mxu0 0
        %8364 = vmatpush2.bf16.msra.mxu0 0
        %8365 = vmatprep.subr.bf16.mxu0 0
        %8366 = vmatpush2.bf16.msra.mxu0 0
        %8367 = vmatprep.subr.bf16.mxu0 0
        %8368 = vmatpush2.bf16.msra.mxu0 0
        %8369 = vmatprep.subr.bf16.mxu0 0
        %8370 = vmatpush2.bf16.msra.mxu0 0
        %8371 = vmatprep.mubr.bf16.mxu0 0
        %8372 = vmatmul.mubr.bf16.gmra.mxu0 %v8316
        %v8373 = vpop.f32.mrf.mxu0
        %v8374 = vadd.f32 %v8290, %v8373
        %v8375 = vpop.f32.mrf.mxu0
        %v8376 = vpop.f32.mrf.mxu0
        %v8377 = vadd.f32 %v8290, %v8376
        %v8378 = vpop.f32.mrf.mxu0
        %8379 = vmatprep.mubr.bf16.mxu0 0
        %8380 = vmatmul.mubr.bf16.gmra.mxu0 %v8319
        %v8381 = vpop.f32.mrf.mxu0
        %v8382 = vadd.f32 %v8290, %v8381
        %v8383 = vpop.f32.mrf.mxu0
        %v8384 = vpop.f32.mrf.mxu0
        %v8385 = vadd.f32 %v8290, %v8384
        %v8386 = vpop.f32.mrf.mxu0
        %8387 = vmatprep.mubr.bf16.mxu0 0
        %8388 = vmatmul.mubr.bf16.gmra.mxu0 %v8322
        %v8389 = vpop.f32.mrf.mxu0
        %v8390 = vadd.f32 %v8290, %v8389
        %v8391 = vpop.f32.mrf.mxu0
        %v8392 = vpop.f32.mrf.mxu0
        %v8393 = vadd.f32 %v8290, %v8392
        %v8394 = vpop.f32.mrf.mxu0
        %8395 = vmatprep.mubr.bf16.mxu0 0
        %8396 = vmatmul.mubr.bf16.gmra.mxu0 %v8325
        %v8397 = vpop.f32.mrf.mxu0
        %v8398 = vadd.f32 %v8290, %v8397
        %v8399 = vpop.f32.mrf.mxu0
        %v8400 = vpop.f32.mrf.mxu0
        %v8401 = vadd.f32 %v8290, %v8400
        %v8402 = vpop.f32.mrf.mxu0
        %8403 = vmatprep.mubr.bf16.mxu0 0
        %8404 = vmatmul.mubr.bf16.gmra.mxu0 %v8328
        %v8405 = vpop.f32.mrf.mxu0
        %v8406 = vadd.f32 %v8290, %v8405
        %v8407 = vpop.f32.mrf.mxu0
        %v8408 = vpop.f32.mrf.mxu0
        %v8409 = vadd.f32 %v8290, %v8408
        %v8410 = vpop.f32.mrf.mxu0
        %8411 = vmatprep.mubr.bf16.mxu0 0
        %8412 = vmatmul.mubr.bf16.gmra.mxu0 %v8331
        %v8413 = vpop.f32.mrf.mxu0
        %v8414 = vadd.f32 %v8290, %v8413
        %v8415 = vpop.f32.mrf.mxu0
        %v8416 = vpop.f32.mrf.mxu0
        %v8417 = vadd.f32 %v8290, %v8416
        %v8418 = vpop.f32.mrf.mxu0
        %8419 = vmatprep.mubr.bf16.mxu0 0
        %8420 = vmatmul.mubr.bf16.gmra.mxu0 %v8334
        %v8421 = vpop.f32.mrf.mxu0
        %v8422 = vadd.f32 %v8290, %v8421
        %v8423 = vpop.f32.mrf.mxu0
        %v8424 = vpop.f32.mrf.mxu0
        %v8425 = vadd.f32 %v8290, %v8424
        %v8426 = vpop.f32.mrf.mxu0
        %8427 = vmatprep.mubr.bf16.mxu0 0
        %8428 = vmatmul.mubr.bf16.gmra.mxu0 %v8337
        %v8429 = vpop.f32.mrf.mxu0
        %v8430 = vadd.f32 %v8290, %v8429
        %v8431 = vpop.f32.mrf.mxu0
        %v8432 = vpop.f32.mrf.mxu0
        %v8433 = vadd.f32 %v8290, %v8432
        %v8434 = vpop.f32.mrf.mxu0
        %8435 = vdwg.mxu0
        %v8436 = vadd.f32 %v6204, %v8374
        %v8437 = vadd.f32 %v6205, %v8377
        %v8438 = vadd.f32 %v6206, %v8382
        %v8439 = vadd.f32 %v6207, %v8385
        %v8440 = vadd.f32 %v6208, %v8390
        %v8441 = vadd.f32 %v6209, %v8393
        %v8442 = vadd.f32 %v6210, %v8398
        %v8443 = vadd.f32 %v6211, %v8401
        %v8444 = vadd.f32 %v6212, %v8406
        %v8445 = vadd.f32 %v6213, %v8409
        %v8446 = vadd.f32 %v6214, %v8414
        %v8447 = vadd.f32 %v6215, %v8417
        %v8448 = vadd.f32 %v6216, %v8422
        %v8449 = vadd.f32 %v6217, %v8425
        %v8450 = vadd.f32 %v6218, %v8430
        %v8451 = vadd.f32 %v6219, %v8433
        %v8452 = vpack.c.bf16 %v8437, %v8436
        %v8453 = vpack.c.bf16 %v8439, %v8438
        %v8454 = vpack.c.bf16 %v8441, %v8440
        %v8455 = vpack.c.bf16 %v8443, %v8442
        %v8456 = vpack.c.bf16 %v8445, %v8444
        %v8457 = vpack.c.bf16 %v8447, %v8446
        %v8458 = vpack.c.bf16 %v8449, %v8448
        %v8459 = vpack.c.bf16 %v8451, %v8450
        %v8460 = vlaneseq
        %v8461 = vshrl.u32 %v8460, 7
        %v8462 = vsub.s32 6, %v8461
        %v8463 = vrot.slane %v601, %v8462
        %v8472 = vunpack.c.l.b16 %v589
        %v8473 = vunpack.c.l.b16 %v590
        %v8474 = vunpack.c.l.b16 %v591
        %v8475 = vunpack.c.l.b16 %v592
        %v8476 = vunpack.c.l.b16 %v593
        %v8477 = vunpack.c.l.b16 %v594
        %v8478 = vunpack.c.l.b16 %v595
        %v8479 = vunpack.c.l.b16 %v596
        %v8480 = vpack.c.b16 %v8473, %v8472
        %v8481 = vpack.c.b16 %v8475, %v8474
        %v8482 = vpack.c.b16 %v8477, %v8476
        %v8483 = vpack.c.b16 %v8479, %v8478
        %v8489 = vsel %vm3955, %v8452, 0
        %v8492 = vsel %vm3955, %v8453, 0
        %v8495 = vsel %vm3955, %v8454, 0
        %v8498 = vsel %vm3955, %v8455, 0
        %v8501 = vsel %vm3955, %v8456, 0
        %v8504 = vsel %vm3955, %v8457, 0
        %v8507 = vsel %vm3955, %v8458, 0
        %v8510 = vsel %vm3955, %v8459, 0
        %8512 = vmatprep.subr.bf16.mxu0 0
        %8513 = vmatpush1.bf16.msra.mxu0 0
        %8514 = vmatprep.subr.bf16.mxu0 0
        %8515 = vmatpush1.bf16.msra.mxu0 0
        %8516 = vmatprep.subr.bf16.mxu0 0
        %8517 = vmatpush1.bf16.msra.mxu0 0
        %8518 = vmatprep.subr.bf16.mxu0 0
        %8519 = vmatpush1.bf16.msra.mxu0 0
        %8520 = vmatprep.subr.bf16.mxu0 0
        %8521 = vmatpush1.bf16.msra.mxu0 %v8483
        %8522 = vmatprep.subr.bf16.mxu0 0
        %8523 = vmatpush1.bf16.msra.mxu0 %v8482
        %8524 = vmatprep.subr.bf16.mxu0 0
        %8525 = vmatpush1.bf16.msra.mxu0 %v8481
        %8526 = vmatprep.subr.bf16.mxu0 0
        %8527 = vmatpush1.bf16.msra.mxu0 %v8480
        %8528 = vmatprep.subr.bf16.mxu0 0
        %8529 = vmatpush2.bf16.msra.mxu0 0
        %8530 = vmatprep.subr.bf16.mxu0 0
        %8531 = vmatpush2.bf16.msra.mxu0 0
        %8532 = vmatprep.subr.bf16.mxu0 0
        %8533 = vmatpush2.bf16.msra.mxu0 0
        %8534 = vmatprep.subr.bf16.mxu0 0
        %8535 = vmatpush2.bf16.msra.mxu0 0
        %8536 = vmatprep.subr.bf16.mxu0 0
        %8537 = vmatpush2.bf16.msra.mxu0 0
        %8538 = vmatprep.subr.bf16.mxu0 0
        %8539 = vmatpush2.bf16.msra.mxu0 0
        %8540 = vmatprep.subr.bf16.mxu0 0
        %8541 = vmatpush2.bf16.msra.mxu0 0
        %8542 = vmatprep.subr.bf16.mxu0 0
        %8543 = vmatpush2.bf16.msra.mxu0 0
        %8544 = vmatprep.mubr.bf16.mxu0 0
        %8545 = vmatmul.mubr.bf16.gmra.mxu0 %v8489
        %v8546 = vpop.f32.mrf.mxu0
        %v8547 = vadd.f32 %v8463, %v8546
        %v8548 = vpop.f32.mrf.mxu0
        %v8549 = vpop.f32.mrf.mxu0
        %v8550 = vadd.f32 %v8463, %v8549
        %v8551 = vpop.f32.mrf.mxu0
        %8552 = vmatprep.mubr.bf16.mxu0 0
        %8553 = vmatmul.mubr.bf16.gmra.mxu0 %v8492
        %v8554 = vpop.f32.mrf.mxu0
        %v8555 = vadd.f32 %v8463, %v8554
        %v8556 = vpop.f32.mrf.mxu0
        %v8557 = vpop.f32.mrf.mxu0
        %v8558 = vadd.f32 %v8463, %v8557
        %v8559 = vpop.f32.mrf.mxu0
        %8560 = vmatprep.mubr.bf16.mxu0 0
        %8561 = vmatmul.mubr.bf16.gmra.mxu0 %v8495
        %v8562 = vpop.f32.mrf.mxu0
        %v8563 = vadd.f32 %v8463, %v8562
        %v8564 = vpop.f32.mrf.mxu0
        %v8565 = vpop.f32.mrf.mxu0
        %v8566 = vadd.f32 %v8463, %v8565
        %v8567 = vpop.f32.mrf.mxu0
        %8568 = vmatprep.mubr.bf16.mxu0 0
        %8569 = vmatmul.mubr.bf16.gmra.mxu0 %v8498
        %v8570 = vpop.f32.mrf.mxu0
        %v8571 = vadd.f32 %v8463, %v8570
        %v8572 = vpop.f32.mrf.mxu0
        %v8573 = vpop.f32.mrf.mxu0
        %v8574 = vadd.f32 %v8463, %v8573
        %v8575 = vpop.f32.mrf.mxu0
        %8576 = vmatprep.mubr.bf16.mxu0 0
        %8577 = vmatmul.mubr.bf16.gmra.mxu0 %v8501
        %v8578 = vpop.f32.mrf.mxu0
        %v8579 = vadd.f32 %v8463, %v8578
        %v8580 = vpop.f32.mrf.mxu0
        %v8581 = vpop.f32.mrf.mxu0
        %v8582 = vadd.f32 %v8463, %v8581
        %v8583 = vpop.f32.mrf.mxu0
        %8584 = vmatprep.mubr.bf16.mxu0 0
        %8585 = vmatmul.mubr.bf16.gmra.mxu0 %v8504
        %v8586 = vpop.f32.mrf.mxu0
        %v8587 = vadd.f32 %v8463, %v8586
        %v8588 = vpop.f32.mrf.mxu0
        %v8589 = vpop.f32.mrf.mxu0
        %v8590 = vadd.f32 %v8463, %v8589
        %v8591 = vpop.f32.mrf.mxu0
        %8592 = vmatprep.mubr.bf16.mxu0 0
        %8593 = vmatmul.mubr.bf16.gmra.mxu0 %v8507
        %v8594 = vpop.f32.mrf.mxu0
        %v8595 = vadd.f32 %v8463, %v8594
        %v8596 = vpop.f32.mrf.mxu0
        %v8597 = vpop.f32.mrf.mxu0
        %v8598 = vadd.f32 %v8463, %v8597
        %v8599 = vpop.f32.mrf.mxu0
        %8600 = vmatprep.mubr.bf16.mxu0 0
        %8601 = vmatmul.mubr.bf16.gmra.mxu0 %v8510
        %v8602 = vpop.f32.mrf.mxu0
        %v8603 = vadd.f32 %v8463, %v8602
        %v8604 = vpop.f32.mrf.mxu0
        %v8605 = vpop.f32.mrf.mxu0
        %v8606 = vadd.f32 %v8463, %v8605
        %v8607 = vpop.f32.mrf.mxu0
        %8608 = vdwg.mxu0
        %v8609 = vmax.f32 %v8547, 0.0
        %v8610 = vmax.f32 %v8550, 0.0
        %v8611 = vmax.f32 %v8555, 0.0
        %v8612 = vmax.f32 %v8558, 0.0
        %v8613 = vmax.f32 %v8563, 0.0
        %v8614 = vmax.f32 %v8566, 0.0
        %v8615 = vmax.f32 %v8571, 0.0
        %v8616 = vmax.f32 %v8574, 0.0
        %v8617 = vmax.f32 %v8579, 0.0
        %v8618 = vmax.f32 %v8582, 0.0
        %v8619 = vmax.f32 %v8587, 0.0
        %v8620 = vmax.f32 %v8590, 0.0
        %v8621 = vmax.f32 %v8595, 0.0
        %v8622 = vmax.f32 %v8598, 0.0
        %v8623 = vmax.f32 %v8603, 0.0
        %v8624 = vmax.f32 %v8606, 0.0
        %v8625 = vand.u32 2147483647, %v8547
        %v8626 = vand.u32 2147483647, %v8550
        %v8627 = vand.u32 2147483647, %v8555
        %v8628 = vand.u32 2147483647, %v8558
        %v8629 = vand.u32 2147483647, %v8563
        %v8630 = vand.u32 2147483647, %v8566
        %v8631 = vand.u32 2147483647, %v8571
        %v8632 = vand.u32 2147483647, %v8574
        %v8633 = vand.u32 2147483647, %v8579
        %v8634 = vand.u32 2147483647, %v8582
        %v8635 = vand.u32 2147483647, %v8587
        %v8636 = vand.u32 2147483647, %v8590
        %v8637 = vand.u32 2147483647, %v8595
        %v8638 = vand.u32 2147483647, %v8598
        %v8639 = vand.u32 2147483647, %v8603
        %v8640 = vand.u32 2147483647, %v8606
        %v8641 = vsub.f32 0.0, %v8625
        %v8642 = vsub.f32 0.0, %v8626
        %v8643 = vsub.f32 0.0, %v8627
        %v8644 = vsub.f32 0.0, %v8628
        %v8645 = vsub.f32 0.0, %v8629
        %v8646 = vsub.f32 0.0, %v8630
        %v8647 = vsub.f32 0.0, %v8631
        %v8648 = vsub.f32 0.0, %v8632
        %v8649 = vsub.f32 0.0, %v8633
        %v8650 = vsub.f32 0.0, %v8634
        %v8651 = vsub.f32 0.0, %v8635
        %v8652 = vsub.f32 0.0, %v8636
        %v8653 = vsub.f32 0.0, %v8637
        %v8654 = vsub.f32 0.0, %v8638
        %v8655 = vsub.f32 0.0, %v8639
        %v8656 = vsub.f32 0.0, %v8640
        %v8657 = vmul.f32 %v8641, 1.442695
        %v8658 = vpow.pop %v8657
        %v8659 = vmul.f32 %v8642, 1.442695
        %v8660 = vpow.pop %v8659
        %v8661 = vmul.f32 %v8643, 1.442695
        %v8662 = vpow.pop %v8661
        %v8663 = vmul.f32 %v8644, 1.442695
        %v8664 = vpow.pop %v8663
        %v8665 = vmul.f32 %v8645, 1.442695
        %v8666 = vpow.pop %v8665
        %v8667 = vmul.f32 %v8646, 1.442695
        %v8668 = vpow.pop %v8667
        %v8669 = vmul.f32 %v8647, 1.442695
        %v8670 = vpow.pop %v8669
        %v8671 = vmul.f32 %v8648, 1.442695
        %v8672 = vpow.pop %v8671
        %v8673 = vmul.f32 %v8649, 1.442695
        %v8674 = vpow.pop %v8673
        %v8675 = vmul.f32 %v8650, 1.442695
        %v8676 = vpow.pop %v8675
        %v8677 = vmul.f32 %v8651, 1.442695
        %v8678 = vpow.pop %v8677
        %v8679 = vmul.f32 %v8652, 1.442695
        %v8680 = vpow.pop %v8679
        %v8681 = vmul.f32 %v8653, 1.442695
        %v8682 = vpow.pop %v8681
        %v8683 = vmul.f32 %v8654, 1.442695
        %v8684 = vpow.pop %v8683
        %v8685 = vmul.f32 %v8655, 1.442695
        %v8686 = vpow.pop %v8685
        %v8687 = vmul.f32 %v8656, 1.442695
        %v8688 = vpow.pop %v8687
        %v8689 = vadd.f32 %v8658, 1.0
        %v8690 = vlog2.pop %v8689
        %v8691 = vmul.f32 %v8690, 0.6931472
        %v8692 = vmul.f32 -0.5, %v8658
        %v8693 = vadd.f32 %v8692, 1.0
        %v8694 = vmul.f32 %v8693, %v8658
        %v8695 = vand.u32 2147483647, %v8658
        %vm8696 = vcmp.lt.f32.partialorder %v8695, 0.0004427343
        %v8697 = vsel %vm8696, %v8694, %v8691
        %v8698 = vadd.f32 %v8660, 1.0
        %v8699 = vlog2.pop %v8698
        %v8700 = vmul.f32 %v8699, 0.6931472
        %v8701 = vmul.f32 -0.5, %v8660
        %v8702 = vadd.f32 %v8701, 1.0
        %v8703 = vmul.f32 %v8702, %v8660
        %v8704 = vand.u32 2147483647, %v8660
        %vm8705 = vcmp.lt.f32.partialorder %v8704, 0.0004427343
        %v8706 = vsel %vm8705, %v8703, %v8700
        %v8707 = vadd.f32 %v8662, 1.0
        %v8708 = vlog2.pop %v8707
        %v8709 = vmul.f32 %v8708, 0.6931472
        %v8710 = vmul.f32 -0.5, %v8662
        %v8711 = vadd.f32 %v8710, 1.0
        %v8712 = vmul.f32 %v8711, %v8662
        %v8713 = vand.u32 2147483647, %v8662
        %vm8714 = vcmp.lt.f32.partialorder %v8713, 0.0004427343
        %v8715 = vsel %vm8714, %v8712, %v8709
        %v8716 = vadd.f32 %v8664, 1.0
        %v8717 = vlog2.pop %v8716
        %v8718 = vmul.f32 %v8717, 0.6931472
        %v8719 = vmul.f32 -0.5, %v8664
        %v8720 = vadd.f32 %v8719, 1.0
        %v8721 = vmul.f32 %v8720, %v8664
        %v8722 = vand.u32 2147483647, %v8664
        %vm8723 = vcmp.lt.f32.partialorder %v8722, 0.0004427343
        %v8724 = vsel %vm8723, %v8721, %v8718
        %v8725 = vadd.f32 %v8666, 1.0
        %v8726 = vlog2.pop %v8725
        %v8727 = vmul.f32 %v8726, 0.6931472
        %v8728 = vmul.f32 -0.5, %v8666
        %v8729 = vadd.f32 %v8728, 1.0
        %v8730 = vmul.f32 %v8729, %v8666
        %v8731 = vand.u32 2147483647, %v8666
        %vm8732 = vcmp.lt.f32.partialorder %v8731, 0.0004427343
        %v8733 = vsel %vm8732, %v8730, %v8727
        %v8734 = vadd.f32 %v8668, 1.0
        %v8735 = vlog2.pop %v8734
        %v8736 = vmul.f32 %v8735, 0.6931472
        %v8737 = vmul.f32 -0.5, %v8668
        %v8738 = vadd.f32 %v8737, 1.0
        %v8739 = vmul.f32 %v8738, %v8668
        %v8740 = vand.u32 2147483647, %v8668
        %vm8741 = vcmp.lt.f32.partialorder %v8740, 0.0004427343
        %v8742 = vsel %vm8741, %v8739, %v8736
        %v8743 = vadd.f32 %v8670, 1.0
        %v8744 = vlog2.pop %v8743
        %v8745 = vmul.f32 %v8744, 0.6931472
        %v8746 = vmul.f32 -0.5, %v8670
        %v8747 = vadd.f32 %v8746, 1.0
        %v8748 = vmul.f32 %v8747, %v8670
        %v8749 = vand.u32 2147483647, %v8670
        %vm8750 = vcmp.lt.f32.partialorder %v8749, 0.0004427343
        %v8751 = vsel %vm8750, %v8748, %v8745
        %v8752 = vadd.f32 %v8672, 1.0
        %v8753 = vlog2.pop %v8752
        %v8754 = vmul.f32 %v8753, 0.6931472
        %v8755 = vmul.f32 -0.5, %v8672
        %v8756 = vadd.f32 %v8755, 1.0
        %v8757 = vmul.f32 %v8756, %v8672
        %v8758 = vand.u32 2147483647, %v8672
        %vm8759 = vcmp.lt.f32.partialorder %v8758, 0.0004427343
        %v8760 = vsel %vm8759, %v8757, %v8754
        %v8761 = vadd.f32 %v8674, 1.0
        %v8762 = vlog2.pop %v8761
        %v8763 = vmul.f32 %v8762, 0.6931472
        %v8764 = vmul.f32 -0.5, %v8674
        %v8765 = vadd.f32 %v8764, 1.0
        %v8766 = vmul.f32 %v8765, %v8674
        %v8767 = vand.u32 2147483647, %v8674
        %vm8768 = vcmp.lt.f32.partialorder %v8767, 0.0004427343
        %v8769 = vsel %vm8768, %v8766, %v8763
        %v8770 = vadd.f32 %v8676, 1.0
        %v8771 = vlog2.pop %v8770
        %v8772 = vmul.f32 %v8771, 0.6931472
        %v8773 = vmul.f32 -0.5, %v8676
        %v8774 = vadd.f32 %v8773, 1.0
        %v8775 = vmul.f32 %v8774, %v8676
        %v8776 = vand.u32 2147483647, %v8676
        %vm8777 = vcmp.lt.f32.partialorder %v8776, 0.0004427343
        %v8778 = vsel %vm8777, %v8775, %v8772
        %v8779 = vadd.f32 %v8678, 1.0
        %v8780 = vlog2.pop %v8779
        %v8781 = vmul.f32 %v8780, 0.6931472
        %v8782 = vmul.f32 -0.5, %v8678
        %v8783 = vadd.f32 %v8782, 1.0
        %v8784 = vmul.f32 %v8783, %v8678
        %v8785 = vand.u32 2147483647, %v8678
        %vm8786 = vcmp.lt.f32.partialorder %v8785, 0.0004427343
        %v8787 = vsel %vm8786, %v8784, %v8781
        %v8788 = vadd.f32 %v8680, 1.0
        %v8789 = vlog2.pop %v8788
        %v8790 = vmul.f32 %v8789, 0.6931472
        %v8791 = vmul.f32 -0.5, %v8680
        %v8792 = vadd.f32 %v8791, 1.0
        %v8793 = vmul.f32 %v8792, %v8680
        %v8794 = vand.u32 2147483647, %v8680
        %vm8795 = vcmp.lt.f32.partialorder %v8794, 0.0004427343
        %v8796 = vsel %vm8795, %v8793, %v8790
        %v8797 = vadd.f32 %v8682, 1.0
        %v8798 = vlog2.pop %v8797
        %v8799 = vmul.f32 %v8798, 0.6931472
        %v8800 = vmul.f32 -0.5, %v8682
        %v8801 = vadd.f32 %v8800, 1.0
        %v8802 = vmul.f32 %v8801, %v8682
        %v8803 = vand.u32 2147483647, %v8682
        %vm8804 = vcmp.lt.f32.partialorder %v8803, 0.0004427343
        %v8805 = vsel %vm8804, %v8802, %v8799
        %v8806 = vadd.f32 %v8684, 1.0
        %v8807 = vlog2.pop %v8806
        %v8808 = vmul.f32 %v8807, 0.6931472
        %v8809 = vmul.f32 -0.5, %v8684
        %v8810 = vadd.f32 %v8809, 1.0
        %v8811 = vmul.f32 %v8810, %v8684
        %v8812 = vand.u32 2147483647, %v8684
        %vm8813 = vcmp.lt.f32.partialorder %v8812, 0.0004427343
        %v8814 = vsel %vm8813, %v8811, %v8808
        %v8815 = vadd.f32 %v8686, 1.0
        %v8816 = vlog2.pop %v8815
        %v8817 = vmul.f32 %v8816, 0.6931472
        %v8818 = vmul.f32 -0.5, %v8686
        %v8819 = vadd.f32 %v8818, 1.0
        %v8820 = vmul.f32 %v8819, %v8686
        %v8821 = vand.u32 2147483647, %v8686
        %vm8822 = vcmp.lt.f32.partialorder %v8821, 0.0004427343
        %v8823 = vsel %vm8822, %v8820, %v8817
        %v8824 = vadd.f32 %v8688, 1.0
        %v8825 = vlog2.pop %v8824
        %v8826 = vmul.f32 %v8825, 0.6931472
        %v8827 = vmul.f32 -0.5, %v8688
        %v8828 = vadd.f32 %v8827, 1.0
        %v8829 = vmul.f32 %v8828, %v8688
        %v8830 = vand.u32 2147483647, %v8688
        %vm8831 = vcmp.lt.f32.partialorder %v8830, 0.0004427343
        %v8832 = vsel %vm8831, %v8829, %v8826
        %v8833 = vadd.f32 %v8609, %v8697
        %v8834 = vadd.f32 %v8610, %v8706
        %v8835 = vadd.f32 %v8611, %v8715
        %v8836 = vadd.f32 %v8612, %v8724
        %v8837 = vadd.f32 %v8613, %v8733
        %v8838 = vadd.f32 %v8614, %v8742
        %v8839 = vadd.f32 %v8615, %v8751
        %v8840 = vadd.f32 %v8616, %v8760
        %v8841 = vadd.f32 %v8617, %v8769
        %v8842 = vadd.f32 %v8618, %v8778
        %v8843 = vadd.f32 %v8619, %v8787
        %v8844 = vadd.f32 %v8620, %v8796
        %v8845 = vadd.f32 %v8621, %v8805
        %v8846 = vadd.f32 %v8622, %v8814
        %v8847 = vadd.f32 %v8623, %v8823
        %v8848 = vadd.f32 %v8624, %v8832
        %v8849 = vsub.f32 %v8833, 0.6931472
        %v8850 = vsub.f32 %v8834, 0.6931472
        %v8851 = vsub.f32 %v8835, 0.6931472
        %v8852 = vsub.f32 %v8836, 0.6931472
        %v8853 = vsub.f32 %v8837, 0.6931472
        %v8854 = vsub.f32 %v8838, 0.6931472
        %v8855 = vsub.f32 %v8839, 0.6931472
        %v8856 = vsub.f32 %v8840, 0.6931472
        %v8857 = vsub.f32 %v8841, 0.6931472
        %v8858 = vsub.f32 %v8842, 0.6931472
        %v8859 = vsub.f32 %v8843, 0.6931472
        %v8860 = vsub.f32 %v8844, 0.6931472
        %v8861 = vsub.f32 %v8845, 0.6931472
        %v8862 = vsub.f32 %v8846, 0.6931472
        %v8863 = vsub.f32 %v8847, 0.6931472
        %v8864 = vsub.f32 %v8848, 0.6931472
        %v8865 = vpack.c.bf16 %v8850, %v8849
        %v8866 = vpack.c.bf16 %v8852, %v8851
        %v8867 = vpack.c.bf16 %v8854, %v8853
        %v8868 = vpack.c.bf16 %v8856, %v8855
        %v8869 = vpack.c.bf16 %v8858, %v8857
        %v8870 = vpack.c.bf16 %v8860, %v8859
        %v8871 = vpack.c.bf16 %v8862, %v8861
        %v8872 = vpack.c.bf16 %v8864, %v8863
        %v8877 = vunpack.c.l.b16 %v597
        %v8878 = vunpack.c.l.b16 %v598
        %v8879 = vunpack.c.l.b16 %v599
        %v8880 = vunpack.c.l.b16 %v600
        %v8881 = vpack.c.b16 %v8878, %v8877
        %v8882 = vpack.c.b16 %v8880, %v8879
        %vm8885 = vcmask 261120
        %v8887 = vsel %vm8885, %v8865, 0
        %v8890 = vsel %vm8885, %v8866, 0
        %v8893 = vsel %vm8885, %v8867, 0
        %v8896 = vsel %vm8885, %v8868, 0
        %v8899 = vsel %vm8885, %v8869, 0
        %v8902 = vsel %vm8885, %v8870, 0
        %v8905 = vsel %vm8885, %v8871, 0
        %v8908 = vsel %vm8885, %v8872, 0
        %8910 = vmatprep.subr.bf16.mxu0 0
        %8911 = vmatpush1.bf16.msra.mxu0 0
        %8912 = vmatprep.subr.bf16.mxu0 0
        %8913 = vmatpush1.bf16.msra.mxu0 0
        %8914 = vmatprep.subr.bf16.mxu0 0
        %8915 = vmatpush1.bf16.msra.mxu0 0
        %8916 = vmatprep.subr.bf16.mxu0 0
        %8917 = vmatpush1.bf16.msra.mxu0 0
        %8918 = vmatprep.subr.bf16.mxu0 0
        %8919 = vmatpush1.bf16.msra.mxu0 0
        %8920 = vmatprep.subr.bf16.mxu0 0
        %8921 = vmatpush1.bf16.msra.mxu0 0
        %8922 = vmatprep.subr.bf16.mxu0 0
        %8923 = vmatpush1.bf16.msra.mxu0 %v8882
        %8924 = vmatprep.subr.bf16.mxu0 0
        %8925 = vmatpush1.bf16.msra.mxu0 %v8881
        %8926 = vmatprep.subr.bf16.mxu0 0
        %8927 = vmatpush2.bf16.msra.mxu0 0
        %8928 = vmatprep.subr.bf16.mxu0 0
        %8929 = vmatpush2.bf16.msra.mxu0 0
        %8930 = vmatprep.subr.bf16.mxu0 0
        %8931 = vmatpush2.bf16.msra.mxu0 0
        %8932 = vmatprep.subr.bf16.mxu0 0
        %8933 = vmatpush2.bf16.msra.mxu0 0
        %8934 = vmatprep.subr.bf16.mxu0 0
        %8935 = vmatpush2.bf16.msra.mxu0 0
        %8936 = vmatprep.subr.bf16.mxu0 0
        %8937 = vmatpush2.bf16.msra.mxu0 0
        %8938 = vmatprep.subr.bf16.mxu0 0
        %8939 = vmatpush2.bf16.msra.mxu0 0
        %8940 = vmatprep.subr.bf16.mxu0 0
        %8941 = vmatpush2.bf16.msra.mxu0 0
        %8942 = vmatprep.mubr.bf16.mxu0 0
        %8943 = vmatmul.mubr.bf16.gmra.mxu0 %v8887
        %v8944 = vpop.f32.mrf.mxu0
        %v8945 = vadd.f32 0.0, %v8944
        %v8946 = vpop.f32.mrf.mxu0
        %v8947 = vpop.f32.mrf.mxu0
        %v8948 = vadd.f32 0.0, %v8947
        %v8949 = vpop.f32.mrf.mxu0
        %8950 = vmatprep.mubr.bf16.mxu0 0
        %8951 = vmatmul.mubr.bf16.gmra.mxu0 %v8890
        %v8952 = vpop.f32.mrf.mxu0
        %v8953 = vadd.f32 0.0, %v8952
        %v8954 = vpop.f32.mrf.mxu0
        %v8955 = vpop.f32.mrf.mxu0
        %v8956 = vadd.f32 0.0, %v8955
        %v8957 = vpop.f32.mrf.mxu0
        %8958 = vmatprep.mubr.bf16.mxu0 0
        %8959 = vmatmul.mubr.bf16.gmra.mxu0 %v8893
        %v8960 = vpop.f32.mrf.mxu0
        %v8961 = vadd.f32 0.0, %v8960
        %v8962 = vpop.f32.mrf.mxu0
        %v8963 = vpop.f32.mrf.mxu0
        %v8964 = vadd.f32 0.0, %v8963
        %v8965 = vpop.f32.mrf.mxu0
        %8966 = vmatprep.mubr.bf16.mxu0 0
        %8967 = vmatmul.mubr.bf16.gmra.mxu0 %v8896
        %v8968 = vpop.f32.mrf.mxu0
        %v8969 = vadd.f32 0.0, %v8968
        %v8970 = vpop.f32.mrf.mxu0
        %v8971 = vpop.f32.mrf.mxu0
        %v8972 = vadd.f32 0.0, %v8971
        %v8973 = vpop.f32.mrf.mxu0
        %8974 = vmatprep.mubr.bf16.mxu0 0
        %8975 = vmatmul.mubr.bf16.gmra.mxu0 %v8899
        %v8976 = vpop.f32.mrf.mxu0
        %v8977 = vadd.f32 0.0, %v8976
        %v8978 = vpop.f32.mrf.mxu0
        %v8979 = vpop.f32.mrf.mxu0
        %v8980 = vadd.f32 0.0, %v8979
        %v8981 = vpop.f32.mrf.mxu0
        %8982 = vmatprep.mubr.bf16.mxu0 0
        %8983 = vmatmul.mubr.bf16.gmra.mxu0 %v8902
        %v8984 = vpop.f32.mrf.mxu0
        %v8985 = vadd.f32 0.0, %v8984
        %v8986 = vpop.f32.mrf.mxu0
        %v8987 = vpop.f32.mrf.mxu0
        %v8988 = vadd.f32 0.0, %v8987
        %v8989 = vpop.f32.mrf.mxu0
        %8990 = vmatprep.mubr.bf16.mxu0 0
        %8991 = vmatmul.mubr.bf16.gmra.mxu0 %v8905
        %v8992 = vpop.f32.mrf.mxu0
        %v8993 = vadd.f32 0.0, %v8992
        %v8994 = vpop.f32.mrf.mxu0
        %v8995 = vpop.f32.mrf.mxu0
        %v8996 = vadd.f32 0.0, %v8995
        %v8997 = vpop.f32.mrf.mxu0
        %8998 = vmatprep.mubr.bf16.mxu0 0
        %8999 = vmatmul.mubr.bf16.gmra.mxu0 %v8908
        %v9000 = vpop.f32.mrf.mxu0
        %v9001 = vadd.f32 0.0, %v9000
        %v9002 = vpop.f32.mrf.mxu0
        %v9003 = vpop.f32.mrf.mxu0
        %v9004 = vadd.f32 0.0, %v9003
        %v9005 = vpop.f32.mrf.mxu0
        %9006 = vdwg.mxu0
        %9007 = vst [vmem:[%s308] sm:$0xff] %v8945
        %9008 = vst [vmem:[%s308 + $0x8] sm:$0xff] %v8948
        %9009 = vst [vmem:[%s308 + $0x10] sm:$0xff] %v8953
        %9010 = vst [vmem:[%s308 + $0x18] sm:$0xff] %v8956
        %9011 = vst [vmem:[%s308 + $0x20] sm:$0xff] %v8961
        %9012 = vst [vmem:[%s308 + $0x28] sm:$0xff] %v8964
        %9013 = vst [vmem:[%s308 + $0x30] sm:$0xff] %v8969
        %9014 = vst [vmem:[%s308 + $0x38] sm:$0xff] %v8972
        %9015 = vst [vmem:[%s308 + $0x40] sm:$0xff] %v8977
        %9016 = vst [vmem:[%s308 + $0x48] sm:$0xff] %v8980
        %9017 = vst [vmem:[%s308 + $0x50] sm:$0xff] %v8985
        %9018 = vst [vmem:[%s308 + $0x58] sm:$0xff] %v8988
        %9019 = vst [vmem:[%s308 + $0x60] sm:$0xff] %v8993
        %9020 = vst [vmem:[%s308 + $0x68] sm:$0xff] %v8996
        %9021 = vst [vmem:[%s308 + $0x70] sm:$0xff] %v9001
        %9022 = vst [vmem:[%s308 + $0x78] sm:$0xff] %v9004
        %s9023 = sand.u32 %s191, 1
        %s9024 = scalar_lea.sflag [#allocation3], %s9023
        %s9025 = sand.u32 %s191, 1
        %s9026 = smul.addr %s9025, 128
        %s9027 = scalar_lea.vmem [#allocation2], %s9026
        // Predicated region
        $region49: #{tpu_custom_call.1} parent=47 // pred_check
          %p9028 = pneg %p201
        $region50: #{tpu_custom_call.1} parent=47 // pred_check_branch
          %9030 = sbr.rel (%p9028) target = $region52
        $region51: #{tpu_custom_call.1} parent=47 // pred_region
          %s9031 = smul.u32 16, %s21
          %s9033 = ssub.s32 2048, 2048
          %9034 = vsyncadd %s9024, %s9033
          %s9035 = smul.addr %s9031, 128
          %s9036 = scalar_lea.hbm %s7, %s9035
          %s9037 = sshll.u32 %s9027, 4
          %s9038 = int_to_ptr.vmem [resolvable:$true] %s9037
          %9043 = dma.vmem_to_hbm [thread:$0]  %s9038, 2048, %s9036, %s9024, 128, 128, 8
        $region52: #{tpu_custom_call.1} parent=47 // pred_fallthru
          _
      $region48: #{tpu_custom_call.1} parent=5 // pred_fallthru
        _
      %p9044 = scmp.le.s32.totalorder 2, %s16
      // Predicated region
      $region53: #{tpu_custom_call.1} parent=5 // pred_check
        %p9045 = pneg %p9044
      $region54: #{tpu_custom_call.1} parent=5 // pred_check_branch
        %9047 = sbr.rel (%p9045) target = $region56
      $region55: #{tpu_custom_call.1} parent=5 // pred_region
        %s9048 = ssub.s32 %s16, 2
        // Predicated region
        $region57: #{tpu_custom_call.1} parent=55 // pred_check
          %p9049 = pneg %p207
        $region58: #{tpu_custom_call.1} parent=55 // pred_check_branch
          %9051 = sbr.rel (%p9049) target = $region60
        $region59: #{tpu_custom_call.1} parent=55 // pred_region
          %s9052 = sand.u32 %s192, 1
          %s9053 = scalar_lea.sflag [#allocation3], %s9052
          %s9054 = sand.u32 %s192, 1
          %s9055 = smul.addr %s9054, 128
          %s9056 = scalar_lea.vmem [#allocation2], %s9055
          %9057 = dma.done %s9053, 2048
        $region60: #{tpu_custom_call.1} parent=55 // pred_fallthru
          _
      $region56: #{tpu_custom_call.1} parent=5 // pred_fallthru
        _
    $region6: #{tpu_custom_call.1} parent=1 // loop_footer
      %s20 = sadd.s32 1, %s16
    $region7: #{tpu_custom_call.1} parent=1 // loop_footer_branch
      %15 = sbr.rel target = $region3
    $region8: #{tpu_custom_call.1} parent=1 // loop_exit
      _
    %9058 = vsyncpa [#allocation3], 1
    %s9059 = scalar_lea.sflag [#allocation3], 1
    %9060 = vsyncpa %s9059, 1

</llo_original>
